<compile_context>
chip_gen: v6e
topology: v6e:2x2x1
jax: 0.10.0
libtpu: 0.0.40
codegen_flags: <defaults>
</compile_context>

<pallas_src>
import jax
import jax.numpy as jnp
import numpy as np
from jax.experimental import pallas as pl
from jax.experimental.pallas import tpu as pltpu


B_TILE = 8   # images per grid step; 8 -> 256-lane matmuls (v6e/v7x MXU width).
             # Use 4 on v5e (128-wide MXU).  On v7x keep batch/B_TILE a
             # multiple of 2 so both TensorCores get grid steps.


# ---------------------------------------------------------------------------
# Kernel: one grid step pushes B_TILE images through all four conv layers.
# Activations live as (M_spatial, B_TILE*C): the batch sits in the lane axis.
# ---------------------------------------------------------------------------
def _fused_encoder_kernel(p1_ref, w1_ref, b1_ref,
                          a2_ref, w2_ref, b2_ref,
                          a3_ref, w3_ref, b3_ref,
                          a4_ref, w4_ref, b4_ref,
                          o_ref):
    bf16, f32 = jnp.bfloat16, jnp.float32

    def sigmoid(x):
        # logistic(x) == 0.5*tanh(x/2) + 0.5 ; tanh runs on the EUP slot.
        return 0.5 * jnp.tanh(0.5 * x) + 0.5

    # ---- layer 1: packed patches (196, B*9) @ block-diag weights (B*9, B*32)
    y = sigmoid(jnp.dot(p1_ref[0], w1_ref[...], preferred_element_type=f32)
                + b1_ref[...])                               # (196, B*32) f32

    # ---- layers 2..4:
    #   a_ref: (9*m_pad, m_in)     stacked 0/1 gather, per-tap rows 16-aligned
    #   w_ref: (9, B*Cin, B*Cout)  block-diagonal per-tap weights
    #   b_ref: (1, B*Cout)
    for a_ref, w_ref, b_ref in ((a2_ref, w2_ref, b2_ref),
                                (a3_ref, w3_ref, b3_ref),
                                (a4_ref, w4_ref, b4_ref)):
        m_pad = a_ref.shape[0] // 9
        # One stacked gather matmul replaces nine small ones.  Every gather row
        # holds at most a single 1, so the bf16 result is exact.
        g = jnp.dot(a_ref[...], y.astype(bf16),
                    preferred_element_type=f32).astype(bf16)  # (9*m_pad, B*Cin)
        # Nine full-width block-diagonal weight matmuls, f32 accumulation.
        acc = jnp.dot(g[0:m_pad], w_ref[0], preferred_element_type=f32)
        for t in range(1, 9):                 # static unroll over the 3x3 taps
            acc = acc + jnp.dot(g[t * m_pad:(t + 1) * m_pad], w_ref[t],
                                preferred_element_type=f32)
        y = sigmoid(acc + b_ref[...])         # (m_pad, B*Cout) f32

    # y is (16, B*n_lat); only rows 0..3 (the 2x2 output) are meaningful.
    o_ref[0] = y[0:8].astype(o_ref.dtype)


# ---------------------------------------------------------------------------
# One-time host-side preparation (gather matrices, block-diagonal weights).
# ---------------------------------------------------------------------------
def _ceil_to(v, m):
    return ((v + m - 1) // m) * m


def _stacked_gather(in_hw, out_hw, in_cols, row_align=16):
    """Stacked 0/1 gather matrix (9*m_pad, in_cols) for conv(k=3, s=2, p=1).

    Row t*m_pad + (r*out_w + c) selects input pixel (2r+kh-1, 2c+kw-1) with
    t = kh*3 + kw.  Out-of-range taps (the zero padding), pad rows and pad
    columns stay all-zero, which reproduces padding=1 exactly and keeps junk
    activation rows of the previous layer from leaking into this one.
    """
    ih, iw = in_hw
    oh, ow = out_hw
    m_pad = _ceil_to(oh * ow, row_align)
    a = np.zeros((9 * m_pad, in_cols), np.float32)
    for kh in range(3):
        for kw in range(3):
            t = kh * 3 + kw
            for r in range(oh):
                sh = 2 * r + kh - 1
                if not (0 <= sh < ih):
                    continue
                for c in range(ow):
                    sw = 2 * c + kw - 1
                    if 0 <= sw < iw:
                        a[t * m_pad + r * ow + c, sh * iw + sw] = 1.0
    return a


def _block_diag(mat, b_tile):
    r, c = mat.shape
    out = np.zeros((b_tile * r, b_tile * c), np.float32)
    for i in range(b_tile):
        out[i * r:(i + 1) * r, i * c:(i + 1) * c] = mat
    return out


def init_conv_encoder_params(latent_size, key):
    """Deterministic synthetic parameters matching the PyTorch module shapes."""
    chans = [1, 32, 32, 32, latent_size // 4]
    params = []
    for li in range(4):
        cin, cout = chans[li], chans[li + 1]
        key, kw_, kb_ = jax.random.split(key, 3)
        bound = 1.0 / np.sqrt(cin * 9)
        w = jax.random.uniform(kw_, (cout, cin, 3, 3), jnp.float32, -bound, bound)
        b = jax.random.uniform(kb_, (cout,), jnp.float32, -bound, bound)
        params.append((w, b))
    return params


def prepare_kernel_params(params, b_tile=B_TILE):
    """One-time packing of kernel constants (done at init, not per forward)."""
    (w1, b1), (w2, b2), (w3, b3), (w4, b4) = params

    def taps(w):                       # (cout,cin,3,3) -> (9, cin, cout), t=kh*3+kw
        w = np.asarray(w, np.float32)
        return np.transpose(w, (2, 3, 1, 0)).reshape(9, w.shape[1], w.shape[0])

    def bd_taps(w):                    # per-tap block-diag (9, B*cin, B*cout)
        t = taps(w)
        return np.stack([_block_diag(t[k], b_tile) for k in range(9)])

    def bias(b):                       # (cout,) -> (1, B*cout); lane = img*cout + c
        return jnp.asarray(np.tile(np.asarray(b, np.float32), b_tile)[None, :])

    bf = lambda a: jnp.asarray(a, jnp.bfloat16)

    # Layer 1 (cin=1): patches arrive packed (196, B*9), so its weight is the
    # block-diagonal of the per-image (9, 32) tap matrix.
    w1_bd = _block_diag(taps(w1).reshape(9, -1), b_tile)            # (B*9, B*32)

    a2 = _stacked_gather((14, 14), (7, 7), in_cols=196)             # (576, 196)
    a3 = _stacked_gather((7, 7), (4, 4), in_cols=a2.shape[0] // 9)  # (144, 64)
    a4 = _stacked_gather((4, 4), (2, 2), in_cols=a3.shape[0] // 9)  # (144, 16)

    return (bf(w1_bd), bias(b1),
            bf(a2), bf(bd_taps(w2)), bias(b2),
            bf(a3), bf(bd_taps(w3)), bias(b3),
            bf(a4), bf(bd_taps(w4)), bias(b4))


# ---------------------------------------------------------------------------
# Forward pass.
# ---------------------------------------------------------------------------
def _layer1_patches(x_nchw, b_tile):
    """(B, 1, 28, 28) -> (B/b_tile, 196, b_tile*9) bf16 packed im2col patches."""
    B = x_nchw.shape[0]
    img = x_nchw[:, 0]                                    # (B, 28, 28)
    xp = jnp.pad(img, ((0, 0), (1, 1), (1, 1)))           # (B, 30, 30)
    cols = [xp[:, kh:kh + 28:2, kw:kw + 28:2]             # (B, 14, 14) each
            for kh in range(3) for kw in range(3)]        # tap order kh*3+kw
    p = jnp.stack(cols, axis=-1).reshape(B, 196, 9)
    p = p.reshape(B // b_tile, b_tile, 196, 9)
    p = jnp.transpose(p, (0, 2, 1, 3)).reshape(B // b_tile, 196, b_tile * 9)
    return p.astype(jnp.bfloat16)                         # lane = img*9 + tap


@jax.jit
def conv_encoder_forward(x_nchw, kparams):
    """(B, 1, 28, 28) NCHW -> (B, latent_size//4, 2, 2) NCHW."""
    (w1_bd, b1, a2, w2_bd, b2, a3, w3_bd, b3, a4, w4_bd, b4) = kparams
    b_tile = w1_bd.shape[0] // 9
    n_lat = w4_bd.shape[2] // b_tile
    B = x_nchw.shape[0]
    n_grid = pl.cdiv(B, b_tile)
    b_padded = n_grid * b_tile
    if b_padded != B:                         # pad the batch to a whole tile
        x_nchw = jnp.pad(x_nchw, ((0, b_padded - B), (0, 0), (0, 0), (0, 0)))

    p1 = _layer1_patches(x_nchw, b_tile)      # (n_grid, 196, b_tile*9) bf16
    consts = (w1_bd, b1, a2, w2_bd, b2, a3, w3_bd, b3, a4, w4_bd, b4)

    def const_spec(arr):                      # full-array block, never re-indexed
        nd = arr.ndim
        return pl.BlockSpec(tuple(arr.shape), lambda g, _n=nd: (0,) * _n)

    # Advisory cost estimate (whole call) so XLA can schedule around the kernel.
    flops = 2 * p1.shape[1] * w1_bd.shape[0] * w1_bd.shape[1]
    trans = p1.shape[1] * w1_bd.shape[1]
    for a, w in ((a2, w2_bd), (a3, w3_bd), (a4, w4_bd)):
        m_pad = a.shape[0] // 9
        flops += 2 * a.shape[0] * a.shape[1] * w.shape[1]          # gather matmul
        flops += 2 * 9 * m_pad * w.shape[1] * w.shape[2]           # weight matmuls
        trans += m_pad * w.shape[2]
    flops *= n_grid
    trans *= n_grid
    out_elems = n_grid * 8 * b_tile * n_lat
    bytes_accessed = (sum(int(c.size) * c.dtype.itemsize for c in consts)
                      + int(p1.size) * p1.dtype.itemsize + out_elems * 4)

    out = pl.pallas_call(
        _fused_encoder_kernel,
        out_shape=jax.ShapeDtypeStruct((n_grid, 8, b_tile * n_lat), jnp.float32),
        grid=(n_grid,),
        in_specs=[pl.BlockSpec((1,) + p1.shape[1:], lambda g: (g, 0, 0))]
                 + [const_spec(c) for c in consts],
        out_specs=pl.BlockSpec((1, 8, b_tile * n_lat), lambda g: (g, 0, 0)),
        compiler_params=pltpu.CompilerParams(
            dimension_semantics=("parallel",)),    # v7x: 2 TCs split the grid
        cost_estimate=pl.CostEstimate(flops=int(flops),
                                      transcendentals=int(trans),
                                      bytes_accessed=int(bytes_accessed)),
    )(p1, *consts)

    # (n_grid, 8, b_tile*n_lat): rows 0..3 are the 2x2 spatial positions, the
    # lane packs (image-in-tile, channel).  Untangle to NCHW in the wrapper.
    out = out.reshape(n_grid, 8, b_tile, n_lat)[:, :4]
    out = jnp.transpose(out, (0, 2, 3, 1)).reshape(b_padded, n_lat, 2, 2)
    return out[:B]


# ---------------------------------------------------------------------------
# Pure-JAX reference.
# ---------------------------------------------------------------------------
def _reference_forward(x_nchw, params):
    x = x_nchw
    for (w, b) in params:
        x = jax.lax.conv_general_dilated(
            x, w, window_strides=(2, 2), padding=((1, 1), (1, 1)),
            dimension_numbers=("NCHW", "OIHW", "NCHW"))
        x = jax.nn.sigmoid(x + b.reshape(1, -1, 1, 1))
    return x


if __name__ == "__main__":
    latent_size = 40              # last conv has latent_size // 4 = 10 channels
    key = jax.random.PRNGKey(0)
    key, kx = jax.random.split(key)

    x = jax.random.normal(kx, (2, 1, 28, 28), dtype=jnp.float32)   # MNIST-sized
    params = init_conv_encoder_params(latent_size, key)
    kparams = prepare_kernel_params(params)     # one-time packing (B_TILE=8)

    out = jax.block_until_ready(conv_encoder_forward(x, kparams))
    assert out.shape == (2, latent_size // 4, 2, 2), out.shape

    ref = jax.block_until_ready(_reference_forward(x, params))
    # Kernel stores weights/activations in bf16 with f32 accumulation, matching
    # the MXU's default bf16-pass behaviour of the f32 reference.
    if not jnp.allclose(out, ref, atol=3e-3, rtol=3e-3):
        err = float(jnp.max(jnp.abs(out - ref)))
        raise AssertionError(
            f"Pallas ConvEncoder mismatch vs reference (max |err| = {err:.2e})")

    print("KERNEL_OK")
</pallas_src>

<mosaic_0001>
module attributes {stable_mosaic.version = 11 : i64} {
  func.func @_fused_encoder_kernel(%arg0: i32, %arg1: memref<1x196x72xbf16, #tpu.memory_space<vmem>>, %arg2: memref<72x256xbf16, #tpu.memory_space<vmem>>, %arg3: memref<1x256xf32, #tpu.memory_space<vmem>>, %arg4: memref<576x196xbf16, #tpu.memory_space<vmem>>, %arg5: memref<9x256x256xbf16, #tpu.memory_space<vmem>>, %arg6: memref<1x256xf32, #tpu.memory_space<vmem>>, %arg7: memref<144x64xbf16, #tpu.memory_space<vmem>>, %arg8: memref<9x256x256xbf16, #tpu.memory_space<vmem>>, %arg9: memref<1x256xf32, #tpu.memory_space<vmem>>, %arg10: memref<144x16xbf16, #tpu.memory_space<vmem>>, %arg11: memref<9x256x80xbf16, #tpu.memory_space<vmem>>, %arg12: memref<1x80xf32, #tpu.memory_space<vmem>>, %arg13: memref<1x8x80xf32, #tpu.memory_space<vmem>>) attributes {dimension_semantics = [#tpu.dimension_semantics<parallel>], iteration_bounds = array<i64: 1>, scalar_prefetch = 0 : i64, scratch_operands = 0 : i64, tpu.core_type = #tpu.core_type<tc>, window_params = [{transform_indices = @transform_0, window_bounds = array<i64: 1, 196, 72>}, {pipeline_mode = #tpu.pipeline_mode<synchronous>, transform_indices = @transform_1, window_bounds = array<i64: 72, 256>}, {pipeline_mode = #tpu.pipeline_mode<synchronous>, transform_indices = @transform_2, window_bounds = array<i64: 1, 256>}, {pipeline_mode = #tpu.pipeline_mode<synchronous>, transform_indices = @transform_3, window_bounds = array<i64: 576, 196>}, {pipeline_mode = #tpu.pipeline_mode<synchronous>, transform_indices = @transform_4, window_bounds = array<i64: 9, 256, 256>}, {pipeline_mode = #tpu.pipeline_mode<synchronous>, transform_indices = @transform_5, window_bounds = array<i64: 1, 256>}, {pipeline_mode = #tpu.pipeline_mode<synchronous>, transform_indices = @transform_6, window_bounds = array<i64: 144, 64>}, {pipeline_mode = #tpu.pipeline_mode<synchronous>, transform_indices = @transform_7, window_bounds = array<i64: 9, 256, 256>}, {pipeline_mode = #tpu.pipeline_mode<synchronous>, transform_indices = @transform_8, window_bounds = array<i64: 1, 256>}, {pipeline_mode = #tpu.pipeline_mode<synchronous>, transform_indices = @transform_9, window_bounds = array<i64: 144, 16>}, {pipeline_mode = #tpu.pipeline_mode<synchronous>, transform_indices = @transform_10, window_bounds = array<i64: 9, 256, 80>}, {pipeline_mode = #tpu.pipeline_mode<synchronous>, transform_indices = @transform_11, window_bounds = array<i64: 1, 80>}, {transform_indices = @transform_12, window_bounds = array<i64: 1, 8, 80>}]} {
    %c0 = arith.constant 0 : index
    %c0_0 = arith.constant 0 : index
    %c0_1 = arith.constant 0 : index
    %0 = vector.load %arg1[%c0, %c0_0, %c0_1] : memref<1x196x72xbf16, #tpu.memory_space<vmem>>, vector<1x196x72xbf16>
    %1 = vector.shape_cast %0 : vector<1x196x72xbf16> to vector<196x72xbf16>
    %c0_2 = arith.constant 0 : index
    %c0_3 = arith.constant 0 : index
    %2 = vector.load %arg2[%c0_2, %c0_3] : memref<72x256xbf16, #tpu.memory_space<vmem>>, vector<72x256xbf16>
    %cst = arith.constant dense<0.000000e+00> : vector<196x256xf32>
    %3 = tpu.matmul %1, %2, %cst {dimension_numbers = #tpu.dot_dimension_numbers<[1], [0], [0], [1], [0, 0, 1, 1], [], []>} : vector<196x72xbf16>, vector<72x256xbf16>, vector<196x256xf32> -> vector<196x256xf32>
    %c0_4 = arith.constant 0 : index
    %c0_5 = arith.constant 0 : index
    %4 = vector.load %arg3[%c0_4, %c0_5] : memref<1x256xf32, #tpu.memory_space<vmem>>, vector<1x256xf32>
    %5 = vector.broadcast %4 : vector<1x256xf32> to vector<196x256xf32>
    %6 = arith.addf %3, %5 : vector<196x256xf32>
    %cst_6 = arith.constant 5.000000e-01 : f32
    %7 = vector.broadcast %cst_6 : f32 to vector<196x256xf32>
    %8 = arith.mulf %7, %6 : vector<196x256xf32>
    %9 = math.tanh %8 : vector<196x256xf32>
    %cst_7 = arith.constant 5.000000e-01 : f32
    %10 = vector.broadcast %cst_7 : f32 to vector<196x256xf32>
    %11 = arith.mulf %10, %9 : vector<196x256xf32>
    %cst_8 = arith.constant 5.000000e-01 : f32
    %12 = vector.broadcast %cst_8 : f32 to vector<196x256xf32>
    %13 = arith.addf %11, %12 : vector<196x256xf32>
    %c0_9 = arith.constant 0 : index
    %c0_10 = arith.constant 0 : index
    %14 = vector.load %arg4[%c0_9, %c0_10] : memref<576x196xbf16, #tpu.memory_space<vmem>>, vector<576x196xbf16>
    %15 = arith.truncf %13 : vector<196x256xf32> to vector<196x256xbf16>
    %cst_11 = arith.constant dense<0.000000e+00> : vector<576x256xf32>
    %16 = tpu.matmul %14, %15, %cst_11 {dimension_numbers = #tpu.dot_dimension_numbers<[1], [0], [0], [1], [0, 0, 1, 1], [], []>} : vector<576x196xbf16>, vector<196x256xbf16>, vector<576x256xf32> -> vector<576x256xf32>
    %17 = arith.truncf %16 : vector<576x256xf32> to vector<576x256xbf16>
    %18 = vector.extract_strided_slice %17 {offsets = [0, 0], sizes = [64, 256], strides = [1, 1]} : vector<576x256xbf16> to vector<64x256xbf16>
    %c0_12 = arith.constant 0 : index
    %c0_13 = arith.constant 0 : index
    %c0_14 = arith.constant 0 : index
    %19 = vector.load %arg5[%c0_12, %c0_13, %c0_14] : memref<9x256x256xbf16, #tpu.memory_space<vmem>>, vector<1x256x256xbf16>
    %20 = vector.shape_cast %19 : vector<1x256x256xbf16> to vector<256x256xbf16>
    %cst_15 = arith.constant dense<0.000000e+00> : vector<64x256xf32>
    %21 = tpu.matmul %18, %20, %cst_15 {dimension_numbers = #tpu.dot_dimension_numbers<[1], [0], [0], [1], [0, 0, 1, 1], [], []>} : vector<64x256xbf16>, vector<256x256xbf16>, vector<64x256xf32> -> vector<64x256xf32>
    %22 = vector.extract_strided_slice %17 {offsets = [64, 0], sizes = [64, 256], strides = [1, 1]} : vector<576x256xbf16> to vector<64x256xbf16>
    %c1 = arith.constant 1 : index
    %c0_16 = arith.constant 0 : index
    %c0_17 = arith.constant 0 : index
    %23 = vector.load %arg5[%c1, %c0_16, %c0_17] : memref<9x256x256xbf16, #tpu.memory_space<vmem>>, vector<1x256x256xbf16>
    %24 = vector.shape_cast %23 : vector<1x256x256xbf16> to vector<256x256xbf16>
    %cst_18 = arith.constant dense<0.000000e+00> : vector<64x256xf32>
    %25 = tpu.matmul %22, %24, %cst_18 {dimension_numbers = #tpu.dot_dimension_numbers<[1], [0], [0], [1], [0, 0, 1, 1], [], []>} : vector<64x256xbf16>, vector<256x256xbf16>, vector<64x256xf32> -> vector<64x256xf32>
    %26 = arith.addf %21, %25 : vector<64x256xf32>
    %27 = vector.extract_strided_slice %17 {offsets = [128, 0], sizes = [64, 256], strides = [1, 1]} : vector<576x256xbf16> to vector<64x256xbf16>
    %c2 = arith.constant 2 : index
    %c0_19 = arith.constant 0 : index
    %c0_20 = arith.constant 0 : index
    %28 = vector.load %arg5[%c2, %c0_19, %c0_20] : memref<9x256x256xbf16, #tpu.memory_space<vmem>>, vector<1x256x256xbf16>
    %29 = vector.shape_cast %28 : vector<1x256x256xbf16> to vector<256x256xbf16>
    %cst_21 = arith.constant dense<0.000000e+00> : vector<64x256xf32>
    %30 = tpu.matmul %27, %29, %cst_21 {dimension_numbers = #tpu.dot_dimension_numbers<[1], [0], [0], [1], [0, 0, 1, 1], [], []>} : vector<64x256xbf16>, vector<256x256xbf16>, vector<64x256xf32> -> vector<64x256xf32>
    %31 = arith.addf %26, %30 : vector<64x256xf32>
    %32 = vector.extract_strided_slice %17 {offsets = [192, 0], sizes = [64, 256], strides = [1, 1]} : vector<576x256xbf16> to vector<64x256xbf16>
    %c3 = arith.constant 3 : index
    %c0_22 = arith.constant 0 : index
    %c0_23 = arith.constant 0 : index
    %33 = vector.load %arg5[%c3, %c0_22, %c0_23] : memref<9x256x256xbf16, #tpu.memory_space<vmem>>, vector<1x256x256xbf16>
    %34 = vector.shape_cast %33 : vector<1x256x256xbf16> to vector<256x256xbf16>
    %cst_24 = arith.constant dense<0.000000e+00> : vector<64x256xf32>
    %35 = tpu.matmul %32, %34, %cst_24 {dimension_numbers = #tpu.dot_dimension_numbers<[1], [0], [0], [1], [0, 0, 1, 1], [], []>} : vector<64x256xbf16>, vector<256x256xbf16>, vector<64x256xf32> -> vector<64x256xf32>
    %36 = arith.addf %31, %35 : vector<64x256xf32>
    %37 = vector.extract_strided_slice %17 {offsets = [256, 0], sizes = [64, 256], strides = [1, 1]} : vector<576x256xbf16> to vector<64x256xbf16>
    %c4 = arith.constant 4 : index
    %c0_25 = arith.constant 0 : index
    %c0_26 = arith.constant 0 : index
    %38 = vector.load %arg5[%c4, %c0_25, %c0_26] : memref<9x256x256xbf16, #tpu.memory_space<vmem>>, vector<1x256x256xbf16>
    %39 = vector.shape_cast %38 : vector<1x256x256xbf16> to vector<256x256xbf16>
    %cst_27 = arith.constant dense<0.000000e+00> : vector<64x256xf32>
    %40 = tpu.matmul %37, %39, %cst_27 {dimension_numbers = #tpu.dot_dimension_numbers<[1], [0], [0], [1], [0, 0, 1, 1], [], []>} : vector<64x256xbf16>, vector<256x256xbf16>, vector<64x256xf32> -> vector<64x256xf32>
    %41 = arith.addf %36, %40 : vector<64x256xf32>
    %42 = vector.extract_strided_slice %17 {offsets = [320, 0], sizes = [64, 256], strides = [1, 1]} : vector<576x256xbf16> to vector<64x256xbf16>
    %c5 = arith.constant 5 : index
    %c0_28 = arith.constant 0 : index
    %c0_29 = arith.constant 0 : index
    %43 = vector.load %arg5[%c5, %c0_28, %c0_29] : memref<9x256x256xbf16, #tpu.memory_space<vmem>>, vector<1x256x256xbf16>
    %44 = vector.shape_cast %43 : vector<1x256x256xbf16> to vector<256x256xbf16>
    %cst_30 = arith.constant dense<0.000000e+00> : vector<64x256xf32>
    %45 = tpu.matmul %42, %44, %cst_30 {dimension_numbers = #tpu.dot_dimension_numbers<[1], [0], [0], [1], [0, 0, 1, 1], [], []>} : vector<64x256xbf16>, vector<256x256xbf16>, vector<64x256xf32> -> vector<64x256xf32>
    %46 = arith.addf %41, %45 : vector<64x256xf32>
    %47 = vector.extract_strided_slice %17 {offsets = [384, 0], sizes = [64, 256], strides = [1, 1]} : vector<576x256xbf16> to vector<64x256xbf16>
    %c6 = arith.constant 6 : index
    %c0_31 = arith.constant 0 : index
    %c0_32 = arith.constant 0 : index
    %48 = vector.load %arg5[%c6, %c0_31, %c0_32] : memref<9x256x256xbf16, #tpu.memory_space<vmem>>, vector<1x256x256xbf16>
    %49 = vector.shape_cast %48 : vector<1x256x256xbf16> to vector<256x256xbf16>
    %cst_33 = arith.constant dense<0.000000e+00> : vector<64x256xf32>
    %50 = tpu.matmul %47, %49, %cst_33 {dimension_numbers = #tpu.dot_dimension_numbers<[1], [0], [0], [1], [0, 0, 1, 1], [], []>} : vector<64x256xbf16>, vector<256x256xbf16>, vector<64x256xf32> -> vector<64x256xf32>
    %51 = arith.addf %46, %50 : vector<64x256xf32>
    %52 = vector.extract_strided_slice %17 {offsets = [448, 0], sizes = [64, 256], strides = [1, 1]} : vector<576x256xbf16> to vector<64x256xbf16>
    %c7 = arith.constant 7 : index
    %c0_34 = arith.constant 0 : index
    %c0_35 = arith.constant 0 : index
    %53 = vector.load %arg5[%c7, %c0_34, %c0_35] : memref<9x256x256xbf16, #tpu.memory_space<vmem>>, vector<1x256x256xbf16>
    %54 = vector.shape_cast %53 : vector<1x256x256xbf16> to vector<256x256xbf16>
    %cst_36 = arith.constant dense<0.000000e+00> : vector<64x256xf32>
    %55 = tpu.matmul %52, %54, %cst_36 {dimension_numbers = #tpu.dot_dimension_numbers<[1], [0], [0], [1], [0, 0, 1, 1], [], []>} : vector<64x256xbf16>, vector<256x256xbf16>, vector<64x256xf32> -> vector<64x256xf32>
    %56 = arith.addf %51, %55 : vector<64x256xf32>
    %57 = vector.extract_strided_slice %17 {offsets = [512, 0], sizes = [64, 256], strides = [1, 1]} : vector<576x256xbf16> to vector<64x256xbf16>
    %c8 = arith.constant 8 : index
    %c0_37 = arith.constant 0 : index
    %c0_38 = arith.constant 0 : index
    %58 = vector.load %arg5[%c8, %c0_37, %c0_38] : memref<9x256x256xbf16, #tpu.memory_space<vmem>>, vector<1x256x256xbf16>
    %59 = vector.shape_cast %58 : vector<1x256x256xbf16> to vector<256x256xbf16>
    %cst_39 = arith.constant dense<0.000000e+00> : vector<64x256xf32>
    %60 = tpu.matmul %57, %59, %cst_39 {dimension_numbers = #tpu.dot_dimension_numbers<[1], [0], [0], [1], [0, 0, 1, 1], [], []>} : vector<64x256xbf16>, vector<256x256xbf16>, vector<64x256xf32> -> vector<64x256xf32>
    %61 = arith.addf %56, %60 : vector<64x256xf32>
    %c0_40 = arith.constant 0 : index
    %c0_41 = arith.constant 0 : index
    %62 = vector.load %arg6[%c0_40, %c0_41] : memref<1x256xf32, #tpu.memory_space<vmem>>, vector<1x256xf32>
    %63 = vector.broadcast %62 : vector<1x256xf32> to vector<64x256xf32>
    %64 = arith.addf %61, %63 : vector<64x256xf32>
    %cst_42 = arith.constant 5.000000e-01 : f32
    %65 = vector.broadcast %cst_42 : f32 to vector<64x256xf32>
    %66 = arith.mulf %65, %64 : vector<64x256xf32>
    %67 = math.tanh %66 : vector<64x256xf32>
    %cst_43 = arith.constant 5.000000e-01 : f32
    %68 = vector.broadcast %cst_43 : f32 to vector<64x256xf32>
    %69 = arith.mulf %68, %67 : vector<64x256xf32>
    %cst_44 = arith.constant 5.000000e-01 : f32
    %70 = vector.broadcast %cst_44 : f32 to vector<64x256xf32>
    %71 = arith.addf %69, %70 : vector<64x256xf32>
    %c0_45 = arith.constant 0 : index
    %c0_46 = arith.constant 0 : index
    %72 = vector.load %arg7[%c0_45, %c0_46] : memref<144x64xbf16, #tpu.memory_space<vmem>>, vector<144x64xbf16>
    %73 = arith.truncf %71 : vector<64x256xf32> to vector<64x256xbf16>
    %cst_47 = arith.constant dense<0.000000e+00> : vector<144x256xf32>
    %74 = tpu.matmul %72, %73, %cst_47 {dimension_numbers = #tpu.dot_dimension_numbers<[1], [0], [0], [1], [0, 0, 1, 1], [], []>} : vector<144x64xbf16>, vector<64x256xbf16>, vector<144x256xf32> -> vector<144x256xf32>
    %75 = arith.truncf %74 : vector<144x256xf32> to vector<144x256xbf16>
    %76 = vector.extract_strided_slice %75 {offsets = [0, 0], sizes = [16, 256], strides = [1, 1]} : vector<144x256xbf16> to vector<16x256xbf16>
    %c0_48 = arith.constant 0 : index
    %c0_49 = arith.constant 0 : index
    %c0_50 = arith.constant 0 : index
    %77 = vector.load %arg8[%c0_48, %c0_49, %c0_50] : memref<9x256x256xbf16, #tpu.memory_space<vmem>>, vector<1x256x256xbf16>
    %78 = vector.shape_cast %77 : vector<1x256x256xbf16> to vector<256x256xbf16>
    %cst_51 = arith.constant dense<0.000000e+00> : vector<16x256xf32>
    %79 = tpu.matmul %76, %78, %cst_51 {dimension_numbers = #tpu.dot_dimension_numbers<[1], [0], [0], [1], [0, 0, 1, 1], [], []>} : vector<16x256xbf16>, vector<256x256xbf16>, vector<16x256xf32> -> vector<16x256xf32>
    %80 = vector.extract_strided_slice %75 {offsets = [16, 0], sizes = [16, 256], strides = [1, 1]} : vector<144x256xbf16> to vector<16x256xbf16>
    %c1_52 = arith.constant 1 : index
    %c0_53 = arith.constant 0 : index
    %c0_54 = arith.constant 0 : index
    %81 = vector.load %arg8[%c1_52, %c0_53, %c0_54] : memref<9x256x256xbf16, #tpu.memory_space<vmem>>, vector<1x256x256xbf16>
    %82 = vector.shape_cast %81 : vector<1x256x256xbf16> to vector<256x256xbf16>
    %cst_55 = arith.constant dense<0.000000e+00> : vector<16x256xf32>
    %83 = tpu.matmul %80, %82, %cst_55 {dimension_numbers = #tpu.dot_dimension_numbers<[1], [0], [0], [1], [0, 0, 1, 1], [], []>} : vector<16x256xbf16>, vector<256x256xbf16>, vector<16x256xf32> -> vector<16x256xf32>
    %84 = arith.addf %79, %83 : vector<16x256xf32>
    %85 = vector.extract_strided_slice %75 {offsets = [32, 0], sizes = [16, 256], strides = [1, 1]} : vector<144x256xbf16> to vector<16x256xbf16>
    %c2_56 = arith.constant 2 : index
    %c0_57 = arith.constant 0 : index
    %c0_58 = arith.constant 0 : index
    %86 = vector.load %arg8[%c2_56, %c0_57, %c0_58] : memref<9x256x256xbf16, #tpu.memory_space<vmem>>, vector<1x256x256xbf16>
    %87 = vector.shape_cast %86 : vector<1x256x256xbf16> to vector<256x256xbf16>
    %cst_59 = arith.constant dense<0.000000e+00> : vector<16x256xf32>
    %88 = tpu.matmul %85, %87, %cst_59 {dimension_numbers = #tpu.dot_dimension_numbers<[1], [0], [0], [1], [0, 0, 1, 1], [], []>} : vector<16x256xbf16>, vector<256x256xbf16>, vector<16x256xf32> -> vector<16x256xf32>
    %89 = arith.addf %84, %88 : vector<16x256xf32>
    %90 = vector.extract_strided_slice %75 {offsets = [48, 0], sizes = [16, 256], strides = [1, 1]} : vector<144x256xbf16> to vector<16x256xbf16>
    %c3_60 = arith.constant 3 : index
    %c0_61 = arith.constant 0 : index
    %c0_62 = arith.constant 0 : index
    %91 = vector.load %arg8[%c3_60, %c0_61, %c0_62] : memref<9x256x256xbf16, #tpu.memory_space<vmem>>, vector<1x256x256xbf16>
    %92 = vector.shape_cast %91 : vector<1x256x256xbf16> to vector<256x256xbf16>
    %cst_63 = arith.constant dense<0.000000e+00> : vector<16x256xf32>
    %93 = tpu.matmul %90, %92, %cst_63 {dimension_numbers = #tpu.dot_dimension_numbers<[1], [0], [0], [1], [0, 0, 1, 1], [], []>} : vector<16x256xbf16>, vector<256x256xbf16>, vector<16x256xf32> -> vector<16x256xf32>
    %94 = arith.addf %89, %93 : vector<16x256xf32>
    %95 = vector.extract_strided_slice %75 {offsets = [64, 0], sizes = [16, 256], strides = [1, 1]} : vector<144x256xbf16> to vector<16x256xbf16>
    %c4_64 = arith.constant 4 : index
    %c0_65 = arith.constant 0 : index
    %c0_66 = arith.constant 0 : index
    %96 = vector.load %arg8[%c4_64, %c0_65, %c0_66] : memref<9x256x256xbf16, #tpu.memory_space<vmem>>, vector<1x256x256xbf16>
    %97 = vector.shape_cast %96 : vector<1x256x256xbf16> to vector<256x256xbf16>
    %cst_67 = arith.constant dense<0.000000e+00> : vector<16x256xf32>
    %98 = tpu.matmul %95, %97, %cst_67 {dimension_numbers = #tpu.dot_dimension_numbers<[1], [0], [0], [1], [0, 0, 1, 1], [], []>} : vector<16x256xbf16>, vector<256x256xbf16>, vector<16x256xf32> -> vector<16x256xf32>
    %99 = arith.addf %94, %98 : vector<16x256xf32>
    %100 = vector.extract_strided_slice %75 {offsets = [80, 0], sizes = [16, 256], strides = [1, 1]} : vector<144x256xbf16> to vector<16x256xbf16>
    %c5_68 = arith.constant 5 : index
    %c0_69 = arith.constant 0 : index
    %c0_70 = arith.constant 0 : index
    %101 = vector.load %arg8[%c5_68, %c0_69, %c0_70] : memref<9x256x256xbf16, #tpu.memory_space<vmem>>, vector<1x256x256xbf16>
    %102 = vector.shape_cast %101 : vector<1x256x256xbf16> to vector<256x256xbf16>
    %cst_71 = arith.constant dense<0.000000e+00> : vector<16x256xf32>
    %103 = tpu.matmul %100, %102, %cst_71 {dimension_numbers = #tpu.dot_dimension_numbers<[1], [0], [0], [1], [0, 0, 1, 1], [], []>} : vector<16x256xbf16>, vector<256x256xbf16>, vector<16x256xf32> -> vector<16x256xf32>
    %104 = arith.addf %99, %103 : vector<16x256xf32>
    %105 = vector.extract_strided_slice %75 {offsets = [96, 0], sizes = [16, 256], strides = [1, 1]} : vector<144x256xbf16> to vector<16x256xbf16>
    %c6_72 = arith.constant 6 : index
    %c0_73 = arith.constant 0 : index
    %c0_74 = arith.constant 0 : index
    %106 = vector.load %arg8[%c6_72, %c0_73, %c0_74] : memref<9x256x256xbf16, #tpu.memory_space<vmem>>, vector<1x256x256xbf16>
    %107 = vector.shape_cast %106 : vector<1x256x256xbf16> to vector<256x256xbf16>
    %cst_75 = arith.constant dense<0.000000e+00> : vector<16x256xf32>
    %108 = tpu.matmul %105, %107, %cst_75 {dimension_numbers = #tpu.dot_dimension_numbers<[1], [0], [0], [1], [0, 0, 1, 1], [], []>} : vector<16x256xbf16>, vector<256x256xbf16>, vector<16x256xf32> -> vector<16x256xf32>
    %109 = arith.addf %104, %108 : vector<16x256xf32>
    %110 = vector.extract_strided_slice %75 {offsets = [112, 0], sizes = [16, 256], strides = [1, 1]} : vector<144x256xbf16> to vector<16x256xbf16>
    %c7_76 = arith.constant 7 : index
    %c0_77 = arith.constant 0 : index
    %c0_78 = arith.constant 0 : index
    %111 = vector.load %arg8[%c7_76, %c0_77, %c0_78] : memref<9x256x256xbf16, #tpu.memory_space<vmem>>, vector<1x256x256xbf16>
    %112 = vector.shape_cast %111 : vector<1x256x256xbf16> to vector<256x256xbf16>
    %cst_79 = arith.constant dense<0.000000e+00> : vector<16x256xf32>
    %113 = tpu.matmul %110, %112, %cst_79 {dimension_numbers = #tpu.dot_dimension_numbers<[1], [0], [0], [1], [0, 0, 1, 1], [], []>} : vector<16x256xbf16>, vector<256x256xbf16>, vector<16x256xf32> -> vector<16x256xf32>
    %114 = arith.addf %109, %113 : vector<16x256xf32>
    %115 = vector.extract_strided_slice %75 {offsets = [128, 0], sizes = [16, 256], strides = [1, 1]} : vector<144x256xbf16> to vector<16x256xbf16>
    %c8_80 = arith.constant 8 : index
    %c0_81 = arith.constant 0 : index
    %c0_82 = arith.constant 0 : index
    %116 = vector.load %arg8[%c8_80, %c0_81, %c0_82] : memref<9x256x256xbf16, #tpu.memory_space<vmem>>, vector<1x256x256xbf16>
    %117 = vector.shape_cast %116 : vector<1x256x256xbf16> to vector<256x256xbf16>
    %cst_83 = arith.constant dense<0.000000e+00> : vector<16x256xf32>
    %118 = tpu.matmul %115, %117, %cst_83 {dimension_numbers = #tpu.dot_dimension_numbers<[1], [0], [0], [1], [0, 0, 1, 1], [], []>} : vector<16x256xbf16>, vector<256x256xbf16>, vector<16x256xf32> -> vector<16x256xf32>
    %119 = arith.addf %114, %118 : vector<16x256xf32>
    %c0_84 = arith.constant 0 : index
    %c0_85 = arith.constant 0 : index
    %120 = vector.load %arg9[%c0_84, %c0_85] : memref<1x256xf32, #tpu.memory_space<vmem>>, vector<1x256xf32>
    %121 = vector.broadcast %120 : vector<1x256xf32> to vector<16x256xf32>
    %122 = arith.addf %119, %121 : vector<16x256xf32>
    %cst_86 = arith.constant 5.000000e-01 : f32
    %123 = vector.broadcast %cst_86 : f32 to vector<16x256xf32>
    %124 = arith.mulf %123, %122 : vector<16x256xf32>
    %125 = math.tanh %124 : vector<16x256xf32>
    %cst_87 = arith.constant 5.000000e-01 : f32
    %126 = vector.broadcast %cst_87 : f32 to vector<16x256xf32>
    %127 = arith.mulf %126, %125 : vector<16x256xf32>
    %cst_88 = arith.constant 5.000000e-01 : f32
    %128 = vector.broadcast %cst_88 : f32 to vector<16x256xf32>
    %129 = arith.addf %127, %128 : vector<16x256xf32>
    %c0_89 = arith.constant 0 : index
    %c0_90 = arith.constant 0 : index
    %130 = vector.load %arg10[%c0_89, %c0_90] : memref<144x16xbf16, #tpu.memory_space<vmem>>, vector<144x16xbf16>
    %131 = arith.truncf %129 : vector<16x256xf32> to vector<16x256xbf16>
    %cst_91 = arith.constant dense<0.000000e+00> : vector<144x256xf32>
    %132 = tpu.matmul %130, %131, %cst_91 {dimension_numbers = #tpu.dot_dimension_numbers<[1], [0], [0], [1], [0, 0, 1, 1], [], []>} : vector<144x16xbf16>, vector<16x256xbf16>, vector<144x256xf32> -> vector<144x256xf32>
    %133 = arith.truncf %132 : vector<144x256xf32> to vector<144x256xbf16>
    %134 = vector.extract_strided_slice %133 {offsets = [0, 0], sizes = [16, 256], strides = [1, 1]} : vector<144x256xbf16> to vector<16x256xbf16>
    %c0_92 = arith.constant 0 : index
    %c0_93 = arith.constant 0 : index
    %c0_94 = arith.constant 0 : index
    %135 = vector.load %arg11[%c0_92, %c0_93, %c0_94] : memref<9x256x80xbf16, #tpu.memory_space<vmem>>, vector<1x256x80xbf16>
    %136 = vector.shape_cast %135 : vector<1x256x80xbf16> to vector<256x80xbf16>
    %cst_95 = arith.constant dense<0.000000e+00> : vector<16x80xf32>
    %137 = tpu.matmul %134, %136, %cst_95 {dimension_numbers = #tpu.dot_dimension_numbers<[1], [0], [0], [1], [0, 0, 1, 1], [], []>} : vector<16x256xbf16>, vector<256x80xbf16>, vector<16x80xf32> -> vector<16x80xf32>
    %138 = vector.extract_strided_slice %133 {offsets = [16, 0], sizes = [16, 256], strides = [1, 1]} : vector<144x256xbf16> to vector<16x256xbf16>
    %c1_96 = arith.constant 1 : index
    %c0_97 = arith.constant 0 : index
    %c0_98 = arith.constant 0 : index
    %139 = vector.load %arg11[%c1_96, %c0_97, %c0_98] : memref<9x256x80xbf16, #tpu.memory_space<vmem>>, vector<1x256x80xbf16>
    %140 = vector.shape_cast %139 : vector<1x256x80xbf16> to vector<256x80xbf16>
    %cst_99 = arith.constant dense<0.000000e+00> : vector<16x80xf32>
    %141 = tpu.matmul %138, %140, %cst_99 {dimension_numbers = #tpu.dot_dimension_numbers<[1], [0], [0], [1], [0, 0, 1, 1], [], []>} : vector<16x256xbf16>, vector<256x80xbf16>, vector<16x80xf32> -> vector<16x80xf32>
    %142 = arith.addf %137, %141 : vector<16x80xf32>
    %143 = vector.extract_strided_slice %133 {offsets = [32, 0], sizes = [16, 256], strides = [1, 1]} : vector<144x256xbf16> to vector<16x256xbf16>
    %c2_100 = arith.constant 2 : index
    %c0_101 = arith.constant 0 : index
    %c0_102 = arith.constant 0 : index
    %144 = vector.load %arg11[%c2_100, %c0_101, %c0_102] : memref<9x256x80xbf16, #tpu.memory_space<vmem>>, vector<1x256x80xbf16>
    %145 = vector.shape_cast %144 : vector<1x256x80xbf16> to vector<256x80xbf16>
    %cst_103 = arith.constant dense<0.000000e+00> : vector<16x80xf32>
    %146 = tpu.matmul %143, %145, %cst_103 {dimension_numbers = #tpu.dot_dimension_numbers<[1], [0], [0], [1], [0, 0, 1, 1], [], []>} : vector<16x256xbf16>, vector<256x80xbf16>, vector<16x80xf32> -> vector<16x80xf32>
    %147 = arith.addf %142, %146 : vector<16x80xf32>
    %148 = vector.extract_strided_slice %133 {offsets = [48, 0], sizes = [16, 256], strides = [1, 1]} : vector<144x256xbf16> to vector<16x256xbf16>
    %c3_104 = arith.constant 3 : index
    %c0_105 = arith.constant 0 : index
    %c0_106 = arith.constant 0 : index
    %149 = vector.load %arg11[%c3_104, %c0_105, %c0_106] : memref<9x256x80xbf16, #tpu.memory_space<vmem>>, vector<1x256x80xbf16>
    %150 = vector.shape_cast %149 : vector<1x256x80xbf16> to vector<256x80xbf16>
    %cst_107 = arith.constant dense<0.000000e+00> : vector<16x80xf32>
    %151 = tpu.matmul %148, %150, %cst_107 {dimension_numbers = #tpu.dot_dimension_numbers<[1], [0], [0], [1], [0, 0, 1, 1], [], []>} : vector<16x256xbf16>, vector<256x80xbf16>, vector<16x80xf32> -> vector<16x80xf32>
    %152 = arith.addf %147, %151 : vector<16x80xf32>
    %153 = vector.extract_strided_slice %133 {offsets = [64, 0], sizes = [16, 256], strides = [1, 1]} : vector<144x256xbf16> to vector<16x256xbf16>
    %c4_108 = arith.constant 4 : index
    %c0_109 = arith.constant 0 : index
    %c0_110 = arith.constant 0 : index
    %154 = vector.load %arg11[%c4_108, %c0_109, %c0_110] : memref<9x256x80xbf16, #tpu.memory_space<vmem>>, vector<1x256x80xbf16>
    %155 = vector.shape_cast %154 : vector<1x256x80xbf16> to vector<256x80xbf16>
    %cst_111 = arith.constant dense<0.000000e+00> : vector<16x80xf32>
    %156 = tpu.matmul %153, %155, %cst_111 {dimension_numbers = #tpu.dot_dimension_numbers<[1], [0], [0], [1], [0, 0, 1, 1], [], []>} : vector<16x256xbf16>, vector<256x80xbf16>, vector<16x80xf32> -> vector<16x80xf32>
    %157 = arith.addf %152, %156 : vector<16x80xf32>
    %158 = vector.extract_strided_slice %133 {offsets = [80, 0], sizes = [16, 256], strides = [1, 1]} : vector<144x256xbf16> to vector<16x256xbf16>
    %c5_112 = arith.constant 5 : index
    %c0_113 = arith.constant 0 : index
    %c0_114 = arith.constant 0 : index
    %159 = vector.load %arg11[%c5_112, %c0_113, %c0_114] : memref<9x256x80xbf16, #tpu.memory_space<vmem>>, vector<1x256x80xbf16>
    %160 = vector.shape_cast %159 : vector<1x256x80xbf16> to vector<256x80xbf16>
    %cst_115 = arith.constant dense<0.000000e+00> : vector<16x80xf32>
    %161 = tpu.matmul %158, %160, %cst_115 {dimension_numbers = #tpu.dot_dimension_numbers<[1], [0], [0], [1], [0, 0, 1, 1], [], []>} : vector<16x256xbf16>, vector<256x80xbf16>, vector<16x80xf32> -> vector<16x80xf32>
    %162 = arith.addf %157, %161 : vector<16x80xf32>
    %163 = vector.extract_strided_slice %133 {offsets = [96, 0], sizes = [16, 256], strides = [1, 1]} : vector<144x256xbf16> to vector<16x256xbf16>
    %c6_116 = arith.constant 6 : index
    %c0_117 = arith.constant 0 : index
    %c0_118 = arith.constant 0 : index
    %164 = vector.load %arg11[%c6_116, %c0_117, %c0_118] : memref<9x256x80xbf16, #tpu.memory_space<vmem>>, vector<1x256x80xbf16>
    %165 = vector.shape_cast %164 : vector<1x256x80xbf16> to vector<256x80xbf16>
    %cst_119 = arith.constant dense<0.000000e+00> : vector<16x80xf32>
    %166 = tpu.matmul %163, %165, %cst_119 {dimension_numbers = #tpu.dot_dimension_numbers<[1], [0], [0], [1], [0, 0, 1, 1], [], []>} : vector<16x256xbf16>, vector<256x80xbf16>, vector<16x80xf32> -> vector<16x80xf32>
    %167 = arith.addf %162, %166 : vector<16x80xf32>
    %168 = vector.extract_strided_slice %133 {offsets = [112, 0], sizes = [16, 256], strides = [1, 1]} : vector<144x256xbf16> to vector<16x256xbf16>
    %c7_120 = arith.constant 7 : index
    %c0_121 = arith.constant 0 : index
    %c0_122 = arith.constant 0 : index
    %169 = vector.load %arg11[%c7_120, %c0_121, %c0_122] : memref<9x256x80xbf16, #tpu.memory_space<vmem>>, vector<1x256x80xbf16>
    %170 = vector.shape_cast %169 : vector<1x256x80xbf16> to vector<256x80xbf16>
    %cst_123 = arith.constant dense<0.000000e+00> : vector<16x80xf32>
    %171 = tpu.matmul %168, %170, %cst_123 {dimension_numbers = #tpu.dot_dimension_numbers<[1], [0], [0], [1], [0, 0, 1, 1], [], []>} : vector<16x256xbf16>, vector<256x80xbf16>, vector<16x80xf32> -> vector<16x80xf32>
    %172 = arith.addf %167, %171 : vector<16x80xf32>
    %173 = vector.extract_strided_slice %133 {offsets = [128, 0], sizes = [16, 256], strides = [1, 1]} : vector<144x256xbf16> to vector<16x256xbf16>
    %c8_124 = arith.constant 8 : index
    %c0_125 = arith.constant 0 : index
    %c0_126 = arith.constant 0 : index
    %174 = vector.load %arg11[%c8_124, %c0_125, %c0_126] : memref<9x256x80xbf16, #tpu.memory_space<vmem>>, vector<1x256x80xbf16>
    %175 = vector.shape_cast %174 : vector<1x256x80xbf16> to vector<256x80xbf16>
    %cst_127 = arith.constant dense<0.000000e+00> : vector<16x80xf32>
    %176 = tpu.matmul %173, %175, %cst_127 {dimension_numbers = #tpu.dot_dimension_numbers<[1], [0], [0], [1], [0, 0, 1, 1], [], []>} : vector<16x256xbf16>, vector<256x80xbf16>, vector<16x80xf32> -> vector<16x80xf32>
    %177 = arith.addf %172, %176 : vector<16x80xf32>
    %c0_128 = arith.constant 0 : index
    %c0_129 = arith.constant 0 : index
    %178 = vector.load %arg12[%c0_128, %c0_129] : memref<1x80xf32, #tpu.memory_space<vmem>>, vector<1x80xf32>
    %179 = vector.broadcast %178 : vector<1x80xf32> to vector<16x80xf32>
    %180 = arith.addf %177, %179 : vector<16x80xf32>
    %cst_130 = arith.constant 5.000000e-01 : f32
    %181 = vector.broadcast %cst_130 : f32 to vector<16x80xf32>
    %182 = arith.mulf %181, %180 : vector<16x80xf32>
    %183 = math.tanh %182 : vector<16x80xf32>
    %cst_131 = arith.constant 5.000000e-01 : f32
    %184 = vector.broadcast %cst_131 : f32 to vector<16x80xf32>
    %185 = arith.mulf %184, %183 : vector<16x80xf32>
    %cst_132 = arith.constant 5.000000e-01 : f32
    %186 = vector.broadcast %cst_132 : f32 to vector<16x80xf32>
    %187 = arith.addf %185, %186 : vector<16x80xf32>
    %188 = vector.extract_strided_slice %187 {offsets = [0, 0], sizes = [8, 80], strides = [1, 1]} : vector<16x80xf32> to vector<8x80xf32>
    %c0_133 = arith.constant 0 : index
    %c0_134 = arith.constant 0 : index
    %c0_135 = arith.constant 0 : index
    %189 = vector.load %arg13[%c0_133, %c0_134, %c0_135] : memref<1x8x80xf32, #tpu.memory_space<vmem>>, vector<1x8x80xf32>
    %190 = vector.shape_cast %189 : vector<1x8x80xf32> to vector<8x80xf32>
    %191 = vector.shape_cast %188 : vector<8x80xf32> to vector<1x8x80xf32>
    tpu.vector_store %arg13[%c0_133, %c0_134, %c0_135], %191 {strides = array<i32>} : memref<1x8x80xf32, #tpu.memory_space<vmem>>, vector<1x8x80xf32>,
    return
  }
  func.func @transform_0(%arg0: i32) -> (i32, i32, i32) {
    %c0_i32 = arith.constant 0 : i32
    %c0_i32_0 = arith.constant 0 : i32
    %c0_i32_1 = arith.constant 0 : i32
    return %arg0, %c0_i32, %c0_i32_0 : i32, i32, i32
  }
  func.func @transform_1(%arg0: i32) -> (i32, i32) {
    %c0_i32 = arith.constant 0 : i32
    %c0_i32_0 = arith.constant 0 : i32
    %c0_i32_1 = arith.constant 0 : i32
    return %c0_i32, %c0_i32_0 : i32, i32
  }
  func.func @transform_2(%arg0: i32) -> (i32, i32) {
    %c0_i32 = arith.constant 0 : i32
    %c0_i32_0 = arith.constant 0 : i32
    %c0_i32_1 = arith.constant 0 : i32
    return %c0_i32, %c0_i32_0 : i32, i32
  }
  func.func @transform_3(%arg0: i32) -> (i32, i32) {
    %c0_i32 = arith.constant 0 : i32
    %c0_i32_0 = arith.constant 0 : i32
    %c0_i32_1 = arith.constant 0 : i32
    return %c0_i32, %c0_i32_0 : i32, i32
  }
  func.func @transform_4(%arg0: i32) -> (i32, i32, i32) {
    %c0_i32 = arith.constant 0 : i32
    %c0_i32_0 = arith.constant 0 : i32
    %c0_i32_1 = arith.constant 0 : i32
    %c0_i32_2 = arith.constant 0 : i32
    return %c0_i32, %c0_i32_0, %c0_i32_1 : i32, i32, i32
  }
  func.func @transform_5(%arg0: i32) -> (i32, i32) {
    %c0_i32 = arith.constant 0 : i32
    %c0_i32_0 = arith.constant 0 : i32
    %c0_i32_1 = arith.constant 0 : i32
    return %c0_i32, %c0_i32_0 : i32, i32
  }
  func.func @transform_6(%arg0: i32) -> (i32, i32) {
    %c0_i32 = arith.constant 0 : i32
    %c0_i32_0 = arith.constant 0 : i32
    %c0_i32_1 = arith.constant 0 : i32
    return %c0_i32, %c0_i32_0 : i32, i32
  }
  func.func @transform_7(%arg0: i32) -> (i32, i32, i32) {
    %c0_i32 = arith.constant 0 : i32
    %c0_i32_0 = arith.constant 0 : i32
    %c0_i32_1 = arith.constant 0 : i32
    %c0_i32_2 = arith.constant 0 : i32
    return %c0_i32, %c0_i32_0, %c0_i32_1 : i32, i32, i32
  }
  func.func @transform_8(%arg0: i32) -> (i32, i32) {
    %c0_i32 = arith.constant 0 : i32
    %c0_i32_0 = arith.constant 0 : i32
    %c0_i32_1 = arith.constant 0 : i32
    return %c0_i32, %c0_i32_0 : i32, i32
  }
  func.func @transform_9(%arg0: i32) -> (i32, i32) {
    %c0_i32 = arith.constant 0 : i32
    %c0_i32_0 = arith.constant 0 : i32
    %c0_i32_1 = arith.constant 0 : i32
    return %c0_i32, %c0_i32_0 : i32, i32
  }
  func.func @transform_10(%arg0: i32) -> (i32, i32, i32) {
    %c0_i32 = arith.constant 0 : i32
    %c0_i32_0 = arith.constant 0 : i32
    %c0_i32_1 = arith.constant 0 : i32
    %c0_i32_2 = arith.constant 0 : i32
    return %c0_i32, %c0_i32_0, %c0_i32_1 : i32, i32, i32
  }
  func.func @transform_11(%arg0: i32) -> (i32, i32) {
    %c0_i32 = arith.constant 0 : i32
    %c0_i32_0 = arith.constant 0 : i32
    %c0_i32_1 = arith.constant 0 : i32
    return %c0_i32, %c0_i32_0 : i32, i32
  }
  func.func @transform_12(%arg0: i32) -> (i32, i32, i32) {
    %c0_i32 = arith.constant 0 : i32
    %c0_i32_0 = arith.constant 0 : i32
    %c0_i32_1 = arith.constant 0 : i32
    return %arg0, %c0_i32, %c0_i32_0 : i32, i32, i32
  }
}

</mosaic_0001>

<llo_original>
// kernel: conv_encoder_forward.1
$region0: #{conv_encoder_forward.1}
  #allocation0 [shape = 'u32[]', space=smem, size = 0x4, offset = 0x4, fixed_abs, tag = 'smem constant byte address 0x4 - core index']
  #allocation1 [shape = 'u32[144,128]{1,0:T(1,128)}', space=vmem, size = 0x12000, scoped, tag = 'internal scratch']
  %s0 = inlined_call_operand.vmem [shape: bf16[1,196,72], index: 0, kind: input, shape index: {}]
  %s1 = inlined_call_operand.vmem [shape: bf16[72,256], index: 1, kind: input, shape index: {}]
  %s2 = inlined_call_operand.vmem [shape: f32[1,256], index: 2, kind: input, shape index: {}]
  %s3 = inlined_call_operand.vmem [shape: bf16[576,196], index: 3, kind: input, shape index: {}]
  %s4 = inlined_call_operand.vmem [shape: bf16[9,256,256], index: 4, kind: input, shape index: {}]
  %s5 = inlined_call_operand.vmem [shape: f32[1,256], index: 5, kind: input, shape index: {}]
  %s6 = inlined_call_operand.vmem [shape: bf16[144,64], index: 6, kind: input, shape index: {}]
  %s7 = inlined_call_operand.vmem [shape: bf16[9,256,256], index: 7, kind: input, shape index: {}]
  %s8 = inlined_call_operand.vmem [shape: f32[1,256], index: 8, kind: input, shape index: {}]
  %s9 = inlined_call_operand.vmem [shape: bf16[144,16], index: 9, kind: input, shape index: {}]
  %s10 = inlined_call_operand.vmem [shape: bf16[9,256,80], index: 10, kind: input, shape index: {}]
  %s11 = inlined_call_operand.vmem [shape: f32[1,80], index: 11, kind: input, shape index: {}]
  %s12 = inlined_call_operand.vmem [shape: f32[1,8,80], index: 12, kind: output, shape index: {}]
  %s13 = sld [smem:[#allocation0]]
  $region58: #{conv_encoder_forward.1} parent=0
    _
  %s15 = ssub.s32 1, %s13
  %s16 = scalar_select 0, %s15, %s13
  // Predicated region
  $region2: #{conv_encoder_forward.1} parent=0 // pred_check
    _
  $region3: #{conv_encoder_forward.1} parent=0 // pred_check_branch
    %18 = sbr.rel (0) target = $region5
  $region4: #{conv_encoder_forward.1} parent=0 // pred_region
    _
  $region5: #{conv_encoder_forward.1} parent=0 // pred_fallthru
    _
  // Predicated region
  $region6: #{conv_encoder_forward.1} parent=0 // pred_check
    _
  $region7: #{conv_encoder_forward.1} parent=0 // pred_check_branch
    %20 = sbr.rel (0) target = $region9
  $region8: #{conv_encoder_forward.1} parent=0 // pred_region
    _
  $region9: #{conv_encoder_forward.1} parent=0 // pred_fallthru
    _
  // Predicated region
  $region10: #{conv_encoder_forward.1} parent=0 // pred_check
    _
  $region11: #{conv_encoder_forward.1} parent=0 // pred_check_branch
    %22 = sbr.rel (0) target = $region13
  $region12: #{conv_encoder_forward.1} parent=0 // pred_region
    _
  $region13: #{conv_encoder_forward.1} parent=0 // pred_fallthru
    _
  // Predicated region
  $region14: #{conv_encoder_forward.1} parent=0 // pred_check
    _
  $region15: #{conv_encoder_forward.1} parent=0 // pred_check_branch
    %24 = sbr.rel (0) target = $region17
  $region16: #{conv_encoder_forward.1} parent=0 // pred_region
    _
  $region17: #{conv_encoder_forward.1} parent=0 // pred_fallthru
    _
  // Predicated region
  $region18: #{conv_encoder_forward.1} parent=0 // pred_check
    _
  $region19: #{conv_encoder_forward.1} parent=0 // pred_check_branch
    %26 = sbr.rel (0) target = $region21
  $region20: #{conv_encoder_forward.1} parent=0 // pred_region
    _
  $region21: #{conv_encoder_forward.1} parent=0 // pred_fallthru
    _
  // Predicated region
  $region22: #{conv_encoder_forward.1} parent=0 // pred_check
    _
  $region23: #{conv_encoder_forward.1} parent=0 // pred_check_branch
    %28 = sbr.rel (0) target = $region25
  $region24: #{conv_encoder_forward.1} parent=0 // pred_region
    _
  $region25: #{conv_encoder_forward.1} parent=0 // pred_fallthru
    _
  // Predicated region
  $region26: #{conv_encoder_forward.1} parent=0 // pred_check
    _
  $region27: #{conv_encoder_forward.1} parent=0 // pred_check_branch
    %30 = sbr.rel (0) target = $region29
  $region28: #{conv_encoder_forward.1} parent=0 // pred_region
    _
  $region29: #{conv_encoder_forward.1} parent=0 // pred_fallthru
    _
  // Predicated region
  $region30: #{conv_encoder_forward.1} parent=0 // pred_check
    _
  $region31: #{conv_encoder_forward.1} parent=0 // pred_check_branch
    %32 = sbr.rel (0) target = $region33
  $region32: #{conv_encoder_forward.1} parent=0 // pred_region
    _
  $region33: #{conv_encoder_forward.1} parent=0 // pred_fallthru
    _
  // Predicated region
  $region34: #{conv_encoder_forward.1} parent=0 // pred_check
    _
  $region35: #{conv_encoder_forward.1} parent=0 // pred_check_branch
    %34 = sbr.rel (0) target = $region37
  $region36: #{conv_encoder_forward.1} parent=0 // pred_region
    _
  $region37: #{conv_encoder_forward.1} parent=0 // pred_fallthru
    _
  // Predicated region
  $region38: #{conv_encoder_forward.1} parent=0 // pred_check
    _
  $region39: #{conv_encoder_forward.1} parent=0 // pred_check_branch
    %36 = sbr.rel (0) target = $region41
  $region40: #{conv_encoder_forward.1} parent=0 // pred_region
    _
  $region41: #{conv_encoder_forward.1} parent=0 // pred_fallthru
    _
  // Predicated region
  $region42: #{conv_encoder_forward.1} parent=0 // pred_check
    _
  $region43: #{conv_encoder_forward.1} parent=0 // pred_check_branch
    %38 = sbr.rel (0) target = $region45
  $region44: #{conv_encoder_forward.1} parent=0 // pred_region
    _
  $region45: #{conv_encoder_forward.1} parent=0 // pred_fallthru
    _
  // Predicated region
  $region46: #{conv_encoder_forward.1} parent=0 // pred_check
    _
  $region47: #{conv_encoder_forward.1} parent=0 // pred_check_branch
    %40 = sbr.rel (0) target = $region49
  $region48: #{conv_encoder_forward.1} parent=0 // pred_region
    _
  $region49: #{conv_encoder_forward.1} parent=0 // pred_fallthru
    _
  %v42 = vld [vmem:[%s0] sm:$0xf]
  %v43 = vld [vmem:[%s0 + $0x4] sm:$0xf]
  %v44 = vld [vmem:[%s0 + $0x8] sm:$0xf]
  %v45 = vld [vmem:[%s0 + $0xc] sm:$0xf]
  %v46 = vld [vmem:[%s0 + $0x10] sm:$0xf]
  %v47 = vld [vmem:[%s0 + $0x14] sm:$0xf]
  %v48 = vld [vmem:[%s0 + $0x18] sm:$0xf]
  %v49 = vld [vmem:[%s0 + $0x1c] sm:$0xf]
  %v50 = vld [vmem:[%s0 + $0x20] sm:$0xf]
  %v51 = vld [vmem:[%s0 + $0x24] sm:$0xf]
  %v52 = vld [vmem:[%s0 + $0x28] sm:$0xf]
  %v53 = vld [vmem:[%s0 + $0x2c] sm:$0xf]
  %v54 = vld [vmem:[%s0 + $0x30] sm:$0xf]
  %v55 = vld [vmem:[%s0 + $0x34] sm:$0xf]
  %v56 = vld [vmem:[%s0 + $0x38] sm:$0xf]
  %v57 = vld [vmem:[%s0 + $0x3c] sm:$0xf]
  %v58 = vld [vmem:[%s0 + $0x40] sm:$0xf]
  %v59 = vld [vmem:[%s0 + $0x44] sm:$0xf]
  %v60 = vld [vmem:[%s0 + $0x48] sm:$0xf]
  %v61 = vld [vmem:[%s0 + $0x4c] sm:$0xf]
  %v62 = vld [vmem:[%s0 + $0x50] sm:$0xf]
  %v63 = vld [vmem:[%s0 + $0x54] sm:$0xf]
  %v64 = vld [vmem:[%s0 + $0x58] sm:$0xf]
  %v65 = vld [vmem:[%s0 + $0x5c] sm:$0xf]
  %v66 = vld [vmem:[%s0 + $0x60] sm:$0x3]
  %v67 = vld [vmem:[%s1] sm:$0xff]
  %v68 = vld [vmem:[%s1 + $0x8] sm:$0xff]
  %v69 = vld [vmem:[%s1 + $0x10] sm:$0xff]
  %v70 = vld [vmem:[%s1 + $0x18] sm:$0xff]
  %v71 = vld [vmem:[%s1 + $0x20] sm:$0xff]
  %v72 = vld [vmem:[%s1 + $0x28] sm:$0xff]
  %v73 = vld [vmem:[%s1 + $0x30] sm:$0xff]
  %v74 = vld [vmem:[%s1 + $0x38] sm:$0xff]
  %v75 = vld [vmem:[%s1 + $0x40] sm:$0xff]
  %v76 = vld [vmem:[%s2] sm:$0x3]
  %v78 = vlaneseq
  %v79 = vshrl.u32 %v78, 7
  %v80 = vsub.s32 0, %v79
  %v81 = vrot.slane %v76, %v80
  %v82 = vlaneseq
  %v83 = vshrl.u32 %v82, 7
  %v84 = vsub.s32 1, %v83
  %v85 = vrot.slane %v76, %v84
  %v113 = vunpack.c.l.b16 %v42
  %v114 = vunpack.c.l.b16 %v43
  %v115 = vunpack.c.l.b16 %v44
  %v116 = vunpack.c.l.b16 %v45
  %v117 = vunpack.c.l.b16 %v46
  %v118 = vunpack.c.l.b16 %v47
  %v119 = vunpack.c.l.b16 %v48
  %v120 = vunpack.c.l.b16 %v49
  %v121 = vunpack.c.l.b16 %v50
  %v122 = vunpack.c.l.b16 %v51
  %v123 = vunpack.c.l.b16 %v52
  %v124 = vunpack.c.l.b16 %v53
  %v125 = vunpack.c.l.b16 %v54
  %v126 = vunpack.c.l.b16 %v55
  %v127 = vunpack.c.l.b16 %v56
  %v128 = vunpack.c.l.b16 %v57
  %v129 = vunpack.c.l.b16 %v58
  %v130 = vunpack.c.l.b16 %v59
  %v131 = vunpack.c.l.b16 %v60
  %v132 = vunpack.c.l.b16 %v61
  %v133 = vunpack.c.l.b16 %v62
  %v134 = vunpack.c.l.b16 %v63
  %v135 = vunpack.c.l.b16 %v64
  %v136 = vunpack.c.l.b16 %v65
  %v137 = vunpack.c.l.b16 %v66
  %v138 = vpack.c.b16 %v114, %v113
  %v139 = vpack.c.b16 %v116, %v115
  %v140 = vpack.c.b16 %v118, %v117
  %v141 = vpack.c.b16 %v120, %v119
  %v142 = vpack.c.b16 %v122, %v121
  %v143 = vpack.c.b16 %v124, %v123
  %v144 = vpack.c.b16 %v126, %v125
  %v145 = vpack.c.b16 %v128, %v127
  %v146 = vpack.c.b16 %v130, %v129
  %v147 = vpack.c.b16 %v132, %v131
  %v148 = vpack.c.b16 %v134, %v133
  %v149 = vpack.c.b16 %v136, %v135
  %v150 = vpack.c.b16 %v137, %v137
  %v160 = vunpack.c.l.b16 %v67
  %v161 = vunpack.c.h.b16 %v67
  %v162 = vunpack.c.l.b16 %v68
  %v163 = vunpack.c.h.b16 %v68
  %v164 = vunpack.c.l.b16 %v69
  %v165 = vunpack.c.h.b16 %v69
  %v166 = vunpack.c.l.b16 %v70
  %v167 = vunpack.c.h.b16 %v70
  %v168 = vunpack.c.l.b16 %v71
  %v169 = vunpack.c.h.b16 %v71
  %v170 = vunpack.c.l.b16 %v72
  %v171 = vunpack.c.h.b16 %v72
  %v172 = vunpack.c.l.b16 %v73
  %v173 = vunpack.c.h.b16 %v73
  %v174 = vunpack.c.l.b16 %v74
  %v175 = vunpack.c.h.b16 %v74
  %v176 = vunpack.c.l.b16 %v75
  %v177 = vunpack.c.h.b16 %v75
  %v178 = vpack.c.b16 %v162, %v160
  %v179 = vpack.c.b16 %v163, %v161
  %v180 = vpack.c.b16 %v166, %v164
  %v181 = vpack.c.b16 %v167, %v165
  %v182 = vpack.c.b16 %v170, %v168
  %v183 = vpack.c.b16 %v171, %v169
  %v184 = vpack.c.b16 %v174, %v172
  %v185 = vpack.c.b16 %v175, %v173
  %v186 = vpack.c.b16 %v176, %v176
  %v187 = vpack.c.b16 %v177, %v177
  %vm196 = vcmask 588800
  %v198 = vsel %vm196, %v138, 0
  %v201 = vsel %vm196, %v139, 0
  %v204 = vsel %vm196, %v140, 0
  %v207 = vsel %vm196, %v141, 0
  %v210 = vsel %vm196, %v142, 0
  %v213 = vsel %vm196, %v143, 0
  %v216 = vsel %vm196, %v144, 0
  %v219 = vsel %vm196, %v145, 0
  %v222 = vsel %vm196, %v146, 0
  %v225 = vsel %vm196, %v147, 0
  %v228 = vsel %vm196, %v148, 0
  %v231 = vsel %vm196, %v149, 0
  %v234 = vsel %vm196, %v150, 0
  %vm236 = vcmask 1043456
  %v238 = vsel %vm236, %v186, 0
  %v241 = vsel %vm236, %v187, 0
  %243 = vmatprep.subr.bf16.mxu0 0
  %244 = vmatpush1.bf16.msra.mxu0 0
  %245 = vmatprep.subr.bf16.mxu0 0
  %246 = vmatpush1.bf16.msra.mxu0 0
  %247 = vmatprep.subr.bf16.mxu0 0
  %248 = vmatpush1.bf16.msra.mxu0 0
  %249 = vmatprep.subr.bf16.mxu0 %v241
  %250 = vmatpush1.bf16.msra.mxu0 %v238
  %251 = vmatprep.subr.bf16.mxu0 %v185
  %252 = vmatpush1.bf16.msra.mxu0 %v184
  %253 = vmatprep.subr.bf16.mxu0 %v183
  %254 = vmatpush1.bf16.msra.mxu0 %v182
  %255 = vmatprep.subr.bf16.mxu0 %v181
  %256 = vmatpush1.bf16.msra.mxu0 %v180
  %257 = vmatprep.subr.bf16.mxu0 %v179
  %258 = vmatpush1.bf16.msra.mxu0 %v178
  %259 = vmatprep.subr.bf16.mxu0 0
  %260 = vmatpush2.bf16.msra.mxu0 0
  %261 = vmatprep.subr.bf16.mxu0 0
  %262 = vmatpush2.bf16.msra.mxu0 0
  %263 = vmatprep.subr.bf16.mxu0 0
  %264 = vmatpush2.bf16.msra.mxu0 0
  %265 = vmatprep.subr.bf16.mxu0 0
  %266 = vmatpush2.bf16.msra.mxu0 0
  %267 = vmatprep.subr.bf16.mxu0 0
  %268 = vmatpush2.bf16.msra.mxu0 0
  %269 = vmatprep.subr.bf16.mxu0 0
  %270 = vmatpush2.bf16.msra.mxu0 0
  %271 = vmatprep.subr.bf16.mxu0 0
  %272 = vmatpush2.bf16.msra.mxu0 0
  %273 = vmatprep.subr.bf16.mxu0 0
  %274 = vmatpush2.bf16.msra.mxu0 0
  %275 = vmatprep.mubr.bf16.mxu0 0
  %276 = vmatmul.mubr.bf16.gmra.mxu0 %v198
  %v277 = vpop.f32.mrf.mxu0
  %v278 = vadd.f32 %v81, %v277
  %v279 = vpop.f32.mrf.mxu0
  %v280 = vadd.f32 %v85, %v279
  %v281 = vpop.f32.mrf.mxu0
  %v282 = vadd.f32 %v81, %v281
  %v283 = vpop.f32.mrf.mxu0
  %v284 = vadd.f32 %v85, %v283
  %285 = vmatprep.mubr.bf16.mxu0 0
  %286 = vmatmul.mubr.bf16.gmra.mxu0 %v201
  %v287 = vpop.f32.mrf.mxu0
  %v288 = vadd.f32 %v81, %v287
  %v289 = vpop.f32.mrf.mxu0
  %v290 = vadd.f32 %v85, %v289
  %v291 = vpop.f32.mrf.mxu0
  %v292 = vadd.f32 %v81, %v291
  %v293 = vpop.f32.mrf.mxu0
  %v294 = vadd.f32 %v85, %v293
  %295 = vmatprep.mubr.bf16.mxu0 0
  %296 = vmatmul.mubr.bf16.gmra.mxu0 %v204
  %v297 = vpop.f32.mrf.mxu0
  %v298 = vadd.f32 %v81, %v297
  %v299 = vpop.f32.mrf.mxu0
  %v300 = vadd.f32 %v85, %v299
  %v301 = vpop.f32.mrf.mxu0
  %v302 = vadd.f32 %v81, %v301
  %v303 = vpop.f32.mrf.mxu0
  %v304 = vadd.f32 %v85, %v303
  %305 = vmatprep.mubr.bf16.mxu0 0
  %306 = vmatmul.mubr.bf16.gmra.mxu0 %v207
  %v307 = vpop.f32.mrf.mxu0
  %v308 = vadd.f32 %v81, %v307
  %v309 = vpop.f32.mrf.mxu0
  %v310 = vadd.f32 %v85, %v309
  %v311 = vpop.f32.mrf.mxu0
  %v312 = vadd.f32 %v81, %v311
  %v313 = vpop.f32.mrf.mxu0
  %v314 = vadd.f32 %v85, %v313
  %315 = vmatprep.mubr.bf16.mxu0 0
  %316 = vmatmul.mubr.bf16.gmra.mxu0 %v210
  %v317 = vpop.f32.mrf.mxu0
  %v318 = vadd.f32 %v81, %v317
  %v319 = vpop.f32.mrf.mxu0
  %v320 = vadd.f32 %v85, %v319
  %v321 = vpop.f32.mrf.mxu0
  %v322 = vadd.f32 %v81, %v321
  %v323 = vpop.f32.mrf.mxu0
  %v324 = vadd.f32 %v85, %v323
  %325 = vmatprep.mubr.bf16.mxu0 0
  %326 = vmatmul.mubr.bf16.gmra.mxu0 %v213
  %v327 = vpop.f32.mrf.mxu0
  %v328 = vadd.f32 %v81, %v327
  %v329 = vpop.f32.mrf.mxu0
  %v330 = vadd.f32 %v85, %v329
  %v331 = vpop.f32.mrf.mxu0
  %v332 = vadd.f32 %v81, %v331
  %v333 = vpop.f32.mrf.mxu0
  %v334 = vadd.f32 %v85, %v333
  %335 = vmatprep.mubr.bf16.mxu0 0
  %336 = vmatmul.mubr.bf16.gmra.mxu0 %v216
  %v337 = vpop.f32.mrf.mxu0
  %v338 = vadd.f32 %v81, %v337
  %v339 = vpop.f32.mrf.mxu0
  %v340 = vadd.f32 %v85, %v339
  %v341 = vpop.f32.mrf.mxu0
  %v342 = vadd.f32 %v81, %v341
  %v343 = vpop.f32.mrf.mxu0
  %v344 = vadd.f32 %v85, %v343
  %345 = vmatprep.mubr.bf16.mxu0 0
  %346 = vmatmul.mubr.bf16.gmra.mxu0 %v219
  %v347 = vpop.f32.mrf.mxu0
  %v348 = vadd.f32 %v81, %v347
  %v349 = vpop.f32.mrf.mxu0
  %v350 = vadd.f32 %v85, %v349
  %v351 = vpop.f32.mrf.mxu0
  %v352 = vadd.f32 %v81, %v351
  %v353 = vpop.f32.mrf.mxu0
  %v354 = vadd.f32 %v85, %v353
  %355 = vmatprep.mubr.bf16.mxu0 0
  %356 = vmatmul.mubr.bf16.gmra.mxu0 %v222
  %v357 = vpop.f32.mrf.mxu0
  %v358 = vadd.f32 %v81, %v357
  %v359 = vpop.f32.mrf.mxu0
  %v360 = vadd.f32 %v85, %v359
  %v361 = vpop.f32.mrf.mxu0
  %v362 = vadd.f32 %v81, %v361
  %v363 = vpop.f32.mrf.mxu0
  %v364 = vadd.f32 %v85, %v363
  %365 = vmatprep.mubr.bf16.mxu0 0
  %366 = vmatmul.mubr.bf16.gmra.mxu0 %v225
  %v367 = vpop.f32.mrf.mxu0
  %v368 = vadd.f32 %v81, %v367
  %v369 = vpop.f32.mrf.mxu0
  %v370 = vadd.f32 %v85, %v369
  %v371 = vpop.f32.mrf.mxu0
  %v372 = vadd.f32 %v81, %v371
  %v373 = vpop.f32.mrf.mxu0
  %v374 = vadd.f32 %v85, %v373
  %375 = vmatprep.mubr.bf16.mxu0 0
  %376 = vmatmul.mubr.bf16.gmra.mxu0 %v228
  %v377 = vpop.f32.mrf.mxu0
  %v378 = vadd.f32 %v81, %v377
  %v379 = vpop.f32.mrf.mxu0
  %v380 = vadd.f32 %v85, %v379
  %v381 = vpop.f32.mrf.mxu0
  %v382 = vadd.f32 %v81, %v381
  %v383 = vpop.f32.mrf.mxu0
  %v384 = vadd.f32 %v85, %v383
  %385 = vmatprep.mubr.bf16.mxu0 0
  %386 = vmatmul.mubr.bf16.gmra.mxu0 %v231
  %v387 = vpop.f32.mrf.mxu0
  %v388 = vadd.f32 %v81, %v387
  %v389 = vpop.f32.mrf.mxu0
  %v390 = vadd.f32 %v85, %v389
  %v391 = vpop.f32.mrf.mxu0
  %v392 = vadd.f32 %v81, %v391
  %v393 = vpop.f32.mrf.mxu0
  %v394 = vadd.f32 %v85, %v393
  %395 = vmatprep.mubr.bf16.mxu0 0
  %396 = vmatmul.mubr.bf16.gmra.mxu0 %v234
  %v397 = vpop.f32.mrf.mxu0
  %v398 = vadd.f32 %v81, %v397
  %v399 = vpop.f32.mrf.mxu0
  %v400 = vadd.f32 %v85, %v399
  %v401 = vpop.f32.mrf.mxu0
  %v402 = vpop.f32.mrf.mxu0
  %403 = vdwg.mxu0
  %v404 = vmul.f32 %v278, 0.5
  %v405 = vmul.f32 %v280, 0.5
  %v406 = vmul.f32 %v282, 0.5
  %v407 = vmul.f32 %v284, 0.5
  %v408 = vmul.f32 %v288, 0.5
  %v409 = vmul.f32 %v290, 0.5
  %v410 = vmul.f32 %v292, 0.5
  %v411 = vmul.f32 %v294, 0.5
  %v412 = vmul.f32 %v298, 0.5
  %v413 = vmul.f32 %v300, 0.5
  %v414 = vmul.f32 %v302, 0.5
  %v415 = vmul.f32 %v304, 0.5
  %v416 = vmul.f32 %v308, 0.5
  %v417 = vmul.f32 %v310, 0.5
  %v418 = vmul.f32 %v312, 0.5
  %v419 = vmul.f32 %v314, 0.5
  %v420 = vmul.f32 %v318, 0.5
  %v421 = vmul.f32 %v320, 0.5
  %v422 = vmul.f32 %v322, 0.5
  %v423 = vmul.f32 %v324, 0.5
  %v424 = vmul.f32 %v328, 0.5
  %v425 = vmul.f32 %v330, 0.5
  %v426 = vmul.f32 %v332, 0.5
  %v427 = vmul.f32 %v334, 0.5
  %v428 = vmul.f32 %v338, 0.5
  %v429 = vmul.f32 %v340, 0.5
  %v430 = vmul.f32 %v342, 0.5
  %v431 = vmul.f32 %v344, 0.5
  %v432 = vmul.f32 %v348, 0.5
  %v433 = vmul.f32 %v350, 0.5
  %v434 = vmul.f32 %v352, 0.5
  %v435 = vmul.f32 %v354, 0.5
  %v436 = vmul.f32 %v358, 0.5
  %v437 = vmul.f32 %v360, 0.5
  %v438 = vmul.f32 %v362, 0.5
  %v439 = vmul.f32 %v364, 0.5
  %v440 = vmul.f32 %v368, 0.5
  %v441 = vmul.f32 %v370, 0.5
  %v442 = vmul.f32 %v372, 0.5
  %v443 = vmul.f32 %v374, 0.5
  %v444 = vmul.f32 %v378, 0.5
  %v445 = vmul.f32 %v380, 0.5
  %v446 = vmul.f32 %v382, 0.5
  %v447 = vmul.f32 %v384, 0.5
  %v448 = vmul.f32 %v388, 0.5
  %v449 = vmul.f32 %v390, 0.5
  %v450 = vmul.f32 %v392, 0.5
  %v451 = vmul.f32 %v394, 0.5
  %v452 = vmul.f32 %v398, 0.5
  %v453 = vmul.f32 %v400, 0.5
  %v454 = vtanh.pop %v404
  %v455 = vtanh.pop %v405
  %v456 = vtanh.pop %v406
  %v457 = vtanh.pop %v407
  %v458 = vtanh.pop %v408
  %v459 = vtanh.pop %v409
  %v460 = vtanh.pop %v410
  %v461 = vtanh.pop %v411
  %v462 = vtanh.pop %v412
  %v463 = vtanh.pop %v413
  %v464 = vtanh.pop %v414
  %v465 = vtanh.pop %v415
  %v466 = vtanh.pop %v416
  %v467 = vtanh.pop %v417
  %v468 = vtanh.pop %v418
  %v469 = vtanh.pop %v419
  %v470 = vtanh.pop %v420
  %v471 = vtanh.pop %v421
  %v472 = vtanh.pop %v422
  %v473 = vtanh.pop %v423
  %v474 = vtanh.pop %v424
  %v475 = vtanh.pop %v425
  %v476 = vtanh.pop %v426
  %v477 = vtanh.pop %v427
  %v478 = vtanh.pop %v428
  %v479 = vtanh.pop %v429
  %v480 = vtanh.pop %v430
  %v481 = vtanh.pop %v431
  %v482 = vtanh.pop %v432
  %v483 = vtanh.pop %v433
  %v484 = vtanh.pop %v434
  %v485 = vtanh.pop %v435
  %v486 = vtanh.pop %v436
  %v487 = vtanh.pop %v437
  %v488 = vtanh.pop %v438
  %v489 = vtanh.pop %v439
  %v490 = vtanh.pop %v440
  %v491 = vtanh.pop %v441
  %v492 = vtanh.pop %v442
  %v493 = vtanh.pop %v443
  %v494 = vtanh.pop %v444
  %v495 = vtanh.pop %v445
  %v496 = vtanh.pop %v446
  %v497 = vtanh.pop %v447
  %v498 = vtanh.pop %v448
  %v499 = vtanh.pop %v449
  %v500 = vtanh.pop %v450
  %v501 = vtanh.pop %v451
  %v502 = vtanh.pop %v452
  %v503 = vtanh.pop %v453
  %v504 = vmul.f32 %v454, 0.5
  %v505 = vmul.f32 %v455, 0.5
  %v506 = vmul.f32 %v456, 0.5
  %v507 = vmul.f32 %v457, 0.5
  %v508 = vmul.f32 %v458, 0.5
  %v509 = vmul.f32 %v459, 0.5
  %v510 = vmul.f32 %v460, 0.5
  %v511 = vmul.f32 %v461, 0.5
  %v512 = vmul.f32 %v462, 0.5
  %v513 = vmul.f32 %v463, 0.5
  %v514 = vmul.f32 %v464, 0.5
  %v515 = vmul.f32 %v465, 0.5
  %v516 = vmul.f32 %v466, 0.5
  %v517 = vmul.f32 %v467, 0.5
  %v518 = vmul.f32 %v468, 0.5
  %v519 = vmul.f32 %v469, 0.5
  %v520 = vmul.f32 %v470, 0.5
  %v521 = vmul.f32 %v471, 0.5
  %v522 = vmul.f32 %v472, 0.5
  %v523 = vmul.f32 %v473, 0.5
  %v524 = vmul.f32 %v474, 0.5
  %v525 = vmul.f32 %v475, 0.5
  %v526 = vmul.f32 %v476, 0.5
  %v527 = vmul.f32 %v477, 0.5
  %v528 = vmul.f32 %v478, 0.5
  %v529 = vmul.f32 %v479, 0.5
  %v530 = vmul.f32 %v480, 0.5
  %v531 = vmul.f32 %v481, 0.5
  %v532 = vmul.f32 %v482, 0.5
  %v533 = vmul.f32 %v483, 0.5
  %v534 = vmul.f32 %v484, 0.5
  %v535 = vmul.f32 %v485, 0.5
  %v536 = vmul.f32 %v486, 0.5
  %v537 = vmul.f32 %v487, 0.5
  %v538 = vmul.f32 %v488, 0.5
  %v539 = vmul.f32 %v489, 0.5
  %v540 = vmul.f32 %v490, 0.5
  %v541 = vmul.f32 %v491, 0.5
  %v542 = vmul.f32 %v492, 0.5
  %v543 = vmul.f32 %v493, 0.5
  %v544 = vmul.f32 %v494, 0.5
  %v545 = vmul.f32 %v495, 0.5
  %v546 = vmul.f32 %v496, 0.5
  %v547 = vmul.f32 %v497, 0.5
  %v548 = vmul.f32 %v498, 0.5
  %v549 = vmul.f32 %v499, 0.5
  %v550 = vmul.f32 %v500, 0.5
  %v551 = vmul.f32 %v501, 0.5
  %v552 = vmul.f32 %v502, 0.5
  %v553 = vmul.f32 %v503, 0.5
  %v554 = vadd.f32 %v504, 0.5
  %v555 = vadd.f32 %v505, 0.5
  %v556 = vadd.f32 %v506, 0.5
  %v557 = vadd.f32 %v507, 0.5
  %v558 = vadd.f32 %v508, 0.5
  %v559 = vadd.f32 %v509, 0.5
  %v560 = vadd.f32 %v510, 0.5
  %v561 = vadd.f32 %v511, 0.5
  %v562 = vadd.f32 %v512, 0.5
  %v563 = vadd.f32 %v513, 0.5
  %v564 = vadd.f32 %v514, 0.5
  %v565 = vadd.f32 %v515, 0.5
  %v566 = vadd.f32 %v516, 0.5
  %v567 = vadd.f32 %v517, 0.5
  %v568 = vadd.f32 %v518, 0.5
  %v569 = vadd.f32 %v519, 0.5
  %v570 = vadd.f32 %v520, 0.5
  %v571 = vadd.f32 %v521, 0.5
  %v572 = vadd.f32 %v522, 0.5
  %v573 = vadd.f32 %v523, 0.5
  %v574 = vadd.f32 %v524, 0.5
  %v575 = vadd.f32 %v525, 0.5
  %v576 = vadd.f32 %v526, 0.5
  %v577 = vadd.f32 %v527, 0.5
  %v578 = vadd.f32 %v528, 0.5
  %v579 = vadd.f32 %v529, 0.5
  %v580 = vadd.f32 %v530, 0.5
  %v581 = vadd.f32 %v531, 0.5
  %v582 = vadd.f32 %v532, 0.5
  %v583 = vadd.f32 %v533, 0.5
  %v584 = vadd.f32 %v534, 0.5
  %v585 = vadd.f32 %v535, 0.5
  %v586 = vadd.f32 %v536, 0.5
  %v587 = vadd.f32 %v537, 0.5
  %v588 = vadd.f32 %v538, 0.5
  %v589 = vadd.f32 %v539, 0.5
  %v590 = vadd.f32 %v540, 0.5
  %v591 = vadd.f32 %v541, 0.5
  %v592 = vadd.f32 %v542, 0.5
  %v593 = vadd.f32 %v543, 0.5
  %v594 = vadd.f32 %v544, 0.5
  %v595 = vadd.f32 %v545, 0.5
  %v596 = vadd.f32 %v546, 0.5
  %v597 = vadd.f32 %v547, 0.5
  %v598 = vadd.f32 %v548, 0.5
  %v599 = vadd.f32 %v549, 0.5
  %v600 = vadd.f32 %v550, 0.5
  %v601 = vadd.f32 %v551, 0.5
  %v602 = vadd.f32 %v552, 0.5
  %v603 = vadd.f32 %v553, 0.5
  %v604 = vld [vmem:[%s3] sm:$0xff]
  %v605 = vld [vmem:[%s3 + $0x8] sm:$0xff]
  %v606 = vld [vmem:[%s3 + $0x10] sm:$0xff]
  %v607 = vld [vmem:[%s3 + $0x18] sm:$0xff]
  %v608 = vld [vmem:[%s3 + $0x20] sm:$0xff]
  %v609 = vld [vmem:[%s3 + $0x28] sm:$0xff]
  %v610 = vld [vmem:[%s3 + $0x30] sm:$0xff]
  %v611 = vld [vmem:[%s3 + $0x38] sm:$0xff]
  %v612 = vld [vmem:[%s3 + $0x40] sm:$0xff]
  %v613 = vld [vmem:[%s3 + $0x48] sm:$0xff]
  %v614 = vld [vmem:[%s3 + $0x50] sm:$0xff]
  %v615 = vld [vmem:[%s3 + $0x58] sm:$0xff]
  %v616 = vld [vmem:[%s3 + $0x60] sm:$0xff]
  %v617 = vld [vmem:[%s3 + $0x68] sm:$0xff]
  %v618 = vld [vmem:[%s3 + $0x70] sm:$0xff]
  %v619 = vld [vmem:[%s3 + $0x78] sm:$0xff]
  %v620 = vld [vmem:[%s3 + $0x80] sm:$0xff]
  %v621 = vld [vmem:[%s3 + $0x88] sm:$0xff]
  %v622 = vld [vmem:[%s3 + $0x90] sm:$0xff]
  %v623 = vld [vmem:[%s3 + $0x98] sm:$0xff]
  %v624 = vld [vmem:[%s3 + $0xa0] sm:$0xff]
  %v625 = vld [vmem:[%s3 + $0xa8] sm:$0xff]
  %v626 = vld [vmem:[%s3 + $0xb0] sm:$0xff]
  %v627 = vld [vmem:[%s3 + $0xb8] sm:$0xff]
  %v628 = vld [vmem:[%s3 + $0xc0] sm:$0xff]
  %v629 = vld [vmem:[%s3 + $0xc8] sm:$0xff]
  %v630 = vld [vmem:[%s3 + $0xd0] sm:$0xff]
  %v631 = vld [vmem:[%s3 + $0xd8] sm:$0xff]
  %v632 = vld [vmem:[%s3 + $0xe0] sm:$0xff]
  %v633 = vld [vmem:[%s3 + $0xe8] sm:$0xff]
  %v634 = vld [vmem:[%s3 + $0xf0] sm:$0xff]
  %v635 = vld [vmem:[%s3 + $0xf8] sm:$0xff]
  %v636 = vld [vmem:[%s3 + $0x100] sm:$0xff]
  %v637 = vld [vmem:[%s3 + $0x108] sm:$0xff]
  %v638 = vld [vmem:[%s3 + $0x110] sm:$0xff]
  %v639 = vld [vmem:[%s3 + $0x118] sm:$0xff]
  %v640 = vld [vmem:[%s3 + $0x120] sm:$0xff]
  %v641 = vld [vmem:[%s3 + $0x128] sm:$0xff]
  %v642 = vld [vmem:[%s3 + $0x130] sm:$0xff]
  %v643 = vld [vmem:[%s3 + $0x138] sm:$0xff]
  %v644 = vld [vmem:[%s3 + $0x140] sm:$0xff]
  %v645 = vld [vmem:[%s3 + $0x148] sm:$0xff]
  %v646 = vld [vmem:[%s3 + $0x150] sm:$0xff]
  %v647 = vld [vmem:[%s3 + $0x158] sm:$0xff]
  %v648 = vld [vmem:[%s3 + $0x160] sm:$0xff]
  %v649 = vld [vmem:[%s3 + $0x168] sm:$0xff]
  %v650 = vld [vmem:[%s3 + $0x170] sm:$0xff]
  %v651 = vld [vmem:[%s3 + $0x178] sm:$0xff]
  %v652 = vld [vmem:[%s3 + $0x180] sm:$0xff]
  %v653 = vld [vmem:[%s3 + $0x188] sm:$0xff]
  %v654 = vld [vmem:[%s3 + $0x190] sm:$0xff]
  %v655 = vld [vmem:[%s3 + $0x198] sm:$0xff]
  %v656 = vld [vmem:[%s3 + $0x1a0] sm:$0xff]
  %v657 = vld [vmem:[%s3 + $0x1a8] sm:$0xff]
  %v658 = vld [vmem:[%s3 + $0x1b0] sm:$0xff]
  %v659 = vld [vmem:[%s3 + $0x1b8] sm:$0xff]
  %v660 = vld [vmem:[%s3 + $0x1c0] sm:$0xff]
  %v661 = vld [vmem:[%s3 + $0x1c8] sm:$0xff]
  %v662 = vld [vmem:[%s3 + $0x1d0] sm:$0xff]
  %v663 = vld [vmem:[%s3 + $0x1d8] sm:$0xff]
  %v664 = vld [vmem:[%s3 + $0x1e0] sm:$0xff]
  %v665 = vld [vmem:[%s3 + $0x1e8] sm:$0xff]
  %v666 = vld [vmem:[%s3 + $0x1f0] sm:$0xff]
  %v667 = vld [vmem:[%s3 + $0x1f8] sm:$0xff]
  %v668 = vld [vmem:[%s3 + $0x200] sm:$0xff]
  %v669 = vld [vmem:[%s3 + $0x208] sm:$0xff]
  %v670 = vld [vmem:[%s3 + $0x210] sm:$0xff]
  %v671 = vld [vmem:[%s3 + $0x218] sm:$0xff]
  %v672 = vld [vmem:[%s3 + $0x220] sm:$0xff]
  %v673 = vld [vmem:[%s3 + $0x228] sm:$0xff]
  %v674 = vld [vmem:[%s3 + $0x230] sm:$0xff]
  %v675 = vld [vmem:[%s3 + $0x238] sm:$0xff]
  %v676 = vpack.c.bf16 %v556, %v554
  %v677 = vpack.c.bf16 %v557, %v555
  %v678 = vpack.c.bf16 %v560, %v558
  %v679 = vpack.c.bf16 %v561, %v559
  %v680 = vpack.c.bf16 %v564, %v562
  %v681 = vpack.c.bf16 %v565, %v563
  %v682 = vpack.c.bf16 %v568, %v566
  %v683 = vpack.c.bf16 %v569, %v567
  %v684 = vpack.c.bf16 %v572, %v570
  %v685 = vpack.c.bf16 %v573, %v571
  %v686 = vpack.c.bf16 %v576, %v574
  %v687 = vpack.c.bf16 %v577, %v575
  %v688 = vpack.c.bf16 %v580, %v578
  %v689 = vpack.c.bf16 %v581, %v579
  %v690 = vpack.c.bf16 %v584, %v582
  %v691 = vpack.c.bf16 %v585, %v583
  %v692 = vpack.c.bf16 %v588, %v586
  %v693 = vpack.c.bf16 %v589, %v587
  %v694 = vpack.c.bf16 %v592, %v590
  %v695 = vpack.c.bf16 %v593, %v591
  %v696 = vpack.c.bf16 %v596, %v594
  %v697 = vpack.c.bf16 %v597, %v595
  %v698 = vpack.c.bf16 %v600, %v598
  %v699 = vpack.c.bf16 %v601, %v599
  %v700 = vpack.c.bf16 %v602, %v602
  %v701 = vpack.c.bf16 %v603, %v603
  %v774 = vunpack.c.l.b16 %v604
  %v775 = vunpack.c.h.b16 %v604
  %v776 = vunpack.c.l.b16 %v605
  %v777 = vunpack.c.h.b16 %v605
  %v778 = vunpack.c.l.b16 %v606
  %v779 = vunpack.c.h.b16 %v606
  %v780 = vunpack.c.l.b16 %v607
  %v781 = vunpack.c.h.b16 %v607
  %v782 = vunpack.c.l.b16 %v608
  %v783 = vunpack.c.h.b16 %v608
  %v784 = vunpack.c.l.b16 %v609
  %v785 = vunpack.c.h.b16 %v609
  %v786 = vunpack.c.l.b16 %v610
  %v787 = vunpack.c.h.b16 %v610
  %v788 = vunpack.c.l.b16 %v611
  %v789 = vunpack.c.h.b16 %v611
  %v790 = vunpack.c.l.b16 %v612
  %v791 = vunpack.c.h.b16 %v612
  %v792 = vunpack.c.l.b16 %v613
  %v793 = vunpack.c.h.b16 %v613
  %v794 = vunpack.c.l.b16 %v614
  %v795 = vunpack.c.h.b16 %v614
  %v796 = vunpack.c.l.b16 %v615
  %v797 = vunpack.c.h.b16 %v615
  %v798 = vunpack.c.l.b16 %v616
  %v799 = vunpack.c.h.b16 %v616
  %v800 = vunpack.c.l.b16 %v617
  %v801 = vunpack.c.h.b16 %v617
  %v802 = vunpack.c.l.b16 %v618
  %v803 = vunpack.c.h.b16 %v618
  %v804 = vunpack.c.l.b16 %v619
  %v805 = vunpack.c.h.b16 %v619
  %v806 = vunpack.c.l.b16 %v620
  %v807 = vunpack.c.h.b16 %v620
  %v808 = vunpack.c.l.b16 %v621
  %v809 = vunpack.c.h.b16 %v621
  %v810 = vunpack.c.l.b16 %v622
  %v811 = vunpack.c.h.b16 %v622
  %v812 = vunpack.c.l.b16 %v623
  %v813 = vunpack.c.h.b16 %v623
  %v814 = vunpack.c.l.b16 %v624
  %v815 = vunpack.c.h.b16 %v624
  %v816 = vunpack.c.l.b16 %v625
  %v817 = vunpack.c.h.b16 %v625
  %v818 = vunpack.c.l.b16 %v626
  %v819 = vunpack.c.h.b16 %v626
  %v820 = vunpack.c.l.b16 %v627
  %v821 = vunpack.c.h.b16 %v627
  %v822 = vunpack.c.l.b16 %v628
  %v823 = vunpack.c.h.b16 %v628
  %v824 = vunpack.c.l.b16 %v629
  %v825 = vunpack.c.h.b16 %v629
  %v826 = vunpack.c.l.b16 %v630
  %v827 = vunpack.c.h.b16 %v630
  %v828 = vunpack.c.l.b16 %v631
  %v829 = vunpack.c.h.b16 %v631
  %v830 = vunpack.c.l.b16 %v632
  %v831 = vunpack.c.h.b16 %v632
  %v832 = vunpack.c.l.b16 %v633
  %v833 = vunpack.c.h.b16 %v633
  %v834 = vunpack.c.l.b16 %v634
  %v835 = vunpack.c.h.b16 %v634
  %v836 = vunpack.c.l.b16 %v635
  %v837 = vunpack.c.h.b16 %v635
  %v838 = vunpack.c.l.b16 %v636
  %v839 = vunpack.c.h.b16 %v636
  %v840 = vunpack.c.l.b16 %v637
  %v841 = vunpack.c.h.b16 %v637
  %v842 = vunpack.c.l.b16 %v638
  %v843 = vunpack.c.h.b16 %v638
  %v844 = vunpack.c.l.b16 %v639
  %v845 = vunpack.c.h.b16 %v639
  %v846 = vunpack.c.l.b16 %v640
  %v847 = vunpack.c.h.b16 %v640
  %v848 = vunpack.c.l.b16 %v641
  %v849 = vunpack.c.h.b16 %v641
  %v850 = vunpack.c.l.b16 %v642
  %v851 = vunpack.c.h.b16 %v642
  %v852 = vunpack.c.l.b16 %v643
  %v853 = vunpack.c.h.b16 %v643
  %v854 = vunpack.c.l.b16 %v644
  %v855 = vunpack.c.h.b16 %v644
  %v856 = vunpack.c.l.b16 %v645
  %v857 = vunpack.c.h.b16 %v645
  %v858 = vunpack.c.l.b16 %v646
  %v859 = vunpack.c.h.b16 %v646
  %v860 = vunpack.c.l.b16 %v647
  %v861 = vunpack.c.h.b16 %v647
  %v862 = vunpack.c.l.b16 %v648
  %v863 = vunpack.c.h.b16 %v648
  %v864 = vunpack.c.l.b16 %v649
  %v865 = vunpack.c.h.b16 %v649
  %v866 = vunpack.c.l.b16 %v650
  %v867 = vunpack.c.h.b16 %v650
  %v868 = vunpack.c.l.b16 %v651
  %v869 = vunpack.c.h.b16 %v651
  %v870 = vunpack.c.l.b16 %v652
  %v871 = vunpack.c.h.b16 %v652
  %v872 = vunpack.c.l.b16 %v653
  %v873 = vunpack.c.h.b16 %v653
  %v874 = vunpack.c.l.b16 %v654
  %v875 = vunpack.c.h.b16 %v654
  %v876 = vunpack.c.l.b16 %v655
  %v877 = vunpack.c.h.b16 %v655
  %v878 = vunpack.c.l.b16 %v656
  %v879 = vunpack.c.h.b16 %v656
  %v880 = vunpack.c.l.b16 %v657
  %v881 = vunpack.c.h.b16 %v657
  %v882 = vunpack.c.l.b16 %v658
  %v883 = vunpack.c.h.b16 %v658
  %v884 = vunpack.c.l.b16 %v659
  %v885 = vunpack.c.h.b16 %v659
  %v886 = vunpack.c.l.b16 %v660
  %v887 = vunpack.c.h.b16 %v660
  %v888 = vunpack.c.l.b16 %v661
  %v889 = vunpack.c.h.b16 %v661
  %v890 = vunpack.c.l.b16 %v662
  %v891 = vunpack.c.h.b16 %v662
  %v892 = vunpack.c.l.b16 %v663
  %v893 = vunpack.c.h.b16 %v663
  %v894 = vunpack.c.l.b16 %v664
  %v895 = vunpack.c.h.b16 %v664
  %v896 = vunpack.c.l.b16 %v665
  %v897 = vunpack.c.h.b16 %v665
  %v898 = vunpack.c.l.b16 %v666
  %v899 = vunpack.c.h.b16 %v666
  %v900 = vunpack.c.l.b16 %v667
  %v901 = vunpack.c.h.b16 %v667
  %v902 = vunpack.c.l.b16 %v668
  %v903 = vunpack.c.h.b16 %v668
  %v904 = vunpack.c.l.b16 %v669
  %v905 = vunpack.c.h.b16 %v669
  %v906 = vunpack.c.l.b16 %v670
  %v907 = vunpack.c.h.b16 %v670
  %v908 = vunpack.c.l.b16 %v671
  %v909 = vunpack.c.h.b16 %v671
  %v910 = vunpack.c.l.b16 %v672
  %v911 = vunpack.c.h.b16 %v672
  %v912 = vunpack.c.l.b16 %v673
  %v913 = vunpack.c.h.b16 %v673
  %v914 = vunpack.c.l.b16 %v674
  %v915 = vunpack.c.h.b16 %v674
  %v916 = vunpack.c.l.b16 %v675
  %v917 = vunpack.c.h.b16 %v675
  %v918 = vpack.c.b16 %v776, %v774
  %v919 = vpack.c.b16 %v777, %v775
  %v920 = vpack.c.b16 %v780, %v778
  %v921 = vpack.c.b16 %v781, %v779
  %v922 = vpack.c.b16 %v784, %v782
  %v923 = vpack.c.b16 %v785, %v783
  %v924 = vpack.c.b16 %v788, %v786
  %v925 = vpack.c.b16 %v789, %v787
  %v926 = vpack.c.b16 %v792, %v790
  %v927 = vpack.c.b16 %v793, %v791
  %v928 = vpack.c.b16 %v796, %v794
  %v929 = vpack.c.b16 %v797, %v795
  %v930 = vpack.c.b16 %v800, %v798
  %v931 = vpack.c.b16 %v801, %v799
  %v932 = vpack.c.b16 %v804, %v802
  %v933 = vpack.c.b16 %v805, %v803
  %v934 = vpack.c.b16 %v808, %v806
  %v935 = vpack.c.b16 %v809, %v807
  %v936 = vpack.c.b16 %v812, %v810
  %v937 = vpack.c.b16 %v813, %v811
  %v938 = vpack.c.b16 %v816, %v814
  %v939 = vpack.c.b16 %v817, %v815
  %v940 = vpack.c.b16 %v820, %v818
  %v941 = vpack.c.b16 %v821, %v819
  %v942 = vpack.c.b16 %v824, %v822
  %v943 = vpack.c.b16 %v825, %v823
  %v944 = vpack.c.b16 %v828, %v826
  %v945 = vpack.c.b16 %v829, %v827
  %v946 = vpack.c.b16 %v832, %v830
  %v947 = vpack.c.b16 %v833, %v831
  %v948 = vpack.c.b16 %v836, %v834
  %v949 = vpack.c.b16 %v837, %v835
  %v950 = vpack.c.b16 %v840, %v838
  %v951 = vpack.c.b16 %v841, %v839
  %v952 = vpack.c.b16 %v844, %v842
  %v953 = vpack.c.b16 %v845, %v843
  %v954 = vpack.c.b16 %v848, %v846
  %v955 = vpack.c.b16 %v849, %v847
  %v956 = vpack.c.b16 %v852, %v850
  %v957 = vpack.c.b16 %v853, %v851
  %v958 = vpack.c.b16 %v856, %v854
  %v959 = vpack.c.b16 %v857, %v855
  %v960 = vpack.c.b16 %v860, %v858
  %v961 = vpack.c.b16 %v861, %v859
  %v962 = vpack.c.b16 %v864, %v862
  %v963 = vpack.c.b16 %v865, %v863
  %v964 = vpack.c.b16 %v868, %v866
  %v965 = vpack.c.b16 %v869, %v867
  %v966 = vpack.c.b16 %v872, %v870
  %v967 = vpack.c.b16 %v873, %v871
  %v968 = vpack.c.b16 %v876, %v874
  %v969 = vpack.c.b16 %v877, %v875
  %v970 = vpack.c.b16 %v880, %v878
  %v971 = vpack.c.b16 %v881, %v879
  %v972 = vpack.c.b16 %v884, %v882
  %v973 = vpack.c.b16 %v885, %v883
  %v974 = vpack.c.b16 %v888, %v886
  %v975 = vpack.c.b16 %v889, %v887
  %v976 = vpack.c.b16 %v892, %v890
  %v977 = vpack.c.b16 %v893, %v891
  %v978 = vpack.c.b16 %v896, %v894
  %v979 = vpack.c.b16 %v897, %v895
  %v980 = vpack.c.b16 %v900, %v898
  %v981 = vpack.c.b16 %v901, %v899
  %v982 = vpack.c.b16 %v904, %v902
  %v983 = vpack.c.b16 %v905, %v903
  %v984 = vpack.c.b16 %v908, %v906
  %v985 = vpack.c.b16 %v909, %v907
  %v986 = vpack.c.b16 %v912, %v910
  %v987 = vpack.c.b16 %v913, %v911
  %v988 = vpack.c.b16 %v916, %v914
  %v989 = vpack.c.b16 %v917, %v915
  %vm1026 = vcmask 556032
  %v1028 = vsel %vm1026, %v919, 0
  %v1031 = vsel %vm1026, %v921, 0
  %v1034 = vsel %vm1026, %v923, 0
  %v1037 = vsel %vm1026, %v925, 0
  %v1040 = vsel %vm1026, %v927, 0
  %v1043 = vsel %vm1026, %v929, 0
  %v1046 = vsel %vm1026, %v931, 0
  %v1049 = vsel %vm1026, %v933, 0
  %v1052 = vsel %vm1026, %v935, 0
  %v1055 = vsel %vm1026, %v937, 0
  %v1058 = vsel %vm1026, %v939, 0
  %v1061 = vsel %vm1026, %v941, 0
  %v1064 = vsel %vm1026, %v943, 0
  %v1067 = vsel %vm1026, %v945, 0
  %v1070 = vsel %vm1026, %v947, 0
  %v1073 = vsel %vm1026, %v949, 0
  %v1076 = vsel %vm1026, %v951, 0
  %v1079 = vsel %vm1026, %v953, 0
  %v1082 = vsel %vm1026, %v955, 0
  %v1085 = vsel %vm1026, %v957, 0
  %v1088 = vsel %vm1026, %v959, 0
  %v1091 = vsel %vm1026, %v961, 0
  %v1094 = vsel %vm1026, %v963, 0
  %v1097 = vsel %vm1026, %v965, 0
  %v1100 = vsel %vm1026, %v967, 0
  %v1103 = vsel %vm1026, %v969, 0
  %v1106 = vsel %vm1026, %v971, 0
  %v1109 = vsel %vm1026, %v973, 0
  %v1112 = vsel %vm1026, %v975, 0
  %v1115 = vsel %vm1026, %v977, 0
  %v1118 = vsel %vm1026, %v979, 0
  %v1121 = vsel %vm1026, %v981, 0
  %v1124 = vsel %vm1026, %v983, 0
  %v1127 = vsel %vm1026, %v985, 0
  %v1130 = vsel %vm1026, %v987, 0
  %v1133 = vsel %vm1026, %v989, 0
  %vm1135 = vcmask 1041408
  %v1137 = vsel %vm1135, %v700, 0
  %v1140 = vsel %vm1135, %v701, 0
  %1142 = vmatprep.subr.bf16.mxu0 %v691
  %1143 = vmatpush1.bf16.msra.mxu0 %v690
  %1144 = vmatprep.subr.bf16.mxu0 %v689
  %1145 = vmatpush1.bf16.msra.mxu0 %v688
  %1146 = vmatprep.subr.bf16.mxu0 %v687
  %1147 = vmatpush1.bf16.msra.mxu0 %v686
  %1148 = vmatprep.subr.bf16.mxu0 %v685
  %1149 = vmatpush1.bf16.msra.mxu0 %v684
  %1150 = vmatprep.subr.bf16.mxu0 %v683
  %1151 = vmatpush1.bf16.msra.mxu0 %v682
  %1152 = vmatprep.subr.bf16.mxu0 %v681
  %1153 = vmatpush1.bf16.msra.mxu0 %v680
  %1154 = vmatprep.subr.bf16.mxu0 %v679
  %1155 = vmatpush1.bf16.msra.mxu0 %v678
  %1156 = vmatprep.subr.bf16.mxu0 %v677
  %1157 = vmatpush1.bf16.msra.mxu0 %v676
  %1158 = vmatprep.subr.bf16.mxu0 0
  %1159 = vmatpush2.bf16.msra.mxu0 0
  %1160 = vmatprep.subr.bf16.mxu0 0
  %1161 = vmatpush2.bf16.msra.mxu0 0
  %1162 = vmatprep.subr.bf16.mxu0 0
  %1163 = vmatpush2.bf16.msra.mxu0 0
  %1164 = vmatprep.subr.bf16.mxu0 %v1140
  %1165 = vmatpush2.bf16.msra.mxu0 %v1137
  %1166 = vmatprep.subr.bf16.mxu0 %v699
  %1167 = vmatpush2.bf16.msra.mxu0 %v698
  %1168 = vmatprep.subr.bf16.mxu0 %v697
  %1169 = vmatpush2.bf16.msra.mxu0 %v696
  %1170 = vmatprep.subr.bf16.mxu0 %v695
  %1171 = vmatpush2.bf16.msra.mxu0 %v694
  %1172 = vmatprep.subr.bf16.mxu0 %v693
  %1173 = vmatpush2.bf16.msra.mxu0 %v692
  %1174 = vmatprep.mubr.bf16.mxu0 %v1028
  %1175 = vmatmul.mubr.bf16.gmra.mxu0 %v918
  %v1176 = vpop.f32.mrf.mxu0
  %v1177 = vadd.f32 0.0, %v1176
  %v1178 = vpop.f32.mrf.mxu0
  %v1179 = vadd.f32 0.0, %v1178
  %v1180 = vpop.f32.mrf.mxu0
  %v1181 = vadd.f32 0.0, %v1180
  %v1182 = vpop.f32.mrf.mxu0
  %v1183 = vadd.f32 0.0, %v1182
  %1184 = vmatprep.mubr.bf16.mxu0 %v1031
  %1185 = vmatmul.mubr.bf16.gmra.mxu0 %v920
  %v1186 = vpop.f32.mrf.mxu0
  %v1187 = vadd.f32 0.0, %v1186
  %v1188 = vpop.f32.mrf.mxu0
  %v1189 = vadd.f32 0.0, %v1188
  %v1190 = vpop.f32.mrf.mxu0
  %v1191 = vadd.f32 0.0, %v1190
  %v1192 = vpop.f32.mrf.mxu0
  %v1193 = vadd.f32 0.0, %v1192
  %1194 = vmatprep.mubr.bf16.mxu0 %v1034
  %1195 = vmatmul.mubr.bf16.gmra.mxu0 %v922
  %v1196 = vpop.f32.mrf.mxu0
  %v1197 = vadd.f32 0.0, %v1196
  %v1198 = vpop.f32.mrf.mxu0
  %v1199 = vadd.f32 0.0, %v1198
  %v1200 = vpop.f32.mrf.mxu0
  %v1201 = vadd.f32 0.0, %v1200
  %v1202 = vpop.f32.mrf.mxu0
  %v1203 = vadd.f32 0.0, %v1202
  %1204 = vmatprep.mubr.bf16.mxu0 %v1037
  %1205 = vmatmul.mubr.bf16.gmra.mxu0 %v924
  %v1206 = vpop.f32.mrf.mxu0
  %v1207 = vadd.f32 0.0, %v1206
  %v1208 = vpop.f32.mrf.mxu0
  %v1209 = vadd.f32 0.0, %v1208
  %v1210 = vpop.f32.mrf.mxu0
  %v1211 = vadd.f32 0.0, %v1210
  %v1212 = vpop.f32.mrf.mxu0
  %v1213 = vadd.f32 0.0, %v1212
  %1214 = vmatprep.mubr.bf16.mxu0 %v1040
  %1215 = vmatmul.mubr.bf16.gmra.mxu0 %v926
  %v1216 = vpop.f32.mrf.mxu0
  %v1217 = vadd.f32 0.0, %v1216
  %v1218 = vpop.f32.mrf.mxu0
  %v1219 = vadd.f32 0.0, %v1218
  %v1220 = vpop.f32.mrf.mxu0
  %v1221 = vadd.f32 0.0, %v1220
  %v1222 = vpop.f32.mrf.mxu0
  %v1223 = vadd.f32 0.0, %v1222
  %1224 = vmatprep.mubr.bf16.mxu0 %v1043
  %1225 = vmatmul.mubr.bf16.gmra.mxu0 %v928
  %v1226 = vpop.f32.mrf.mxu0
  %v1227 = vadd.f32 0.0, %v1226
  %v1228 = vpop.f32.mrf.mxu0
  %v1229 = vadd.f32 0.0, %v1228
  %v1230 = vpop.f32.mrf.mxu0
  %v1231 = vadd.f32 0.0, %v1230
  %v1232 = vpop.f32.mrf.mxu0
  %v1233 = vadd.f32 0.0, %v1232
  %1234 = vmatprep.mubr.bf16.mxu0 %v1046
  %1235 = vmatmul.mubr.bf16.gmra.mxu0 %v930
  %v1236 = vpop.f32.mrf.mxu0
  %v1237 = vadd.f32 0.0, %v1236
  %v1238 = vpop.f32.mrf.mxu0
  %v1239 = vadd.f32 0.0, %v1238
  %v1240 = vpop.f32.mrf.mxu0
  %v1241 = vadd.f32 0.0, %v1240
  %v1242 = vpop.f32.mrf.mxu0
  %v1243 = vadd.f32 0.0, %v1242
  %1244 = vmatprep.mubr.bf16.mxu0 %v1049
  %1245 = vmatmul.mubr.bf16.gmra.mxu0 %v932
  %v1246 = vpop.f32.mrf.mxu0
  %v1247 = vadd.f32 0.0, %v1246
  %v1248 = vpop.f32.mrf.mxu0
  %v1249 = vadd.f32 0.0, %v1248
  %v1250 = vpop.f32.mrf.mxu0
  %v1251 = vadd.f32 0.0, %v1250
  %v1252 = vpop.f32.mrf.mxu0
  %v1253 = vadd.f32 0.0, %v1252
  %1254 = vmatprep.mubr.bf16.mxu0 %v1052
  %1255 = vmatmul.mubr.bf16.gmra.mxu0 %v934
  %v1256 = vpop.f32.mrf.mxu0
  %v1257 = vadd.f32 0.0, %v1256
  %v1258 = vpop.f32.mrf.mxu0
  %v1259 = vadd.f32 0.0, %v1258
  %v1260 = vpop.f32.mrf.mxu0
  %v1261 = vadd.f32 0.0, %v1260
  %v1262 = vpop.f32.mrf.mxu0
  %v1263 = vadd.f32 0.0, %v1262
  %1264 = vmatprep.mubr.bf16.mxu0 %v1055
  %1265 = vmatmul.mubr.bf16.gmra.mxu0 %v936
  %v1266 = vpop.f32.mrf.mxu0
  %v1267 = vadd.f32 0.0, %v1266
  %v1268 = vpop.f32.mrf.mxu0
  %v1269 = vadd.f32 0.0, %v1268
  %v1270 = vpop.f32.mrf.mxu0
  %v1271 = vadd.f32 0.0, %v1270
  %v1272 = vpop.f32.mrf.mxu0
  %v1273 = vadd.f32 0.0, %v1272
  %1274 = vmatprep.mubr.bf16.mxu0 %v1058
  %1275 = vmatmul.mubr.bf16.gmra.mxu0 %v938
  %v1276 = vpop.f32.mrf.mxu0
  %v1277 = vadd.f32 0.0, %v1276
  %v1278 = vpop.f32.mrf.mxu0
  %v1279 = vadd.f32 0.0, %v1278
  %v1280 = vpop.f32.mrf.mxu0
  %v1281 = vadd.f32 0.0, %v1280
  %v1282 = vpop.f32.mrf.mxu0
  %v1283 = vadd.f32 0.0, %v1282
  %1284 = vmatprep.mubr.bf16.mxu0 %v1061
  %1285 = vmatmul.mubr.bf16.gmra.mxu0 %v940
  %v1286 = vpop.f32.mrf.mxu0
  %v1287 = vadd.f32 0.0, %v1286
  %v1288 = vpop.f32.mrf.mxu0
  %v1289 = vadd.f32 0.0, %v1288
  %v1290 = vpop.f32.mrf.mxu0
  %v1291 = vadd.f32 0.0, %v1290
  %v1292 = vpop.f32.mrf.mxu0
  %v1293 = vadd.f32 0.0, %v1292
  %1294 = vmatprep.mubr.bf16.mxu0 %v1064
  %1295 = vmatmul.mubr.bf16.gmra.mxu0 %v942
  %v1296 = vpop.f32.mrf.mxu0
  %v1297 = vadd.f32 0.0, %v1296
  %v1298 = vpop.f32.mrf.mxu0
  %v1299 = vadd.f32 0.0, %v1298
  %v1300 = vpop.f32.mrf.mxu0
  %v1301 = vadd.f32 0.0, %v1300
  %v1302 = vpop.f32.mrf.mxu0
  %v1303 = vadd.f32 0.0, %v1302
  %1304 = vmatprep.mubr.bf16.mxu0 %v1067
  %1305 = vmatmul.mubr.bf16.gmra.mxu0 %v944
  %v1306 = vpop.f32.mrf.mxu0
  %v1307 = vadd.f32 0.0, %v1306
  %v1308 = vpop.f32.mrf.mxu0
  %v1309 = vadd.f32 0.0, %v1308
  %v1310 = vpop.f32.mrf.mxu0
  %v1311 = vadd.f32 0.0, %v1310
  %v1312 = vpop.f32.mrf.mxu0
  %v1313 = vadd.f32 0.0, %v1312
  %1314 = vmatprep.mubr.bf16.mxu0 %v1070
  %1315 = vmatmul.mubr.bf16.gmra.mxu0 %v946
  %v1316 = vpop.f32.mrf.mxu0
  %v1317 = vadd.f32 0.0, %v1316
  %v1318 = vpop.f32.mrf.mxu0
  %v1319 = vadd.f32 0.0, %v1318
  %v1320 = vpop.f32.mrf.mxu0
  %v1321 = vadd.f32 0.0, %v1320
  %v1322 = vpop.f32.mrf.mxu0
  %v1323 = vadd.f32 0.0, %v1322
  %1324 = vmatprep.mubr.bf16.mxu0 %v1073
  %1325 = vmatmul.mubr.bf16.gmra.mxu0 %v948
  %v1326 = vpop.f32.mrf.mxu0
  %v1327 = vadd.f32 0.0, %v1326
  %v1328 = vpop.f32.mrf.mxu0
  %v1329 = vadd.f32 0.0, %v1328
  %v1330 = vpop.f32.mrf.mxu0
  %v1331 = vadd.f32 0.0, %v1330
  %v1332 = vpop.f32.mrf.mxu0
  %v1333 = vadd.f32 0.0, %v1332
  %1334 = vmatprep.mubr.bf16.mxu0 %v1076
  %1335 = vmatmul.mubr.bf16.gmra.mxu0 %v950
  %v1336 = vpop.f32.mrf.mxu0
  %v1337 = vadd.f32 0.0, %v1336
  %v1338 = vpop.f32.mrf.mxu0
  %v1339 = vadd.f32 0.0, %v1338
  %v1340 = vpop.f32.mrf.mxu0
  %v1341 = vadd.f32 0.0, %v1340
  %v1342 = vpop.f32.mrf.mxu0
  %v1343 = vadd.f32 0.0, %v1342
  %1344 = vmatprep.mubr.bf16.mxu0 %v1079
  %1345 = vmatmul.mubr.bf16.gmra.mxu0 %v952
  %v1346 = vpop.f32.mrf.mxu0
  %v1347 = vadd.f32 0.0, %v1346
  %v1348 = vpop.f32.mrf.mxu0
  %v1349 = vadd.f32 0.0, %v1348
  %v1350 = vpop.f32.mrf.mxu0
  %v1351 = vadd.f32 0.0, %v1350
  %v1352 = vpop.f32.mrf.mxu0
  %v1353 = vadd.f32 0.0, %v1352
  %1354 = vmatprep.mubr.bf16.mxu0 %v1082
  %1355 = vmatmul.mubr.bf16.gmra.mxu0 %v954
  %v1356 = vpop.f32.mrf.mxu0
  %v1357 = vadd.f32 0.0, %v1356
  %v1358 = vpop.f32.mrf.mxu0
  %v1359 = vadd.f32 0.0, %v1358
  %v1360 = vpop.f32.mrf.mxu0
  %v1361 = vadd.f32 0.0, %v1360
  %v1362 = vpop.f32.mrf.mxu0
  %v1363 = vadd.f32 0.0, %v1362
  %1364 = vmatprep.mubr.bf16.mxu0 %v1085
  %1365 = vmatmul.mubr.bf16.gmra.mxu0 %v956
  %v1366 = vpop.f32.mrf.mxu0
  %v1367 = vadd.f32 0.0, %v1366
  %v1368 = vpop.f32.mrf.mxu0
  %v1369 = vadd.f32 0.0, %v1368
  %v1370 = vpop.f32.mrf.mxu0
  %v1371 = vadd.f32 0.0, %v1370
  %v1372 = vpop.f32.mrf.mxu0
  %v1373 = vadd.f32 0.0, %v1372
  %1374 = vmatprep.mubr.bf16.mxu0 %v1088
  %1375 = vmatmul.mubr.bf16.gmra.mxu0 %v958
  %v1376 = vpop.f32.mrf.mxu0
  %v1377 = vadd.f32 0.0, %v1376
  %v1378 = vpop.f32.mrf.mxu0
  %v1379 = vadd.f32 0.0, %v1378
  %v1380 = vpop.f32.mrf.mxu0
  %v1381 = vadd.f32 0.0, %v1380
  %v1382 = vpop.f32.mrf.mxu0
  %v1383 = vadd.f32 0.0, %v1382
  %1384 = vmatprep.mubr.bf16.mxu0 %v1091
  %1385 = vmatmul.mubr.bf16.gmra.mxu0 %v960
  %v1386 = vpop.f32.mrf.mxu0
  %v1387 = vadd.f32 0.0, %v1386
  %v1388 = vpop.f32.mrf.mxu0
  %v1389 = vadd.f32 0.0, %v1388
  %v1390 = vpop.f32.mrf.mxu0
  %v1391 = vadd.f32 0.0, %v1390
  %v1392 = vpop.f32.mrf.mxu0
  %v1393 = vadd.f32 0.0, %v1392
  %1394 = vmatprep.mubr.bf16.mxu0 %v1094
  %1395 = vmatmul.mubr.bf16.gmra.mxu0 %v962
  %v1396 = vpop.f32.mrf.mxu0
  %v1397 = vadd.f32 0.0, %v1396
  %v1398 = vpop.f32.mrf.mxu0
  %v1399 = vadd.f32 0.0, %v1398
  %v1400 = vpop.f32.mrf.mxu0
  %v1401 = vadd.f32 0.0, %v1400
  %v1402 = vpop.f32.mrf.mxu0
  %v1403 = vadd.f32 0.0, %v1402
  %1404 = vmatprep.mubr.bf16.mxu0 %v1097
  %1405 = vmatmul.mubr.bf16.gmra.mxu0 %v964
  %v1406 = vpop.f32.mrf.mxu0
  %v1407 = vadd.f32 0.0, %v1406
  %v1408 = vpop.f32.mrf.mxu0
  %v1409 = vadd.f32 0.0, %v1408
  %v1410 = vpop.f32.mrf.mxu0
  %v1411 = vadd.f32 0.0, %v1410
  %v1412 = vpop.f32.mrf.mxu0
  %v1413 = vadd.f32 0.0, %v1412
  %1414 = vmatprep.mubr.bf16.mxu0 %v1100
  %1415 = vmatmul.mubr.bf16.gmra.mxu0 %v966
  %v1416 = vpop.f32.mrf.mxu0
  %v1417 = vadd.f32 0.0, %v1416
  %v1418 = vpop.f32.mrf.mxu0
  %v1419 = vadd.f32 0.0, %v1418
  %v1420 = vpop.f32.mrf.mxu0
  %v1421 = vadd.f32 0.0, %v1420
  %v1422 = vpop.f32.mrf.mxu0
  %v1423 = vadd.f32 0.0, %v1422
  %1424 = vmatprep.mubr.bf16.mxu0 %v1103
  %1425 = vmatmul.mubr.bf16.gmra.mxu0 %v968
  %v1426 = vpop.f32.mrf.mxu0
  %v1427 = vadd.f32 0.0, %v1426
  %v1428 = vpop.f32.mrf.mxu0
  %v1429 = vadd.f32 0.0, %v1428
  %v1430 = vpop.f32.mrf.mxu0
  %v1431 = vadd.f32 0.0, %v1430
  %v1432 = vpop.f32.mrf.mxu0
  %v1433 = vadd.f32 0.0, %v1432
  %1434 = vmatprep.mubr.bf16.mxu0 %v1106
  %1435 = vmatmul.mubr.bf16.gmra.mxu0 %v970
  %v1436 = vpop.f32.mrf.mxu0
  %v1437 = vadd.f32 0.0, %v1436
  %v1438 = vpop.f32.mrf.mxu0
  %v1439 = vadd.f32 0.0, %v1438
  %v1440 = vpop.f32.mrf.mxu0
  %v1441 = vadd.f32 0.0, %v1440
  %v1442 = vpop.f32.mrf.mxu0
  %v1443 = vadd.f32 0.0, %v1442
  %1444 = vmatprep.mubr.bf16.mxu0 %v1109
  %1445 = vmatmul.mubr.bf16.gmra.mxu0 %v972
  %v1446 = vpop.f32.mrf.mxu0
  %v1447 = vadd.f32 0.0, %v1446
  %v1448 = vpop.f32.mrf.mxu0
  %v1449 = vadd.f32 0.0, %v1448
  %v1450 = vpop.f32.mrf.mxu0
  %v1451 = vadd.f32 0.0, %v1450
  %v1452 = vpop.f32.mrf.mxu0
  %v1453 = vadd.f32 0.0, %v1452
  %1454 = vmatprep.mubr.bf16.mxu0 %v1112
  %1455 = vmatmul.mubr.bf16.gmra.mxu0 %v974
  %v1456 = vpop.f32.mrf.mxu0
  %v1457 = vadd.f32 0.0, %v1456
  %v1458 = vpop.f32.mrf.mxu0
  %v1459 = vadd.f32 0.0, %v1458
  %v1460 = vpop.f32.mrf.mxu0
  %v1461 = vadd.f32 0.0, %v1460
  %v1462 = vpop.f32.mrf.mxu0
  %v1463 = vadd.f32 0.0, %v1462
  %1464 = vmatprep.mubr.bf16.mxu0 %v1115
  %1465 = vmatmul.mubr.bf16.gmra.mxu0 %v976
  %v1466 = vpop.f32.mrf.mxu0
  %v1467 = vadd.f32 0.0, %v1466
  %v1468 = vpop.f32.mrf.mxu0
  %v1469 = vadd.f32 0.0, %v1468
  %v1470 = vpop.f32.mrf.mxu0
  %v1471 = vadd.f32 0.0, %v1470
  %v1472 = vpop.f32.mrf.mxu0
  %v1473 = vadd.f32 0.0, %v1472
  %1474 = vmatprep.mubr.bf16.mxu0 %v1118
  %1475 = vmatmul.mubr.bf16.gmra.mxu0 %v978
  %v1476 = vpop.f32.mrf.mxu0
  %v1477 = vadd.f32 0.0, %v1476
  %v1478 = vpop.f32.mrf.mxu0
  %v1479 = vadd.f32 0.0, %v1478
  %v1480 = vpop.f32.mrf.mxu0
  %v1481 = vadd.f32 0.0, %v1480
  %v1482 = vpop.f32.mrf.mxu0
  %v1483 = vadd.f32 0.0, %v1482
  %1484 = vmatprep.mubr.bf16.mxu0 %v1121
  %1485 = vmatmul.mubr.bf16.gmra.mxu0 %v980
  %v1486 = vpop.f32.mrf.mxu0
  %v1487 = vadd.f32 0.0, %v1486
  %v1488 = vpop.f32.mrf.mxu0
  %v1489 = vadd.f32 0.0, %v1488
  %v1490 = vpop.f32.mrf.mxu0
  %v1491 = vadd.f32 0.0, %v1490
  %v1492 = vpop.f32.mrf.mxu0
  %v1493 = vadd.f32 0.0, %v1492
  %1494 = vmatprep.mubr.bf16.mxu0 %v1124
  %1495 = vmatmul.mubr.bf16.gmra.mxu0 %v982
  %v1496 = vpop.f32.mrf.mxu0
  %v1497 = vadd.f32 0.0, %v1496
  %v1498 = vpop.f32.mrf.mxu0
  %v1499 = vadd.f32 0.0, %v1498
  %v1500 = vpop.f32.mrf.mxu0
  %v1501 = vadd.f32 0.0, %v1500
  %v1502 = vpop.f32.mrf.mxu0
  %v1503 = vadd.f32 0.0, %v1502
  %1504 = vmatprep.mubr.bf16.mxu0 %v1127
  %1505 = vmatmul.mubr.bf16.gmra.mxu0 %v984
  %v1506 = vpop.f32.mrf.mxu0
  %v1507 = vadd.f32 0.0, %v1506
  %v1508 = vpop.f32.mrf.mxu0
  %v1509 = vadd.f32 0.0, %v1508
  %v1510 = vpop.f32.mrf.mxu0
  %v1511 = vadd.f32 0.0, %v1510
  %v1512 = vpop.f32.mrf.mxu0
  %v1513 = vadd.f32 0.0, %v1512
  %1514 = vmatprep.mubr.bf16.mxu0 %v1130
  %1515 = vmatmul.mubr.bf16.gmra.mxu0 %v986
  %v1516 = vpop.f32.mrf.mxu0
  %v1517 = vadd.f32 0.0, %v1516
  %v1518 = vpop.f32.mrf.mxu0
  %v1519 = vadd.f32 0.0, %v1518
  %v1520 = vpop.f32.mrf.mxu0
  %v1521 = vadd.f32 0.0, %v1520
  %v1522 = vpop.f32.mrf.mxu0
  %v1523 = vadd.f32 0.0, %v1522
  %1524 = vmatprep.mubr.bf16.mxu0 %v1133
  %1525 = vmatmul.mubr.bf16.gmra.mxu0 %v988
  %v1526 = vpop.f32.mrf.mxu0
  %v1527 = vadd.f32 0.0, %v1526
  %v1528 = vpop.f32.mrf.mxu0
  %v1529 = vadd.f32 0.0, %v1528
  %v1530 = vpop.f32.mrf.mxu0
  %v1531 = vadd.f32 0.0, %v1530
  %v1532 = vpop.f32.mrf.mxu0
  %v1533 = vadd.f32 0.0, %v1532
  %1534 = vdwg.mxu0
  %v1535 = vpack.c.bf16 %v1181, %v1177
  %v1536 = vpack.c.bf16 %v1183, %v1179
  %v1537 = vpack.c.bf16 %v1191, %v1187
  %v1538 = vpack.c.bf16 %v1193, %v1189
  %v1539 = vpack.c.bf16 %v1201, %v1197
  %v1540 = vpack.c.bf16 %v1203, %v1199
  %v1541 = vpack.c.bf16 %v1211, %v1207
  %v1542 = vpack.c.bf16 %v1213, %v1209
  %v1543 = vpack.c.bf16 %v1221, %v1217
  %v1544 = vpack.c.bf16 %v1223, %v1219
  %v1545 = vpack.c.bf16 %v1231, %v1227
  %v1546 = vpack.c.bf16 %v1233, %v1229
  %v1547 = vpack.c.bf16 %v1241, %v1237
  %v1548 = vpack.c.bf16 %v1243, %v1239
  %v1549 = vpack.c.bf16 %v1251, %v1247
  %v1550 = vpack.c.bf16 %v1253, %v1249
  %v1551 = vpack.c.bf16 %v1261, %v1257
  %v1552 = vpack.c.bf16 %v1263, %v1259
  %v1553 = vpack.c.bf16 %v1271, %v1267
  %v1554 = vpack.c.bf16 %v1273, %v1269
  %v1555 = vpack.c.bf16 %v1281, %v1277
  %v1556 = vpack.c.bf16 %v1283, %v1279
  %v1557 = vpack.c.bf16 %v1291, %v1287
  %v1558 = vpack.c.bf16 %v1293, %v1289
  %v1559 = vpack.c.bf16 %v1301, %v1297
  %v1560 = vpack.c.bf16 %v1303, %v1299
  %v1561 = vpack.c.bf16 %v1311, %v1307
  %v1562 = vpack.c.bf16 %v1313, %v1309
  %v1563 = vpack.c.bf16 %v1321, %v1317
  %v1564 = vpack.c.bf16 %v1323, %v1319
  %v1565 = vpack.c.bf16 %v1331, %v1327
  %v1566 = vpack.c.bf16 %v1333, %v1329
  %v1567 = vpack.c.bf16 %v1341, %v1337
  %v1568 = vpack.c.bf16 %v1343, %v1339
  %v1569 = vpack.c.bf16 %v1351, %v1347
  %v1570 = vpack.c.bf16 %v1353, %v1349
  %v1571 = vpack.c.bf16 %v1361, %v1357
  %v1572 = vpack.c.bf16 %v1363, %v1359
  %v1573 = vpack.c.bf16 %v1371, %v1367
  %v1574 = vpack.c.bf16 %v1373, %v1369
  %v1575 = vpack.c.bf16 %v1381, %v1377
  %v1576 = vpack.c.bf16 %v1383, %v1379
  %v1577 = vpack.c.bf16 %v1391, %v1387
  %v1578 = vpack.c.bf16 %v1393, %v1389
  %v1579 = vpack.c.bf16 %v1401, %v1397
  %v1580 = vpack.c.bf16 %v1403, %v1399
  %v1581 = vpack.c.bf16 %v1411, %v1407
  %v1582 = vpack.c.bf16 %v1413, %v1409
  %v1583 = vpack.c.bf16 %v1421, %v1417
  %v1584 = vpack.c.bf16 %v1423, %v1419
  %v1585 = vpack.c.bf16 %v1431, %v1427
  %v1586 = vpack.c.bf16 %v1433, %v1429
  %v1587 = vpack.c.bf16 %v1441, %v1437
  %v1588 = vpack.c.bf16 %v1443, %v1439
  %v1589 = vpack.c.bf16 %v1451, %v1447
  %v1590 = vpack.c.bf16 %v1453, %v1449
  %v1591 = vpack.c.bf16 %v1461, %v1457
  %v1592 = vpack.c.bf16 %v1463, %v1459
  %v1593 = vpack.c.bf16 %v1471, %v1467
  %v1594 = vpack.c.bf16 %v1473, %v1469
  %v1595 = vpack.c.bf16 %v1481, %v1477
  %v1596 = vpack.c.bf16 %v1483, %v1479
  %v1597 = vpack.c.bf16 %v1491, %v1487
  %v1598 = vpack.c.bf16 %v1493, %v1489
  %v1599 = vpack.c.bf16 %v1501, %v1497
  %v1600 = vpack.c.bf16 %v1503, %v1499
  %v1601 = vpack.c.bf16 %v1511, %v1507
  %v1602 = vpack.c.bf16 %v1513, %v1509
  %v1603 = vpack.c.bf16 %v1521, %v1517
  %v1604 = vpack.c.bf16 %v1523, %v1519
  %v1605 = vpack.c.bf16 %v1531, %v1527
  %v1606 = vpack.c.bf16 %v1533, %v1529
  %v1607 = vld [vmem:[%s4] sm:$0xff]
  %v1608 = vld [vmem:[%s4 + $0x8] sm:$0xff]
  %v1609 = vld [vmem:[%s4 + $0x10] sm:$0xff]
  %v1610 = vld [vmem:[%s4 + $0x18] sm:$0xff]
  %v1611 = vld [vmem:[%s4 + $0x20] sm:$0xff]
  %v1612 = vld [vmem:[%s4 + $0x28] sm:$0xff]
  %v1613 = vld [vmem:[%s4 + $0x30] sm:$0xff]
  %v1614 = vld [vmem:[%s4 + $0x38] sm:$0xff]
  %v1615 = vld [vmem:[%s4 + $0x40] sm:$0xff]
  %v1616 = vld [vmem:[%s4 + $0x48] sm:$0xff]
  %v1617 = vld [vmem:[%s4 + $0x50] sm:$0xff]
  %v1618 = vld [vmem:[%s4 + $0x58] sm:$0xff]
  %v1619 = vld [vmem:[%s4 + $0x60] sm:$0xff]
  %v1620 = vld [vmem:[%s4 + $0x68] sm:$0xff]
  %v1621 = vld [vmem:[%s4 + $0x70] sm:$0xff]
  %v1622 = vld [vmem:[%s4 + $0x78] sm:$0xff]
  %v1623 = vld [vmem:[%s4 + $0x80] sm:$0xff]
  %v1624 = vld [vmem:[%s4 + $0x88] sm:$0xff]
  %v1625 = vld [vmem:[%s4 + $0x90] sm:$0xff]
  %v1626 = vld [vmem:[%s4 + $0x98] sm:$0xff]
  %v1627 = vld [vmem:[%s4 + $0xa0] sm:$0xff]
  %v1628 = vld [vmem:[%s4 + $0xa8] sm:$0xff]
  %v1629 = vld [vmem:[%s4 + $0xb0] sm:$0xff]
  %v1630 = vld [vmem:[%s4 + $0xb8] sm:$0xff]
  %v1631 = vld [vmem:[%s4 + $0xc0] sm:$0xff]
  %v1632 = vld [vmem:[%s4 + $0xc8] sm:$0xff]
  %v1633 = vld [vmem:[%s4 + $0xd0] sm:$0xff]
  %v1634 = vld [vmem:[%s4 + $0xd8] sm:$0xff]
  %v1635 = vld [vmem:[%s4 + $0xe0] sm:$0xff]
  %v1636 = vld [vmem:[%s4 + $0xe8] sm:$0xff]
  %v1637 = vld [vmem:[%s4 + $0xf0] sm:$0xff]
  %v1638 = vld [vmem:[%s4 + $0xf8] sm:$0xff]
  %s1639 = scalar_lea.vmem %s4, 256
  %v1640 = vld [vmem:[%s1639] sm:$0xff]
  %v1641 = vld [vmem:[%s1639 + $0x8] sm:$0xff]
  %v1642 = vld [vmem:[%s1639 + $0x10] sm:$0xff]
  %v1643 = vld [vmem:[%s1639 + $0x18] sm:$0xff]
  %v1644 = vld [vmem:[%s1639 + $0x20] sm:$0xff]
  %v1645 = vld [vmem:[%s1639 + $0x28] sm:$0xff]
  %v1646 = vld [vmem:[%s1639 + $0x30] sm:$0xff]
  %v1647 = vld [vmem:[%s1639 + $0x38] sm:$0xff]
  %v1648 = vld [vmem:[%s1639 + $0x40] sm:$0xff]
  %v1649 = vld [vmem:[%s1639 + $0x48] sm:$0xff]
  %v1650 = vld [vmem:[%s1639 + $0x50] sm:$0xff]
  %v1651 = vld [vmem:[%s1639 + $0x58] sm:$0xff]
  %v1652 = vld [vmem:[%s1639 + $0x60] sm:$0xff]
  %v1653 = vld [vmem:[%s1639 + $0x68] sm:$0xff]
  %v1654 = vld [vmem:[%s1639 + $0x70] sm:$0xff]
  %v1655 = vld [vmem:[%s1639 + $0x78] sm:$0xff]
  %v1656 = vld [vmem:[%s1639 + $0x80] sm:$0xff]
  %v1657 = vld [vmem:[%s1639 + $0x88] sm:$0xff]
  %v1658 = vld [vmem:[%s1639 + $0x90] sm:$0xff]
  %v1659 = vld [vmem:[%s1639 + $0x98] sm:$0xff]
  %v1660 = vld [vmem:[%s1639 + $0xa0] sm:$0xff]
  %v1661 = vld [vmem:[%s1639 + $0xa8] sm:$0xff]
  %v1662 = vld [vmem:[%s1639 + $0xb0] sm:$0xff]
  %v1663 = vld [vmem:[%s1639 + $0xb8] sm:$0xff]
  %v1664 = vld [vmem:[%s1639 + $0xc0] sm:$0xff]
  %v1665 = vld [vmem:[%s1639 + $0xc8] sm:$0xff]
  %v1666 = vld [vmem:[%s1639 + $0xd0] sm:$0xff]
  %v1667 = vld [vmem:[%s1639 + $0xd8] sm:$0xff]
  %v1668 = vld [vmem:[%s1639 + $0xe0] sm:$0xff]
  %v1669 = vld [vmem:[%s1639 + $0xe8] sm:$0xff]
  %v1670 = vld [vmem:[%s1639 + $0xf0] sm:$0xff]
  %v1671 = vld [vmem:[%s1639 + $0xf8] sm:$0xff]
  %v1704 = vunpack.c.l.b16 %v1640
  %v1705 = vunpack.c.h.b16 %v1640
  %v1706 = vunpack.c.l.b16 %v1641
  %v1707 = vunpack.c.h.b16 %v1641
  %v1708 = vunpack.c.l.b16 %v1642
  %v1709 = vunpack.c.h.b16 %v1642
  %v1710 = vunpack.c.l.b16 %v1643
  %v1711 = vunpack.c.h.b16 %v1643
  %v1712 = vunpack.c.l.b16 %v1644
  %v1713 = vunpack.c.h.b16 %v1644
  %v1714 = vunpack.c.l.b16 %v1645
  %v1715 = vunpack.c.h.b16 %v1645
  %v1716 = vunpack.c.l.b16 %v1646
  %v1717 = vunpack.c.h.b16 %v1646
  %v1718 = vunpack.c.l.b16 %v1647
  %v1719 = vunpack.c.h.b16 %v1647
  %v1720 = vunpack.c.l.b16 %v1648
  %v1721 = vunpack.c.h.b16 %v1648
  %v1722 = vunpack.c.l.b16 %v1649
  %v1723 = vunpack.c.h.b16 %v1649
  %v1724 = vunpack.c.l.b16 %v1650
  %v1725 = vunpack.c.h.b16 %v1650
  %v1726 = vunpack.c.l.b16 %v1651
  %v1727 = vunpack.c.h.b16 %v1651
  %v1728 = vunpack.c.l.b16 %v1652
  %v1729 = vunpack.c.h.b16 %v1652
  %v1730 = vunpack.c.l.b16 %v1653
  %v1731 = vunpack.c.h.b16 %v1653
  %v1732 = vunpack.c.l.b16 %v1654
  %v1733 = vunpack.c.h.b16 %v1654
  %v1734 = vunpack.c.l.b16 %v1655
  %v1735 = vunpack.c.h.b16 %v1655
  %v1736 = vunpack.c.l.b16 %v1656
  %v1737 = vunpack.c.h.b16 %v1656
  %v1738 = vunpack.c.l.b16 %v1657
  %v1739 = vunpack.c.h.b16 %v1657
  %v1740 = vunpack.c.l.b16 %v1658
  %v1741 = vunpack.c.h.b16 %v1658
  %v1742 = vunpack.c.l.b16 %v1659
  %v1743 = vunpack.c.h.b16 %v1659
  %v1744 = vunpack.c.l.b16 %v1660
  %v1745 = vunpack.c.h.b16 %v1660
  %v1746 = vunpack.c.l.b16 %v1661
  %v1747 = vunpack.c.h.b16 %v1661
  %v1748 = vunpack.c.l.b16 %v1662
  %v1749 = vunpack.c.h.b16 %v1662
  %v1750 = vunpack.c.l.b16 %v1663
  %v1751 = vunpack.c.h.b16 %v1663
  %v1752 = vunpack.c.l.b16 %v1664
  %v1753 = vunpack.c.h.b16 %v1664
  %v1754 = vunpack.c.l.b16 %v1665
  %v1755 = vunpack.c.h.b16 %v1665
  %v1756 = vunpack.c.l.b16 %v1666
  %v1757 = vunpack.c.h.b16 %v1666
  %v1758 = vunpack.c.l.b16 %v1667
  %v1759 = vunpack.c.h.b16 %v1667
  %v1760 = vunpack.c.l.b16 %v1668
  %v1761 = vunpack.c.h.b16 %v1668
  %v1762 = vunpack.c.l.b16 %v1669
  %v1763 = vunpack.c.h.b16 %v1669
  %v1764 = vunpack.c.l.b16 %v1670
  %v1765 = vunpack.c.h.b16 %v1670
  %v1766 = vunpack.c.l.b16 %v1671
  %v1767 = vunpack.c.h.b16 %v1671
  %v1768 = vpack.c.b16 %v1706, %v1704
  %v1769 = vpack.c.b16 %v1707, %v1705
  %v1770 = vpack.c.b16 %v1710, %v1708
  %v1771 = vpack.c.b16 %v1711, %v1709
  %v1772 = vpack.c.b16 %v1714, %v1712
  %v1773 = vpack.c.b16 %v1715, %v1713
  %v1774 = vpack.c.b16 %v1718, %v1716
  %v1775 = vpack.c.b16 %v1719, %v1717
  %v1776 = vpack.c.b16 %v1722, %v1720
  %v1777 = vpack.c.b16 %v1723, %v1721
  %v1778 = vpack.c.b16 %v1726, %v1724
  %v1779 = vpack.c.b16 %v1727, %v1725
  %v1780 = vpack.c.b16 %v1730, %v1728
  %v1781 = vpack.c.b16 %v1731, %v1729
  %v1782 = vpack.c.b16 %v1734, %v1732
  %v1783 = vpack.c.b16 %v1735, %v1733
  %v1784 = vpack.c.b16 %v1738, %v1736
  %v1785 = vpack.c.b16 %v1739, %v1737
  %v1786 = vpack.c.b16 %v1742, %v1740
  %v1787 = vpack.c.b16 %v1743, %v1741
  %v1788 = vpack.c.b16 %v1746, %v1744
  %v1789 = vpack.c.b16 %v1747, %v1745
  %v1790 = vpack.c.b16 %v1750, %v1748
  %v1791 = vpack.c.b16 %v1751, %v1749
  %v1792 = vpack.c.b16 %v1754, %v1752
  %v1793 = vpack.c.b16 %v1755, %v1753
  %v1794 = vpack.c.b16 %v1758, %v1756
  %v1795 = vpack.c.b16 %v1759, %v1757
  %v1796 = vpack.c.b16 %v1762, %v1760
  %v1797 = vpack.c.b16 %v1763, %v1761
  %v1798 = vpack.c.b16 %v1766, %v1764
  %v1799 = vpack.c.b16 %v1767, %v1765
  %1832 = vmatprep.subr.bf16.mxu0 %v1783
  %1833 = vmatpush1.bf16.msra.mxu0 %v1782
  %1834 = vmatprep.subr.bf16.mxu0 %v1781
  %1835 = vmatpush1.bf16.msra.mxu0 %v1780
  %1836 = vmatprep.subr.bf16.mxu0 %v1779
  %1837 = vmatpush1.bf16.msra.mxu0 %v1778
  %1838 = vmatprep.subr.bf16.mxu0 %v1777
  %1839 = vmatpush1.bf16.msra.mxu0 %v1776
  %1840 = vmatprep.subr.bf16.mxu0 %v1775
  %1841 = vmatpush1.bf16.msra.mxu0 %v1774
  %1842 = vmatprep.subr.bf16.mxu0 %v1773
  %1843 = vmatpush1.bf16.msra.mxu0 %v1772
  %1844 = vmatprep.subr.bf16.mxu0 %v1771
  %1845 = vmatpush1.bf16.msra.mxu0 %v1770
  %1846 = vmatprep.subr.bf16.mxu0 %v1769
  %1847 = vmatpush1.bf16.msra.mxu0 %v1768
  %1848 = vmatprep.subr.bf16.mxu0 %v1799
  %1849 = vmatpush2.bf16.msra.mxu0 %v1798
  %1850 = vmatprep.subr.bf16.mxu0 %v1797
  %1851 = vmatpush2.bf16.msra.mxu0 %v1796
  %1852 = vmatprep.subr.bf16.mxu0 %v1795
  %1853 = vmatpush2.bf16.msra.mxu0 %v1794
  %1854 = vmatprep.subr.bf16.mxu0 %v1793
  %1855 = vmatpush2.bf16.msra.mxu0 %v1792
  %1856 = vmatprep.subr.bf16.mxu0 %v1791
  %1857 = vmatpush2.bf16.msra.mxu0 %v1790
  %1858 = vmatprep.subr.bf16.mxu0 %v1789
  %1859 = vmatpush2.bf16.msra.mxu0 %v1788
  %1860 = vmatprep.subr.bf16.mxu0 %v1787
  %1861 = vmatpush2.bf16.msra.mxu0 %v1786
  %1862 = vmatprep.subr.bf16.mxu0 %v1785
  %1863 = vmatpush2.bf16.msra.mxu0 %v1784
  %1864 = vmatprep.mubr.bf16.mxu0 %v1544
  %1865 = vmatmul.mubr.bf16.gmra.mxu0 %v1543
  %v1866 = vpop.f32.mrf.mxu0
  %v1867 = vadd.f32 0.0, %v1866
  %v1868 = vpop.f32.mrf.mxu0
  %v1869 = vadd.f32 0.0, %v1868
  %v1870 = vpop.f32.mrf.mxu0
  %v1871 = vadd.f32 0.0, %v1870
  %v1872 = vpop.f32.mrf.mxu0
  %v1873 = vadd.f32 0.0, %v1872
  %1874 = vmatprep.mubr.bf16.mxu0 %v1546
  %1875 = vmatmul.mubr.bf16.gmra.mxu0 %v1545
  %v1876 = vpop.f32.mrf.mxu0
  %v1877 = vadd.f32 0.0, %v1876
  %v1878 = vpop.f32.mrf.mxu0
  %v1879 = vadd.f32 0.0, %v1878
  %v1880 = vpop.f32.mrf.mxu0
  %v1881 = vadd.f32 0.0, %v1880
  %v1882 = vpop.f32.mrf.mxu0
  %v1883 = vadd.f32 0.0, %v1882
  %1884 = vmatprep.mubr.bf16.mxu0 %v1548
  %1885 = vmatmul.mubr.bf16.gmra.mxu0 %v1547
  %v1886 = vpop.f32.mrf.mxu0
  %v1887 = vadd.f32 0.0, %v1886
  %v1888 = vpop.f32.mrf.mxu0
  %v1889 = vadd.f32 0.0, %v1888
  %v1890 = vpop.f32.mrf.mxu0
  %v1891 = vadd.f32 0.0, %v1890
  %v1892 = vpop.f32.mrf.mxu0
  %v1893 = vadd.f32 0.0, %v1892
  %1894 = vmatprep.mubr.bf16.mxu0 %v1550
  %1895 = vmatmul.mubr.bf16.gmra.mxu0 %v1549
  %v1896 = vpop.f32.mrf.mxu0
  %v1897 = vadd.f32 0.0, %v1896
  %v1898 = vpop.f32.mrf.mxu0
  %v1899 = vadd.f32 0.0, %v1898
  %v1900 = vpop.f32.mrf.mxu0
  %v1901 = vadd.f32 0.0, %v1900
  %v1902 = vpop.f32.mrf.mxu0
  %v1903 = vadd.f32 0.0, %v1902
  %1904 = vdwg.mxu0
  %v1937 = vunpack.c.l.b16 %v1607
  %v1938 = vunpack.c.h.b16 %v1607
  %v1939 = vunpack.c.l.b16 %v1608
  %v1940 = vunpack.c.h.b16 %v1608
  %v1941 = vunpack.c.l.b16 %v1609
  %v1942 = vunpack.c.h.b16 %v1609
  %v1943 = vunpack.c.l.b16 %v1610
  %v1944 = vunpack.c.h.b16 %v1610
  %v1945 = vunpack.c.l.b16 %v1611
  %v1946 = vunpack.c.h.b16 %v1611
  %v1947 = vunpack.c.l.b16 %v1612
  %v1948 = vunpack.c.h.b16 %v1612
  %v1949 = vunpack.c.l.b16 %v1613
  %v1950 = vunpack.c.h.b16 %v1613
  %v1951 = vunpack.c.l.b16 %v1614
  %v1952 = vunpack.c.h.b16 %v1614
  %v1953 = vunpack.c.l.b16 %v1615
  %v1954 = vunpack.c.h.b16 %v1615
  %v1955 = vunpack.c.l.b16 %v1616
  %v1956 = vunpack.c.h.b16 %v1616
  %v1957 = vunpack.c.l.b16 %v1617
  %v1958 = vunpack.c.h.b16 %v1617
  %v1959 = vunpack.c.l.b16 %v1618
  %v1960 = vunpack.c.h.b16 %v1618
  %v1961 = vunpack.c.l.b16 %v1619
  %v1962 = vunpack.c.h.b16 %v1619
  %v1963 = vunpack.c.l.b16 %v1620
  %v1964 = vunpack.c.h.b16 %v1620
  %v1965 = vunpack.c.l.b16 %v1621
  %v1966 = vunpack.c.h.b16 %v1621
  %v1967 = vunpack.c.l.b16 %v1622
  %v1968 = vunpack.c.h.b16 %v1622
  %v1969 = vunpack.c.l.b16 %v1623
  %v1970 = vunpack.c.h.b16 %v1623
  %v1971 = vunpack.c.l.b16 %v1624
  %v1972 = vunpack.c.h.b16 %v1624
  %v1973 = vunpack.c.l.b16 %v1625
  %v1974 = vunpack.c.h.b16 %v1625
  %v1975 = vunpack.c.l.b16 %v1626
  %v1976 = vunpack.c.h.b16 %v1626
  %v1977 = vunpack.c.l.b16 %v1627
  %v1978 = vunpack.c.h.b16 %v1627
  %v1979 = vunpack.c.l.b16 %v1628
  %v1980 = vunpack.c.h.b16 %v1628
  %v1981 = vunpack.c.l.b16 %v1629
  %v1982 = vunpack.c.h.b16 %v1629
  %v1983 = vunpack.c.l.b16 %v1630
  %v1984 = vunpack.c.h.b16 %v1630
  %v1985 = vunpack.c.l.b16 %v1631
  %v1986 = vunpack.c.h.b16 %v1631
  %v1987 = vunpack.c.l.b16 %v1632
  %v1988 = vunpack.c.h.b16 %v1632
  %v1989 = vunpack.c.l.b16 %v1633
  %v1990 = vunpack.c.h.b16 %v1633
  %v1991 = vunpack.c.l.b16 %v1634
  %v1992 = vunpack.c.h.b16 %v1634
  %v1993 = vunpack.c.l.b16 %v1635
  %v1994 = vunpack.c.h.b16 %v1635
  %v1995 = vunpack.c.l.b16 %v1636
  %v1996 = vunpack.c.h.b16 %v1636
  %v1997 = vunpack.c.l.b16 %v1637
  %v1998 = vunpack.c.h.b16 %v1637
  %v1999 = vunpack.c.l.b16 %v1638
  %v2000 = vunpack.c.h.b16 %v1638
  %v2001 = vpack.c.b16 %v1939, %v1937
  %v2002 = vpack.c.b16 %v1940, %v1938
  %v2003 = vpack.c.b16 %v1943, %v1941
  %v2004 = vpack.c.b16 %v1944, %v1942
  %v2005 = vpack.c.b16 %v1947, %v1945
  %v2006 = vpack.c.b16 %v1948, %v1946
  %v2007 = vpack.c.b16 %v1951, %v1949
  %v2008 = vpack.c.b16 %v1952, %v1950
  %v2009 = vpack.c.b16 %v1955, %v1953
  %v2010 = vpack.c.b16 %v1956, %v1954
  %v2011 = vpack.c.b16 %v1959, %v1957
  %v2012 = vpack.c.b16 %v1960, %v1958
  %v2013 = vpack.c.b16 %v1963, %v1961
  %v2014 = vpack.c.b16 %v1964, %v1962
  %v2015 = vpack.c.b16 %v1967, %v1965
  %v2016 = vpack.c.b16 %v1968, %v1966
  %v2017 = vpack.c.b16 %v1971, %v1969
  %v2018 = vpack.c.b16 %v1972, %v1970
  %v2019 = vpack.c.b16 %v1975, %v1973
  %v2020 = vpack.c.b16 %v1976, %v1974
  %v2021 = vpack.c.b16 %v1979, %v1977
  %v2022 = vpack.c.b16 %v1980, %v1978
  %v2023 = vpack.c.b16 %v1983, %v1981
  %v2024 = vpack.c.b16 %v1984, %v1982
  %v2025 = vpack.c.b16 %v1987, %v1985
  %v2026 = vpack.c.b16 %v1988, %v1986
  %v2027 = vpack.c.b16 %v1991, %v1989
  %v2028 = vpack.c.b16 %v1992, %v1990
  %v2029 = vpack.c.b16 %v1995, %v1993
  %v2030 = vpack.c.b16 %v1996, %v1994
  %v2031 = vpack.c.b16 %v1999, %v1997
  %v2032 = vpack.c.b16 %v2000, %v1998
  %2065 = vmatprep.subr.bf16.mxu0 %v2016
  %2066 = vmatpush1.bf16.msra.mxu0 %v2015
  %2067 = vmatprep.subr.bf16.mxu0 %v2014
  %2068 = vmatpush1.bf16.msra.mxu0 %v2013
  %2069 = vmatprep.subr.bf16.mxu0 %v2012
  %2070 = vmatpush1.bf16.msra.mxu0 %v2011
  %2071 = vmatprep.subr.bf16.mxu0 %v2010
  %2072 = vmatpush1.bf16.msra.mxu0 %v2009
  %2073 = vmatprep.subr.bf16.mxu0 %v2008
  %2074 = vmatpush1.bf16.msra.mxu0 %v2007
  %2075 = vmatprep.subr.bf16.mxu0 %v2006
  %2076 = vmatpush1.bf16.msra.mxu0 %v2005
  %2077 = vmatprep.subr.bf16.mxu0 %v2004
  %2078 = vmatpush1.bf16.msra.mxu0 %v2003
  %2079 = vmatprep.subr.bf16.mxu0 %v2002
  %2080 = vmatpush1.bf16.msra.mxu0 %v2001
  %2081 = vmatprep.subr.bf16.mxu0 %v2032
  %2082 = vmatpush2.bf16.msra.mxu0 %v2031
  %2083 = vmatprep.subr.bf16.mxu0 %v2030
  %2084 = vmatpush2.bf16.msra.mxu0 %v2029
  %2085 = vmatprep.subr.bf16.mxu0 %v2028
  %2086 = vmatpush2.bf16.msra.mxu0 %v2027
  %2087 = vmatprep.subr.bf16.mxu0 %v2026
  %2088 = vmatpush2.bf16.msra.mxu0 %v2025
  %2089 = vmatprep.subr.bf16.mxu0 %v2024
  %2090 = vmatpush2.bf16.msra.mxu0 %v2023
  %2091 = vmatprep.subr.bf16.mxu0 %v2022
  %2092 = vmatpush2.bf16.msra.mxu0 %v2021
  %2093 = vmatprep.subr.bf16.mxu0 %v2020
  %2094 = vmatpush2.bf16.msra.mxu0 %v2019
  %2095 = vmatprep.subr.bf16.mxu0 %v2018
  %2096 = vmatpush2.bf16.msra.mxu0 %v2017
  %2097 = vmatprep.mubr.bf16.mxu0 %v1536
  %2098 = vmatmul.mubr.bf16.gmra.mxu0 %v1535
  %v2099 = vpop.f32.mrf.mxu0
  %v2100 = vadd.f32 %v1867, %v2099
  %v2101 = vpop.f32.mrf.mxu0
  %v2102 = vadd.f32 %v1869, %v2101
  %v2103 = vpop.f32.mrf.mxu0
  %v2104 = vadd.f32 %v1871, %v2103
  %v2105 = vpop.f32.mrf.mxu0
  %v2106 = vadd.f32 %v1873, %v2105
  %2107 = vmatprep.mubr.bf16.mxu0 %v1538
  %2108 = vmatmul.mubr.bf16.gmra.mxu0 %v1537
  %v2109 = vpop.f32.mrf.mxu0
  %v2110 = vadd.f32 %v1877, %v2109
  %v2111 = vpop.f32.mrf.mxu0
  %v2112 = vadd.f32 %v1879, %v2111
  %v2113 = vpop.f32.mrf.mxu0
  %v2114 = vadd.f32 %v1881, %v2113
  %v2115 = vpop.f32.mrf.mxu0
  %v2116 = vadd.f32 %v1883, %v2115
  %2117 = vmatprep.mubr.bf16.mxu0 %v1540
  %2118 = vmatmul.mubr.bf16.gmra.mxu0 %v1539
  %v2119 = vpop.f32.mrf.mxu0
  %v2120 = vadd.f32 %v1887, %v2119
  %v2121 = vpop.f32.mrf.mxu0
  %v2122 = vadd.f32 %v1889, %v2121
  %v2123 = vpop.f32.mrf.mxu0
  %v2124 = vadd.f32 %v1891, %v2123
  %v2125 = vpop.f32.mrf.mxu0
  %v2126 = vadd.f32 %v1893, %v2125
  %2127 = vmatprep.mubr.bf16.mxu0 %v1542
  %2128 = vmatmul.mubr.bf16.gmra.mxu0 %v1541
  %v2129 = vpop.f32.mrf.mxu0
  %v2130 = vadd.f32 %v1897, %v2129
  %v2131 = vpop.f32.mrf.mxu0
  %v2132 = vadd.f32 %v1899, %v2131
  %v2133 = vpop.f32.mrf.mxu0
  %v2134 = vadd.f32 %v1901, %v2133
  %v2135 = vpop.f32.mrf.mxu0
  %v2136 = vadd.f32 %v1903, %v2135
  %2137 = vdwg.mxu0
  %s2138 = scalar_lea.vmem %s4, 512
  %v2139 = vld [vmem:[%s2138] sm:$0xff]
  %v2140 = vld [vmem:[%s2138 + $0x8] sm:$0xff]
  %v2141 = vld [vmem:[%s2138 + $0x10] sm:$0xff]
  %v2142 = vld [vmem:[%s2138 + $0x18] sm:$0xff]
  %v2143 = vld [vmem:[%s2138 + $0x20] sm:$0xff]
  %v2144 = vld [vmem:[%s2138 + $0x28] sm:$0xff]
  %v2145 = vld [vmem:[%s2138 + $0x30] sm:$0xff]
  %v2146 = vld [vmem:[%s2138 + $0x38] sm:$0xff]
  %v2147 = vld [vmem:[%s2138 + $0x40] sm:$0xff]
  %v2148 = vld [vmem:[%s2138 + $0x48] sm:$0xff]
  %v2149 = vld [vmem:[%s2138 + $0x50] sm:$0xff]
  %v2150 = vld [vmem:[%s2138 + $0x58] sm:$0xff]
  %v2151 = vld [vmem:[%s2138 + $0x60] sm:$0xff]
  %v2152 = vld [vmem:[%s2138 + $0x68] sm:$0xff]
  %v2153 = vld [vmem:[%s2138 + $0x70] sm:$0xff]
  %v2154 = vld [vmem:[%s2138 + $0x78] sm:$0xff]
  %v2155 = vld [vmem:[%s2138 + $0x80] sm:$0xff]
  %v2156 = vld [vmem:[%s2138 + $0x88] sm:$0xff]
  %v2157 = vld [vmem:[%s2138 + $0x90] sm:$0xff]
  %v2158 = vld [vmem:[%s2138 + $0x98] sm:$0xff]
  %v2159 = vld [vmem:[%s2138 + $0xa0] sm:$0xff]
  %v2160 = vld [vmem:[%s2138 + $0xa8] sm:$0xff]
  %v2161 = vld [vmem:[%s2138 + $0xb0] sm:$0xff]
  %v2162 = vld [vmem:[%s2138 + $0xb8] sm:$0xff]
  %v2163 = vld [vmem:[%s2138 + $0xc0] sm:$0xff]
  %v2164 = vld [vmem:[%s2138 + $0xc8] sm:$0xff]
  %v2165 = vld [vmem:[%s2138 + $0xd0] sm:$0xff]
  %v2166 = vld [vmem:[%s2138 + $0xd8] sm:$0xff]
  %v2167 = vld [vmem:[%s2138 + $0xe0] sm:$0xff]
  %v2168 = vld [vmem:[%s2138 + $0xe8] sm:$0xff]
  %v2169 = vld [vmem:[%s2138 + $0xf0] sm:$0xff]
  %v2170 = vld [vmem:[%s2138 + $0xf8] sm:$0xff]
  %v2203 = vunpack.c.l.b16 %v2139
  %v2204 = vunpack.c.h.b16 %v2139
  %v2205 = vunpack.c.l.b16 %v2140
  %v2206 = vunpack.c.h.b16 %v2140
  %v2207 = vunpack.c.l.b16 %v2141
  %v2208 = vunpack.c.h.b16 %v2141
  %v2209 = vunpack.c.l.b16 %v2142
  %v2210 = vunpack.c.h.b16 %v2142
  %v2211 = vunpack.c.l.b16 %v2143
  %v2212 = vunpack.c.h.b16 %v2143
  %v2213 = vunpack.c.l.b16 %v2144
  %v2214 = vunpack.c.h.b16 %v2144
  %v2215 = vunpack.c.l.b16 %v2145
  %v2216 = vunpack.c.h.b16 %v2145
  %v2217 = vunpack.c.l.b16 %v2146
  %v2218 = vunpack.c.h.b16 %v2146
  %v2219 = vunpack.c.l.b16 %v2147
  %v2220 = vunpack.c.h.b16 %v2147
  %v2221 = vunpack.c.l.b16 %v2148
  %v2222 = vunpack.c.h.b16 %v2148
  %v2223 = vunpack.c.l.b16 %v2149
  %v2224 = vunpack.c.h.b16 %v2149
  %v2225 = vunpack.c.l.b16 %v2150
  %v2226 = vunpack.c.h.b16 %v2150
  %v2227 = vunpack.c.l.b16 %v2151
  %v2228 = vunpack.c.h.b16 %v2151
  %v2229 = vunpack.c.l.b16 %v2152
  %v2230 = vunpack.c.h.b16 %v2152
  %v2231 = vunpack.c.l.b16 %v2153
  %v2232 = vunpack.c.h.b16 %v2153
  %v2233 = vunpack.c.l.b16 %v2154
  %v2234 = vunpack.c.h.b16 %v2154
  %v2235 = vunpack.c.l.b16 %v2155
  %v2236 = vunpack.c.h.b16 %v2155
  %v2237 = vunpack.c.l.b16 %v2156
  %v2238 = vunpack.c.h.b16 %v2156
  %v2239 = vunpack.c.l.b16 %v2157
  %v2240 = vunpack.c.h.b16 %v2157
  %v2241 = vunpack.c.l.b16 %v2158
  %v2242 = vunpack.c.h.b16 %v2158
  %v2243 = vunpack.c.l.b16 %v2159
  %v2244 = vunpack.c.h.b16 %v2159
  %v2245 = vunpack.c.l.b16 %v2160
  %v2246 = vunpack.c.h.b16 %v2160
  %v2247 = vunpack.c.l.b16 %v2161
  %v2248 = vunpack.c.h.b16 %v2161
  %v2249 = vunpack.c.l.b16 %v2162
  %v2250 = vunpack.c.h.b16 %v2162
  %v2251 = vunpack.c.l.b16 %v2163
  %v2252 = vunpack.c.h.b16 %v2163
  %v2253 = vunpack.c.l.b16 %v2164
  %v2254 = vunpack.c.h.b16 %v2164
  %v2255 = vunpack.c.l.b16 %v2165
  %v2256 = vunpack.c.h.b16 %v2165
  %v2257 = vunpack.c.l.b16 %v2166
  %v2258 = vunpack.c.h.b16 %v2166
  %v2259 = vunpack.c.l.b16 %v2167
  %v2260 = vunpack.c.h.b16 %v2167
  %v2261 = vunpack.c.l.b16 %v2168
  %v2262 = vunpack.c.h.b16 %v2168
  %v2263 = vunpack.c.l.b16 %v2169
  %v2264 = vunpack.c.h.b16 %v2169
  %v2265 = vunpack.c.l.b16 %v2170
  %v2266 = vunpack.c.h.b16 %v2170
  %v2267 = vpack.c.b16 %v2205, %v2203
  %v2268 = vpack.c.b16 %v2206, %v2204
  %v2269 = vpack.c.b16 %v2209, %v2207
  %v2270 = vpack.c.b16 %v2210, %v2208
  %v2271 = vpack.c.b16 %v2213, %v2211
  %v2272 = vpack.c.b16 %v2214, %v2212
  %v2273 = vpack.c.b16 %v2217, %v2215
  %v2274 = vpack.c.b16 %v2218, %v2216
  %v2275 = vpack.c.b16 %v2221, %v2219
  %v2276 = vpack.c.b16 %v2222, %v2220
  %v2277 = vpack.c.b16 %v2225, %v2223
  %v2278 = vpack.c.b16 %v2226, %v2224
  %v2279 = vpack.c.b16 %v2229, %v2227
  %v2280 = vpack.c.b16 %v2230, %v2228
  %v2281 = vpack.c.b16 %v2233, %v2231
  %v2282 = vpack.c.b16 %v2234, %v2232
  %v2283 = vpack.c.b16 %v2237, %v2235
  %v2284 = vpack.c.b16 %v2238, %v2236
  %v2285 = vpack.c.b16 %v2241, %v2239
  %v2286 = vpack.c.b16 %v2242, %v2240
  %v2287 = vpack.c.b16 %v2245, %v2243
  %v2288 = vpack.c.b16 %v2246, %v2244
  %v2289 = vpack.c.b16 %v2249, %v2247
  %v2290 = vpack.c.b16 %v2250, %v2248
  %v2291 = vpack.c.b16 %v2253, %v2251
  %v2292 = vpack.c.b16 %v2254, %v2252
  %v2293 = vpack.c.b16 %v2257, %v2255
  %v2294 = vpack.c.b16 %v2258, %v2256
  %v2295 = vpack.c.b16 %v2261, %v2259
  %v2296 = vpack.c.b16 %v2262, %v2260
  %v2297 = vpack.c.b16 %v2265, %v2263
  %v2298 = vpack.c.b16 %v2266, %v2264
  %2331 = vmatprep.subr.bf16.mxu0 %v2282
  %2332 = vmatpush1.bf16.msra.mxu0 %v2281
  %2333 = vmatprep.subr.bf16.mxu0 %v2280
  %2334 = vmatpush1.bf16.msra.mxu0 %v2279
  %2335 = vmatprep.subr.bf16.mxu0 %v2278
  %2336 = vmatpush1.bf16.msra.mxu0 %v2277
  %2337 = vmatprep.subr.bf16.mxu0 %v2276
  %2338 = vmatpush1.bf16.msra.mxu0 %v2275
  %2339 = vmatprep.subr.bf16.mxu0 %v2274
  %2340 = vmatpush1.bf16.msra.mxu0 %v2273
  %2341 = vmatprep.subr.bf16.mxu0 %v2272
  %2342 = vmatpush1.bf16.msra.mxu0 %v2271
  %2343 = vmatprep.subr.bf16.mxu0 %v2270
  %2344 = vmatpush1.bf16.msra.mxu0 %v2269
  %2345 = vmatprep.subr.bf16.mxu0 %v2268
  %2346 = vmatpush1.bf16.msra.mxu0 %v2267
  %2347 = vmatprep.subr.bf16.mxu0 %v2298
  %2348 = vmatpush2.bf16.msra.mxu0 %v2297
  %2349 = vmatprep.subr.bf16.mxu0 %v2296
  %2350 = vmatpush2.bf16.msra.mxu0 %v2295
  %2351 = vmatprep.subr.bf16.mxu0 %v2294
  %2352 = vmatpush2.bf16.msra.mxu0 %v2293
  %2353 = vmatprep.subr.bf16.mxu0 %v2292
  %2354 = vmatpush2.bf16.msra.mxu0 %v2291
  %2355 = vmatprep.subr.bf16.mxu0 %v2290
  %2356 = vmatpush2.bf16.msra.mxu0 %v2289
  %2357 = vmatprep.subr.bf16.mxu0 %v2288
  %2358 = vmatpush2.bf16.msra.mxu0 %v2287
  %2359 = vmatprep.subr.bf16.mxu0 %v2286
  %2360 = vmatpush2.bf16.msra.mxu0 %v2285
  %2361 = vmatprep.subr.bf16.mxu0 %v2284
  %2362 = vmatpush2.bf16.msra.mxu0 %v2283
  %2363 = vmatprep.mubr.bf16.mxu0 %v1552
  %2364 = vmatmul.mubr.bf16.gmra.mxu0 %v1551
  %v2365 = vpop.f32.mrf.mxu0
  %v2366 = vadd.f32 0.0, %v2365
  %v2367 = vpop.f32.mrf.mxu0
  %v2368 = vadd.f32 0.0, %v2367
  %v2369 = vpop.f32.mrf.mxu0
  %v2370 = vadd.f32 0.0, %v2369
  %v2371 = vpop.f32.mrf.mxu0
  %v2372 = vadd.f32 0.0, %v2371
  %2373 = vmatprep.mubr.bf16.mxu0 %v1554
  %2374 = vmatmul.mubr.bf16.gmra.mxu0 %v1553
  %v2375 = vpop.f32.mrf.mxu0
  %v2376 = vadd.f32 0.0, %v2375
  %v2377 = vpop.f32.mrf.mxu0
  %v2378 = vadd.f32 0.0, %v2377
  %v2379 = vpop.f32.mrf.mxu0
  %v2380 = vadd.f32 0.0, %v2379
  %v2381 = vpop.f32.mrf.mxu0
  %v2382 = vadd.f32 0.0, %v2381
  %2383 = vmatprep.mubr.bf16.mxu0 %v1556
  %2384 = vmatmul.mubr.bf16.gmra.mxu0 %v1555
  %v2385 = vpop.f32.mrf.mxu0
  %v2386 = vadd.f32 0.0, %v2385
  %v2387 = vpop.f32.mrf.mxu0
  %v2388 = vadd.f32 0.0, %v2387
  %v2389 = vpop.f32.mrf.mxu0
  %v2390 = vadd.f32 0.0, %v2389
  %v2391 = vpop.f32.mrf.mxu0
  %v2392 = vadd.f32 0.0, %v2391
  %2393 = vmatprep.mubr.bf16.mxu0 %v1558
  %2394 = vmatmul.mubr.bf16.gmra.mxu0 %v1557
  %v2395 = vpop.f32.mrf.mxu0
  %v2396 = vadd.f32 0.0, %v2395
  %v2397 = vpop.f32.mrf.mxu0
  %v2398 = vadd.f32 0.0, %v2397
  %v2399 = vpop.f32.mrf.mxu0
  %v2400 = vadd.f32 0.0, %v2399
  %v2401 = vpop.f32.mrf.mxu0
  %v2402 = vadd.f32 0.0, %v2401
  %2403 = vdwg.mxu0
  %v2404 = vadd.f32 %v2100, %v2366
  %v2405 = vadd.f32 %v2102, %v2368
  %v2406 = vadd.f32 %v2104, %v2370
  %v2407 = vadd.f32 %v2106, %v2372
  %v2408 = vadd.f32 %v2110, %v2376
  %v2409 = vadd.f32 %v2112, %v2378
  %v2410 = vadd.f32 %v2114, %v2380
  %v2411 = vadd.f32 %v2116, %v2382
  %v2412 = vadd.f32 %v2120, %v2386
  %v2413 = vadd.f32 %v2122, %v2388
  %v2414 = vadd.f32 %v2124, %v2390
  %v2415 = vadd.f32 %v2126, %v2392
  %v2416 = vadd.f32 %v2130, %v2396
  %v2417 = vadd.f32 %v2132, %v2398
  %v2418 = vadd.f32 %v2134, %v2400
  %v2419 = vadd.f32 %v2136, %v2402
  %s2420 = scalar_lea.vmem %s4, 768
  %v2421 = vld [vmem:[%s2420] sm:$0xff]
  %v2422 = vld [vmem:[%s2420 + $0x8] sm:$0xff]
  %v2423 = vld [vmem:[%s2420 + $0x10] sm:$0xff]
  %v2424 = vld [vmem:[%s2420 + $0x18] sm:$0xff]
  %v2425 = vld [vmem:[%s2420 + $0x20] sm:$0xff]
  %v2426 = vld [vmem:[%s2420 + $0x28] sm:$0xff]
  %v2427 = vld [vmem:[%s2420 + $0x30] sm:$0xff]
  %v2428 = vld [vmem:[%s2420 + $0x38] sm:$0xff]
  %v2429 = vld [vmem:[%s2420 + $0x40] sm:$0xff]
  %v2430 = vld [vmem:[%s2420 + $0x48] sm:$0xff]
  %v2431 = vld [vmem:[%s2420 + $0x50] sm:$0xff]
  %v2432 = vld [vmem:[%s2420 + $0x58] sm:$0xff]
  %v2433 = vld [vmem:[%s2420 + $0x60] sm:$0xff]
  %v2434 = vld [vmem:[%s2420 + $0x68] sm:$0xff]
  %v2435 = vld [vmem:[%s2420 + $0x70] sm:$0xff]
  %v2436 = vld [vmem:[%s2420 + $0x78] sm:$0xff]
  %v2437 = vld [vmem:[%s2420 + $0x80] sm:$0xff]
  %v2438 = vld [vmem:[%s2420 + $0x88] sm:$0xff]
  %v2439 = vld [vmem:[%s2420 + $0x90] sm:$0xff]
  %v2440 = vld [vmem:[%s2420 + $0x98] sm:$0xff]
  %v2441 = vld [vmem:[%s2420 + $0xa0] sm:$0xff]
  %v2442 = vld [vmem:[%s2420 + $0xa8] sm:$0xff]
  %v2443 = vld [vmem:[%s2420 + $0xb0] sm:$0xff]
  %v2444 = vld [vmem:[%s2420 + $0xb8] sm:$0xff]
  %v2445 = vld [vmem:[%s2420 + $0xc0] sm:$0xff]
  %v2446 = vld [vmem:[%s2420 + $0xc8] sm:$0xff]
  %v2447 = vld [vmem:[%s2420 + $0xd0] sm:$0xff]
  %v2448 = vld [vmem:[%s2420 + $0xd8] sm:$0xff]
  %v2449 = vld [vmem:[%s2420 + $0xe0] sm:$0xff]
  %v2450 = vld [vmem:[%s2420 + $0xe8] sm:$0xff]
  %v2451 = vld [vmem:[%s2420 + $0xf0] sm:$0xff]
  %v2452 = vld [vmem:[%s2420 + $0xf8] sm:$0xff]
  %v2485 = vunpack.c.l.b16 %v2421
  %v2486 = vunpack.c.h.b16 %v2421
  %v2487 = vunpack.c.l.b16 %v2422
  %v2488 = vunpack.c.h.b16 %v2422
  %v2489 = vunpack.c.l.b16 %v2423
  %v2490 = vunpack.c.h.b16 %v2423
  %v2491 = vunpack.c.l.b16 %v2424
  %v2492 = vunpack.c.h.b16 %v2424
  %v2493 = vunpack.c.l.b16 %v2425
  %v2494 = vunpack.c.h.b16 %v2425
  %v2495 = vunpack.c.l.b16 %v2426
  %v2496 = vunpack.c.h.b16 %v2426
  %v2497 = vunpack.c.l.b16 %v2427
  %v2498 = vunpack.c.h.b16 %v2427
  %v2499 = vunpack.c.l.b16 %v2428
  %v2500 = vunpack.c.h.b16 %v2428
  %v2501 = vunpack.c.l.b16 %v2429
  %v2502 = vunpack.c.h.b16 %v2429
  %v2503 = vunpack.c.l.b16 %v2430
  %v2504 = vunpack.c.h.b16 %v2430
  %v2505 = vunpack.c.l.b16 %v2431
  %v2506 = vunpack.c.h.b16 %v2431
  %v2507 = vunpack.c.l.b16 %v2432
  %v2508 = vunpack.c.h.b16 %v2432
  %v2509 = vunpack.c.l.b16 %v2433
  %v2510 = vunpack.c.h.b16 %v2433
  %v2511 = vunpack.c.l.b16 %v2434
  %v2512 = vunpack.c.h.b16 %v2434
  %v2513 = vunpack.c.l.b16 %v2435
  %v2514 = vunpack.c.h.b16 %v2435
  %v2515 = vunpack.c.l.b16 %v2436
  %v2516 = vunpack.c.h.b16 %v2436
  %v2517 = vunpack.c.l.b16 %v2437
  %v2518 = vunpack.c.h.b16 %v2437
  %v2519 = vunpack.c.l.b16 %v2438
  %v2520 = vunpack.c.h.b16 %v2438
  %v2521 = vunpack.c.l.b16 %v2439
  %v2522 = vunpack.c.h.b16 %v2439
  %v2523 = vunpack.c.l.b16 %v2440
  %v2524 = vunpack.c.h.b16 %v2440
  %v2525 = vunpack.c.l.b16 %v2441
  %v2526 = vunpack.c.h.b16 %v2441
  %v2527 = vunpack.c.l.b16 %v2442
  %v2528 = vunpack.c.h.b16 %v2442
  %v2529 = vunpack.c.l.b16 %v2443
  %v2530 = vunpack.c.h.b16 %v2443
  %v2531 = vunpack.c.l.b16 %v2444
  %v2532 = vunpack.c.h.b16 %v2444
  %v2533 = vunpack.c.l.b16 %v2445
  %v2534 = vunpack.c.h.b16 %v2445
  %v2535 = vunpack.c.l.b16 %v2446
  %v2536 = vunpack.c.h.b16 %v2446
  %v2537 = vunpack.c.l.b16 %v2447
  %v2538 = vunpack.c.h.b16 %v2447
  %v2539 = vunpack.c.l.b16 %v2448
  %v2540 = vunpack.c.h.b16 %v2448
  %v2541 = vunpack.c.l.b16 %v2449
  %v2542 = vunpack.c.h.b16 %v2449
  %v2543 = vunpack.c.l.b16 %v2450
  %v2544 = vunpack.c.h.b16 %v2450
  %v2545 = vunpack.c.l.b16 %v2451
  %v2546 = vunpack.c.h.b16 %v2451
  %v2547 = vunpack.c.l.b16 %v2452
  %v2548 = vunpack.c.h.b16 %v2452
  %v2549 = vpack.c.b16 %v2487, %v2485
  %v2550 = vpack.c.b16 %v2488, %v2486
  %v2551 = vpack.c.b16 %v2491, %v2489
  %v2552 = vpack.c.b16 %v2492, %v2490
  %v2553 = vpack.c.b16 %v2495, %v2493
  %v2554 = vpack.c.b16 %v2496, %v2494
  %v2555 = vpack.c.b16 %v2499, %v2497
  %v2556 = vpack.c.b16 %v2500, %v2498
  %v2557 = vpack.c.b16 %v2503, %v2501
  %v2558 = vpack.c.b16 %v2504, %v2502
  %v2559 = vpack.c.b16 %v2507, %v2505
  %v2560 = vpack.c.b16 %v2508, %v2506
  %v2561 = vpack.c.b16 %v2511, %v2509
  %v2562 = vpack.c.b16 %v2512, %v2510
  %v2563 = vpack.c.b16 %v2515, %v2513
  %v2564 = vpack.c.b16 %v2516, %v2514
  %v2565 = vpack.c.b16 %v2519, %v2517
  %v2566 = vpack.c.b16 %v2520, %v2518
  %v2567 = vpack.c.b16 %v2523, %v2521
  %v2568 = vpack.c.b16 %v2524, %v2522
  %v2569 = vpack.c.b16 %v2527, %v2525
  %v2570 = vpack.c.b16 %v2528, %v2526
  %v2571 = vpack.c.b16 %v2531, %v2529
  %v2572 = vpack.c.b16 %v2532, %v2530
  %v2573 = vpack.c.b16 %v2535, %v2533
  %v2574 = vpack.c.b16 %v2536, %v2534
  %v2575 = vpack.c.b16 %v2539, %v2537
  %v2576 = vpack.c.b16 %v2540, %v2538
  %v2577 = vpack.c.b16 %v2543, %v2541
  %v2578 = vpack.c.b16 %v2544, %v2542
  %v2579 = vpack.c.b16 %v2547, %v2545
  %v2580 = vpack.c.b16 %v2548, %v2546
  %2613 = vmatprep.subr.bf16.mxu0 %v2564
  %2614 = vmatpush1.bf16.msra.mxu0 %v2563
  %2615 = vmatprep.subr.bf16.mxu0 %v2562
  %2616 = vmatpush1.bf16.msra.mxu0 %v2561
  %2617 = vmatprep.subr.bf16.mxu0 %v2560
  %2618 = vmatpush1.bf16.msra.mxu0 %v2559
  %2619 = vmatprep.subr.bf16.mxu0 %v2558
  %2620 = vmatpush1.bf16.msra.mxu0 %v2557
  %2621 = vmatprep.subr.bf16.mxu0 %v2556
  %2622 = vmatpush1.bf16.msra.mxu0 %v2555
  %2623 = vmatprep.subr.bf16.mxu0 %v2554
  %2624 = vmatpush1.bf16.msra.mxu0 %v2553
  %2625 = vmatprep.subr.bf16.mxu0 %v2552
  %2626 = vmatpush1.bf16.msra.mxu0 %v2551
  %2627 = vmatprep.subr.bf16.mxu0 %v2550
  %2628 = vmatpush1.bf16.msra.mxu0 %v2549
  %2629 = vmatprep.subr.bf16.mxu0 %v2580
  %2630 = vmatpush2.bf16.msra.mxu0 %v2579
  %2631 = vmatprep.subr.bf16.mxu0 %v2578
  %2632 = vmatpush2.bf16.msra.mxu0 %v2577
  %2633 = vmatprep.subr.bf16.mxu0 %v2576
  %2634 = vmatpush2.bf16.msra.mxu0 %v2575
  %2635 = vmatprep.subr.bf16.mxu0 %v2574
  %2636 = vmatpush2.bf16.msra.mxu0 %v2573
  %2637 = vmatprep.subr.bf16.mxu0 %v2572
  %2638 = vmatpush2.bf16.msra.mxu0 %v2571
  %2639 = vmatprep.subr.bf16.mxu0 %v2570
  %2640 = vmatpush2.bf16.msra.mxu0 %v2569
  %2641 = vmatprep.subr.bf16.mxu0 %v2568
  %2642 = vmatpush2.bf16.msra.mxu0 %v2567
  %2643 = vmatprep.subr.bf16.mxu0 %v2566
  %2644 = vmatpush2.bf16.msra.mxu0 %v2565
  %2645 = vmatprep.mubr.bf16.mxu0 %v1560
  %2646 = vmatmul.mubr.bf16.gmra.mxu0 %v1559
  %v2647 = vpop.f32.mrf.mxu0
  %v2648 = vadd.f32 0.0, %v2647
  %v2649 = vpop.f32.mrf.mxu0
  %v2650 = vadd.f32 0.0, %v2649
  %v2651 = vpop.f32.mrf.mxu0
  %v2652 = vadd.f32 0.0, %v2651
  %v2653 = vpop.f32.mrf.mxu0
  %v2654 = vadd.f32 0.0, %v2653
  %2655 = vmatprep.mubr.bf16.mxu0 %v1562
  %2656 = vmatmul.mubr.bf16.gmra.mxu0 %v1561
  %v2657 = vpop.f32.mrf.mxu0
  %v2658 = vadd.f32 0.0, %v2657
  %v2659 = vpop.f32.mrf.mxu0
  %v2660 = vadd.f32 0.0, %v2659
  %v2661 = vpop.f32.mrf.mxu0
  %v2662 = vadd.f32 0.0, %v2661
  %v2663 = vpop.f32.mrf.mxu0
  %v2664 = vadd.f32 0.0, %v2663
  %2665 = vmatprep.mubr.bf16.mxu0 %v1564
  %2666 = vmatmul.mubr.bf16.gmra.mxu0 %v1563
  %v2667 = vpop.f32.mrf.mxu0
  %v2668 = vadd.f32 0.0, %v2667
  %v2669 = vpop.f32.mrf.mxu0
  %v2670 = vadd.f32 0.0, %v2669
  %v2671 = vpop.f32.mrf.mxu0
  %v2672 = vadd.f32 0.0, %v2671
  %v2673 = vpop.f32.mrf.mxu0
  %v2674 = vadd.f32 0.0, %v2673
  %2675 = vmatprep.mubr.bf16.mxu0 %v1566
  %2676 = vmatmul.mubr.bf16.gmra.mxu0 %v1565
  %v2677 = vpop.f32.mrf.mxu0
  %v2678 = vadd.f32 0.0, %v2677
  %v2679 = vpop.f32.mrf.mxu0
  %v2680 = vadd.f32 0.0, %v2679
  %v2681 = vpop.f32.mrf.mxu0
  %v2682 = vadd.f32 0.0, %v2681
  %v2683 = vpop.f32.mrf.mxu0
  %v2684 = vadd.f32 0.0, %v2683
  %2685 = vdwg.mxu0
  %v2686 = vadd.f32 %v2404, %v2648
  %v2687 = vadd.f32 %v2405, %v2650
  %v2688 = vadd.f32 %v2406, %v2652
  %v2689 = vadd.f32 %v2407, %v2654
  %v2690 = vadd.f32 %v2408, %v2658
  %v2691 = vadd.f32 %v2409, %v2660
  %v2692 = vadd.f32 %v2410, %v2662
  %v2693 = vadd.f32 %v2411, %v2664
  %v2694 = vadd.f32 %v2412, %v2668
  %v2695 = vadd.f32 %v2413, %v2670
  %v2696 = vadd.f32 %v2414, %v2672
  %v2697 = vadd.f32 %v2415, %v2674
  %v2698 = vadd.f32 %v2416, %v2678
  %v2699 = vadd.f32 %v2417, %v2680
  %v2700 = vadd.f32 %v2418, %v2682
  %v2701 = vadd.f32 %v2419, %v2684
  %s2702 = scalar_lea.vmem %s4, 1024
  %v2703 = vld [vmem:[%s2702] sm:$0xff]
  %v2704 = vld [vmem:[%s2702 + $0x8] sm:$0xff]
  %v2705 = vld [vmem:[%s2702 + $0x10] sm:$0xff]
  %v2706 = vld [vmem:[%s2702 + $0x18] sm:$0xff]
  %v2707 = vld [vmem:[%s2702 + $0x20] sm:$0xff]
  %v2708 = vld [vmem:[%s2702 + $0x28] sm:$0xff]
  %v2709 = vld [vmem:[%s2702 + $0x30] sm:$0xff]
  %v2710 = vld [vmem:[%s2702 + $0x38] sm:$0xff]
  %v2711 = vld [vmem:[%s2702 + $0x40] sm:$0xff]
  %v2712 = vld [vmem:[%s2702 + $0x48] sm:$0xff]
  %v2713 = vld [vmem:[%s2702 + $0x50] sm:$0xff]
  %v2714 = vld [vmem:[%s2702 + $0x58] sm:$0xff]
  %v2715 = vld [vmem:[%s2702 + $0x60] sm:$0xff]
  %v2716 = vld [vmem:[%s2702 + $0x68] sm:$0xff]
  %v2717 = vld [vmem:[%s2702 + $0x70] sm:$0xff]
  %v2718 = vld [vmem:[%s2702 + $0x78] sm:$0xff]
  %v2719 = vld [vmem:[%s2702 + $0x80] sm:$0xff]
  %v2720 = vld [vmem:[%s2702 + $0x88] sm:$0xff]
  %v2721 = vld [vmem:[%s2702 + $0x90] sm:$0xff]
  %v2722 = vld [vmem:[%s2702 + $0x98] sm:$0xff]
  %v2723 = vld [vmem:[%s2702 + $0xa0] sm:$0xff]
  %v2724 = vld [vmem:[%s2702 + $0xa8] sm:$0xff]
  %v2725 = vld [vmem:[%s2702 + $0xb0] sm:$0xff]
  %v2726 = vld [vmem:[%s2702 + $0xb8] sm:$0xff]
  %v2727 = vld [vmem:[%s2702 + $0xc0] sm:$0xff]
  %v2728 = vld [vmem:[%s2702 + $0xc8] sm:$0xff]
  %v2729 = vld [vmem:[%s2702 + $0xd0] sm:$0xff]
  %v2730 = vld [vmem:[%s2702 + $0xd8] sm:$0xff]
  %v2731 = vld [vmem:[%s2702 + $0xe0] sm:$0xff]
  %v2732 = vld [vmem:[%s2702 + $0xe8] sm:$0xff]
  %v2733 = vld [vmem:[%s2702 + $0xf0] sm:$0xff]
  %v2734 = vld [vmem:[%s2702 + $0xf8] sm:$0xff]
  %v2767 = vunpack.c.l.b16 %v2703
  %v2768 = vunpack.c.h.b16 %v2703
  %v2769 = vunpack.c.l.b16 %v2704
  %v2770 = vunpack.c.h.b16 %v2704
  %v2771 = vunpack.c.l.b16 %v2705
  %v2772 = vunpack.c.h.b16 %v2705
  %v2773 = vunpack.c.l.b16 %v2706
  %v2774 = vunpack.c.h.b16 %v2706
  %v2775 = vunpack.c.l.b16 %v2707
  %v2776 = vunpack.c.h.b16 %v2707
  %v2777 = vunpack.c.l.b16 %v2708
  %v2778 = vunpack.c.h.b16 %v2708
  %v2779 = vunpack.c.l.b16 %v2709
  %v2780 = vunpack.c.h.b16 %v2709
  %v2781 = vunpack.c.l.b16 %v2710
  %v2782 = vunpack.c.h.b16 %v2710
  %v2783 = vunpack.c.l.b16 %v2711
  %v2784 = vunpack.c.h.b16 %v2711
  %v2785 = vunpack.c.l.b16 %v2712
  %v2786 = vunpack.c.h.b16 %v2712
  %v2787 = vunpack.c.l.b16 %v2713
  %v2788 = vunpack.c.h.b16 %v2713
  %v2789 = vunpack.c.l.b16 %v2714
  %v2790 = vunpack.c.h.b16 %v2714
  %v2791 = vunpack.c.l.b16 %v2715
  %v2792 = vunpack.c.h.b16 %v2715
  %v2793 = vunpack.c.l.b16 %v2716
  %v2794 = vunpack.c.h.b16 %v2716
  %v2795 = vunpack.c.l.b16 %v2717
  %v2796 = vunpack.c.h.b16 %v2717
  %v2797 = vunpack.c.l.b16 %v2718
  %v2798 = vunpack.c.h.b16 %v2718
  %v2799 = vunpack.c.l.b16 %v2719
  %v2800 = vunpack.c.h.b16 %v2719
  %v2801 = vunpack.c.l.b16 %v2720
  %v2802 = vunpack.c.h.b16 %v2720
  %v2803 = vunpack.c.l.b16 %v2721
  %v2804 = vunpack.c.h.b16 %v2721
  %v2805 = vunpack.c.l.b16 %v2722
  %v2806 = vunpack.c.h.b16 %v2722
  %v2807 = vunpack.c.l.b16 %v2723
  %v2808 = vunpack.c.h.b16 %v2723
  %v2809 = vunpack.c.l.b16 %v2724
  %v2810 = vunpack.c.h.b16 %v2724
  %v2811 = vunpack.c.l.b16 %v2725
  %v2812 = vunpack.c.h.b16 %v2725
  %v2813 = vunpack.c.l.b16 %v2726
  %v2814 = vunpack.c.h.b16 %v2726
  %v2815 = vunpack.c.l.b16 %v2727
  %v2816 = vunpack.c.h.b16 %v2727
  %v2817 = vunpack.c.l.b16 %v2728
  %v2818 = vunpack.c.h.b16 %v2728
  %v2819 = vunpack.c.l.b16 %v2729
  %v2820 = vunpack.c.h.b16 %v2729
  %v2821 = vunpack.c.l.b16 %v2730
  %v2822 = vunpack.c.h.b16 %v2730
  %v2823 = vunpack.c.l.b16 %v2731
  %v2824 = vunpack.c.h.b16 %v2731
  %v2825 = vunpack.c.l.b16 %v2732
  %v2826 = vunpack.c.h.b16 %v2732
  %v2827 = vunpack.c.l.b16 %v2733
  %v2828 = vunpack.c.h.b16 %v2733
  %v2829 = vunpack.c.l.b16 %v2734
  %v2830 = vunpack.c.h.b16 %v2734
  %v2831 = vpack.c.b16 %v2769, %v2767
  %v2832 = vpack.c.b16 %v2770, %v2768
  %v2833 = vpack.c.b16 %v2773, %v2771
  %v2834 = vpack.c.b16 %v2774, %v2772
  %v2835 = vpack.c.b16 %v2777, %v2775
  %v2836 = vpack.c.b16 %v2778, %v2776
  %v2837 = vpack.c.b16 %v2781, %v2779
  %v2838 = vpack.c.b16 %v2782, %v2780
  %v2839 = vpack.c.b16 %v2785, %v2783
  %v2840 = vpack.c.b16 %v2786, %v2784
  %v2841 = vpack.c.b16 %v2789, %v2787
  %v2842 = vpack.c.b16 %v2790, %v2788
  %v2843 = vpack.c.b16 %v2793, %v2791
  %v2844 = vpack.c.b16 %v2794, %v2792
  %v2845 = vpack.c.b16 %v2797, %v2795
  %v2846 = vpack.c.b16 %v2798, %v2796
  %v2847 = vpack.c.b16 %v2801, %v2799
  %v2848 = vpack.c.b16 %v2802, %v2800
  %v2849 = vpack.c.b16 %v2805, %v2803
  %v2850 = vpack.c.b16 %v2806, %v2804
  %v2851 = vpack.c.b16 %v2809, %v2807
  %v2852 = vpack.c.b16 %v2810, %v2808
  %v2853 = vpack.c.b16 %v2813, %v2811
  %v2854 = vpack.c.b16 %v2814, %v2812
  %v2855 = vpack.c.b16 %v2817, %v2815
  %v2856 = vpack.c.b16 %v2818, %v2816
  %v2857 = vpack.c.b16 %v2821, %v2819
  %v2858 = vpack.c.b16 %v2822, %v2820
  %v2859 = vpack.c.b16 %v2825, %v2823
  %v2860 = vpack.c.b16 %v2826, %v2824
  %v2861 = vpack.c.b16 %v2829, %v2827
  %v2862 = vpack.c.b16 %v2830, %v2828
  %2895 = vmatprep.subr.bf16.mxu0 %v2846
  %2896 = vmatpush1.bf16.msra.mxu0 %v2845
  %2897 = vmatprep.subr.bf16.mxu0 %v2844
  %2898 = vmatpush1.bf16.msra.mxu0 %v2843
  %2899 = vmatprep.subr.bf16.mxu0 %v2842
  %2900 = vmatpush1.bf16.msra.mxu0 %v2841
  %2901 = vmatprep.subr.bf16.mxu0 %v2840
  %2902 = vmatpush1.bf16.msra.mxu0 %v2839
  %2903 = vmatprep.subr.bf16.mxu0 %v2838
  %2904 = vmatpush1.bf16.msra.mxu0 %v2837
  %2905 = vmatprep.subr.bf16.mxu0 %v2836
  %2906 = vmatpush1.bf16.msra.mxu0 %v2835
  %2907 = vmatprep.subr.bf16.mxu0 %v2834
  %2908 = vmatpush1.bf16.msra.mxu0 %v2833
  %2909 = vmatprep.subr.bf16.mxu0 %v2832
  %2910 = vmatpush1.bf16.msra.mxu0 %v2831
  %2911 = vmatprep.subr.bf16.mxu0 %v2862
  %2912 = vmatpush2.bf16.msra.mxu0 %v2861
  %2913 = vmatprep.subr.bf16.mxu0 %v2860
  %2914 = vmatpush2.bf16.msra.mxu0 %v2859
  %2915 = vmatprep.subr.bf16.mxu0 %v2858
  %2916 = vmatpush2.bf16.msra.mxu0 %v2857
  %2917 = vmatprep.subr.bf16.mxu0 %v2856
  %2918 = vmatpush2.bf16.msra.mxu0 %v2855
  %2919 = vmatprep.subr.bf16.mxu0 %v2854
  %2920 = vmatpush2.bf16.msra.mxu0 %v2853
  %2921 = vmatprep.subr.bf16.mxu0 %v2852
  %2922 = vmatpush2.bf16.msra.mxu0 %v2851
  %2923 = vmatprep.subr.bf16.mxu0 %v2850
  %2924 = vmatpush2.bf16.msra.mxu0 %v2849
  %2925 = vmatprep.subr.bf16.mxu0 %v2848
  %2926 = vmatpush2.bf16.msra.mxu0 %v2847
  %2927 = vmatprep.mubr.bf16.mxu0 %v1568
  %2928 = vmatmul.mubr.bf16.gmra.mxu0 %v1567
  %v2929 = vpop.f32.mrf.mxu0
  %v2930 = vadd.f32 0.0, %v2929
  %v2931 = vpop.f32.mrf.mxu0
  %v2932 = vadd.f32 0.0, %v2931
  %v2933 = vpop.f32.mrf.mxu0
  %v2934 = vadd.f32 0.0, %v2933
  %v2935 = vpop.f32.mrf.mxu0
  %v2936 = vadd.f32 0.0, %v2935
  %2937 = vmatprep.mubr.bf16.mxu0 %v1570
  %2938 = vmatmul.mubr.bf16.gmra.mxu0 %v1569
  %v2939 = vpop.f32.mrf.mxu0
  %v2940 = vadd.f32 0.0, %v2939
  %v2941 = vpop.f32.mrf.mxu0
  %v2942 = vadd.f32 0.0, %v2941
  %v2943 = vpop.f32.mrf.mxu0
  %v2944 = vadd.f32 0.0, %v2943
  %v2945 = vpop.f32.mrf.mxu0
  %v2946 = vadd.f32 0.0, %v2945
  %2947 = vmatprep.mubr.bf16.mxu0 %v1572
  %2948 = vmatmul.mubr.bf16.gmra.mxu0 %v1571
  %v2949 = vpop.f32.mrf.mxu0
  %v2950 = vadd.f32 0.0, %v2949
  %v2951 = vpop.f32.mrf.mxu0
  %v2952 = vadd.f32 0.0, %v2951
  %v2953 = vpop.f32.mrf.mxu0
  %v2954 = vadd.f32 0.0, %v2953
  %v2955 = vpop.f32.mrf.mxu0
  %v2956 = vadd.f32 0.0, %v2955
  %2957 = vmatprep.mubr.bf16.mxu0 %v1574
  %2958 = vmatmul.mubr.bf16.gmra.mxu0 %v1573
  %v2959 = vpop.f32.mrf.mxu0
  %v2960 = vadd.f32 0.0, %v2959
  %v2961 = vpop.f32.mrf.mxu0
  %v2962 = vadd.f32 0.0, %v2961
  %v2963 = vpop.f32.mrf.mxu0
  %v2964 = vadd.f32 0.0, %v2963
  %v2965 = vpop.f32.mrf.mxu0
  %v2966 = vadd.f32 0.0, %v2965
  %2967 = vdwg.mxu0
  %v2968 = vadd.f32 %v2686, %v2930
  %v2969 = vadd.f32 %v2687, %v2932
  %v2970 = vadd.f32 %v2688, %v2934
  %v2971 = vadd.f32 %v2689, %v2936
  %v2972 = vadd.f32 %v2690, %v2940
  %v2973 = vadd.f32 %v2691, %v2942
  %v2974 = vadd.f32 %v2692, %v2944
  %v2975 = vadd.f32 %v2693, %v2946
  %v2976 = vadd.f32 %v2694, %v2950
  %v2977 = vadd.f32 %v2695, %v2952
  %v2978 = vadd.f32 %v2696, %v2954
  %v2979 = vadd.f32 %v2697, %v2956
  %v2980 = vadd.f32 %v2698, %v2960
  %v2981 = vadd.f32 %v2699, %v2962
  %v2982 = vadd.f32 %v2700, %v2964
  %v2983 = vadd.f32 %v2701, %v2966
  %s2984 = scalar_lea.vmem %s4, 1280
  %v2985 = vld [vmem:[%s2984] sm:$0xff]
  %v2986 = vld [vmem:[%s2984 + $0x8] sm:$0xff]
  %v2987 = vld [vmem:[%s2984 + $0x10] sm:$0xff]
  %v2988 = vld [vmem:[%s2984 + $0x18] sm:$0xff]
  %v2989 = vld [vmem:[%s2984 + $0x20] sm:$0xff]
  %v2990 = vld [vmem:[%s2984 + $0x28] sm:$0xff]
  %v2991 = vld [vmem:[%s2984 + $0x30] sm:$0xff]
  %v2992 = vld [vmem:[%s2984 + $0x38] sm:$0xff]
  %v2993 = vld [vmem:[%s2984 + $0x40] sm:$0xff]
  %v2994 = vld [vmem:[%s2984 + $0x48] sm:$0xff]
  %v2995 = vld [vmem:[%s2984 + $0x50] sm:$0xff]
  %v2996 = vld [vmem:[%s2984 + $0x58] sm:$0xff]
  %v2997 = vld [vmem:[%s2984 + $0x60] sm:$0xff]
  %v2998 = vld [vmem:[%s2984 + $0x68] sm:$0xff]
  %v2999 = vld [vmem:[%s2984 + $0x70] sm:$0xff]
  %v3000 = vld [vmem:[%s2984 + $0x78] sm:$0xff]
  %v3001 = vld [vmem:[%s2984 + $0x80] sm:$0xff]
  %v3002 = vld [vmem:[%s2984 + $0x88] sm:$0xff]
  %v3003 = vld [vmem:[%s2984 + $0x90] sm:$0xff]
  %v3004 = vld [vmem:[%s2984 + $0x98] sm:$0xff]
  %v3005 = vld [vmem:[%s2984 + $0xa0] sm:$0xff]
  %v3006 = vld [vmem:[%s2984 + $0xa8] sm:$0xff]
  %v3007 = vld [vmem:[%s2984 + $0xb0] sm:$0xff]
  %v3008 = vld [vmem:[%s2984 + $0xb8] sm:$0xff]
  %v3009 = vld [vmem:[%s2984 + $0xc0] sm:$0xff]
  %v3010 = vld [vmem:[%s2984 + $0xc8] sm:$0xff]
  %v3011 = vld [vmem:[%s2984 + $0xd0] sm:$0xff]
  %v3012 = vld [vmem:[%s2984 + $0xd8] sm:$0xff]
  %v3013 = vld [vmem:[%s2984 + $0xe0] sm:$0xff]
  %v3014 = vld [vmem:[%s2984 + $0xe8] sm:$0xff]
  %v3015 = vld [vmem:[%s2984 + $0xf0] sm:$0xff]
  %v3016 = vld [vmem:[%s2984 + $0xf8] sm:$0xff]
  %v3049 = vunpack.c.l.b16 %v2985
  %v3050 = vunpack.c.h.b16 %v2985
  %v3051 = vunpack.c.l.b16 %v2986
  %v3052 = vunpack.c.h.b16 %v2986
  %v3053 = vunpack.c.l.b16 %v2987
  %v3054 = vunpack.c.h.b16 %v2987
  %v3055 = vunpack.c.l.b16 %v2988
  %v3056 = vunpack.c.h.b16 %v2988
  %v3057 = vunpack.c.l.b16 %v2989
  %v3058 = vunpack.c.h.b16 %v2989
  %v3059 = vunpack.c.l.b16 %v2990
  %v3060 = vunpack.c.h.b16 %v2990
  %v3061 = vunpack.c.l.b16 %v2991
  %v3062 = vunpack.c.h.b16 %v2991
  %v3063 = vunpack.c.l.b16 %v2992
  %v3064 = vunpack.c.h.b16 %v2992
  %v3065 = vunpack.c.l.b16 %v2993
  %v3066 = vunpack.c.h.b16 %v2993
  %v3067 = vunpack.c.l.b16 %v2994
  %v3068 = vunpack.c.h.b16 %v2994
  %v3069 = vunpack.c.l.b16 %v2995
  %v3070 = vunpack.c.h.b16 %v2995
  %v3071 = vunpack.c.l.b16 %v2996
  %v3072 = vunpack.c.h.b16 %v2996
  %v3073 = vunpack.c.l.b16 %v2997
  %v3074 = vunpack.c.h.b16 %v2997
  %v3075 = vunpack.c.l.b16 %v2998
  %v3076 = vunpack.c.h.b16 %v2998
  %v3077 = vunpack.c.l.b16 %v2999
  %v3078 = vunpack.c.h.b16 %v2999
  %v3079 = vunpack.c.l.b16 %v3000
  %v3080 = vunpack.c.h.b16 %v3000
  %v3081 = vunpack.c.l.b16 %v3001
  %v3082 = vunpack.c.h.b16 %v3001
  %v3083 = vunpack.c.l.b16 %v3002
  %v3084 = vunpack.c.h.b16 %v3002
  %v3085 = vunpack.c.l.b16 %v3003
  %v3086 = vunpack.c.h.b16 %v3003
  %v3087 = vunpack.c.l.b16 %v3004
  %v3088 = vunpack.c.h.b16 %v3004
  %v3089 = vunpack.c.l.b16 %v3005
  %v3090 = vunpack.c.h.b16 %v3005
  %v3091 = vunpack.c.l.b16 %v3006
  %v3092 = vunpack.c.h.b16 %v3006
  %v3093 = vunpack.c.l.b16 %v3007
  %v3094 = vunpack.c.h.b16 %v3007
  %v3095 = vunpack.c.l.b16 %v3008
  %v3096 = vunpack.c.h.b16 %v3008
  %v3097 = vunpack.c.l.b16 %v3009
  %v3098 = vunpack.c.h.b16 %v3009
  %v3099 = vunpack.c.l.b16 %v3010
  %v3100 = vunpack.c.h.b16 %v3010
  %v3101 = vunpack.c.l.b16 %v3011
  %v3102 = vunpack.c.h.b16 %v3011
  %v3103 = vunpack.c.l.b16 %v3012
  %v3104 = vunpack.c.h.b16 %v3012
  %v3105 = vunpack.c.l.b16 %v3013
  %v3106 = vunpack.c.h.b16 %v3013
  %v3107 = vunpack.c.l.b16 %v3014
  %v3108 = vunpack.c.h.b16 %v3014
  %v3109 = vunpack.c.l.b16 %v3015
  %v3110 = vunpack.c.h.b16 %v3015
  %v3111 = vunpack.c.l.b16 %v3016
  %v3112 = vunpack.c.h.b16 %v3016
  %v3113 = vpack.c.b16 %v3051, %v3049
  %v3114 = vpack.c.b16 %v3052, %v3050
  %v3115 = vpack.c.b16 %v3055, %v3053
  %v3116 = vpack.c.b16 %v3056, %v3054
  %v3117 = vpack.c.b16 %v3059, %v3057
  %v3118 = vpack.c.b16 %v3060, %v3058
  %v3119 = vpack.c.b16 %v3063, %v3061
  %v3120 = vpack.c.b16 %v3064, %v3062
  %v3121 = vpack.c.b16 %v3067, %v3065
  %v3122 = vpack.c.b16 %v3068, %v3066
  %v3123 = vpack.c.b16 %v3071, %v3069
  %v3124 = vpack.c.b16 %v3072, %v3070
  %v3125 = vpack.c.b16 %v3075, %v3073
  %v3126 = vpack.c.b16 %v3076, %v3074
  %v3127 = vpack.c.b16 %v3079, %v3077
  %v3128 = vpack.c.b16 %v3080, %v3078
  %v3129 = vpack.c.b16 %v3083, %v3081
  %v3130 = vpack.c.b16 %v3084, %v3082
  %v3131 = vpack.c.b16 %v3087, %v3085
  %v3132 = vpack.c.b16 %v3088, %v3086
  %v3133 = vpack.c.b16 %v3091, %v3089
  %v3134 = vpack.c.b16 %v3092, %v3090
  %v3135 = vpack.c.b16 %v3095, %v3093
  %v3136 = vpack.c.b16 %v3096, %v3094
  %v3137 = vpack.c.b16 %v3099, %v3097
  %v3138 = vpack.c.b16 %v3100, %v3098
  %v3139 = vpack.c.b16 %v3103, %v3101
  %v3140 = vpack.c.b16 %v3104, %v3102
  %v3141 = vpack.c.b16 %v3107, %v3105
  %v3142 = vpack.c.b16 %v3108, %v3106
  %v3143 = vpack.c.b16 %v3111, %v3109
  %v3144 = vpack.c.b16 %v3112, %v3110
  %3177 = vmatprep.subr.bf16.mxu0 %v3128
  %3178 = vmatpush1.bf16.msra.mxu0 %v3127
  %3179 = vmatprep.subr.bf16.mxu0 %v3126
  %3180 = vmatpush1.bf16.msra.mxu0 %v3125
  %3181 = vmatprep.subr.bf16.mxu0 %v3124
  %3182 = vmatpush1.bf16.msra.mxu0 %v3123
  %3183 = vmatprep.subr.bf16.mxu0 %v3122
  %3184 = vmatpush1.bf16.msra.mxu0 %v3121
  %3185 = vmatprep.subr.bf16.mxu0 %v3120
  %3186 = vmatpush1.bf16.msra.mxu0 %v3119
  %3187 = vmatprep.subr.bf16.mxu0 %v3118
  %3188 = vmatpush1.bf16.msra.mxu0 %v3117
  %3189 = vmatprep.subr.bf16.mxu0 %v3116
  %3190 = vmatpush1.bf16.msra.mxu0 %v3115
  %3191 = vmatprep.subr.bf16.mxu0 %v3114
  %3192 = vmatpush1.bf16.msra.mxu0 %v3113
  %3193 = vmatprep.subr.bf16.mxu0 %v3144
  %3194 = vmatpush2.bf16.msra.mxu0 %v3143
  %3195 = vmatprep.subr.bf16.mxu0 %v3142
  %3196 = vmatpush2.bf16.msra.mxu0 %v3141
  %3197 = vmatprep.subr.bf16.mxu0 %v3140
  %3198 = vmatpush2.bf16.msra.mxu0 %v3139
  %3199 = vmatprep.subr.bf16.mxu0 %v3138
  %3200 = vmatpush2.bf16.msra.mxu0 %v3137
  %3201 = vmatprep.subr.bf16.mxu0 %v3136
  %3202 = vmatpush2.bf16.msra.mxu0 %v3135
  %3203 = vmatprep.subr.bf16.mxu0 %v3134
  %3204 = vmatpush2.bf16.msra.mxu0 %v3133
  %3205 = vmatprep.subr.bf16.mxu0 %v3132
  %3206 = vmatpush2.bf16.msra.mxu0 %v3131
  %3207 = vmatprep.subr.bf16.mxu0 %v3130
  %3208 = vmatpush2.bf16.msra.mxu0 %v3129
  %3209 = vmatprep.mubr.bf16.mxu0 %v1576
  %3210 = vmatmul.mubr.bf16.gmra.mxu0 %v1575
  %v3211 = vpop.f32.mrf.mxu0
  %v3212 = vadd.f32 0.0, %v3211
  %v3213 = vpop.f32.mrf.mxu0
  %v3214 = vadd.f32 0.0, %v3213
  %v3215 = vpop.f32.mrf.mxu0
  %v3216 = vadd.f32 0.0, %v3215
  %v3217 = vpop.f32.mrf.mxu0
  %v3218 = vadd.f32 0.0, %v3217
  %3219 = vmatprep.mubr.bf16.mxu0 %v1578
  %3220 = vmatmul.mubr.bf16.gmra.mxu0 %v1577
  %v3221 = vpop.f32.mrf.mxu0
  %v3222 = vadd.f32 0.0, %v3221
  %v3223 = vpop.f32.mrf.mxu0
  %v3224 = vadd.f32 0.0, %v3223
  %v3225 = vpop.f32.mrf.mxu0
  %v3226 = vadd.f32 0.0, %v3225
  %v3227 = vpop.f32.mrf.mxu0
  %v3228 = vadd.f32 0.0, %v3227
  %3229 = vmatprep.mubr.bf16.mxu0 %v1580
  %3230 = vmatmul.mubr.bf16.gmra.mxu0 %v1579
  %v3231 = vpop.f32.mrf.mxu0
  %v3232 = vadd.f32 0.0, %v3231
  %v3233 = vpop.f32.mrf.mxu0
  %v3234 = vadd.f32 0.0, %v3233
  %v3235 = vpop.f32.mrf.mxu0
  %v3236 = vadd.f32 0.0, %v3235
  %v3237 = vpop.f32.mrf.mxu0
  %v3238 = vadd.f32 0.0, %v3237
  %3239 = vmatprep.mubr.bf16.mxu0 %v1582
  %3240 = vmatmul.mubr.bf16.gmra.mxu0 %v1581
  %v3241 = vpop.f32.mrf.mxu0
  %v3242 = vadd.f32 0.0, %v3241
  %v3243 = vpop.f32.mrf.mxu0
  %v3244 = vadd.f32 0.0, %v3243
  %v3245 = vpop.f32.mrf.mxu0
  %v3246 = vadd.f32 0.0, %v3245
  %v3247 = vpop.f32.mrf.mxu0
  %v3248 = vadd.f32 0.0, %v3247
  %3249 = vdwg.mxu0
  %v3250 = vadd.f32 %v2968, %v3212
  %v3251 = vadd.f32 %v2969, %v3214
  %v3252 = vadd.f32 %v2970, %v3216
  %v3253 = vadd.f32 %v2971, %v3218
  %v3254 = vadd.f32 %v2972, %v3222
  %v3255 = vadd.f32 %v2973, %v3224
  %v3256 = vadd.f32 %v2974, %v3226
  %v3257 = vadd.f32 %v2975, %v3228
  %v3258 = vadd.f32 %v2976, %v3232
  %v3259 = vadd.f32 %v2977, %v3234
  %v3260 = vadd.f32 %v2978, %v3236
  %v3261 = vadd.f32 %v2979, %v3238
  %v3262 = vadd.f32 %v2980, %v3242
  %v3263 = vadd.f32 %v2981, %v3244
  %v3264 = vadd.f32 %v2982, %v3246
  %v3265 = vadd.f32 %v2983, %v3248
  %s3266 = scalar_lea.vmem %s4, 1536
  %v3267 = vld [vmem:[%s3266] sm:$0xff]
  %v3268 = vld [vmem:[%s3266 + $0x8] sm:$0xff]
  %v3269 = vld [vmem:[%s3266 + $0x10] sm:$0xff]
  %v3270 = vld [vmem:[%s3266 + $0x18] sm:$0xff]
  %v3271 = vld [vmem:[%s3266 + $0x20] sm:$0xff]
  %v3272 = vld [vmem:[%s3266 + $0x28] sm:$0xff]
  %v3273 = vld [vmem:[%s3266 + $0x30] sm:$0xff]
  %v3274 = vld [vmem:[%s3266 + $0x38] sm:$0xff]
  %v3275 = vld [vmem:[%s3266 + $0x40] sm:$0xff]
  %v3276 = vld [vmem:[%s3266 + $0x48] sm:$0xff]
  %v3277 = vld [vmem:[%s3266 + $0x50] sm:$0xff]
  %v3278 = vld [vmem:[%s3266 + $0x58] sm:$0xff]
  %v3279 = vld [vmem:[%s3266 + $0x60] sm:$0xff]
  %v3280 = vld [vmem:[%s3266 + $0x68] sm:$0xff]
  %v3281 = vld [vmem:[%s3266 + $0x70] sm:$0xff]
  %v3282 = vld [vmem:[%s3266 + $0x78] sm:$0xff]
  %v3283 = vld [vmem:[%s3266 + $0x80] sm:$0xff]
  %v3284 = vld [vmem:[%s3266 + $0x88] sm:$0xff]
  %v3285 = vld [vmem:[%s3266 + $0x90] sm:$0xff]
  %v3286 = vld [vmem:[%s3266 + $0x98] sm:$0xff]
  %v3287 = vld [vmem:[%s3266 + $0xa0] sm:$0xff]
  %v3288 = vld [vmem:[%s3266 + $0xa8] sm:$0xff]
  %v3289 = vld [vmem:[%s3266 + $0xb0] sm:$0xff]
  %v3290 = vld [vmem:[%s3266 + $0xb8] sm:$0xff]
  %v3291 = vld [vmem:[%s3266 + $0xc0] sm:$0xff]
  %v3292 = vld [vmem:[%s3266 + $0xc8] sm:$0xff]
  %v3293 = vld [vmem:[%s3266 + $0xd0] sm:$0xff]
  %v3294 = vld [vmem:[%s3266 + $0xd8] sm:$0xff]
  %v3295 = vld [vmem:[%s3266 + $0xe0] sm:$0xff]
  %v3296 = vld [vmem:[%s3266 + $0xe8] sm:$0xff]
  %v3297 = vld [vmem:[%s3266 + $0xf0] sm:$0xff]
  %v3298 = vld [vmem:[%s3266 + $0xf8] sm:$0xff]
  %v3331 = vunpack.c.l.b16 %v3267
  %v3332 = vunpack.c.h.b16 %v3267
  %v3333 = vunpack.c.l.b16 %v3268
  %v3334 = vunpack.c.h.b16 %v3268
  %v3335 = vunpack.c.l.b16 %v3269
  %v3336 = vunpack.c.h.b16 %v3269
  %v3337 = vunpack.c.l.b16 %v3270
  %v3338 = vunpack.c.h.b16 %v3270
  %v3339 = vunpack.c.l.b16 %v3271
  %v3340 = vunpack.c.h.b16 %v3271
  %v3341 = vunpack.c.l.b16 %v3272
  %v3342 = vunpack.c.h.b16 %v3272
  %v3343 = vunpack.c.l.b16 %v3273
  %v3344 = vunpack.c.h.b16 %v3273
  %v3345 = vunpack.c.l.b16 %v3274
  %v3346 = vunpack.c.h.b16 %v3274
  %v3347 = vunpack.c.l.b16 %v3275
  %v3348 = vunpack.c.h.b16 %v3275
  %v3349 = vunpack.c.l.b16 %v3276
  %v3350 = vunpack.c.h.b16 %v3276
  %v3351 = vunpack.c.l.b16 %v3277
  %v3352 = vunpack.c.h.b16 %v3277
  %v3353 = vunpack.c.l.b16 %v3278
  %v3354 = vunpack.c.h.b16 %v3278
  %v3355 = vunpack.c.l.b16 %v3279
  %v3356 = vunpack.c.h.b16 %v3279
  %v3357 = vunpack.c.l.b16 %v3280
  %v3358 = vunpack.c.h.b16 %v3280
  %v3359 = vunpack.c.l.b16 %v3281
  %v3360 = vunpack.c.h.b16 %v3281
  %v3361 = vunpack.c.l.b16 %v3282
  %v3362 = vunpack.c.h.b16 %v3282
  %v3363 = vunpack.c.l.b16 %v3283
  %v3364 = vunpack.c.h.b16 %v3283
  %v3365 = vunpack.c.l.b16 %v3284
  %v3366 = vunpack.c.h.b16 %v3284
  %v3367 = vunpack.c.l.b16 %v3285
  %v3368 = vunpack.c.h.b16 %v3285
  %v3369 = vunpack.c.l.b16 %v3286
  %v3370 = vunpack.c.h.b16 %v3286
  %v3371 = vunpack.c.l.b16 %v3287
  %v3372 = vunpack.c.h.b16 %v3287
  %v3373 = vunpack.c.l.b16 %v3288
  %v3374 = vunpack.c.h.b16 %v3288
  %v3375 = vunpack.c.l.b16 %v3289
  %v3376 = vunpack.c.h.b16 %v3289
  %v3377 = vunpack.c.l.b16 %v3290
  %v3378 = vunpack.c.h.b16 %v3290
  %v3379 = vunpack.c.l.b16 %v3291
  %v3380 = vunpack.c.h.b16 %v3291
  %v3381 = vunpack.c.l.b16 %v3292
  %v3382 = vunpack.c.h.b16 %v3292
  %v3383 = vunpack.c.l.b16 %v3293
  %v3384 = vunpack.c.h.b16 %v3293
  %v3385 = vunpack.c.l.b16 %v3294
  %v3386 = vunpack.c.h.b16 %v3294
  %v3387 = vunpack.c.l.b16 %v3295
  %v3388 = vunpack.c.h.b16 %v3295
  %v3389 = vunpack.c.l.b16 %v3296
  %v3390 = vunpack.c.h.b16 %v3296
  %v3391 = vunpack.c.l.b16 %v3297
  %v3392 = vunpack.c.h.b16 %v3297
  %v3393 = vunpack.c.l.b16 %v3298
  %v3394 = vunpack.c.h.b16 %v3298
  %v3395 = vpack.c.b16 %v3333, %v3331
  %v3396 = vpack.c.b16 %v3334, %v3332
  %v3397 = vpack.c.b16 %v3337, %v3335
  %v3398 = vpack.c.b16 %v3338, %v3336
  %v3399 = vpack.c.b16 %v3341, %v3339
  %v3400 = vpack.c.b16 %v3342, %v3340
  %v3401 = vpack.c.b16 %v3345, %v3343
  %v3402 = vpack.c.b16 %v3346, %v3344
  %v3403 = vpack.c.b16 %v3349, %v3347
  %v3404 = vpack.c.b16 %v3350, %v3348
  %v3405 = vpack.c.b16 %v3353, %v3351
  %v3406 = vpack.c.b16 %v3354, %v3352
  %v3407 = vpack.c.b16 %v3357, %v3355
  %v3408 = vpack.c.b16 %v3358, %v3356
  %v3409 = vpack.c.b16 %v3361, %v3359
  %v3410 = vpack.c.b16 %v3362, %v3360
  %v3411 = vpack.c.b16 %v3365, %v3363
  %v3412 = vpack.c.b16 %v3366, %v3364
  %v3413 = vpack.c.b16 %v3369, %v3367
  %v3414 = vpack.c.b16 %v3370, %v3368
  %v3415 = vpack.c.b16 %v3373, %v3371
  %v3416 = vpack.c.b16 %v3374, %v3372
  %v3417 = vpack.c.b16 %v3377, %v3375
  %v3418 = vpack.c.b16 %v3378, %v3376
  %v3419 = vpack.c.b16 %v3381, %v3379
  %v3420 = vpack.c.b16 %v3382, %v3380
  %v3421 = vpack.c.b16 %v3385, %v3383
  %v3422 = vpack.c.b16 %v3386, %v3384
  %v3423 = vpack.c.b16 %v3389, %v3387
  %v3424 = vpack.c.b16 %v3390, %v3388
  %v3425 = vpack.c.b16 %v3393, %v3391
  %v3426 = vpack.c.b16 %v3394, %v3392
  %3459 = vmatprep.subr.bf16.mxu0 %v3410
  %3460 = vmatpush1.bf16.msra.mxu0 %v3409
  %3461 = vmatprep.subr.bf16.mxu0 %v3408
  %3462 = vmatpush1.bf16.msra.mxu0 %v3407
  %3463 = vmatprep.subr.bf16.mxu0 %v3406
  %3464 = vmatpush1.bf16.msra.mxu0 %v3405
  %3465 = vmatprep.subr.bf16.mxu0 %v3404
  %3466 = vmatpush1.bf16.msra.mxu0 %v3403
  %3467 = vmatprep.subr.bf16.mxu0 %v3402
  %3468 = vmatpush1.bf16.msra.mxu0 %v3401
  %3469 = vmatprep.subr.bf16.mxu0 %v3400
  %3470 = vmatpush1.bf16.msra.mxu0 %v3399
  %3471 = vmatprep.subr.bf16.mxu0 %v3398
  %3472 = vmatpush1.bf16.msra.mxu0 %v3397
  %3473 = vmatprep.subr.bf16.mxu0 %v3396
  %3474 = vmatpush1.bf16.msra.mxu0 %v3395
  %3475 = vmatprep.subr.bf16.mxu0 %v3426
  %3476 = vmatpush2.bf16.msra.mxu0 %v3425
  %3477 = vmatprep.subr.bf16.mxu0 %v3424
  %3478 = vmatpush2.bf16.msra.mxu0 %v3423
  %3479 = vmatprep.subr.bf16.mxu0 %v3422
  %3480 = vmatpush2.bf16.msra.mxu0 %v3421
  %3481 = vmatprep.subr.bf16.mxu0 %v3420
  %3482 = vmatpush2.bf16.msra.mxu0 %v3419
  %3483 = vmatprep.subr.bf16.mxu0 %v3418
  %3484 = vmatpush2.bf16.msra.mxu0 %v3417
  %3485 = vmatprep.subr.bf16.mxu0 %v3416
  %3486 = vmatpush2.bf16.msra.mxu0 %v3415
  %3487 = vmatprep.subr.bf16.mxu0 %v3414
  %3488 = vmatpush2.bf16.msra.mxu0 %v3413
  %3489 = vmatprep.subr.bf16.mxu0 %v3412
  %3490 = vmatpush2.bf16.msra.mxu0 %v3411
  %3491 = vmatprep.mubr.bf16.mxu0 %v1584
  %3492 = vmatmul.mubr.bf16.gmra.mxu0 %v1583
  %v3493 = vpop.f32.mrf.mxu0
  %v3494 = vadd.f32 0.0, %v3493
  %v3495 = vpop.f32.mrf.mxu0
  %v3496 = vadd.f32 0.0, %v3495
  %v3497 = vpop.f32.mrf.mxu0
  %v3498 = vadd.f32 0.0, %v3497
  %v3499 = vpop.f32.mrf.mxu0
  %v3500 = vadd.f32 0.0, %v3499
  %3501 = vmatprep.mubr.bf16.mxu0 %v1586
  %3502 = vmatmul.mubr.bf16.gmra.mxu0 %v1585
  %v3503 = vpop.f32.mrf.mxu0
  %v3504 = vadd.f32 0.0, %v3503
  %v3505 = vpop.f32.mrf.mxu0
  %v3506 = vadd.f32 0.0, %v3505
  %v3507 = vpop.f32.mrf.mxu0
  %v3508 = vadd.f32 0.0, %v3507
  %v3509 = vpop.f32.mrf.mxu0
  %v3510 = vadd.f32 0.0, %v3509
  %3511 = vmatprep.mubr.bf16.mxu0 %v1588
  %3512 = vmatmul.mubr.bf16.gmra.mxu0 %v1587
  %v3513 = vpop.f32.mrf.mxu0
  %v3514 = vadd.f32 0.0, %v3513
  %v3515 = vpop.f32.mrf.mxu0
  %v3516 = vadd.f32 0.0, %v3515
  %v3517 = vpop.f32.mrf.mxu0
  %v3518 = vadd.f32 0.0, %v3517
  %v3519 = vpop.f32.mrf.mxu0
  %v3520 = vadd.f32 0.0, %v3519
  %3521 = vmatprep.mubr.bf16.mxu0 %v1590
  %3522 = vmatmul.mubr.bf16.gmra.mxu0 %v1589
  %v3523 = vpop.f32.mrf.mxu0
  %v3524 = vadd.f32 0.0, %v3523
  %v3525 = vpop.f32.mrf.mxu0
  %v3526 = vadd.f32 0.0, %v3525
  %v3527 = vpop.f32.mrf.mxu0
  %v3528 = vadd.f32 0.0, %v3527
  %v3529 = vpop.f32.mrf.mxu0
  %v3530 = vadd.f32 0.0, %v3529
  %3531 = vdwg.mxu0
  %v3532 = vadd.f32 %v3250, %v3494
  %v3533 = vadd.f32 %v3251, %v3496
  %v3534 = vadd.f32 %v3252, %v3498
  %v3535 = vadd.f32 %v3253, %v3500
  %v3536 = vadd.f32 %v3254, %v3504
  %v3537 = vadd.f32 %v3255, %v3506
  %v3538 = vadd.f32 %v3256, %v3508
  %v3539 = vadd.f32 %v3257, %v3510
  %v3540 = vadd.f32 %v3258, %v3514
  %v3541 = vadd.f32 %v3259, %v3516
  %v3542 = vadd.f32 %v3260, %v3518
  %v3543 = vadd.f32 %v3261, %v3520
  %v3544 = vadd.f32 %v3262, %v3524
  %v3545 = vadd.f32 %v3263, %v3526
  %v3546 = vadd.f32 %v3264, %v3528
  %v3547 = vadd.f32 %v3265, %v3530
  %s3548 = scalar_lea.vmem %s4, 1792
  %v3549 = vld [vmem:[%s3548] sm:$0xff]
  %v3550 = vld [vmem:[%s3548 + $0x8] sm:$0xff]
  %v3551 = vld [vmem:[%s3548 + $0x10] sm:$0xff]
  %v3552 = vld [vmem:[%s3548 + $0x18] sm:$0xff]
  %v3553 = vld [vmem:[%s3548 + $0x20] sm:$0xff]
  %v3554 = vld [vmem:[%s3548 + $0x28] sm:$0xff]
  %v3555 = vld [vmem:[%s3548 + $0x30] sm:$0xff]
  %v3556 = vld [vmem:[%s3548 + $0x38] sm:$0xff]
  %v3557 = vld [vmem:[%s3548 + $0x40] sm:$0xff]
  %v3558 = vld [vmem:[%s3548 + $0x48] sm:$0xff]
  %v3559 = vld [vmem:[%s3548 + $0x50] sm:$0xff]
  %v3560 = vld [vmem:[%s3548 + $0x58] sm:$0xff]
  %v3561 = vld [vmem:[%s3548 + $0x60] sm:$0xff]
  %v3562 = vld [vmem:[%s3548 + $0x68] sm:$0xff]
  %v3563 = vld [vmem:[%s3548 + $0x70] sm:$0xff]
  %v3564 = vld [vmem:[%s3548 + $0x78] sm:$0xff]
  %v3565 = vld [vmem:[%s3548 + $0x80] sm:$0xff]
  %v3566 = vld [vmem:[%s3548 + $0x88] sm:$0xff]
  %v3567 = vld [vmem:[%s3548 + $0x90] sm:$0xff]
  %v3568 = vld [vmem:[%s3548 + $0x98] sm:$0xff]
  %v3569 = vld [vmem:[%s3548 + $0xa0] sm:$0xff]
  %v3570 = vld [vmem:[%s3548 + $0xa8] sm:$0xff]
  %v3571 = vld [vmem:[%s3548 + $0xb0] sm:$0xff]
  %v3572 = vld [vmem:[%s3548 + $0xb8] sm:$0xff]
  %v3573 = vld [vmem:[%s3548 + $0xc0] sm:$0xff]
  %v3574 = vld [vmem:[%s3548 + $0xc8] sm:$0xff]
  %v3575 = vld [vmem:[%s3548 + $0xd0] sm:$0xff]
  %v3576 = vld [vmem:[%s3548 + $0xd8] sm:$0xff]
  %v3577 = vld [vmem:[%s3548 + $0xe0] sm:$0xff]
  %v3578 = vld [vmem:[%s3548 + $0xe8] sm:$0xff]
  %v3579 = vld [vmem:[%s3548 + $0xf0] sm:$0xff]
  %v3580 = vld [vmem:[%s3548 + $0xf8] sm:$0xff]
  %v3613 = vunpack.c.l.b16 %v3549
  %v3614 = vunpack.c.h.b16 %v3549
  %v3615 = vunpack.c.l.b16 %v3550
  %v3616 = vunpack.c.h.b16 %v3550
  %v3617 = vunpack.c.l.b16 %v3551
  %v3618 = vunpack.c.h.b16 %v3551
  %v3619 = vunpack.c.l.b16 %v3552
  %v3620 = vunpack.c.h.b16 %v3552
  %v3621 = vunpack.c.l.b16 %v3553
  %v3622 = vunpack.c.h.b16 %v3553
  %v3623 = vunpack.c.l.b16 %v3554
  %v3624 = vunpack.c.h.b16 %v3554
  %v3625 = vunpack.c.l.b16 %v3555
  %v3626 = vunpack.c.h.b16 %v3555
  %v3627 = vunpack.c.l.b16 %v3556
  %v3628 = vunpack.c.h.b16 %v3556
  %v3629 = vunpack.c.l.b16 %v3557
  %v3630 = vunpack.c.h.b16 %v3557
  %v3631 = vunpack.c.l.b16 %v3558
  %v3632 = vunpack.c.h.b16 %v3558
  %v3633 = vunpack.c.l.b16 %v3559
  %v3634 = vunpack.c.h.b16 %v3559
  %v3635 = vunpack.c.l.b16 %v3560
  %v3636 = vunpack.c.h.b16 %v3560
  %v3637 = vunpack.c.l.b16 %v3561
  %v3638 = vunpack.c.h.b16 %v3561
  %v3639 = vunpack.c.l.b16 %v3562
  %v3640 = vunpack.c.h.b16 %v3562
  %v3641 = vunpack.c.l.b16 %v3563
  %v3642 = vunpack.c.h.b16 %v3563
  %v3643 = vunpack.c.l.b16 %v3564
  %v3644 = vunpack.c.h.b16 %v3564
  %v3645 = vunpack.c.l.b16 %v3565
  %v3646 = vunpack.c.h.b16 %v3565
  %v3647 = vunpack.c.l.b16 %v3566
  %v3648 = vunpack.c.h.b16 %v3566
  %v3649 = vunpack.c.l.b16 %v3567
  %v3650 = vunpack.c.h.b16 %v3567
  %v3651 = vunpack.c.l.b16 %v3568
  %v3652 = vunpack.c.h.b16 %v3568
  %v3653 = vunpack.c.l.b16 %v3569
  %v3654 = vunpack.c.h.b16 %v3569
  %v3655 = vunpack.c.l.b16 %v3570
  %v3656 = vunpack.c.h.b16 %v3570
  %v3657 = vunpack.c.l.b16 %v3571
  %v3658 = vunpack.c.h.b16 %v3571
  %v3659 = vunpack.c.l.b16 %v3572
  %v3660 = vunpack.c.h.b16 %v3572
  %v3661 = vunpack.c.l.b16 %v3573
  %v3662 = vunpack.c.h.b16 %v3573
  %v3663 = vunpack.c.l.b16 %v3574
  %v3664 = vunpack.c.h.b16 %v3574
  %v3665 = vunpack.c.l.b16 %v3575
  %v3666 = vunpack.c.h.b16 %v3575
  %v3667 = vunpack.c.l.b16 %v3576
  %v3668 = vunpack.c.h.b16 %v3576
  %v3669 = vunpack.c.l.b16 %v3577
  %v3670 = vunpack.c.h.b16 %v3577
  %v3671 = vunpack.c.l.b16 %v3578
  %v3672 = vunpack.c.h.b16 %v3578
  %v3673 = vunpack.c.l.b16 %v3579
  %v3674 = vunpack.c.h.b16 %v3579
  %v3675 = vunpack.c.l.b16 %v3580
  %v3676 = vunpack.c.h.b16 %v3580
  %v3677 = vpack.c.b16 %v3615, %v3613
  %v3678 = vpack.c.b16 %v3616, %v3614
  %v3679 = vpack.c.b16 %v3619, %v3617
  %v3680 = vpack.c.b16 %v3620, %v3618
  %v3681 = vpack.c.b16 %v3623, %v3621
  %v3682 = vpack.c.b16 %v3624, %v3622
  %v3683 = vpack.c.b16 %v3627, %v3625
  %v3684 = vpack.c.b16 %v3628, %v3626
  %v3685 = vpack.c.b16 %v3631, %v3629
  %v3686 = vpack.c.b16 %v3632, %v3630
  %v3687 = vpack.c.b16 %v3635, %v3633
  %v3688 = vpack.c.b16 %v3636, %v3634
  %v3689 = vpack.c.b16 %v3639, %v3637
  %v3690 = vpack.c.b16 %v3640, %v3638
  %v3691 = vpack.c.b16 %v3643, %v3641
  %v3692 = vpack.c.b16 %v3644, %v3642
  %v3693 = vpack.c.b16 %v3647, %v3645
  %v3694 = vpack.c.b16 %v3648, %v3646
  %v3695 = vpack.c.b16 %v3651, %v3649
  %v3696 = vpack.c.b16 %v3652, %v3650
  %v3697 = vpack.c.b16 %v3655, %v3653
  %v3698 = vpack.c.b16 %v3656, %v3654
  %v3699 = vpack.c.b16 %v3659, %v3657
  %v3700 = vpack.c.b16 %v3660, %v3658
  %v3701 = vpack.c.b16 %v3663, %v3661
  %v3702 = vpack.c.b16 %v3664, %v3662
  %v3703 = vpack.c.b16 %v3667, %v3665
  %v3704 = vpack.c.b16 %v3668, %v3666
  %v3705 = vpack.c.b16 %v3671, %v3669
  %v3706 = vpack.c.b16 %v3672, %v3670
  %v3707 = vpack.c.b16 %v3675, %v3673
  %v3708 = vpack.c.b16 %v3676, %v3674
  %3741 = vmatprep.subr.bf16.mxu0 %v3692
  %3742 = vmatpush1.bf16.msra.mxu0 %v3691
  %3743 = vmatprep.subr.bf16.mxu0 %v3690
  %3744 = vmatpush1.bf16.msra.mxu0 %v3689
  %3745 = vmatprep.subr.bf16.mxu0 %v3688
  %3746 = vmatpush1.bf16.msra.mxu0 %v3687
  %3747 = vmatprep.subr.bf16.mxu0 %v3686
  %3748 = vmatpush1.bf16.msra.mxu0 %v3685
  %3749 = vmatprep.subr.bf16.mxu0 %v3684
  %3750 = vmatpush1.bf16.msra.mxu0 %v3683
  %3751 = vmatprep.subr.bf16.mxu0 %v3682
  %3752 = vmatpush1.bf16.msra.mxu0 %v3681
  %3753 = vmatprep.subr.bf16.mxu0 %v3680
  %3754 = vmatpush1.bf16.msra.mxu0 %v3679
  %3755 = vmatprep.subr.bf16.mxu0 %v3678
  %3756 = vmatpush1.bf16.msra.mxu0 %v3677
  %3757 = vmatprep.subr.bf16.mxu0 %v3708
  %3758 = vmatpush2.bf16.msra.mxu0 %v3707
  %3759 = vmatprep.subr.bf16.mxu0 %v3706
  %3760 = vmatpush2.bf16.msra.mxu0 %v3705
  %3761 = vmatprep.subr.bf16.mxu0 %v3704
  %3762 = vmatpush2.bf16.msra.mxu0 %v3703
  %3763 = vmatprep.subr.bf16.mxu0 %v3702
  %3764 = vmatpush2.bf16.msra.mxu0 %v3701
  %3765 = vmatprep.subr.bf16.mxu0 %v3700
  %3766 = vmatpush2.bf16.msra.mxu0 %v3699
  %3767 = vmatprep.subr.bf16.mxu0 %v3698
  %3768 = vmatpush2.bf16.msra.mxu0 %v3697
  %3769 = vmatprep.subr.bf16.mxu0 %v3696
  %3770 = vmatpush2.bf16.msra.mxu0 %v3695
  %3771 = vmatprep.subr.bf16.mxu0 %v3694
  %3772 = vmatpush2.bf16.msra.mxu0 %v3693
  %3773 = vmatprep.mubr.bf16.mxu0 %v1592
  %3774 = vmatmul.mubr.bf16.gmra.mxu0 %v1591
  %v3775 = vpop.f32.mrf.mxu0
  %v3776 = vadd.f32 0.0, %v3775
  %v3777 = vpop.f32.mrf.mxu0
  %v3778 = vadd.f32 0.0, %v3777
  %v3779 = vpop.f32.mrf.mxu0
  %v3780 = vadd.f32 0.0, %v3779
  %v3781 = vpop.f32.mrf.mxu0
  %v3782 = vadd.f32 0.0, %v3781
  %3783 = vmatprep.mubr.bf16.mxu0 %v1594
  %3784 = vmatmul.mubr.bf16.gmra.mxu0 %v1593
  %v3785 = vpop.f32.mrf.mxu0
  %v3786 = vadd.f32 0.0, %v3785
  %v3787 = vpop.f32.mrf.mxu0
  %v3788 = vadd.f32 0.0, %v3787
  %v3789 = vpop.f32.mrf.mxu0
  %v3790 = vadd.f32 0.0, %v3789
  %v3791 = vpop.f32.mrf.mxu0
  %v3792 = vadd.f32 0.0, %v3791
  %3793 = vmatprep.mubr.bf16.mxu0 %v1596
  %3794 = vmatmul.mubr.bf16.gmra.mxu0 %v1595
  %v3795 = vpop.f32.mrf.mxu0
  %v3796 = vadd.f32 0.0, %v3795
  %v3797 = vpop.f32.mrf.mxu0
  %v3798 = vadd.f32 0.0, %v3797
  %v3799 = vpop.f32.mrf.mxu0
  %v3800 = vadd.f32 0.0, %v3799
  %v3801 = vpop.f32.mrf.mxu0
  %v3802 = vadd.f32 0.0, %v3801
  %3803 = vmatprep.mubr.bf16.mxu0 %v1598
  %3804 = vmatmul.mubr.bf16.gmra.mxu0 %v1597
  %v3805 = vpop.f32.mrf.mxu0
  %v3806 = vadd.f32 0.0, %v3805
  %v3807 = vpop.f32.mrf.mxu0
  %v3808 = vadd.f32 0.0, %v3807
  %v3809 = vpop.f32.mrf.mxu0
  %v3810 = vadd.f32 0.0, %v3809
  %v3811 = vpop.f32.mrf.mxu0
  %v3812 = vadd.f32 0.0, %v3811
  %3813 = vdwg.mxu0
  %v3814 = vadd.f32 %v3532, %v3776
  %v3815 = vadd.f32 %v3533, %v3778
  %v3816 = vadd.f32 %v3534, %v3780
  %v3817 = vadd.f32 %v3535, %v3782
  %v3818 = vadd.f32 %v3536, %v3786
  %v3819 = vadd.f32 %v3537, %v3788
  %v3820 = vadd.f32 %v3538, %v3790
  %v3821 = vadd.f32 %v3539, %v3792
  %v3822 = vadd.f32 %v3540, %v3796
  %v3823 = vadd.f32 %v3541, %v3798
  %v3824 = vadd.f32 %v3542, %v3800
  %v3825 = vadd.f32 %v3543, %v3802
  %v3826 = vadd.f32 %v3544, %v3806
  %v3827 = vadd.f32 %v3545, %v3808
  %v3828 = vadd.f32 %v3546, %v3810
  %v3829 = vadd.f32 %v3547, %v3812
  %s3830 = scalar_lea.vmem %s4, 2048
  %v3831 = vld [vmem:[%s3830] sm:$0xff]
  %v3832 = vld [vmem:[%s3830 + $0x8] sm:$0xff]
  %v3833 = vld [vmem:[%s3830 + $0x10] sm:$0xff]
  %v3834 = vld [vmem:[%s3830 + $0x18] sm:$0xff]
  %v3835 = vld [vmem:[%s3830 + $0x20] sm:$0xff]
  %v3836 = vld [vmem:[%s3830 + $0x28] sm:$0xff]
  %v3837 = vld [vmem:[%s3830 + $0x30] sm:$0xff]
  %v3838 = vld [vmem:[%s3830 + $0x38] sm:$0xff]
  %v3839 = vld [vmem:[%s3830 + $0x40] sm:$0xff]
  %v3840 = vld [vmem:[%s3830 + $0x48] sm:$0xff]
  %v3841 = vld [vmem:[%s3830 + $0x50] sm:$0xff]
  %v3842 = vld [vmem:[%s3830 + $0x58] sm:$0xff]
  %v3843 = vld [vmem:[%s3830 + $0x60] sm:$0xff]
  %v3844 = vld [vmem:[%s3830 + $0x68] sm:$0xff]
  %v3845 = vld [vmem:[%s3830 + $0x70] sm:$0xff]
  %v3846 = vld [vmem:[%s3830 + $0x78] sm:$0xff]
  %v3847 = vld [vmem:[%s3830 + $0x80] sm:$0xff]
  %v3848 = vld [vmem:[%s3830 + $0x88] sm:$0xff]
  %v3849 = vld [vmem:[%s3830 + $0x90] sm:$0xff]
  %v3850 = vld [vmem:[%s3830 + $0x98] sm:$0xff]
  %v3851 = vld [vmem:[%s3830 + $0xa0] sm:$0xff]
  %v3852 = vld [vmem:[%s3830 + $0xa8] sm:$0xff]
  %v3853 = vld [vmem:[%s3830 + $0xb0] sm:$0xff]
  %v3854 = vld [vmem:[%s3830 + $0xb8] sm:$0xff]
  %v3855 = vld [vmem:[%s3830 + $0xc0] sm:$0xff]
  %v3856 = vld [vmem:[%s3830 + $0xc8] sm:$0xff]
  %v3857 = vld [vmem:[%s3830 + $0xd0] sm:$0xff]
  %v3858 = vld [vmem:[%s3830 + $0xd8] sm:$0xff]
  %v3859 = vld [vmem:[%s3830 + $0xe0] sm:$0xff]
  %v3860 = vld [vmem:[%s3830 + $0xe8] sm:$0xff]
  %v3861 = vld [vmem:[%s3830 + $0xf0] sm:$0xff]
  %v3862 = vld [vmem:[%s3830 + $0xf8] sm:$0xff]
  %v3895 = vunpack.c.l.b16 %v3831
  %v3896 = vunpack.c.h.b16 %v3831
  %v3897 = vunpack.c.l.b16 %v3832
  %v3898 = vunpack.c.h.b16 %v3832
  %v3899 = vunpack.c.l.b16 %v3833
  %v3900 = vunpack.c.h.b16 %v3833
  %v3901 = vunpack.c.l.b16 %v3834
  %v3902 = vunpack.c.h.b16 %v3834
  %v3903 = vunpack.c.l.b16 %v3835
  %v3904 = vunpack.c.h.b16 %v3835
  %v3905 = vunpack.c.l.b16 %v3836
  %v3906 = vunpack.c.h.b16 %v3836
  %v3907 = vunpack.c.l.b16 %v3837
  %v3908 = vunpack.c.h.b16 %v3837
  %v3909 = vunpack.c.l.b16 %v3838
  %v3910 = vunpack.c.h.b16 %v3838
  %v3911 = vunpack.c.l.b16 %v3839
  %v3912 = vunpack.c.h.b16 %v3839
  %v3913 = vunpack.c.l.b16 %v3840
  %v3914 = vunpack.c.h.b16 %v3840
  %v3915 = vunpack.c.l.b16 %v3841
  %v3916 = vunpack.c.h.b16 %v3841
  %v3917 = vunpack.c.l.b16 %v3842
  %v3918 = vunpack.c.h.b16 %v3842
  %v3919 = vunpack.c.l.b16 %v3843
  %v3920 = vunpack.c.h.b16 %v3843
  %v3921 = vunpack.c.l.b16 %v3844
  %v3922 = vunpack.c.h.b16 %v3844
  %v3923 = vunpack.c.l.b16 %v3845
  %v3924 = vunpack.c.h.b16 %v3845
  %v3925 = vunpack.c.l.b16 %v3846
  %v3926 = vunpack.c.h.b16 %v3846
  %v3927 = vunpack.c.l.b16 %v3847
  %v3928 = vunpack.c.h.b16 %v3847
  %v3929 = vunpack.c.l.b16 %v3848
  %v3930 = vunpack.c.h.b16 %v3848
  %v3931 = vunpack.c.l.b16 %v3849
  %v3932 = vunpack.c.h.b16 %v3849
  %v3933 = vunpack.c.l.b16 %v3850
  %v3934 = vunpack.c.h.b16 %v3850
  %v3935 = vunpack.c.l.b16 %v3851
  %v3936 = vunpack.c.h.b16 %v3851
  %v3937 = vunpack.c.l.b16 %v3852
  %v3938 = vunpack.c.h.b16 %v3852
  %v3939 = vunpack.c.l.b16 %v3853
  %v3940 = vunpack.c.h.b16 %v3853
  %v3941 = vunpack.c.l.b16 %v3854
  %v3942 = vunpack.c.h.b16 %v3854
  %v3943 = vunpack.c.l.b16 %v3855
  %v3944 = vunpack.c.h.b16 %v3855
  %v3945 = vunpack.c.l.b16 %v3856
  %v3946 = vunpack.c.h.b16 %v3856
  %v3947 = vunpack.c.l.b16 %v3857
  %v3948 = vunpack.c.h.b16 %v3857
  %v3949 = vunpack.c.l.b16 %v3858
  %v3950 = vunpack.c.h.b16 %v3858
  %v3951 = vunpack.c.l.b16 %v3859
  %v3952 = vunpack.c.h.b16 %v3859
  %v3953 = vunpack.c.l.b16 %v3860
  %v3954 = vunpack.c.h.b16 %v3860
  %v3955 = vunpack.c.l.b16 %v3861
  %v3956 = vunpack.c.h.b16 %v3861
  %v3957 = vunpack.c.l.b16 %v3862
  %v3958 = vunpack.c.h.b16 %v3862
  %v3959 = vpack.c.b16 %v3897, %v3895
  %v3960 = vpack.c.b16 %v3898, %v3896
  %v3961 = vpack.c.b16 %v3901, %v3899
  %v3962 = vpack.c.b16 %v3902, %v3900
  %v3963 = vpack.c.b16 %v3905, %v3903
  %v3964 = vpack.c.b16 %v3906, %v3904
  %v3965 = vpack.c.b16 %v3909, %v3907
  %v3966 = vpack.c.b16 %v3910, %v3908
  %v3967 = vpack.c.b16 %v3913, %v3911
  %v3968 = vpack.c.b16 %v3914, %v3912
  %v3969 = vpack.c.b16 %v3917, %v3915
  %v3970 = vpack.c.b16 %v3918, %v3916
  %v3971 = vpack.c.b16 %v3921, %v3919
  %v3972 = vpack.c.b16 %v3922, %v3920
  %v3973 = vpack.c.b16 %v3925, %v3923
  %v3974 = vpack.c.b16 %v3926, %v3924
  %v3975 = vpack.c.b16 %v3929, %v3927
  %v3976 = vpack.c.b16 %v3930, %v3928
  %v3977 = vpack.c.b16 %v3933, %v3931
  %v3978 = vpack.c.b16 %v3934, %v3932
  %v3979 = vpack.c.b16 %v3937, %v3935
  %v3980 = vpack.c.b16 %v3938, %v3936
  %v3981 = vpack.c.b16 %v3941, %v3939
  %v3982 = vpack.c.b16 %v3942, %v3940
  %v3983 = vpack.c.b16 %v3945, %v3943
  %v3984 = vpack.c.b16 %v3946, %v3944
  %v3985 = vpack.c.b16 %v3949, %v3947
  %v3986 = vpack.c.b16 %v3950, %v3948
  %v3987 = vpack.c.b16 %v3953, %v3951
  %v3988 = vpack.c.b16 %v3954, %v3952
  %v3989 = vpack.c.b16 %v3957, %v3955
  %v3990 = vpack.c.b16 %v3958, %v3956
  %4023 = vmatprep.subr.bf16.mxu0 %v3974
  %4024 = vmatpush1.bf16.msra.mxu0 %v3973
  %4025 = vmatprep.subr.bf16.mxu0 %v3972
  %4026 = vmatpush1.bf16.msra.mxu0 %v3971
  %4027 = vmatprep.subr.bf16.mxu0 %v3970
  %4028 = vmatpush1.bf16.msra.mxu0 %v3969
  %4029 = vmatprep.subr.bf16.mxu0 %v3968
  %4030 = vmatpush1.bf16.msra.mxu0 %v3967
  %4031 = vmatprep.subr.bf16.mxu0 %v3966
  %4032 = vmatpush1.bf16.msra.mxu0 %v3965
  %4033 = vmatprep.subr.bf16.mxu0 %v3964
  %4034 = vmatpush1.bf16.msra.mxu0 %v3963
  %4035 = vmatprep.subr.bf16.mxu0 %v3962
  %4036 = vmatpush1.bf16.msra.mxu0 %v3961
  %4037 = vmatprep.subr.bf16.mxu0 %v3960
  %4038 = vmatpush1.bf16.msra.mxu0 %v3959
  %4039 = vmatprep.subr.bf16.mxu0 %v3990
  %4040 = vmatpush2.bf16.msra.mxu0 %v3989
  %4041 = vmatprep.subr.bf16.mxu0 %v3988
  %4042 = vmatpush2.bf16.msra.mxu0 %v3987
  %4043 = vmatprep.subr.bf16.mxu0 %v3986
  %4044 = vmatpush2.bf16.msra.mxu0 %v3985
  %4045 = vmatprep.subr.bf16.mxu0 %v3984
  %4046 = vmatpush2.bf16.msra.mxu0 %v3983
  %4047 = vmatprep.subr.bf16.mxu0 %v3982
  %4048 = vmatpush2.bf16.msra.mxu0 %v3981
  %4049 = vmatprep.subr.bf16.mxu0 %v3980
  %4050 = vmatpush2.bf16.msra.mxu0 %v3979
  %4051 = vmatprep.subr.bf16.mxu0 %v3978
  %4052 = vmatpush2.bf16.msra.mxu0 %v3977
  %4053 = vmatprep.subr.bf16.mxu0 %v3976
  %4054 = vmatpush2.bf16.msra.mxu0 %v3975
  %4055 = vmatprep.mubr.bf16.mxu0 %v1600
  %4056 = vmatmul.mubr.bf16.gmra.mxu0 %v1599
  %v4057 = vpop.f32.mrf.mxu0
  %v4058 = vadd.f32 0.0, %v4057
  %v4059 = vpop.f32.mrf.mxu0
  %v4060 = vadd.f32 0.0, %v4059
  %v4061 = vpop.f32.mrf.mxu0
  %v4062 = vadd.f32 0.0, %v4061
  %v4063 = vpop.f32.mrf.mxu0
  %v4064 = vadd.f32 0.0, %v4063
  %4065 = vmatprep.mubr.bf16.mxu0 %v1602
  %4066 = vmatmul.mubr.bf16.gmra.mxu0 %v1601
  %v4067 = vpop.f32.mrf.mxu0
  %v4068 = vadd.f32 0.0, %v4067
  %v4069 = vpop.f32.mrf.mxu0
  %v4070 = vadd.f32 0.0, %v4069
  %v4071 = vpop.f32.mrf.mxu0
  %v4072 = vadd.f32 0.0, %v4071
  %v4073 = vpop.f32.mrf.mxu0
  %v4074 = vadd.f32 0.0, %v4073
  %4075 = vmatprep.mubr.bf16.mxu0 %v1604
  %4076 = vmatmul.mubr.bf16.gmra.mxu0 %v1603
  %v4077 = vpop.f32.mrf.mxu0
  %v4078 = vadd.f32 0.0, %v4077
  %v4079 = vpop.f32.mrf.mxu0
  %v4080 = vadd.f32 0.0, %v4079
  %v4081 = vpop.f32.mrf.mxu0
  %v4082 = vadd.f32 0.0, %v4081
  %v4083 = vpop.f32.mrf.mxu0
  %v4084 = vadd.f32 0.0, %v4083
  %4085 = vmatprep.mubr.bf16.mxu0 %v1606
  %4086 = vmatmul.mubr.bf16.gmra.mxu0 %v1605
  %v4087 = vpop.f32.mrf.mxu0
  %v4088 = vadd.f32 0.0, %v4087
  %v4089 = vpop.f32.mrf.mxu0
  %v4090 = vadd.f32 0.0, %v4089
  %v4091 = vpop.f32.mrf.mxu0
  %v4092 = vadd.f32 0.0, %v4091
  %v4093 = vpop.f32.mrf.mxu0
  %v4094 = vadd.f32 0.0, %v4093
  %4095 = vdwg.mxu0
  %v4096 = vadd.f32 %v3814, %v4058
  %v4097 = vadd.f32 %v3815, %v4060
  %v4098 = vadd.f32 %v3816, %v4062
  %v4099 = vadd.f32 %v3817, %v4064
  %v4100 = vadd.f32 %v3818, %v4068
  %v4101 = vadd.f32 %v3819, %v4070
  %v4102 = vadd.f32 %v3820, %v4072
  %v4103 = vadd.f32 %v3821, %v4074
  %v4104 = vadd.f32 %v3822, %v4078
  %v4105 = vadd.f32 %v3823, %v4080
  %v4106 = vadd.f32 %v3824, %v4082
  %v4107 = vadd.f32 %v3825, %v4084
  %v4108 = vadd.f32 %v3826, %v4088
  %v4109 = vadd.f32 %v3827, %v4090
  %v4110 = vadd.f32 %v3828, %v4092
  %v4111 = vadd.f32 %v3829, %v4094
  %v4112 = vld [vmem:[%s5] sm:$0x3]
  %v4114 = vlaneseq
  %v4115 = vshrl.u32 %v4114, 7
  %v4116 = vsub.s32 0, %v4115
  %v4117 = vrot.slane %v4112, %v4116
  %v4118 = vlaneseq
  %v4119 = vshrl.u32 %v4118, 7
  %v4120 = vsub.s32 1, %v4119
  %v4121 = vrot.slane %v4112, %v4120
  %v4124 = vadd.f32 %v4096, %v4117
  %v4125 = vadd.f32 %v4097, %v4121
  %v4126 = vadd.f32 %v4098, %v4117
  %v4127 = vadd.f32 %v4099, %v4121
  %v4128 = vadd.f32 %v4100, %v4117
  %v4129 = vadd.f32 %v4101, %v4121
  %v4130 = vadd.f32 %v4102, %v4117
  %v4131 = vadd.f32 %v4103, %v4121
  %v4132 = vadd.f32 %v4104, %v4117
  %v4133 = vadd.f32 %v4105, %v4121
  %v4134 = vadd.f32 %v4106, %v4117
  %v4135 = vadd.f32 %v4107, %v4121
  %v4136 = vadd.f32 %v4108, %v4117
  %v4137 = vadd.f32 %v4109, %v4121
  %v4138 = vadd.f32 %v4110, %v4117
  %v4139 = vadd.f32 %v4111, %v4121
  %v4140 = vmul.f32 %v4124, 0.5
  %v4141 = vmul.f32 %v4125, 0.5
  %v4142 = vmul.f32 %v4126, 0.5
  %v4143 = vmul.f32 %v4127, 0.5
  %v4144 = vmul.f32 %v4128, 0.5
  %v4145 = vmul.f32 %v4129, 0.5
  %v4146 = vmul.f32 %v4130, 0.5
  %v4147 = vmul.f32 %v4131, 0.5
  %v4148 = vmul.f32 %v4132, 0.5
  %v4149 = vmul.f32 %v4133, 0.5
  %v4150 = vmul.f32 %v4134, 0.5
  %v4151 = vmul.f32 %v4135, 0.5
  %v4152 = vmul.f32 %v4136, 0.5
  %v4153 = vmul.f32 %v4137, 0.5
  %v4154 = vmul.f32 %v4138, 0.5
  %v4155 = vmul.f32 %v4139, 0.5
  %v4156 = vtanh.pop %v4140
  %v4157 = vtanh.pop %v4141
  %v4158 = vtanh.pop %v4142
  %v4159 = vtanh.pop %v4143
  %v4160 = vtanh.pop %v4144
  %v4161 = vtanh.pop %v4145
  %v4162 = vtanh.pop %v4146
  %v4163 = vtanh.pop %v4147
  %v4164 = vtanh.pop %v4148
  %v4165 = vtanh.pop %v4149
  %v4166 = vtanh.pop %v4150
  %v4167 = vtanh.pop %v4151
  %v4168 = vtanh.pop %v4152
  %v4169 = vtanh.pop %v4153
  %v4170 = vtanh.pop %v4154
  %v4171 = vtanh.pop %v4155
  %v4172 = vmul.f32 %v4156, 0.5
  %v4173 = vmul.f32 %v4157, 0.5
  %v4174 = vmul.f32 %v4158, 0.5
  %v4175 = vmul.f32 %v4159, 0.5
  %v4176 = vmul.f32 %v4160, 0.5
  %v4177 = vmul.f32 %v4161, 0.5
  %v4178 = vmul.f32 %v4162, 0.5
  %v4179 = vmul.f32 %v4163, 0.5
  %v4180 = vmul.f32 %v4164, 0.5
  %v4181 = vmul.f32 %v4165, 0.5
  %v4182 = vmul.f32 %v4166, 0.5
  %v4183 = vmul.f32 %v4167, 0.5
  %v4184 = vmul.f32 %v4168, 0.5
  %v4185 = vmul.f32 %v4169, 0.5
  %v4186 = vmul.f32 %v4170, 0.5
  %v4187 = vmul.f32 %v4171, 0.5
  %v4188 = vadd.f32 %v4172, 0.5
  %v4189 = vadd.f32 %v4173, 0.5
  %v4190 = vadd.f32 %v4174, 0.5
  %v4191 = vadd.f32 %v4175, 0.5
  %v4192 = vadd.f32 %v4176, 0.5
  %v4193 = vadd.f32 %v4177, 0.5
  %v4194 = vadd.f32 %v4178, 0.5
  %v4195 = vadd.f32 %v4179, 0.5
  %v4196 = vadd.f32 %v4180, 0.5
  %v4197 = vadd.f32 %v4181, 0.5
  %v4198 = vadd.f32 %v4182, 0.5
  %v4199 = vadd.f32 %v4183, 0.5
  %v4200 = vadd.f32 %v4184, 0.5
  %v4201 = vadd.f32 %v4185, 0.5
  %v4202 = vadd.f32 %v4186, 0.5
  %v4203 = vadd.f32 %v4187, 0.5
  %v4204 = vld [vmem:[%s6] sm:$0xf]
  %v4205 = vld [vmem:[%s6 + $0x4] sm:$0xf]
  %v4206 = vld [vmem:[%s6 + $0x8] sm:$0xf]
  %v4207 = vld [vmem:[%s6 + $0xc] sm:$0xf]
  %v4208 = vld [vmem:[%s6 + $0x10] sm:$0xf]
  %v4209 = vld [vmem:[%s6 + $0x14] sm:$0xf]
  %v4210 = vld [vmem:[%s6 + $0x18] sm:$0xf]
  %v4211 = vld [vmem:[%s6 + $0x1c] sm:$0xf]
  %v4212 = vld [vmem:[%s6 + $0x20] sm:$0xf]
  %v4213 = vld [vmem:[%s6 + $0x24] sm:$0xf]
  %v4214 = vld [vmem:[%s6 + $0x28] sm:$0xf]
  %v4215 = vld [vmem:[%s6 + $0x2c] sm:$0xf]
  %v4216 = vld [vmem:[%s6 + $0x30] sm:$0xf]
  %v4217 = vld [vmem:[%s6 + $0x34] sm:$0xf]
  %v4218 = vld [vmem:[%s6 + $0x38] sm:$0xf]
  %v4219 = vld [vmem:[%s6 + $0x3c] sm:$0xf]
  %v4220 = vld [vmem:[%s6 + $0x40] sm:$0xf]
  %v4221 = vld [vmem:[%s6 + $0x44] sm:$0xf]
  %v4222 = vpack.c.bf16 %v4190, %v4188
  %v4223 = vpack.c.bf16 %v4191, %v4189
  %v4224 = vpack.c.bf16 %v4194, %v4192
  %v4225 = vpack.c.bf16 %v4195, %v4193
  %v4226 = vpack.c.bf16 %v4198, %v4196
  %v4227 = vpack.c.bf16 %v4199, %v4197
  %v4228 = vpack.c.bf16 %v4202, %v4200
  %v4229 = vpack.c.bf16 %v4203, %v4201
  %v4248 = vunpack.c.l.b16 %v4204
  %v4249 = vunpack.c.l.b16 %v4205
  %v4250 = vunpack.c.l.b16 %v4206
  %v4251 = vunpack.c.l.b16 %v4207
  %v4252 = vunpack.c.l.b16 %v4208
  %v4253 = vunpack.c.l.b16 %v4209
  %v4254 = vunpack.c.l.b16 %v4210
  %v4255 = vunpack.c.l.b16 %v4211
  %v4256 = vunpack.c.l.b16 %v4212
  %v4257 = vunpack.c.l.b16 %v4213
  %v4258 = vunpack.c.l.b16 %v4214
  %v4259 = vunpack.c.l.b16 %v4215
  %v4260 = vunpack.c.l.b16 %v4216
  %v4261 = vunpack.c.l.b16 %v4217
  %v4262 = vunpack.c.l.b16 %v4218
  %v4263 = vunpack.c.l.b16 %v4219
  %v4264 = vunpack.c.l.b16 %v4220
  %v4265 = vunpack.c.l.b16 %v4221
  %v4266 = vpack.c.b16 %v4249, %v4248
  %v4267 = vpack.c.b16 %v4251, %v4250
  %v4268 = vpack.c.b16 %v4253, %v4252
  %v4269 = vpack.c.b16 %v4255, %v4254
  %v4270 = vpack.c.b16 %v4257, %v4256
  %v4271 = vpack.c.b16 %v4259, %v4258
  %v4272 = vpack.c.b16 %v4261, %v4260
  %v4273 = vpack.c.b16 %v4263, %v4262
  %v4274 = vpack.c.b16 %v4265, %v4264
  %vm4275 = vcmask 523264
  %v4277 = vsel %vm4275, %v4266, 0
  %v4280 = vsel %vm4275, %v4267, 0
  %v4283 = vsel %vm4275, %v4268, 0
  %v4286 = vsel %vm4275, %v4269, 0
  %v4289 = vsel %vm4275, %v4270, 0
  %v4292 = vsel %vm4275, %v4271, 0
  %v4295 = vsel %vm4275, %v4272, 0
  %v4298 = vsel %vm4275, %v4273, 0
  %v4301 = vsel %vm4275, %v4274, 0
  %4303 = vmatprep.subr.bf16.mxu0 0
  %4304 = vmatpush1.bf16.msra.mxu0 0
  %4305 = vmatprep.subr.bf16.mxu0 0
  %4306 = vmatpush1.bf16.msra.mxu0 0
  %4307 = vmatprep.subr.bf16.mxu0 0
  %4308 = vmatpush1.bf16.msra.mxu0 0
  %4309 = vmatprep.subr.bf16.mxu0 0
  %4310 = vmatpush1.bf16.msra.mxu0 0
  %4311 = vmatprep.subr.bf16.mxu0 %v4229
  %4312 = vmatpush1.bf16.msra.mxu0 %v4228
  %4313 = vmatprep.subr.bf16.mxu0 %v4227
  %4314 = vmatpush1.bf16.msra.mxu0 %v4226
  %4315 = vmatprep.subr.bf16.mxu0 %v4225
  %4316 = vmatpush1.bf16.msra.mxu0 %v4224
  %4317 = vmatprep.subr.bf16.mxu0 %v4223
  %4318 = vmatpush1.bf16.msra.mxu0 %v4222
  %4319 = vmatprep.subr.bf16.mxu0 0
  %4320 = vmatpush2.bf16.msra.mxu0 0
  %4321 = vmatprep.subr.bf16.mxu0 0
  %4322 = vmatpush2.bf16.msra.mxu0 0
  %4323 = vmatprep.subr.bf16.mxu0 0
  %4324 = vmatpush2.bf16.msra.mxu0 0
  %4325 = vmatprep.subr.bf16.mxu0 0
  %4326 = vmatpush2.bf16.msra.mxu0 0
  %4327 = vmatprep.subr.bf16.mxu0 0
  %4328 = vmatpush2.bf16.msra.mxu0 0
  %4329 = vmatprep.subr.bf16.mxu0 0
  %4330 = vmatpush2.bf16.msra.mxu0 0
  %4331 = vmatprep.subr.bf16.mxu0 0
  %4332 = vmatpush2.bf16.msra.mxu0 0
  %4333 = vmatprep.subr.bf16.mxu0 0
  %4334 = vmatpush2.bf16.msra.mxu0 0
  %4335 = vmatprep.mubr.bf16.mxu0 0
  %4336 = vmatmul.mubr.bf16.gmra.mxu0 %v4277
  %v4337 = vpop.f32.mrf.mxu0
  %v4338 = vadd.f32 0.0, %v4337
  %v4339 = vpop.f32.mrf.mxu0
  %v4340 = vadd.f32 0.0, %v4339
  %v4341 = vpop.f32.mrf.mxu0
  %v4342 = vadd.f32 0.0, %v4341
  %v4343 = vpop.f32.mrf.mxu0
  %v4344 = vadd.f32 0.0, %v4343
  %4345 = vmatprep.mubr.bf16.mxu0 0
  %4346 = vmatmul.mubr.bf16.gmra.mxu0 %v4280
  %v4347 = vpop.f32.mrf.mxu0
  %v4348 = vadd.f32 0.0, %v4347
  %v4349 = vpop.f32.mrf.mxu0
  %v4350 = vadd.f32 0.0, %v4349
  %v4351 = vpop.f32.mrf.mxu0
  %v4352 = vadd.f32 0.0, %v4351
  %v4353 = vpop.f32.mrf.mxu0
  %v4354 = vadd.f32 0.0, %v4353
  %4355 = vmatprep.mubr.bf16.mxu0 0
  %4356 = vmatmul.mubr.bf16.gmra.mxu0 %v4283
  %v4357 = vpop.f32.mrf.mxu0
  %v4358 = vadd.f32 0.0, %v4357
  %v4359 = vpop.f32.mrf.mxu0
  %v4360 = vadd.f32 0.0, %v4359
  %v4361 = vpop.f32.mrf.mxu0
  %v4362 = vadd.f32 0.0, %v4361
  %v4363 = vpop.f32.mrf.mxu0
  %v4364 = vadd.f32 0.0, %v4363
  %4365 = vmatprep.mubr.bf16.mxu0 0
  %4366 = vmatmul.mubr.bf16.gmra.mxu0 %v4286
  %v4367 = vpop.f32.mrf.mxu0
  %v4368 = vadd.f32 0.0, %v4367
  %v4369 = vpop.f32.mrf.mxu0
  %v4370 = vadd.f32 0.0, %v4369
  %v4371 = vpop.f32.mrf.mxu0
  %v4372 = vadd.f32 0.0, %v4371
  %v4373 = vpop.f32.mrf.mxu0
  %v4374 = vadd.f32 0.0, %v4373
  %4375 = vmatprep.mubr.bf16.mxu0 0
  %4376 = vmatmul.mubr.bf16.gmra.mxu0 %v4289
  %v4377 = vpop.f32.mrf.mxu0
  %v4378 = vadd.f32 0.0, %v4377
  %v4379 = vpop.f32.mrf.mxu0
  %v4380 = vadd.f32 0.0, %v4379
  %v4381 = vpop.f32.mrf.mxu0
  %v4382 = vadd.f32 0.0, %v4381
  %v4383 = vpop.f32.mrf.mxu0
  %v4384 = vadd.f32 0.0, %v4383
  %4385 = vmatprep.mubr.bf16.mxu0 0
  %4386 = vmatmul.mubr.bf16.gmra.mxu0 %v4292
  %v4387 = vpop.f32.mrf.mxu0
  %v4388 = vadd.f32 0.0, %v4387
  %v4389 = vpop.f32.mrf.mxu0
  %v4390 = vadd.f32 0.0, %v4389
  %v4391 = vpop.f32.mrf.mxu0
  %v4392 = vadd.f32 0.0, %v4391
  %v4393 = vpop.f32.mrf.mxu0
  %v4394 = vadd.f32 0.0, %v4393
  %4395 = vmatprep.mubr.bf16.mxu0 0
  %4396 = vmatmul.mubr.bf16.gmra.mxu0 %v4295
  %v4397 = vpop.f32.mrf.mxu0
  %v4398 = vadd.f32 0.0, %v4397
  %v4399 = vpop.f32.mrf.mxu0
  %v4400 = vadd.f32 0.0, %v4399
  %v4401 = vpop.f32.mrf.mxu0
  %v4402 = vadd.f32 0.0, %v4401
  %v4403 = vpop.f32.mrf.mxu0
  %v4404 = vadd.f32 0.0, %v4403
  %4405 = vmatprep.mubr.bf16.mxu0 0
  %4406 = vmatmul.mubr.bf16.gmra.mxu0 %v4298
  %v4407 = vpop.f32.mrf.mxu0
  %v4408 = vadd.f32 0.0, %v4407
  %v4409 = vpop.f32.mrf.mxu0
  %v4410 = vadd.f32 0.0, %v4409
  %v4411 = vpop.f32.mrf.mxu0
  %v4412 = vadd.f32 0.0, %v4411
  %v4413 = vpop.f32.mrf.mxu0
  %v4414 = vadd.f32 0.0, %v4413
  %4415 = vmatprep.mubr.bf16.mxu0 0
  %4416 = vmatmul.mubr.bf16.gmra.mxu0 %v4301
  %v4417 = vpop.f32.mrf.mxu0
  %v4418 = vadd.f32 0.0, %v4417
  %v4419 = vpop.f32.mrf.mxu0
  %v4420 = vadd.f32 0.0, %v4419
  %v4421 = vpop.f32.mrf.mxu0
  %v4422 = vadd.f32 0.0, %v4421
  %v4423 = vpop.f32.mrf.mxu0
  %v4424 = vadd.f32 0.0, %v4423
  %4425 = vdwg.mxu0
  %v4426 = vpack.c.bf16 %v4342, %v4338
  %v4427 = vpack.c.bf16 %v4344, %v4340
  %v4428 = vpack.c.bf16 %v4352, %v4348
  %v4429 = vpack.c.bf16 %v4354, %v4350
  %v4430 = vpack.c.bf16 %v4362, %v4358
  %v4431 = vpack.c.bf16 %v4364, %v4360
  %v4432 = vpack.c.bf16 %v4372, %v4368
  %v4433 = vpack.c.bf16 %v4374, %v4370
  %v4434 = vpack.c.bf16 %v4382, %v4378
  %v4435 = vpack.c.bf16 %v4384, %v4380
  %v4436 = vpack.c.bf16 %v4392, %v4388
  %v4437 = vpack.c.bf16 %v4394, %v4390
  %v4438 = vpack.c.bf16 %v4402, %v4398
  %v4439 = vpack.c.bf16 %v4404, %v4400
  %v4440 = vpack.c.bf16 %v4412, %v4408
  %v4441 = vpack.c.bf16 %v4414, %v4410
  %v4442 = vpack.c.bf16 %v4422, %v4418
  %v4443 = vpack.c.bf16 %v4424, %v4420
  %v4444 = vld [vmem:[%s7] sm:$0xff]
  %v4445 = vld [vmem:[%s7 + $0x8] sm:$0xff]
  %v4446 = vld [vmem:[%s7 + $0x10] sm:$0xff]
  %v4447 = vld [vmem:[%s7 + $0x18] sm:$0xff]
  %v4448 = vld [vmem:[%s7 + $0x20] sm:$0xff]
  %v4449 = vld [vmem:[%s7 + $0x28] sm:$0xff]
  %v4450 = vld [vmem:[%s7 + $0x30] sm:$0xff]
  %v4451 = vld [vmem:[%s7 + $0x38] sm:$0xff]
  %v4452 = vld [vmem:[%s7 + $0x40] sm:$0xff]
  %v4453 = vld [vmem:[%s7 + $0x48] sm:$0xff]
  %v4454 = vld [vmem:[%s7 + $0x50] sm:$0xff]
  %v4455 = vld [vmem:[%s7 + $0x58] sm:$0xff]
  %v4456 = vld [vmem:[%s7 + $0x60] sm:$0xff]
  %v4457 = vld [vmem:[%s7 + $0x68] sm:$0xff]
  %v4458 = vld [vmem:[%s7 + $0x70] sm:$0xff]
  %v4459 = vld [vmem:[%s7 + $0x78] sm:$0xff]
  %v4460 = vld [vmem:[%s7 + $0x80] sm:$0xff]
  %v4461 = vld [vmem:[%s7 + $0x88] sm:$0xff]
  %v4462 = vld [vmem:[%s7 + $0x90] sm:$0xff]
  %v4463 = vld [vmem:[%s7 + $0x98] sm:$0xff]
  %v4464 = vld [vmem:[%s7 + $0xa0] sm:$0xff]
  %v4465 = vld [vmem:[%s7 + $0xa8] sm:$0xff]
  %v4466 = vld [vmem:[%s7 + $0xb0] sm:$0xff]
  %v4467 = vld [vmem:[%s7 + $0xb8] sm:$0xff]
  %v4468 = vld [vmem:[%s7 + $0xc0] sm:$0xff]
  %v4469 = vld [vmem:[%s7 + $0xc8] sm:$0xff]
  %v4470 = vld [vmem:[%s7 + $0xd0] sm:$0xff]
  %v4471 = vld [vmem:[%s7 + $0xd8] sm:$0xff]
  %v4472 = vld [vmem:[%s7 + $0xe0] sm:$0xff]
  %v4473 = vld [vmem:[%s7 + $0xe8] sm:$0xff]
  %v4474 = vld [vmem:[%s7 + $0xf0] sm:$0xff]
  %v4475 = vld [vmem:[%s7 + $0xf8] sm:$0xff]
  %s4476 = scalar_lea.vmem %s7, 256
  %v4477 = vld [vmem:[%s4476] sm:$0xff]
  %v4478 = vld [vmem:[%s4476 + $0x8] sm:$0xff]
  %v4479 = vld [vmem:[%s4476 + $0x10] sm:$0xff]
  %v4480 = vld [vmem:[%s4476 + $0x18] sm:$0xff]
  %v4481 = vld [vmem:[%s4476 + $0x20] sm:$0xff]
  %v4482 = vld [vmem:[%s4476 + $0x28] sm:$0xff]
  %v4483 = vld [vmem:[%s4476 + $0x30] sm:$0xff]
  %v4484 = vld [vmem:[%s4476 + $0x38] sm:$0xff]
  %v4485 = vld [vmem:[%s4476 + $0x40] sm:$0xff]
  %v4486 = vld [vmem:[%s4476 + $0x48] sm:$0xff]
  %v4487 = vld [vmem:[%s4476 + $0x50] sm:$0xff]
  %v4488 = vld [vmem:[%s4476 + $0x58] sm:$0xff]
  %v4489 = vld [vmem:[%s4476 + $0x60] sm:$0xff]
  %v4490 = vld [vmem:[%s4476 + $0x68] sm:$0xff]
  %v4491 = vld [vmem:[%s4476 + $0x70] sm:$0xff]
  %v4492 = vld [vmem:[%s4476 + $0x78] sm:$0xff]
  %v4493 = vld [vmem:[%s4476 + $0x80] sm:$0xff]
  %v4494 = vld [vmem:[%s4476 + $0x88] sm:$0xff]
  %v4495 = vld [vmem:[%s4476 + $0x90] sm:$0xff]
  %v4496 = vld [vmem:[%s4476 + $0x98] sm:$0xff]
  %v4497 = vld [vmem:[%s4476 + $0xa0] sm:$0xff]
  %v4498 = vld [vmem:[%s4476 + $0xa8] sm:$0xff]
  %v4499 = vld [vmem:[%s4476 + $0xb0] sm:$0xff]
  %v4500 = vld [vmem:[%s4476 + $0xb8] sm:$0xff]
  %v4501 = vld [vmem:[%s4476 + $0xc0] sm:$0xff]
  %v4502 = vld [vmem:[%s4476 + $0xc8] sm:$0xff]
  %v4503 = vld [vmem:[%s4476 + $0xd0] sm:$0xff]
  %v4504 = vld [vmem:[%s4476 + $0xd8] sm:$0xff]
  %v4505 = vld [vmem:[%s4476 + $0xe0] sm:$0xff]
  %v4506 = vld [vmem:[%s4476 + $0xe8] sm:$0xff]
  %v4507 = vld [vmem:[%s4476 + $0xf0] sm:$0xff]
  %v4508 = vld [vmem:[%s4476 + $0xf8] sm:$0xff]
  %v4541 = vunpack.c.l.b16 %v4477
  %v4542 = vunpack.c.h.b16 %v4477
  %v4543 = vunpack.c.l.b16 %v4478
  %v4544 = vunpack.c.h.b16 %v4478
  %v4545 = vunpack.c.l.b16 %v4479
  %v4546 = vunpack.c.h.b16 %v4479
  %v4547 = vunpack.c.l.b16 %v4480
  %v4548 = vunpack.c.h.b16 %v4480
  %v4549 = vunpack.c.l.b16 %v4481
  %v4550 = vunpack.c.h.b16 %v4481
  %v4551 = vunpack.c.l.b16 %v4482
  %v4552 = vunpack.c.h.b16 %v4482
  %v4553 = vunpack.c.l.b16 %v4483
  %v4554 = vunpack.c.h.b16 %v4483
  %v4555 = vunpack.c.l.b16 %v4484
  %v4556 = vunpack.c.h.b16 %v4484
  %v4557 = vunpack.c.l.b16 %v4485
  %v4558 = vunpack.c.h.b16 %v4485
  %v4559 = vunpack.c.l.b16 %v4486
  %v4560 = vunpack.c.h.b16 %v4486
  %v4561 = vunpack.c.l.b16 %v4487
  %v4562 = vunpack.c.h.b16 %v4487
  %v4563 = vunpack.c.l.b16 %v4488
  %v4564 = vunpack.c.h.b16 %v4488
  %v4565 = vunpack.c.l.b16 %v4489
  %v4566 = vunpack.c.h.b16 %v4489
  %v4567 = vunpack.c.l.b16 %v4490
  %v4568 = vunpack.c.h.b16 %v4490
  %v4569 = vunpack.c.l.b16 %v4491
  %v4570 = vunpack.c.h.b16 %v4491
  %v4571 = vunpack.c.l.b16 %v4492
  %v4572 = vunpack.c.h.b16 %v4492
  %v4573 = vunpack.c.l.b16 %v4493
  %v4574 = vunpack.c.h.b16 %v4493
  %v4575 = vunpack.c.l.b16 %v4494
  %v4576 = vunpack.c.h.b16 %v4494
  %v4577 = vunpack.c.l.b16 %v4495
  %v4578 = vunpack.c.h.b16 %v4495
  %v4579 = vunpack.c.l.b16 %v4496
  %v4580 = vunpack.c.h.b16 %v4496
  %v4581 = vunpack.c.l.b16 %v4497
  %v4582 = vunpack.c.h.b16 %v4497
  %v4583 = vunpack.c.l.b16 %v4498
  %v4584 = vunpack.c.h.b16 %v4498
  %v4585 = vunpack.c.l.b16 %v4499
  %v4586 = vunpack.c.h.b16 %v4499
  %v4587 = vunpack.c.l.b16 %v4500
  %v4588 = vunpack.c.h.b16 %v4500
  %v4589 = vunpack.c.l.b16 %v4501
  %v4590 = vunpack.c.h.b16 %v4501
  %v4591 = vunpack.c.l.b16 %v4502
  %v4592 = vunpack.c.h.b16 %v4502
  %v4593 = vunpack.c.l.b16 %v4503
  %v4594 = vunpack.c.h.b16 %v4503
  %v4595 = vunpack.c.l.b16 %v4504
  %v4596 = vunpack.c.h.b16 %v4504
  %v4597 = vunpack.c.l.b16 %v4505
  %v4598 = vunpack.c.h.b16 %v4505
  %v4599 = vunpack.c.l.b16 %v4506
  %v4600 = vunpack.c.h.b16 %v4506
  %v4601 = vunpack.c.l.b16 %v4507
  %v4602 = vunpack.c.h.b16 %v4507
  %v4603 = vunpack.c.l.b16 %v4508
  %v4604 = vunpack.c.h.b16 %v4508
  %v4605 = vpack.c.b16 %v4543, %v4541
  %v4606 = vpack.c.b16 %v4544, %v4542
  %v4607 = vpack.c.b16 %v4547, %v4545
  %v4608 = vpack.c.b16 %v4548, %v4546
  %v4609 = vpack.c.b16 %v4551, %v4549
  %v4610 = vpack.c.b16 %v4552, %v4550
  %v4611 = vpack.c.b16 %v4555, %v4553
  %v4612 = vpack.c.b16 %v4556, %v4554
  %v4613 = vpack.c.b16 %v4559, %v4557
  %v4614 = vpack.c.b16 %v4560, %v4558
  %v4615 = vpack.c.b16 %v4563, %v4561
  %v4616 = vpack.c.b16 %v4564, %v4562
  %v4617 = vpack.c.b16 %v4567, %v4565
  %v4618 = vpack.c.b16 %v4568, %v4566
  %v4619 = vpack.c.b16 %v4571, %v4569
  %v4620 = vpack.c.b16 %v4572, %v4570
  %v4621 = vpack.c.b16 %v4575, %v4573
  %v4622 = vpack.c.b16 %v4576, %v4574
  %v4623 = vpack.c.b16 %v4579, %v4577
  %v4624 = vpack.c.b16 %v4580, %v4578
  %v4625 = vpack.c.b16 %v4583, %v4581
  %v4626 = vpack.c.b16 %v4584, %v4582
  %v4627 = vpack.c.b16 %v4587, %v4585
  %v4628 = vpack.c.b16 %v4588, %v4586
  %v4629 = vpack.c.b16 %v4591, %v4589
  %v4630 = vpack.c.b16 %v4592, %v4590
  %v4631 = vpack.c.b16 %v4595, %v4593
  %v4632 = vpack.c.b16 %v4596, %v4594
  %v4633 = vpack.c.b16 %v4599, %v4597
  %v4634 = vpack.c.b16 %v4600, %v4598
  %v4635 = vpack.c.b16 %v4603, %v4601
  %v4636 = vpack.c.b16 %v4604, %v4602
  %4669 = vmatprep.subr.bf16.mxu0 %v4620
  %4670 = vmatpush1.bf16.msra.mxu0 %v4619
  %4671 = vmatprep.subr.bf16.mxu0 %v4618
  %4672 = vmatpush1.bf16.msra.mxu0 %v4617
  %4673 = vmatprep.subr.bf16.mxu0 %v4616
  %4674 = vmatpush1.bf16.msra.mxu0 %v4615
  %4675 = vmatprep.subr.bf16.mxu0 %v4614
  %4676 = vmatpush1.bf16.msra.mxu0 %v4613
  %4677 = vmatprep.subr.bf16.mxu0 %v4612
  %4678 = vmatpush1.bf16.msra.mxu0 %v4611
  %4679 = vmatprep.subr.bf16.mxu0 %v4610
  %4680 = vmatpush1.bf16.msra.mxu0 %v4609
  %4681 = vmatprep.subr.bf16.mxu0 %v4608
  %4682 = vmatpush1.bf16.msra.mxu0 %v4607
  %4683 = vmatprep.subr.bf16.mxu0 %v4606
  %4684 = vmatpush1.bf16.msra.mxu0 %v4605
  %4685 = vmatprep.subr.bf16.mxu0 %v4636
  %4686 = vmatpush2.bf16.msra.mxu0 %v4635
  %4687 = vmatprep.subr.bf16.mxu0 %v4634
  %4688 = vmatpush2.bf16.msra.mxu0 %v4633
  %4689 = vmatprep.subr.bf16.mxu0 %v4632
  %4690 = vmatpush2.bf16.msra.mxu0 %v4631
  %4691 = vmatprep.subr.bf16.mxu0 %v4630
  %4692 = vmatpush2.bf16.msra.mxu0 %v4629
  %4693 = vmatprep.subr.bf16.mxu0 %v4628
  %4694 = vmatpush2.bf16.msra.mxu0 %v4627
  %4695 = vmatprep.subr.bf16.mxu0 %v4626
  %4696 = vmatpush2.bf16.msra.mxu0 %v4625
  %4697 = vmatprep.subr.bf16.mxu0 %v4624
  %4698 = vmatpush2.bf16.msra.mxu0 %v4623
  %4699 = vmatprep.subr.bf16.mxu0 %v4622
  %4700 = vmatpush2.bf16.msra.mxu0 %v4621
  %4701 = vmatprep.mubr.bf16.mxu0 %v4429
  %4702 = vmatmul.mubr.bf16.gmra.mxu0 %v4428
  %v4703 = vpop.f32.mrf.mxu0
  %v4704 = vadd.f32 0.0, %v4703
  %v4705 = vpop.f32.mrf.mxu0
  %v4706 = vadd.f32 0.0, %v4705
  %v4707 = vpop.f32.mrf.mxu0
  %v4708 = vadd.f32 0.0, %v4707
  %v4709 = vpop.f32.mrf.mxu0
  %v4710 = vadd.f32 0.0, %v4709
  %4711 = vdwg.mxu0
  %v4744 = vunpack.c.l.b16 %v4444
  %v4745 = vunpack.c.h.b16 %v4444
  %v4746 = vunpack.c.l.b16 %v4445
  %v4747 = vunpack.c.h.b16 %v4445
  %v4748 = vunpack.c.l.b16 %v4446
  %v4749 = vunpack.c.h.b16 %v4446
  %v4750 = vunpack.c.l.b16 %v4447
  %v4751 = vunpack.c.h.b16 %v4447
  %v4752 = vunpack.c.l.b16 %v4448
  %v4753 = vunpack.c.h.b16 %v4448
  %v4754 = vunpack.c.l.b16 %v4449
  %v4755 = vunpack.c.h.b16 %v4449
  %v4756 = vunpack.c.l.b16 %v4450
  %v4757 = vunpack.c.h.b16 %v4450
  %v4758 = vunpack.c.l.b16 %v4451
  %v4759 = vunpack.c.h.b16 %v4451
  %v4760 = vunpack.c.l.b16 %v4452
  %v4761 = vunpack.c.h.b16 %v4452
  %v4762 = vunpack.c.l.b16 %v4453
  %v4763 = vunpack.c.h.b16 %v4453
  %v4764 = vunpack.c.l.b16 %v4454
  %v4765 = vunpack.c.h.b16 %v4454
  %v4766 = vunpack.c.l.b16 %v4455
  %v4767 = vunpack.c.h.b16 %v4455
  %v4768 = vunpack.c.l.b16 %v4456
  %v4769 = vunpack.c.h.b16 %v4456
  %v4770 = vunpack.c.l.b16 %v4457
  %v4771 = vunpack.c.h.b16 %v4457
  %v4772 = vunpack.c.l.b16 %v4458
  %v4773 = vunpack.c.h.b16 %v4458
  %v4774 = vunpack.c.l.b16 %v4459
  %v4775 = vunpack.c.h.b16 %v4459
  %v4776 = vunpack.c.l.b16 %v4460
  %v4777 = vunpack.c.h.b16 %v4460
  %v4778 = vunpack.c.l.b16 %v4461
  %v4779 = vunpack.c.h.b16 %v4461
  %v4780 = vunpack.c.l.b16 %v4462
  %v4781 = vunpack.c.h.b16 %v4462
  %v4782 = vunpack.c.l.b16 %v4463
  %v4783 = vunpack.c.h.b16 %v4463
  %v4784 = vunpack.c.l.b16 %v4464
  %v4785 = vunpack.c.h.b16 %v4464
  %v4786 = vunpack.c.l.b16 %v4465
  %v4787 = vunpack.c.h.b16 %v4465
  %v4788 = vunpack.c.l.b16 %v4466
  %v4789 = vunpack.c.h.b16 %v4466
  %v4790 = vunpack.c.l.b16 %v4467
  %v4791 = vunpack.c.h.b16 %v4467
  %v4792 = vunpack.c.l.b16 %v4468
  %v4793 = vunpack.c.h.b16 %v4468
  %v4794 = vunpack.c.l.b16 %v4469
  %v4795 = vunpack.c.h.b16 %v4469
  %v4796 = vunpack.c.l.b16 %v4470
  %v4797 = vunpack.c.h.b16 %v4470
  %v4798 = vunpack.c.l.b16 %v4471
  %v4799 = vunpack.c.h.b16 %v4471
  %v4800 = vunpack.c.l.b16 %v4472
  %v4801 = vunpack.c.h.b16 %v4472
  %v4802 = vunpack.c.l.b16 %v4473
  %v4803 = vunpack.c.h.b16 %v4473
  %v4804 = vunpack.c.l.b16 %v4474
  %v4805 = vunpack.c.h.b16 %v4474
  %v4806 = vunpack.c.l.b16 %v4475
  %v4807 = vunpack.c.h.b16 %v4475
  %v4808 = vpack.c.b16 %v4746, %v4744
  %v4809 = vpack.c.b16 %v4747, %v4745
  %v4810 = vpack.c.b16 %v4750, %v4748
  %v4811 = vpack.c.b16 %v4751, %v4749
  %v4812 = vpack.c.b16 %v4754, %v4752
  %v4813 = vpack.c.b16 %v4755, %v4753
  %v4814 = vpack.c.b16 %v4758, %v4756
  %v4815 = vpack.c.b16 %v4759, %v4757
  %v4816 = vpack.c.b16 %v4762, %v4760
  %v4817 = vpack.c.b16 %v4763, %v4761
  %v4818 = vpack.c.b16 %v4766, %v4764
  %v4819 = vpack.c.b16 %v4767, %v4765
  %v4820 = vpack.c.b16 %v4770, %v4768
  %v4821 = vpack.c.b16 %v4771, %v4769
  %v4822 = vpack.c.b16 %v4774, %v4772
  %v4823 = vpack.c.b16 %v4775, %v4773
  %v4824 = vpack.c.b16 %v4778, %v4776
  %v4825 = vpack.c.b16 %v4779, %v4777
  %v4826 = vpack.c.b16 %v4782, %v4780
  %v4827 = vpack.c.b16 %v4783, %v4781
  %v4828 = vpack.c.b16 %v4786, %v4784
  %v4829 = vpack.c.b16 %v4787, %v4785
  %v4830 = vpack.c.b16 %v4790, %v4788
  %v4831 = vpack.c.b16 %v4791, %v4789
  %v4832 = vpack.c.b16 %v4794, %v4792
  %v4833 = vpack.c.b16 %v4795, %v4793
  %v4834 = vpack.c.b16 %v4798, %v4796
  %v4835 = vpack.c.b16 %v4799, %v4797
  %v4836 = vpack.c.b16 %v4802, %v4800
  %v4837 = vpack.c.b16 %v4803, %v4801
  %v4838 = vpack.c.b16 %v4806, %v4804
  %v4839 = vpack.c.b16 %v4807, %v4805
  %4872 = vmatprep.subr.bf16.mxu0 %v4823
  %4873 = vmatpush1.bf16.msra.mxu0 %v4822
  %4874 = vmatprep.subr.bf16.mxu0 %v4821
  %4875 = vmatpush1.bf16.msra.mxu0 %v4820
  %4876 = vmatprep.subr.bf16.mxu0 %v4819
  %4877 = vmatpush1.bf16.msra.mxu0 %v4818
  %4878 = vmatprep.subr.bf16.mxu0 %v4817
  %4879 = vmatpush1.bf16.msra.mxu0 %v4816
  %4880 = vmatprep.subr.bf16.mxu0 %v4815
  %4881 = vmatpush1.bf16.msra.mxu0 %v4814
  %4882 = vmatprep.subr.bf16.mxu0 %v4813
  %4883 = vmatpush1.bf16.msra.mxu0 %v4812
  %4884 = vmatprep.subr.bf16.mxu0 %v4811
  %4885 = vmatpush1.bf16.msra.mxu0 %v4810
  %4886 = vmatprep.subr.bf16.mxu0 %v4809
  %4887 = vmatpush1.bf16.msra.mxu0 %v4808
  %4888 = vmatprep.subr.bf16.mxu0 %v4839
  %4889 = vmatpush2.bf16.msra.mxu0 %v4838
  %4890 = vmatprep.subr.bf16.mxu0 %v4837
  %4891 = vmatpush2.bf16.msra.mxu0 %v4836
  %4892 = vmatprep.subr.bf16.mxu0 %v4835
  %4893 = vmatpush2.bf16.msra.mxu0 %v4834
  %4894 = vmatprep.subr.bf16.mxu0 %v4833
  %4895 = vmatpush2.bf16.msra.mxu0 %v4832
  %4896 = vmatprep.subr.bf16.mxu0 %v4831
  %4897 = vmatpush2.bf16.msra.mxu0 %v4830
  %4898 = vmatprep.subr.bf16.mxu0 %v4829
  %4899 = vmatpush2.bf16.msra.mxu0 %v4828
  %4900 = vmatprep.subr.bf16.mxu0 %v4827
  %4901 = vmatpush2.bf16.msra.mxu0 %v4826
  %4902 = vmatprep.subr.bf16.mxu0 %v4825
  %4903 = vmatpush2.bf16.msra.mxu0 %v4824
  %4904 = vmatprep.mubr.bf16.mxu0 %v4427
  %4905 = vmatmul.mubr.bf16.gmra.mxu0 %v4426
  %v4906 = vpop.f32.mrf.mxu0
  %v4907 = vadd.f32 %v4704, %v4906
  %v4908 = vpop.f32.mrf.mxu0
  %v4909 = vadd.f32 %v4706, %v4908
  %v4910 = vpop.f32.mrf.mxu0
  %v4911 = vadd.f32 %v4708, %v4910
  %v4912 = vpop.f32.mrf.mxu0
  %v4913 = vadd.f32 %v4710, %v4912
  %4914 = vdwg.mxu0
  %s4915 = scalar_lea.vmem %s7, 512
  %v4916 = vld [vmem:[%s4915] sm:$0xff]
  %v4917 = vld [vmem:[%s4915 + $0x8] sm:$0xff]
  %v4918 = vld [vmem:[%s4915 + $0x10] sm:$0xff]
  %v4919 = vld [vmem:[%s4915 + $0x18] sm:$0xff]
  %v4920 = vld [vmem:[%s4915 + $0x20] sm:$0xff]
  %v4921 = vld [vmem:[%s4915 + $0x28] sm:$0xff]
  %v4922 = vld [vmem:[%s4915 + $0x30] sm:$0xff]
  %v4923 = vld [vmem:[%s4915 + $0x38] sm:$0xff]
  %v4924 = vld [vmem:[%s4915 + $0x40] sm:$0xff]
  %v4925 = vld [vmem:[%s4915 + $0x48] sm:$0xff]
  %v4926 = vld [vmem:[%s4915 + $0x50] sm:$0xff]
  %v4927 = vld [vmem:[%s4915 + $0x58] sm:$0xff]
  %v4928 = vld [vmem:[%s4915 + $0x60] sm:$0xff]
  %v4929 = vld [vmem:[%s4915 + $0x68] sm:$0xff]
  %v4930 = vld [vmem:[%s4915 + $0x70] sm:$0xff]
  %v4931 = vld [vmem:[%s4915 + $0x78] sm:$0xff]
  %v4932 = vld [vmem:[%s4915 + $0x80] sm:$0xff]
  %v4933 = vld [vmem:[%s4915 + $0x88] sm:$0xff]
  %v4934 = vld [vmem:[%s4915 + $0x90] sm:$0xff]
  %v4935 = vld [vmem:[%s4915 + $0x98] sm:$0xff]
  %v4936 = vld [vmem:[%s4915 + $0xa0] sm:$0xff]
  %v4937 = vld [vmem:[%s4915 + $0xa8] sm:$0xff]
  %v4938 = vld [vmem:[%s4915 + $0xb0] sm:$0xff]
  %v4939 = vld [vmem:[%s4915 + $0xb8] sm:$0xff]
  %v4940 = vld [vmem:[%s4915 + $0xc0] sm:$0xff]
  %v4941 = vld [vmem:[%s4915 + $0xc8] sm:$0xff]
  %v4942 = vld [vmem:[%s4915 + $0xd0] sm:$0xff]
  %v4943 = vld [vmem:[%s4915 + $0xd8] sm:$0xff]
  %v4944 = vld [vmem:[%s4915 + $0xe0] sm:$0xff]
  %v4945 = vld [vmem:[%s4915 + $0xe8] sm:$0xff]
  %v4946 = vld [vmem:[%s4915 + $0xf0] sm:$0xff]
  %v4947 = vld [vmem:[%s4915 + $0xf8] sm:$0xff]
  %v4980 = vunpack.c.l.b16 %v4916
  %v4981 = vunpack.c.h.b16 %v4916
  %v4982 = vunpack.c.l.b16 %v4917
  %v4983 = vunpack.c.h.b16 %v4917
  %v4984 = vunpack.c.l.b16 %v4918
  %v4985 = vunpack.c.h.b16 %v4918
  %v4986 = vunpack.c.l.b16 %v4919
  %v4987 = vunpack.c.h.b16 %v4919
  %v4988 = vunpack.c.l.b16 %v4920
  %v4989 = vunpack.c.h.b16 %v4920
  %v4990 = vunpack.c.l.b16 %v4921
  %v4991 = vunpack.c.h.b16 %v4921
  %v4992 = vunpack.c.l.b16 %v4922
  %v4993 = vunpack.c.h.b16 %v4922
  %v4994 = vunpack.c.l.b16 %v4923
  %v4995 = vunpack.c.h.b16 %v4923
  %v4996 = vunpack.c.l.b16 %v4924
  %v4997 = vunpack.c.h.b16 %v4924
  %v4998 = vunpack.c.l.b16 %v4925
  %v4999 = vunpack.c.h.b16 %v4925
  %v5000 = vunpack.c.l.b16 %v4926
  %v5001 = vunpack.c.h.b16 %v4926
  %v5002 = vunpack.c.l.b16 %v4927
  %v5003 = vunpack.c.h.b16 %v4927
  %v5004 = vunpack.c.l.b16 %v4928
  %v5005 = vunpack.c.h.b16 %v4928
  %v5006 = vunpack.c.l.b16 %v4929
  %v5007 = vunpack.c.h.b16 %v4929
  %v5008 = vunpack.c.l.b16 %v4930
  %v5009 = vunpack.c.h.b16 %v4930
  %v5010 = vunpack.c.l.b16 %v4931
  %v5011 = vunpack.c.h.b16 %v4931
  %v5012 = vunpack.c.l.b16 %v4932
  %v5013 = vunpack.c.h.b16 %v4932
  %v5014 = vunpack.c.l.b16 %v4933
  %v5015 = vunpack.c.h.b16 %v4933
  %v5016 = vunpack.c.l.b16 %v4934
  %v5017 = vunpack.c.h.b16 %v4934
  %v5018 = vunpack.c.l.b16 %v4935
  %v5019 = vunpack.c.h.b16 %v4935
  %v5020 = vunpack.c.l.b16 %v4936
  %v5021 = vunpack.c.h.b16 %v4936
  %v5022 = vunpack.c.l.b16 %v4937
  %v5023 = vunpack.c.h.b16 %v4937
  %v5024 = vunpack.c.l.b16 %v4938
  %v5025 = vunpack.c.h.b16 %v4938
  %v5026 = vunpack.c.l.b16 %v4939
  %v5027 = vunpack.c.h.b16 %v4939
  %v5028 = vunpack.c.l.b16 %v4940
  %v5029 = vunpack.c.h.b16 %v4940
  %v5030 = vunpack.c.l.b16 %v4941
  %v5031 = vunpack.c.h.b16 %v4941
  %v5032 = vunpack.c.l.b16 %v4942
  %v5033 = vunpack.c.h.b16 %v4942
  %v5034 = vunpack.c.l.b16 %v4943
  %v5035 = vunpack.c.h.b16 %v4943
  %v5036 = vunpack.c.l.b16 %v4944
  %v5037 = vunpack.c.h.b16 %v4944
  %v5038 = vunpack.c.l.b16 %v4945
  %v5039 = vunpack.c.h.b16 %v4945
  %v5040 = vunpack.c.l.b16 %v4946
  %v5041 = vunpack.c.h.b16 %v4946
  %v5042 = vunpack.c.l.b16 %v4947
  %v5043 = vunpack.c.h.b16 %v4947
  %v5044 = vpack.c.b16 %v4982, %v4980
  %v5045 = vpack.c.b16 %v4983, %v4981
  %v5046 = vpack.c.b16 %v4986, %v4984
  %v5047 = vpack.c.b16 %v4987, %v4985
  %v5048 = vpack.c.b16 %v4990, %v4988
  %v5049 = vpack.c.b16 %v4991, %v4989
  %v5050 = vpack.c.b16 %v4994, %v4992
  %v5051 = vpack.c.b16 %v4995, %v4993
  %v5052 = vpack.c.b16 %v4998, %v4996
  %v5053 = vpack.c.b16 %v4999, %v4997
  %v5054 = vpack.c.b16 %v5002, %v5000
  %v5055 = vpack.c.b16 %v5003, %v5001
  %v5056 = vpack.c.b16 %v5006, %v5004
  %v5057 = vpack.c.b16 %v5007, %v5005
  %v5058 = vpack.c.b16 %v5010, %v5008
  %v5059 = vpack.c.b16 %v5011, %v5009
  %v5060 = vpack.c.b16 %v5014, %v5012
  %v5061 = vpack.c.b16 %v5015, %v5013
  %v5062 = vpack.c.b16 %v5018, %v5016
  %v5063 = vpack.c.b16 %v5019, %v5017
  %v5064 = vpack.c.b16 %v5022, %v5020
  %v5065 = vpack.c.b16 %v5023, %v5021
  %v5066 = vpack.c.b16 %v5026, %v5024
  %v5067 = vpack.c.b16 %v5027, %v5025
  %v5068 = vpack.c.b16 %v5030, %v5028
  %v5069 = vpack.c.b16 %v5031, %v5029
  %v5070 = vpack.c.b16 %v5034, %v5032
  %v5071 = vpack.c.b16 %v5035, %v5033
  %v5072 = vpack.c.b16 %v5038, %v5036
  %v5073 = vpack.c.b16 %v5039, %v5037
  %v5074 = vpack.c.b16 %v5042, %v5040
  %v5075 = vpack.c.b16 %v5043, %v5041
  %5108 = vmatprep.subr.bf16.mxu0 %v5059
  %5109 = vmatpush1.bf16.msra.mxu0 %v5058
  %5110 = vmatprep.subr.bf16.mxu0 %v5057
  %5111 = vmatpush1.bf16.msra.mxu0 %v5056
  %5112 = vmatprep.subr.bf16.mxu0 %v5055
  %5113 = vmatpush1.bf16.msra.mxu0 %v5054
  %5114 = vmatprep.subr.bf16.mxu0 %v5053
  %5115 = vmatpush1.bf16.msra.mxu0 %v5052
  %5116 = vmatprep.subr.bf16.mxu0 %v5051
  %5117 = vmatpush1.bf16.msra.mxu0 %v5050
  %5118 = vmatprep.subr.bf16.mxu0 %v5049
  %5119 = vmatpush1.bf16.msra.mxu0 %v5048
  %5120 = vmatprep.subr.bf16.mxu0 %v5047
  %5121 = vmatpush1.bf16.msra.mxu0 %v5046
  %5122 = vmatprep.subr.bf16.mxu0 %v5045
  %5123 = vmatpush1.bf16.msra.mxu0 %v5044
  %5124 = vmatprep.subr.bf16.mxu0 %v5075
  %5125 = vmatpush2.bf16.msra.mxu0 %v5074
  %5126 = vmatprep.subr.bf16.mxu0 %v5073
  %5127 = vmatpush2.bf16.msra.mxu0 %v5072
  %5128 = vmatprep.subr.bf16.mxu0 %v5071
  %5129 = vmatpush2.bf16.msra.mxu0 %v5070
  %5130 = vmatprep.subr.bf16.mxu0 %v5069
  %5131 = vmatpush2.bf16.msra.mxu0 %v5068
  %5132 = vmatprep.subr.bf16.mxu0 %v5067
  %5133 = vmatpush2.bf16.msra.mxu0 %v5066
  %5134 = vmatprep.subr.bf16.mxu0 %v5065
  %5135 = vmatpush2.bf16.msra.mxu0 %v5064
  %5136 = vmatprep.subr.bf16.mxu0 %v5063
  %5137 = vmatpush2.bf16.msra.mxu0 %v5062
  %5138 = vmatprep.subr.bf16.mxu0 %v5061
  %5139 = vmatpush2.bf16.msra.mxu0 %v5060
  %5140 = vmatprep.mubr.bf16.mxu0 %v4431
  %5141 = vmatmul.mubr.bf16.gmra.mxu0 %v4430
  %v5142 = vpop.f32.mrf.mxu0
  %v5143 = vadd.f32 0.0, %v5142
  %v5144 = vpop.f32.mrf.mxu0
  %v5145 = vadd.f32 0.0, %v5144
  %v5146 = vpop.f32.mrf.mxu0
  %v5147 = vadd.f32 0.0, %v5146
  %v5148 = vpop.f32.mrf.mxu0
  %v5149 = vadd.f32 0.0, %v5148
  %5150 = vdwg.mxu0
  %v5151 = vadd.f32 %v4907, %v5143
  %v5152 = vadd.f32 %v4909, %v5145
  %v5153 = vadd.f32 %v4911, %v5147
  %v5154 = vadd.f32 %v4913, %v5149
  %s5155 = scalar_lea.vmem %s7, 768
  %v5156 = vld [vmem:[%s5155] sm:$0xff]
  %v5157 = vld [vmem:[%s5155 + $0x8] sm:$0xff]
  %v5158 = vld [vmem:[%s5155 + $0x10] sm:$0xff]
  %v5159 = vld [vmem:[%s5155 + $0x18] sm:$0xff]
  %v5160 = vld [vmem:[%s5155 + $0x20] sm:$0xff]
  %v5161 = vld [vmem:[%s5155 + $0x28] sm:$0xff]
  %v5162 = vld [vmem:[%s5155 + $0x30] sm:$0xff]
  %v5163 = vld [vmem:[%s5155 + $0x38] sm:$0xff]
  %v5164 = vld [vmem:[%s5155 + $0x40] sm:$0xff]
  %v5165 = vld [vmem:[%s5155 + $0x48] sm:$0xff]
  %v5166 = vld [vmem:[%s5155 + $0x50] sm:$0xff]
  %v5167 = vld [vmem:[%s5155 + $0x58] sm:$0xff]
  %v5168 = vld [vmem:[%s5155 + $0x60] sm:$0xff]
  %v5169 = vld [vmem:[%s5155 + $0x68] sm:$0xff]
  %v5170 = vld [vmem:[%s5155 + $0x70] sm:$0xff]
  %v5171 = vld [vmem:[%s5155 + $0x78] sm:$0xff]
  %v5172 = vld [vmem:[%s5155 + $0x80] sm:$0xff]
  %v5173 = vld [vmem:[%s5155 + $0x88] sm:$0xff]
  %v5174 = vld [vmem:[%s5155 + $0x90] sm:$0xff]
  %v5175 = vld [vmem:[%s5155 + $0x98] sm:$0xff]
  %v5176 = vld [vmem:[%s5155 + $0xa0] sm:$0xff]
  %v5177 = vld [vmem:[%s5155 + $0xa8] sm:$0xff]
  %v5178 = vld [vmem:[%s5155 + $0xb0] sm:$0xff]
  %v5179 = vld [vmem:[%s5155 + $0xb8] sm:$0xff]
  %v5180 = vld [vmem:[%s5155 + $0xc0] sm:$0xff]
  %v5181 = vld [vmem:[%s5155 + $0xc8] sm:$0xff]
  %v5182 = vld [vmem:[%s5155 + $0xd0] sm:$0xff]
  %v5183 = vld [vmem:[%s5155 + $0xd8] sm:$0xff]
  %v5184 = vld [vmem:[%s5155 + $0xe0] sm:$0xff]
  %v5185 = vld [vmem:[%s5155 + $0xe8] sm:$0xff]
  %v5186 = vld [vmem:[%s5155 + $0xf0] sm:$0xff]
  %v5187 = vld [vmem:[%s5155 + $0xf8] sm:$0xff]
  %v5220 = vunpack.c.l.b16 %v5156
  %v5221 = vunpack.c.h.b16 %v5156
  %v5222 = vunpack.c.l.b16 %v5157
  %v5223 = vunpack.c.h.b16 %v5157
  %v5224 = vunpack.c.l.b16 %v5158
  %v5225 = vunpack.c.h.b16 %v5158
  %v5226 = vunpack.c.l.b16 %v5159
  %v5227 = vunpack.c.h.b16 %v5159
  %v5228 = vunpack.c.l.b16 %v5160
  %v5229 = vunpack.c.h.b16 %v5160
  %v5230 = vunpack.c.l.b16 %v5161
  %v5231 = vunpack.c.h.b16 %v5161
  %v5232 = vunpack.c.l.b16 %v5162
  %v5233 = vunpack.c.h.b16 %v5162
  %v5234 = vunpack.c.l.b16 %v5163
  %v5235 = vunpack.c.h.b16 %v5163
  %v5236 = vunpack.c.l.b16 %v5164
  %v5237 = vunpack.c.h.b16 %v5164
  %v5238 = vunpack.c.l.b16 %v5165
  %v5239 = vunpack.c.h.b16 %v5165
  %v5240 = vunpack.c.l.b16 %v5166
  %v5241 = vunpack.c.h.b16 %v5166
  %v5242 = vunpack.c.l.b16 %v5167
  %v5243 = vunpack.c.h.b16 %v5167
  %v5244 = vunpack.c.l.b16 %v5168
  %v5245 = vunpack.c.h.b16 %v5168
  %v5246 = vunpack.c.l.b16 %v5169
  %v5247 = vunpack.c.h.b16 %v5169
  %v5248 = vunpack.c.l.b16 %v5170
  %v5249 = vunpack.c.h.b16 %v5170
  %v5250 = vunpack.c.l.b16 %v5171
  %v5251 = vunpack.c.h.b16 %v5171
  %v5252 = vunpack.c.l.b16 %v5172
  %v5253 = vunpack.c.h.b16 %v5172
  %v5254 = vunpack.c.l.b16 %v5173
  %v5255 = vunpack.c.h.b16 %v5173
  %v5256 = vunpack.c.l.b16 %v5174
  %v5257 = vunpack.c.h.b16 %v5174
  %v5258 = vunpack.c.l.b16 %v5175
  %v5259 = vunpack.c.h.b16 %v5175
  %v5260 = vunpack.c.l.b16 %v5176
  %v5261 = vunpack.c.h.b16 %v5176
  %v5262 = vunpack.c.l.b16 %v5177
  %v5263 = vunpack.c.h.b16 %v5177
  %v5264 = vunpack.c.l.b16 %v5178
  %v5265 = vunpack.c.h.b16 %v5178
  %v5266 = vunpack.c.l.b16 %v5179
  %v5267 = vunpack.c.h.b16 %v5179
  %v5268 = vunpack.c.l.b16 %v5180
  %v5269 = vunpack.c.h.b16 %v5180
  %v5270 = vunpack.c.l.b16 %v5181
  %v5271 = vunpack.c.h.b16 %v5181
  %v5272 = vunpack.c.l.b16 %v5182
  %v5273 = vunpack.c.h.b16 %v5182
  %v5274 = vunpack.c.l.b16 %v5183
  %v5275 = vunpack.c.h.b16 %v5183
  %v5276 = vunpack.c.l.b16 %v5184
  %v5277 = vunpack.c.h.b16 %v5184
  %v5278 = vunpack.c.l.b16 %v5185
  %v5279 = vunpack.c.h.b16 %v5185
  %v5280 = vunpack.c.l.b16 %v5186
  %v5281 = vunpack.c.h.b16 %v5186
  %v5282 = vunpack.c.l.b16 %v5187
  %v5283 = vunpack.c.h.b16 %v5187
  %v5284 = vpack.c.b16 %v5222, %v5220
  %v5285 = vpack.c.b16 %v5223, %v5221
  %v5286 = vpack.c.b16 %v5226, %v5224
  %v5287 = vpack.c.b16 %v5227, %v5225
  %v5288 = vpack.c.b16 %v5230, %v5228
  %v5289 = vpack.c.b16 %v5231, %v5229
  %v5290 = vpack.c.b16 %v5234, %v5232
  %v5291 = vpack.c.b16 %v5235, %v5233
  %v5292 = vpack.c.b16 %v5238, %v5236
  %v5293 = vpack.c.b16 %v5239, %v5237
  %v5294 = vpack.c.b16 %v5242, %v5240
  %v5295 = vpack.c.b16 %v5243, %v5241
  %v5296 = vpack.c.b16 %v5246, %v5244
  %v5297 = vpack.c.b16 %v5247, %v5245
  %v5298 = vpack.c.b16 %v5250, %v5248
  %v5299 = vpack.c.b16 %v5251, %v5249
  %v5300 = vpack.c.b16 %v5254, %v5252
  %v5301 = vpack.c.b16 %v5255, %v5253
  %v5302 = vpack.c.b16 %v5258, %v5256
  %v5303 = vpack.c.b16 %v5259, %v5257
  %v5304 = vpack.c.b16 %v5262, %v5260
  %v5305 = vpack.c.b16 %v5263, %v5261
  %v5306 = vpack.c.b16 %v5266, %v5264
  %v5307 = vpack.c.b16 %v5267, %v5265
  %v5308 = vpack.c.b16 %v5270, %v5268
  %v5309 = vpack.c.b16 %v5271, %v5269
  %v5310 = vpack.c.b16 %v5274, %v5272
  %v5311 = vpack.c.b16 %v5275, %v5273
  %v5312 = vpack.c.b16 %v5278, %v5276
  %v5313 = vpack.c.b16 %v5279, %v5277
  %v5314 = vpack.c.b16 %v5282, %v5280
  %v5315 = vpack.c.b16 %v5283, %v5281
  %5348 = vmatprep.subr.bf16.mxu0 %v5299
  %5349 = vmatpush1.bf16.msra.mxu0 %v5298
  %5350 = vmatprep.subr.bf16.mxu0 %v5297
  %5351 = vmatpush1.bf16.msra.mxu0 %v5296
  %5352 = vmatprep.subr.bf16.mxu0 %v5295
  %5353 = vmatpush1.bf16.msra.mxu0 %v5294
  %5354 = vmatprep.subr.bf16.mxu0 %v5293
  %5355 = vmatpush1.bf16.msra.mxu0 %v5292
  %5356 = vmatprep.subr.bf16.mxu0 %v5291
  %5357 = vmatpush1.bf16.msra.mxu0 %v5290
  %5358 = vmatprep.subr.bf16.mxu0 %v5289
  %5359 = vmatpush1.bf16.msra.mxu0 %v5288
  %5360 = vmatprep.subr.bf16.mxu0 %v5287
  %5361 = vmatpush1.bf16.msra.mxu0 %v5286
  %5362 = vmatprep.subr.bf16.mxu0 %v5285
  %5363 = vmatpush1.bf16.msra.mxu0 %v5284
  %5364 = vmatprep.subr.bf16.mxu0 %v5315
  %5365 = vmatpush2.bf16.msra.mxu0 %v5314
  %5366 = vmatprep.subr.bf16.mxu0 %v5313
  %5367 = vmatpush2.bf16.msra.mxu0 %v5312
  %5368 = vmatprep.subr.bf16.mxu0 %v5311
  %5369 = vmatpush2.bf16.msra.mxu0 %v5310
  %5370 = vmatprep.subr.bf16.mxu0 %v5309
  %5371 = vmatpush2.bf16.msra.mxu0 %v5308
  %5372 = vmatprep.subr.bf16.mxu0 %v5307
  %5373 = vmatpush2.bf16.msra.mxu0 %v5306
  %5374 = vmatprep.subr.bf16.mxu0 %v5305
  %5375 = vmatpush2.bf16.msra.mxu0 %v5304
  %5376 = vmatprep.subr.bf16.mxu0 %v5303
  %5377 = vmatpush2.bf16.msra.mxu0 %v5302
  %5378 = vmatprep.subr.bf16.mxu0 %v5301
  %5379 = vmatpush2.bf16.msra.mxu0 %v5300
  %5380 = vmatprep.mubr.bf16.mxu0 %v4433
  %5381 = vmatmul.mubr.bf16.gmra.mxu0 %v4432
  %v5382 = vpop.f32.mrf.mxu0
  %v5383 = vadd.f32 0.0, %v5382
  %v5384 = vpop.f32.mrf.mxu0
  %v5385 = vadd.f32 0.0, %v5384
  %v5386 = vpop.f32.mrf.mxu0
  %v5387 = vadd.f32 0.0, %v5386
  %v5388 = vpop.f32.mrf.mxu0
  %v5389 = vadd.f32 0.0, %v5388
  %5390 = vdwg.mxu0
  %v5391 = vadd.f32 %v5151, %v5383
  %v5392 = vadd.f32 %v5152, %v5385
  %v5393 = vadd.f32 %v5153, %v5387
  %v5394 = vadd.f32 %v5154, %v5389
  %s5395 = scalar_lea.vmem %s7, 1024
  %v5396 = vld [vmem:[%s5395] sm:$0xff]
  %v5397 = vld [vmem:[%s5395 + $0x8] sm:$0xff]
  %v5398 = vld [vmem:[%s5395 + $0x10] sm:$0xff]
  %v5399 = vld [vmem:[%s5395 + $0x18] sm:$0xff]
  %v5400 = vld [vmem:[%s5395 + $0x20] sm:$0xff]
  %v5401 = vld [vmem:[%s5395 + $0x28] sm:$0xff]
  %v5402 = vld [vmem:[%s5395 + $0x30] sm:$0xff]
  %v5403 = vld [vmem:[%s5395 + $0x38] sm:$0xff]
  %v5404 = vld [vmem:[%s5395 + $0x40] sm:$0xff]
  %v5405 = vld [vmem:[%s5395 + $0x48] sm:$0xff]
  %v5406 = vld [vmem:[%s5395 + $0x50] sm:$0xff]
  %v5407 = vld [vmem:[%s5395 + $0x58] sm:$0xff]
  %v5408 = vld [vmem:[%s5395 + $0x60] sm:$0xff]
  %v5409 = vld [vmem:[%s5395 + $0x68] sm:$0xff]
  %v5410 = vld [vmem:[%s5395 + $0x70] sm:$0xff]
  %v5411 = vld [vmem:[%s5395 + $0x78] sm:$0xff]
  %v5412 = vld [vmem:[%s5395 + $0x80] sm:$0xff]
  %v5413 = vld [vmem:[%s5395 + $0x88] sm:$0xff]
  %v5414 = vld [vmem:[%s5395 + $0x90] sm:$0xff]
  %v5415 = vld [vmem:[%s5395 + $0x98] sm:$0xff]
  %v5416 = vld [vmem:[%s5395 + $0xa0] sm:$0xff]
  %v5417 = vld [vmem:[%s5395 + $0xa8] sm:$0xff]
  %v5418 = vld [vmem:[%s5395 + $0xb0] sm:$0xff]
  %v5419 = vld [vmem:[%s5395 + $0xb8] sm:$0xff]
  %v5420 = vld [vmem:[%s5395 + $0xc0] sm:$0xff]
  %v5421 = vld [vmem:[%s5395 + $0xc8] sm:$0xff]
  %v5422 = vld [vmem:[%s5395 + $0xd0] sm:$0xff]
  %v5423 = vld [vmem:[%s5395 + $0xd8] sm:$0xff]
  %v5424 = vld [vmem:[%s5395 + $0xe0] sm:$0xff]
  %v5425 = vld [vmem:[%s5395 + $0xe8] sm:$0xff]
  %v5426 = vld [vmem:[%s5395 + $0xf0] sm:$0xff]
  %v5427 = vld [vmem:[%s5395 + $0xf8] sm:$0xff]
  %v5460 = vunpack.c.l.b16 %v5396
  %v5461 = vunpack.c.h.b16 %v5396
  %v5462 = vunpack.c.l.b16 %v5397
  %v5463 = vunpack.c.h.b16 %v5397
  %v5464 = vunpack.c.l.b16 %v5398
  %v5465 = vunpack.c.h.b16 %v5398
  %v5466 = vunpack.c.l.b16 %v5399
  %v5467 = vunpack.c.h.b16 %v5399
  %v5468 = vunpack.c.l.b16 %v5400
  %v5469 = vunpack.c.h.b16 %v5400
  %v5470 = vunpack.c.l.b16 %v5401
  %v5471 = vunpack.c.h.b16 %v5401
  %v5472 = vunpack.c.l.b16 %v5402
  %v5473 = vunpack.c.h.b16 %v5402
  %v5474 = vunpack.c.l.b16 %v5403
  %v5475 = vunpack.c.h.b16 %v5403
  %v5476 = vunpack.c.l.b16 %v5404
  %v5477 = vunpack.c.h.b16 %v5404
  %v5478 = vunpack.c.l.b16 %v5405
  %v5479 = vunpack.c.h.b16 %v5405
  %v5480 = vunpack.c.l.b16 %v5406
  %v5481 = vunpack.c.h.b16 %v5406
  %v5482 = vunpack.c.l.b16 %v5407
  %v5483 = vunpack.c.h.b16 %v5407
  %v5484 = vunpack.c.l.b16 %v5408
  %v5485 = vunpack.c.h.b16 %v5408
  %v5486 = vunpack.c.l.b16 %v5409
  %v5487 = vunpack.c.h.b16 %v5409
  %v5488 = vunpack.c.l.b16 %v5410
  %v5489 = vunpack.c.h.b16 %v5410
  %v5490 = vunpack.c.l.b16 %v5411
  %v5491 = vunpack.c.h.b16 %v5411
  %v5492 = vunpack.c.l.b16 %v5412
  %v5493 = vunpack.c.h.b16 %v5412
  %v5494 = vunpack.c.l.b16 %v5413
  %v5495 = vunpack.c.h.b16 %v5413
  %v5496 = vunpack.c.l.b16 %v5414
  %v5497 = vunpack.c.h.b16 %v5414
  %v5498 = vunpack.c.l.b16 %v5415
  %v5499 = vunpack.c.h.b16 %v5415
  %v5500 = vunpack.c.l.b16 %v5416
  %v5501 = vunpack.c.h.b16 %v5416
  %v5502 = vunpack.c.l.b16 %v5417
  %v5503 = vunpack.c.h.b16 %v5417
  %v5504 = vunpack.c.l.b16 %v5418
  %v5505 = vunpack.c.h.b16 %v5418
  %v5506 = vunpack.c.l.b16 %v5419
  %v5507 = vunpack.c.h.b16 %v5419
  %v5508 = vunpack.c.l.b16 %v5420
  %v5509 = vunpack.c.h.b16 %v5420
  %v5510 = vunpack.c.l.b16 %v5421
  %v5511 = vunpack.c.h.b16 %v5421
  %v5512 = vunpack.c.l.b16 %v5422
  %v5513 = vunpack.c.h.b16 %v5422
  %v5514 = vunpack.c.l.b16 %v5423
  %v5515 = vunpack.c.h.b16 %v5423
  %v5516 = vunpack.c.l.b16 %v5424
  %v5517 = vunpack.c.h.b16 %v5424
  %v5518 = vunpack.c.l.b16 %v5425
  %v5519 = vunpack.c.h.b16 %v5425
  %v5520 = vunpack.c.l.b16 %v5426
  %v5521 = vunpack.c.h.b16 %v5426
  %v5522 = vunpack.c.l.b16 %v5427
  %v5523 = vunpack.c.h.b16 %v5427
  %v5524 = vpack.c.b16 %v5462, %v5460
  %v5525 = vpack.c.b16 %v5463, %v5461
  %v5526 = vpack.c.b16 %v5466, %v5464
  %v5527 = vpack.c.b16 %v5467, %v5465
  %v5528 = vpack.c.b16 %v5470, %v5468
  %v5529 = vpack.c.b16 %v5471, %v5469
  %v5530 = vpack.c.b16 %v5474, %v5472
  %v5531 = vpack.c.b16 %v5475, %v5473
  %v5532 = vpack.c.b16 %v5478, %v5476
  %v5533 = vpack.c.b16 %v5479, %v5477
  %v5534 = vpack.c.b16 %v5482, %v5480
  %v5535 = vpack.c.b16 %v5483, %v5481
  %v5536 = vpack.c.b16 %v5486, %v5484
  %v5537 = vpack.c.b16 %v5487, %v5485
  %v5538 = vpack.c.b16 %v5490, %v5488
  %v5539 = vpack.c.b16 %v5491, %v5489
  %v5540 = vpack.c.b16 %v5494, %v5492
  %v5541 = vpack.c.b16 %v5495, %v5493
  %v5542 = vpack.c.b16 %v5498, %v5496
  %v5543 = vpack.c.b16 %v5499, %v5497
  %v5544 = vpack.c.b16 %v5502, %v5500
  %v5545 = vpack.c.b16 %v5503, %v5501
  %v5546 = vpack.c.b16 %v5506, %v5504
  %v5547 = vpack.c.b16 %v5507, %v5505
  %v5548 = vpack.c.b16 %v5510, %v5508
  %v5549 = vpack.c.b16 %v5511, %v5509
  %v5550 = vpack.c.b16 %v5514, %v5512
  %v5551 = vpack.c.b16 %v5515, %v5513
  %v5552 = vpack.c.b16 %v5518, %v5516
  %v5553 = vpack.c.b16 %v5519, %v5517
  %v5554 = vpack.c.b16 %v5522, %v5520
  %v5555 = vpack.c.b16 %v5523, %v5521
  %5588 = vmatprep.subr.bf16.mxu0 %v5539
  %5589 = vmatpush1.bf16.msra.mxu0 %v5538
  %5590 = vmatprep.subr.bf16.mxu0 %v5537
  %5591 = vmatpush1.bf16.msra.mxu0 %v5536
  %5592 = vmatprep.subr.bf16.mxu0 %v5535
  %5593 = vmatpush1.bf16.msra.mxu0 %v5534
  %5594 = vmatprep.subr.bf16.mxu0 %v5533
  %5595 = vmatpush1.bf16.msra.mxu0 %v5532
  %5596 = vmatprep.subr.bf16.mxu0 %v5531
  %5597 = vmatpush1.bf16.msra.mxu0 %v5530
  %5598 = vmatprep.subr.bf16.mxu0 %v5529
  %5599 = vmatpush1.bf16.msra.mxu0 %v5528
  %5600 = vmatprep.subr.bf16.mxu0 %v5527
  %5601 = vmatpush1.bf16.msra.mxu0 %v5526
  %5602 = vmatprep.subr.bf16.mxu0 %v5525
  %5603 = vmatpush1.bf16.msra.mxu0 %v5524
  %5604 = vmatprep.subr.bf16.mxu0 %v5555
  %5605 = vmatpush2.bf16.msra.mxu0 %v5554
  %5606 = vmatprep.subr.bf16.mxu0 %v5553
  %5607 = vmatpush2.bf16.msra.mxu0 %v5552
  %5608 = vmatprep.subr.bf16.mxu0 %v5551
  %5609 = vmatpush2.bf16.msra.mxu0 %v5550
  %5610 = vmatprep.subr.bf16.mxu0 %v5549
  %5611 = vmatpush2.bf16.msra.mxu0 %v5548
  %5612 = vmatprep.subr.bf16.mxu0 %v5547
  %5613 = vmatpush2.bf16.msra.mxu0 %v5546
  %5614 = vmatprep.subr.bf16.mxu0 %v5545
  %5615 = vmatpush2.bf16.msra.mxu0 %v5544
  %5616 = vmatprep.subr.bf16.mxu0 %v5543
  %5617 = vmatpush2.bf16.msra.mxu0 %v5542
  %5618 = vmatprep.subr.bf16.mxu0 %v5541
  %5619 = vmatpush2.bf16.msra.mxu0 %v5540
  %5620 = vmatprep.mubr.bf16.mxu0 %v4435
  %5621 = vmatmul.mubr.bf16.gmra.mxu0 %v4434
  %v5622 = vpop.f32.mrf.mxu0
  %v5623 = vadd.f32 0.0, %v5622
  %v5624 = vpop.f32.mrf.mxu0
  %v5625 = vadd.f32 0.0, %v5624
  %v5626 = vpop.f32.mrf.mxu0
  %v5627 = vadd.f32 0.0, %v5626
  %v5628 = vpop.f32.mrf.mxu0
  %v5629 = vadd.f32 0.0, %v5628
  %5630 = vdwg.mxu0
  %v5631 = vadd.f32 %v5391, %v5623
  %v5632 = vadd.f32 %v5392, %v5625
  %v5633 = vadd.f32 %v5393, %v5627
  %v5634 = vadd.f32 %v5394, %v5629
  %s5635 = scalar_lea.vmem %s7, 1280
  %v5636 = vld [vmem:[%s5635] sm:$0xff]
  %v5637 = vld [vmem:[%s5635 + $0x8] sm:$0xff]
  %v5638 = vld [vmem:[%s5635 + $0x10] sm:$0xff]
  %v5639 = vld [vmem:[%s5635 + $0x18] sm:$0xff]
  %v5640 = vld [vmem:[%s5635 + $0x20] sm:$0xff]
  %v5641 = vld [vmem:[%s5635 + $0x28] sm:$0xff]
  %v5642 = vld [vmem:[%s5635 + $0x30] sm:$0xff]
  %v5643 = vld [vmem:[%s5635 + $0x38] sm:$0xff]
  %v5644 = vld [vmem:[%s5635 + $0x40] sm:$0xff]
  %v5645 = vld [vmem:[%s5635 + $0x48] sm:$0xff]
  %v5646 = vld [vmem:[%s5635 + $0x50] sm:$0xff]
  %v5647 = vld [vmem:[%s5635 + $0x58] sm:$0xff]
  %v5648 = vld [vmem:[%s5635 + $0x60] sm:$0xff]
  %v5649 = vld [vmem:[%s5635 + $0x68] sm:$0xff]
  %v5650 = vld [vmem:[%s5635 + $0x70] sm:$0xff]
  %v5651 = vld [vmem:[%s5635 + $0x78] sm:$0xff]
  %v5652 = vld [vmem:[%s5635 + $0x80] sm:$0xff]
  %v5653 = vld [vmem:[%s5635 + $0x88] sm:$0xff]
  %v5654 = vld [vmem:[%s5635 + $0x90] sm:$0xff]
  %v5655 = vld [vmem:[%s5635 + $0x98] sm:$0xff]
  %v5656 = vld [vmem:[%s5635 + $0xa0] sm:$0xff]
  %v5657 = vld [vmem:[%s5635 + $0xa8] sm:$0xff]
  %v5658 = vld [vmem:[%s5635 + $0xb0] sm:$0xff]
  %v5659 = vld [vmem:[%s5635 + $0xb8] sm:$0xff]
  %v5660 = vld [vmem:[%s5635 + $0xc0] sm:$0xff]
  %v5661 = vld [vmem:[%s5635 + $0xc8] sm:$0xff]
  %v5662 = vld [vmem:[%s5635 + $0xd0] sm:$0xff]
  %v5663 = vld [vmem:[%s5635 + $0xd8] sm:$0xff]
  %v5664 = vld [vmem:[%s5635 + $0xe0] sm:$0xff]
  %v5665 = vld [vmem:[%s5635 + $0xe8] sm:$0xff]
  %v5666 = vld [vmem:[%s5635 + $0xf0] sm:$0xff]
  %v5667 = vld [vmem:[%s5635 + $0xf8] sm:$0xff]
  %v5700 = vunpack.c.l.b16 %v5636
  %v5701 = vunpack.c.h.b16 %v5636
  %v5702 = vunpack.c.l.b16 %v5637
  %v5703 = vunpack.c.h.b16 %v5637
  %v5704 = vunpack.c.l.b16 %v5638
  %v5705 = vunpack.c.h.b16 %v5638
  %v5706 = vunpack.c.l.b16 %v5639
  %v5707 = vunpack.c.h.b16 %v5639
  %v5708 = vunpack.c.l.b16 %v5640
  %v5709 = vunpack.c.h.b16 %v5640
  %v5710 = vunpack.c.l.b16 %v5641
  %v5711 = vunpack.c.h.b16 %v5641
  %v5712 = vunpack.c.l.b16 %v5642
  %v5713 = vunpack.c.h.b16 %v5642
  %v5714 = vunpack.c.l.b16 %v5643
  %v5715 = vunpack.c.h.b16 %v5643
  %v5716 = vunpack.c.l.b16 %v5644
  %v5717 = vunpack.c.h.b16 %v5644
  %v5718 = vunpack.c.l.b16 %v5645
  %v5719 = vunpack.c.h.b16 %v5645
  %v5720 = vunpack.c.l.b16 %v5646
  %v5721 = vunpack.c.h.b16 %v5646
  %v5722 = vunpack.c.l.b16 %v5647
  %v5723 = vunpack.c.h.b16 %v5647
  %v5724 = vunpack.c.l.b16 %v5648
  %v5725 = vunpack.c.h.b16 %v5648
  %v5726 = vunpack.c.l.b16 %v5649
  %v5727 = vunpack.c.h.b16 %v5649
  %v5728 = vunpack.c.l.b16 %v5650
  %v5729 = vunpack.c.h.b16 %v5650
  %v5730 = vunpack.c.l.b16 %v5651
  %v5731 = vunpack.c.h.b16 %v5651
  %v5732 = vunpack.c.l.b16 %v5652
  %v5733 = vunpack.c.h.b16 %v5652
  %v5734 = vunpack.c.l.b16 %v5653
  %v5735 = vunpack.c.h.b16 %v5653
  %v5736 = vunpack.c.l.b16 %v5654
  %v5737 = vunpack.c.h.b16 %v5654
  %v5738 = vunpack.c.l.b16 %v5655
  %v5739 = vunpack.c.h.b16 %v5655
  %v5740 = vunpack.c.l.b16 %v5656
  %v5741 = vunpack.c.h.b16 %v5656
  %v5742 = vunpack.c.l.b16 %v5657
  %v5743 = vunpack.c.h.b16 %v5657
  %v5744 = vunpack.c.l.b16 %v5658
  %v5745 = vunpack.c.h.b16 %v5658
  %v5746 = vunpack.c.l.b16 %v5659
  %v5747 = vunpack.c.h.b16 %v5659
  %v5748 = vunpack.c.l.b16 %v5660
  %v5749 = vunpack.c.h.b16 %v5660
  %v5750 = vunpack.c.l.b16 %v5661
  %v5751 = vunpack.c.h.b16 %v5661
  %v5752 = vunpack.c.l.b16 %v5662
  %v5753 = vunpack.c.h.b16 %v5662
  %v5754 = vunpack.c.l.b16 %v5663
  %v5755 = vunpack.c.h.b16 %v5663
  %v5756 = vunpack.c.l.b16 %v5664
  %v5757 = vunpack.c.h.b16 %v5664
  %v5758 = vunpack.c.l.b16 %v5665
  %v5759 = vunpack.c.h.b16 %v5665
  %v5760 = vunpack.c.l.b16 %v5666
  %v5761 = vunpack.c.h.b16 %v5666
  %v5762 = vunpack.c.l.b16 %v5667
  %v5763 = vunpack.c.h.b16 %v5667
  %v5764 = vpack.c.b16 %v5702, %v5700
  %v5765 = vpack.c.b16 %v5703, %v5701
  %v5766 = vpack.c.b16 %v5706, %v5704
  %v5767 = vpack.c.b16 %v5707, %v5705
  %v5768 = vpack.c.b16 %v5710, %v5708
  %v5769 = vpack.c.b16 %v5711, %v5709
  %v5770 = vpack.c.b16 %v5714, %v5712
  %v5771 = vpack.c.b16 %v5715, %v5713
  %v5772 = vpack.c.b16 %v5718, %v5716
  %v5773 = vpack.c.b16 %v5719, %v5717
  %v5774 = vpack.c.b16 %v5722, %v5720
  %v5775 = vpack.c.b16 %v5723, %v5721
  %v5776 = vpack.c.b16 %v5726, %v5724
  %v5777 = vpack.c.b16 %v5727, %v5725
  %v5778 = vpack.c.b16 %v5730, %v5728
  %v5779 = vpack.c.b16 %v5731, %v5729
  %v5780 = vpack.c.b16 %v5734, %v5732
  %v5781 = vpack.c.b16 %v5735, %v5733
  %v5782 = vpack.c.b16 %v5738, %v5736
  %v5783 = vpack.c.b16 %v5739, %v5737
  %v5784 = vpack.c.b16 %v5742, %v5740
  %v5785 = vpack.c.b16 %v5743, %v5741
  %v5786 = vpack.c.b16 %v5746, %v5744
  %v5787 = vpack.c.b16 %v5747, %v5745
  %v5788 = vpack.c.b16 %v5750, %v5748
  %v5789 = vpack.c.b16 %v5751, %v5749
  %v5790 = vpack.c.b16 %v5754, %v5752
  %v5791 = vpack.c.b16 %v5755, %v5753
  %v5792 = vpack.c.b16 %v5758, %v5756
  %v5793 = vpack.c.b16 %v5759, %v5757
  %v5794 = vpack.c.b16 %v5762, %v5760
  %v5795 = vpack.c.b16 %v5763, %v5761
  %5828 = vmatprep.subr.bf16.mxu0 %v5779
  %5829 = vmatpush1.bf16.msra.mxu0 %v5778
  %5830 = vmatprep.subr.bf16.mxu0 %v5777
  %5831 = vmatpush1.bf16.msra.mxu0 %v5776
  %5832 = vmatprep.subr.bf16.mxu0 %v5775
  %5833 = vmatpush1.bf16.msra.mxu0 %v5774
  %5834 = vmatprep.subr.bf16.mxu0 %v5773
  %5835 = vmatpush1.bf16.msra.mxu0 %v5772
  %5836 = vmatprep.subr.bf16.mxu0 %v5771
  %5837 = vmatpush1.bf16.msra.mxu0 %v5770
  %5838 = vmatprep.subr.bf16.mxu0 %v5769
  %5839 = vmatpush1.bf16.msra.mxu0 %v5768
  %5840 = vmatprep.subr.bf16.mxu0 %v5767
  %5841 = vmatpush1.bf16.msra.mxu0 %v5766
  %5842 = vmatprep.subr.bf16.mxu0 %v5765
  %5843 = vmatpush1.bf16.msra.mxu0 %v5764
  %5844 = vmatprep.subr.bf16.mxu0 %v5795
  %5845 = vmatpush2.bf16.msra.mxu0 %v5794
  %5846 = vmatprep.subr.bf16.mxu0 %v5793
  %5847 = vmatpush2.bf16.msra.mxu0 %v5792
  %5848 = vmatprep.subr.bf16.mxu0 %v5791
  %5849 = vmatpush2.bf16.msra.mxu0 %v5790
  %5850 = vmatprep.subr.bf16.mxu0 %v5789
  %5851 = vmatpush2.bf16.msra.mxu0 %v5788
  %5852 = vmatprep.subr.bf16.mxu0 %v5787
  %5853 = vmatpush2.bf16.msra.mxu0 %v5786
  %5854 = vmatprep.subr.bf16.mxu0 %v5785
  %5855 = vmatpush2.bf16.msra.mxu0 %v5784
  %5856 = vmatprep.subr.bf16.mxu0 %v5783
  %5857 = vmatpush2.bf16.msra.mxu0 %v5782
  %5858 = vmatprep.subr.bf16.mxu0 %v5781
  %5859 = vmatpush2.bf16.msra.mxu0 %v5780
  %5860 = vmatprep.mubr.bf16.mxu0 %v4437
  %5861 = vmatmul.mubr.bf16.gmra.mxu0 %v4436
  %v5862 = vpop.f32.mrf.mxu0
  %v5863 = vadd.f32 0.0, %v5862
  %v5864 = vpop.f32.mrf.mxu0
  %v5865 = vadd.f32 0.0, %v5864
  %v5866 = vpop.f32.mrf.mxu0
  %v5867 = vadd.f32 0.0, %v5866
  %v5868 = vpop.f32.mrf.mxu0
  %v5869 = vadd.f32 0.0, %v5868
  %5870 = vdwg.mxu0
  %v5871 = vadd.f32 %v5631, %v5863
  %v5872 = vadd.f32 %v5632, %v5865
  %v5873 = vadd.f32 %v5633, %v5867
  %v5874 = vadd.f32 %v5634, %v5869
  %s5875 = scalar_lea.vmem %s7, 1536
  %v5876 = vld [vmem:[%s5875] sm:$0xff]
  %v5877 = vld [vmem:[%s5875 + $0x8] sm:$0xff]
  %v5878 = vld [vmem:[%s5875 + $0x10] sm:$0xff]
  %v5879 = vld [vmem:[%s5875 + $0x18] sm:$0xff]
  %v5880 = vld [vmem:[%s5875 + $0x20] sm:$0xff]
  %v5881 = vld [vmem:[%s5875 + $0x28] sm:$0xff]
  %v5882 = vld [vmem:[%s5875 + $0x30] sm:$0xff]
  %v5883 = vld [vmem:[%s5875 + $0x38] sm:$0xff]
  %v5884 = vld [vmem:[%s5875 + $0x40] sm:$0xff]
  %v5885 = vld [vmem:[%s5875 + $0x48] sm:$0xff]
  %v5886 = vld [vmem:[%s5875 + $0x50] sm:$0xff]
  %v5887 = vld [vmem:[%s5875 + $0x58] sm:$0xff]
  %v5888 = vld [vmem:[%s5875 + $0x60] sm:$0xff]
  %v5889 = vld [vmem:[%s5875 + $0x68] sm:$0xff]
  %v5890 = vld [vmem:[%s5875 + $0x70] sm:$0xff]
  %v5891 = vld [vmem:[%s5875 + $0x78] sm:$0xff]
  %v5892 = vld [vmem:[%s5875 + $0x80] sm:$0xff]
  %v5893 = vld [vmem:[%s5875 + $0x88] sm:$0xff]
  %v5894 = vld [vmem:[%s5875 + $0x90] sm:$0xff]
  %v5895 = vld [vmem:[%s5875 + $0x98] sm:$0xff]
  %v5896 = vld [vmem:[%s5875 + $0xa0] sm:$0xff]
  %v5897 = vld [vmem:[%s5875 + $0xa8] sm:$0xff]
  %v5898 = vld [vmem:[%s5875 + $0xb0] sm:$0xff]
  %v5899 = vld [vmem:[%s5875 + $0xb8] sm:$0xff]
  %v5900 = vld [vmem:[%s5875 + $0xc0] sm:$0xff]
  %v5901 = vld [vmem:[%s5875 + $0xc8] sm:$0xff]
  %v5902 = vld [vmem:[%s5875 + $0xd0] sm:$0xff]
  %v5903 = vld [vmem:[%s5875 + $0xd8] sm:$0xff]
  %v5904 = vld [vmem:[%s5875 + $0xe0] sm:$0xff]
  %v5905 = vld [vmem:[%s5875 + $0xe8] sm:$0xff]
  %v5906 = vld [vmem:[%s5875 + $0xf0] sm:$0xff]
  %v5907 = vld [vmem:[%s5875 + $0xf8] sm:$0xff]
  %v5940 = vunpack.c.l.b16 %v5876
  %v5941 = vunpack.c.h.b16 %v5876
  %v5942 = vunpack.c.l.b16 %v5877
  %v5943 = vunpack.c.h.b16 %v5877
  %v5944 = vunpack.c.l.b16 %v5878
  %v5945 = vunpack.c.h.b16 %v5878
  %v5946 = vunpack.c.l.b16 %v5879
  %v5947 = vunpack.c.h.b16 %v5879
  %v5948 = vunpack.c.l.b16 %v5880
  %v5949 = vunpack.c.h.b16 %v5880
  %v5950 = vunpack.c.l.b16 %v5881
  %v5951 = vunpack.c.h.b16 %v5881
  %v5952 = vunpack.c.l.b16 %v5882
  %v5953 = vunpack.c.h.b16 %v5882
  %v5954 = vunpack.c.l.b16 %v5883
  %v5955 = vunpack.c.h.b16 %v5883
  %v5956 = vunpack.c.l.b16 %v5884
  %v5957 = vunpack.c.h.b16 %v5884
  %v5958 = vunpack.c.l.b16 %v5885
  %v5959 = vunpack.c.h.b16 %v5885
  %v5960 = vunpack.c.l.b16 %v5886
  %v5961 = vunpack.c.h.b16 %v5886
  %v5962 = vunpack.c.l.b16 %v5887
  %v5963 = vunpack.c.h.b16 %v5887
  %v5964 = vunpack.c.l.b16 %v5888
  %v5965 = vunpack.c.h.b16 %v5888
  %v5966 = vunpack.c.l.b16 %v5889
  %v5967 = vunpack.c.h.b16 %v5889
  %v5968 = vunpack.c.l.b16 %v5890
  %v5969 = vunpack.c.h.b16 %v5890
  %v5970 = vunpack.c.l.b16 %v5891
  %v5971 = vunpack.c.h.b16 %v5891
  %v5972 = vunpack.c.l.b16 %v5892
  %v5973 = vunpack.c.h.b16 %v5892
  %v5974 = vunpack.c.l.b16 %v5893
  %v5975 = vunpack.c.h.b16 %v5893
  %v5976 = vunpack.c.l.b16 %v5894
  %v5977 = vunpack.c.h.b16 %v5894
  %v5978 = vunpack.c.l.b16 %v5895
  %v5979 = vunpack.c.h.b16 %v5895
  %v5980 = vunpack.c.l.b16 %v5896
  %v5981 = vunpack.c.h.b16 %v5896
  %v5982 = vunpack.c.l.b16 %v5897
  %v5983 = vunpack.c.h.b16 %v5897
  %v5984 = vunpack.c.l.b16 %v5898
  %v5985 = vunpack.c.h.b16 %v5898
  %v5986 = vunpack.c.l.b16 %v5899
  %v5987 = vunpack.c.h.b16 %v5899
  %v5988 = vunpack.c.l.b16 %v5900
  %v5989 = vunpack.c.h.b16 %v5900
  %v5990 = vunpack.c.l.b16 %v5901
  %v5991 = vunpack.c.h.b16 %v5901
  %v5992 = vunpack.c.l.b16 %v5902
  %v5993 = vunpack.c.h.b16 %v5902
  %v5994 = vunpack.c.l.b16 %v5903
  %v5995 = vunpack.c.h.b16 %v5903
  %v5996 = vunpack.c.l.b16 %v5904
  %v5997 = vunpack.c.h.b16 %v5904
  %v5998 = vunpack.c.l.b16 %v5905
  %v5999 = vunpack.c.h.b16 %v5905
  %v6000 = vunpack.c.l.b16 %v5906
  %v6001 = vunpack.c.h.b16 %v5906
  %v6002 = vunpack.c.l.b16 %v5907
  %v6003 = vunpack.c.h.b16 %v5907
  %v6004 = vpack.c.b16 %v5942, %v5940
  %v6005 = vpack.c.b16 %v5943, %v5941
  %v6006 = vpack.c.b16 %v5946, %v5944
  %v6007 = vpack.c.b16 %v5947, %v5945
  %v6008 = vpack.c.b16 %v5950, %v5948
  %v6009 = vpack.c.b16 %v5951, %v5949
  %v6010 = vpack.c.b16 %v5954, %v5952
  %v6011 = vpack.c.b16 %v5955, %v5953
  %v6012 = vpack.c.b16 %v5958, %v5956
  %v6013 = vpack.c.b16 %v5959, %v5957
  %v6014 = vpack.c.b16 %v5962, %v5960
  %v6015 = vpack.c.b16 %v5963, %v5961
  %v6016 = vpack.c.b16 %v5966, %v5964
  %v6017 = vpack.c.b16 %v5967, %v5965
  %v6018 = vpack.c.b16 %v5970, %v5968
  %v6019 = vpack.c.b16 %v5971, %v5969
  %v6020 = vpack.c.b16 %v5974, %v5972
  %v6021 = vpack.c.b16 %v5975, %v5973
  %v6022 = vpack.c.b16 %v5978, %v5976
  %v6023 = vpack.c.b16 %v5979, %v5977
  %v6024 = vpack.c.b16 %v5982, %v5980
  %v6025 = vpack.c.b16 %v5983, %v5981
  %v6026 = vpack.c.b16 %v5986, %v5984
  %v6027 = vpack.c.b16 %v5987, %v5985
  %v6028 = vpack.c.b16 %v5990, %v5988
  %v6029 = vpack.c.b16 %v5991, %v5989
  %v6030 = vpack.c.b16 %v5994, %v5992
  %v6031 = vpack.c.b16 %v5995, %v5993
  %v6032 = vpack.c.b16 %v5998, %v5996
  %v6033 = vpack.c.b16 %v5999, %v5997
  %v6034 = vpack.c.b16 %v6002, %v6000
  %v6035 = vpack.c.b16 %v6003, %v6001
  %6068 = vmatprep.subr.bf16.mxu0 %v6019
  %6069 = vmatpush1.bf16.msra.mxu0 %v6018
  %6070 = vmatprep.subr.bf16.mxu0 %v6017
  %6071 = vmatpush1.bf16.msra.mxu0 %v6016
  %6072 = vmatprep.subr.bf16.mxu0 %v6015
  %6073 = vmatpush1.bf16.msra.mxu0 %v6014
  %6074 = vmatprep.subr.bf16.mxu0 %v6013
  %6075 = vmatpush1.bf16.msra.mxu0 %v6012
  %6076 = vmatprep.subr.bf16.mxu0 %v6011
  %6077 = vmatpush1.bf16.msra.mxu0 %v6010
  %6078 = vmatprep.subr.bf16.mxu0 %v6009
  %6079 = vmatpush1.bf16.msra.mxu0 %v6008
  %6080 = vmatprep.subr.bf16.mxu0 %v6007
  %6081 = vmatpush1.bf16.msra.mxu0 %v6006
  %6082 = vmatprep.subr.bf16.mxu0 %v6005
  %6083 = vmatpush1.bf16.msra.mxu0 %v6004
  %6084 = vmatprep.subr.bf16.mxu0 %v6035
  %6085 = vmatpush2.bf16.msra.mxu0 %v6034
  %6086 = vmatprep.subr.bf16.mxu0 %v6033
  %6087 = vmatpush2.bf16.msra.mxu0 %v6032
  %6088 = vmatprep.subr.bf16.mxu0 %v6031
  %6089 = vmatpush2.bf16.msra.mxu0 %v6030
  %6090 = vmatprep.subr.bf16.mxu0 %v6029
  %6091 = vmatpush2.bf16.msra.mxu0 %v6028
  %6092 = vmatprep.subr.bf16.mxu0 %v6027
  %6093 = vmatpush2.bf16.msra.mxu0 %v6026
  %6094 = vmatprep.subr.bf16.mxu0 %v6025
  %6095 = vmatpush2.bf16.msra.mxu0 %v6024
  %6096 = vmatprep.subr.bf16.mxu0 %v6023
  %6097 = vmatpush2.bf16.msra.mxu0 %v6022
  %6098 = vmatprep.subr.bf16.mxu0 %v6021
  %6099 = vmatpush2.bf16.msra.mxu0 %v6020
  %6100 = vmatprep.mubr.bf16.mxu0 %v4439
  %6101 = vmatmul.mubr.bf16.gmra.mxu0 %v4438
  %v6102 = vpop.f32.mrf.mxu0
  %v6103 = vadd.f32 0.0, %v6102
  %v6104 = vpop.f32.mrf.mxu0
  %v6105 = vadd.f32 0.0, %v6104
  %v6106 = vpop.f32.mrf.mxu0
  %v6107 = vadd.f32 0.0, %v6106
  %v6108 = vpop.f32.mrf.mxu0
  %v6109 = vadd.f32 0.0, %v6108
  %6110 = vdwg.mxu0
  %v6111 = vadd.f32 %v5871, %v6103
  %v6112 = vadd.f32 %v5872, %v6105
  %v6113 = vadd.f32 %v5873, %v6107
  %v6114 = vadd.f32 %v5874, %v6109
  %s6115 = scalar_lea.vmem %s7, 1792
  %v6116 = vld [vmem:[%s6115] sm:$0xff]
  %v6117 = vld [vmem:[%s6115 + $0x8] sm:$0xff]
  %v6118 = vld [vmem:[%s6115 + $0x10] sm:$0xff]
  %v6119 = vld [vmem:[%s6115 + $0x18] sm:$0xff]
  %v6120 = vld [vmem:[%s6115 + $0x20] sm:$0xff]
  %v6121 = vld [vmem:[%s6115 + $0x28] sm:$0xff]
  %v6122 = vld [vmem:[%s6115 + $0x30] sm:$0xff]
  %v6123 = vld [vmem:[%s6115 + $0x38] sm:$0xff]
  %v6124 = vld [vmem:[%s6115 + $0x40] sm:$0xff]
  %v6125 = vld [vmem:[%s6115 + $0x48] sm:$0xff]
  %v6126 = vld [vmem:[%s6115 + $0x50] sm:$0xff]
  %v6127 = vld [vmem:[%s6115 + $0x58] sm:$0xff]
  %v6128 = vld [vmem:[%s6115 + $0x60] sm:$0xff]
  %v6129 = vld [vmem:[%s6115 + $0x68] sm:$0xff]
  %v6130 = vld [vmem:[%s6115 + $0x70] sm:$0xff]
  %v6131 = vld [vmem:[%s6115 + $0x78] sm:$0xff]
  %v6132 = vld [vmem:[%s6115 + $0x80] sm:$0xff]
  %v6133 = vld [vmem:[%s6115 + $0x88] sm:$0xff]
  %v6134 = vld [vmem:[%s6115 + $0x90] sm:$0xff]
  %v6135 = vld [vmem:[%s6115 + $0x98] sm:$0xff]
  %v6136 = vld [vmem:[%s6115 + $0xa0] sm:$0xff]
  %v6137 = vld [vmem:[%s6115 + $0xa8] sm:$0xff]
  %v6138 = vld [vmem:[%s6115 + $0xb0] sm:$0xff]
  %v6139 = vld [vmem:[%s6115 + $0xb8] sm:$0xff]
  %v6140 = vld [vmem:[%s6115 + $0xc0] sm:$0xff]
  %v6141 = vld [vmem:[%s6115 + $0xc8] sm:$0xff]
  %v6142 = vld [vmem:[%s6115 + $0xd0] sm:$0xff]
  %v6143 = vld [vmem:[%s6115 + $0xd8] sm:$0xff]
  %v6144 = vld [vmem:[%s6115 + $0xe0] sm:$0xff]
  %v6145 = vld [vmem:[%s6115 + $0xe8] sm:$0xff]
  %v6146 = vld [vmem:[%s6115 + $0xf0] sm:$0xff]
  %v6147 = vld [vmem:[%s6115 + $0xf8] sm:$0xff]
  %v6180 = vunpack.c.l.b16 %v6116
  %v6181 = vunpack.c.h.b16 %v6116
  %v6182 = vunpack.c.l.b16 %v6117
  %v6183 = vunpack.c.h.b16 %v6117
  %v6184 = vunpack.c.l.b16 %v6118
  %v6185 = vunpack.c.h.b16 %v6118
  %v6186 = vunpack.c.l.b16 %v6119
  %v6187 = vunpack.c.h.b16 %v6119
  %v6188 = vunpack.c.l.b16 %v6120
  %v6189 = vunpack.c.h.b16 %v6120
  %v6190 = vunpack.c.l.b16 %v6121
  %v6191 = vunpack.c.h.b16 %v6121
  %v6192 = vunpack.c.l.b16 %v6122
  %v6193 = vunpack.c.h.b16 %v6122
  %v6194 = vunpack.c.l.b16 %v6123
  %v6195 = vunpack.c.h.b16 %v6123
  %v6196 = vunpack.c.l.b16 %v6124
  %v6197 = vunpack.c.h.b16 %v6124
  %v6198 = vunpack.c.l.b16 %v6125
  %v6199 = vunpack.c.h.b16 %v6125
  %v6200 = vunpack.c.l.b16 %v6126
  %v6201 = vunpack.c.h.b16 %v6126
  %v6202 = vunpack.c.l.b16 %v6127
  %v6203 = vunpack.c.h.b16 %v6127
  %v6204 = vunpack.c.l.b16 %v6128
  %v6205 = vunpack.c.h.b16 %v6128
  %v6206 = vunpack.c.l.b16 %v6129
  %v6207 = vunpack.c.h.b16 %v6129
  %v6208 = vunpack.c.l.b16 %v6130
  %v6209 = vunpack.c.h.b16 %v6130
  %v6210 = vunpack.c.l.b16 %v6131
  %v6211 = vunpack.c.h.b16 %v6131
  %v6212 = vunpack.c.l.b16 %v6132
  %v6213 = vunpack.c.h.b16 %v6132
  %v6214 = vunpack.c.l.b16 %v6133
  %v6215 = vunpack.c.h.b16 %v6133
  %v6216 = vunpack.c.l.b16 %v6134
  %v6217 = vunpack.c.h.b16 %v6134
  %v6218 = vunpack.c.l.b16 %v6135
  %v6219 = vunpack.c.h.b16 %v6135
  %v6220 = vunpack.c.l.b16 %v6136
  %v6221 = vunpack.c.h.b16 %v6136
  %v6222 = vunpack.c.l.b16 %v6137
  %v6223 = vunpack.c.h.b16 %v6137
  %v6224 = vunpack.c.l.b16 %v6138
  %v6225 = vunpack.c.h.b16 %v6138
  %v6226 = vunpack.c.l.b16 %v6139
  %v6227 = vunpack.c.h.b16 %v6139
  %v6228 = vunpack.c.l.b16 %v6140
  %v6229 = vunpack.c.h.b16 %v6140
  %v6230 = vunpack.c.l.b16 %v6141
  %v6231 = vunpack.c.h.b16 %v6141
  %v6232 = vunpack.c.l.b16 %v6142
  %v6233 = vunpack.c.h.b16 %v6142
  %v6234 = vunpack.c.l.b16 %v6143
  %v6235 = vunpack.c.h.b16 %v6143
  %v6236 = vunpack.c.l.b16 %v6144
  %v6237 = vunpack.c.h.b16 %v6144
  %v6238 = vunpack.c.l.b16 %v6145
  %v6239 = vunpack.c.h.b16 %v6145
  %v6240 = vunpack.c.l.b16 %v6146
  %v6241 = vunpack.c.h.b16 %v6146
  %v6242 = vunpack.c.l.b16 %v6147
  %v6243 = vunpack.c.h.b16 %v6147
  %v6244 = vpack.c.b16 %v6182, %v6180
  %v6245 = vpack.c.b16 %v6183, %v6181
  %v6246 = vpack.c.b16 %v6186, %v6184
  %v6247 = vpack.c.b16 %v6187, %v6185
  %v6248 = vpack.c.b16 %v6190, %v6188
  %v6249 = vpack.c.b16 %v6191, %v6189
  %v6250 = vpack.c.b16 %v6194, %v6192
  %v6251 = vpack.c.b16 %v6195, %v6193
  %v6252 = vpack.c.b16 %v6198, %v6196
  %v6253 = vpack.c.b16 %v6199, %v6197
  %v6254 = vpack.c.b16 %v6202, %v6200
  %v6255 = vpack.c.b16 %v6203, %v6201
  %v6256 = vpack.c.b16 %v6206, %v6204
  %v6257 = vpack.c.b16 %v6207, %v6205
  %v6258 = vpack.c.b16 %v6210, %v6208
  %v6259 = vpack.c.b16 %v6211, %v6209
  %v6260 = vpack.c.b16 %v6214, %v6212
  %v6261 = vpack.c.b16 %v6215, %v6213
  %v6262 = vpack.c.b16 %v6218, %v6216
  %v6263 = vpack.c.b16 %v6219, %v6217
  %v6264 = vpack.c.b16 %v6222, %v6220
  %v6265 = vpack.c.b16 %v6223, %v6221
  %v6266 = vpack.c.b16 %v6226, %v6224
  %v6267 = vpack.c.b16 %v6227, %v6225
  %v6268 = vpack.c.b16 %v6230, %v6228
  %v6269 = vpack.c.b16 %v6231, %v6229
  %v6270 = vpack.c.b16 %v6234, %v6232
  %v6271 = vpack.c.b16 %v6235, %v6233
  %v6272 = vpack.c.b16 %v6238, %v6236
  %v6273 = vpack.c.b16 %v6239, %v6237
  %v6274 = vpack.c.b16 %v6242, %v6240
  %v6275 = vpack.c.b16 %v6243, %v6241
  %6308 = vmatprep.subr.bf16.mxu0 %v6259
  %6309 = vmatpush1.bf16.msra.mxu0 %v6258
  %6310 = vmatprep.subr.bf16.mxu0 %v6257
  %6311 = vmatpush1.bf16.msra.mxu0 %v6256
  %6312 = vmatprep.subr.bf16.mxu0 %v6255
  %6313 = vmatpush1.bf16.msra.mxu0 %v6254
  %6314 = vmatprep.subr.bf16.mxu0 %v6253
  %6315 = vmatpush1.bf16.msra.mxu0 %v6252
  %6316 = vmatprep.subr.bf16.mxu0 %v6251
  %6317 = vmatpush1.bf16.msra.mxu0 %v6250
  %6318 = vmatprep.subr.bf16.mxu0 %v6249
  %6319 = vmatpush1.bf16.msra.mxu0 %v6248
  %6320 = vmatprep.subr.bf16.mxu0 %v6247
  %6321 = vmatpush1.bf16.msra.mxu0 %v6246
  %6322 = vmatprep.subr.bf16.mxu0 %v6245
  %6323 = vmatpush1.bf16.msra.mxu0 %v6244
  %6324 = vmatprep.subr.bf16.mxu0 %v6275
  %6325 = vmatpush2.bf16.msra.mxu0 %v6274
  %6326 = vmatprep.subr.bf16.mxu0 %v6273
  %6327 = vmatpush2.bf16.msra.mxu0 %v6272
  %6328 = vmatprep.subr.bf16.mxu0 %v6271
  %6329 = vmatpush2.bf16.msra.mxu0 %v6270
  %6330 = vmatprep.subr.bf16.mxu0 %v6269
  %6331 = vmatpush2.bf16.msra.mxu0 %v6268
  %6332 = vmatprep.subr.bf16.mxu0 %v6267
  %6333 = vmatpush2.bf16.msra.mxu0 %v6266
  %6334 = vmatprep.subr.bf16.mxu0 %v6265
  %6335 = vmatpush2.bf16.msra.mxu0 %v6264
  %6336 = vmatprep.subr.bf16.mxu0 %v6263
  %6337 = vmatpush2.bf16.msra.mxu0 %v6262
  %6338 = vmatprep.subr.bf16.mxu0 %v6261
  %6339 = vmatpush2.bf16.msra.mxu0 %v6260
  %6340 = vmatprep.mubr.bf16.mxu0 %v4441
  %6341 = vmatmul.mubr.bf16.gmra.mxu0 %v4440
  %v6342 = vpop.f32.mrf.mxu0
  %v6343 = vadd.f32 0.0, %v6342
  %v6344 = vpop.f32.mrf.mxu0
  %v6345 = vadd.f32 0.0, %v6344
  %v6346 = vpop.f32.mrf.mxu0
  %v6347 = vadd.f32 0.0, %v6346
  %v6348 = vpop.f32.mrf.mxu0
  %v6349 = vadd.f32 0.0, %v6348
  %6350 = vdwg.mxu0
  %v6351 = vadd.f32 %v6111, %v6343
  %v6352 = vadd.f32 %v6112, %v6345
  %v6353 = vadd.f32 %v6113, %v6347
  %v6354 = vadd.f32 %v6114, %v6349
  %s6355 = scalar_lea.vmem %s7, 2048
  %v6356 = vld [vmem:[%s6355] sm:$0xff]
  %v6357 = vld [vmem:[%s6355 + $0x8] sm:$0xff]
  %v6358 = vld [vmem:[%s6355 + $0x10] sm:$0xff]
  %v6359 = vld [vmem:[%s6355 + $0x18] sm:$0xff]
  %v6360 = vld [vmem:[%s6355 + $0x20] sm:$0xff]
  %v6361 = vld [vmem:[%s6355 + $0x28] sm:$0xff]
  %v6362 = vld [vmem:[%s6355 + $0x30] sm:$0xff]
  %v6363 = vld [vmem:[%s6355 + $0x38] sm:$0xff]
  %v6364 = vld [vmem:[%s6355 + $0x40] sm:$0xff]
  %v6365 = vld [vmem:[%s6355 + $0x48] sm:$0xff]
  %v6366 = vld [vmem:[%s6355 + $0x50] sm:$0xff]
  %v6367 = vld [vmem:[%s6355 + $0x58] sm:$0xff]
  %v6368 = vld [vmem:[%s6355 + $0x60] sm:$0xff]
  %v6369 = vld [vmem:[%s6355 + $0x68] sm:$0xff]
  %v6370 = vld [vmem:[%s6355 + $0x70] sm:$0xff]
  %v6371 = vld [vmem:[%s6355 + $0x78] sm:$0xff]
  %v6372 = vld [vmem:[%s6355 + $0x80] sm:$0xff]
  %v6373 = vld [vmem:[%s6355 + $0x88] sm:$0xff]
  %v6374 = vld [vmem:[%s6355 + $0x90] sm:$0xff]
  %v6375 = vld [vmem:[%s6355 + $0x98] sm:$0xff]
  %v6376 = vld [vmem:[%s6355 + $0xa0] sm:$0xff]
  %v6377 = vld [vmem:[%s6355 + $0xa8] sm:$0xff]
  %v6378 = vld [vmem:[%s6355 + $0xb0] sm:$0xff]
  %v6379 = vld [vmem:[%s6355 + $0xb8] sm:$0xff]
  %v6380 = vld [vmem:[%s6355 + $0xc0] sm:$0xff]
  %v6381 = vld [vmem:[%s6355 + $0xc8] sm:$0xff]
  %v6382 = vld [vmem:[%s6355 + $0xd0] sm:$0xff]
  %v6383 = vld [vmem:[%s6355 + $0xd8] sm:$0xff]
  %v6384 = vld [vmem:[%s6355 + $0xe0] sm:$0xff]
  %v6385 = vld [vmem:[%s6355 + $0xe8] sm:$0xff]
  %v6386 = vld [vmem:[%s6355 + $0xf0] sm:$0xff]
  %v6387 = vld [vmem:[%s6355 + $0xf8] sm:$0xff]
  %v6420 = vunpack.c.l.b16 %v6356
  %v6421 = vunpack.c.h.b16 %v6356
  %v6422 = vunpack.c.l.b16 %v6357
  %v6423 = vunpack.c.h.b16 %v6357
  %v6424 = vunpack.c.l.b16 %v6358
  %v6425 = vunpack.c.h.b16 %v6358
  %v6426 = vunpack.c.l.b16 %v6359
  %v6427 = vunpack.c.h.b16 %v6359
  %v6428 = vunpack.c.l.b16 %v6360
  %v6429 = vunpack.c.h.b16 %v6360
  %v6430 = vunpack.c.l.b16 %v6361
  %v6431 = vunpack.c.h.b16 %v6361
  %v6432 = vunpack.c.l.b16 %v6362
  %v6433 = vunpack.c.h.b16 %v6362
  %v6434 = vunpack.c.l.b16 %v6363
  %v6435 = vunpack.c.h.b16 %v6363
  %v6436 = vunpack.c.l.b16 %v6364
  %v6437 = vunpack.c.h.b16 %v6364
  %v6438 = vunpack.c.l.b16 %v6365
  %v6439 = vunpack.c.h.b16 %v6365
  %v6440 = vunpack.c.l.b16 %v6366
  %v6441 = vunpack.c.h.b16 %v6366
  %v6442 = vunpack.c.l.b16 %v6367
  %v6443 = vunpack.c.h.b16 %v6367
  %v6444 = vunpack.c.l.b16 %v6368
  %v6445 = vunpack.c.h.b16 %v6368
  %v6446 = vunpack.c.l.b16 %v6369
  %v6447 = vunpack.c.h.b16 %v6369
  %v6448 = vunpack.c.l.b16 %v6370
  %v6449 = vunpack.c.h.b16 %v6370
  %v6450 = vunpack.c.l.b16 %v6371
  %v6451 = vunpack.c.h.b16 %v6371
  %v6452 = vunpack.c.l.b16 %v6372
  %v6453 = vunpack.c.h.b16 %v6372
  %v6454 = vunpack.c.l.b16 %v6373
  %v6455 = vunpack.c.h.b16 %v6373
  %v6456 = vunpack.c.l.b16 %v6374
  %v6457 = vunpack.c.h.b16 %v6374
  %v6458 = vunpack.c.l.b16 %v6375
  %v6459 = vunpack.c.h.b16 %v6375
  %v6460 = vunpack.c.l.b16 %v6376
  %v6461 = vunpack.c.h.b16 %v6376
  %v6462 = vunpack.c.l.b16 %v6377
  %v6463 = vunpack.c.h.b16 %v6377
  %v6464 = vunpack.c.l.b16 %v6378
  %v6465 = vunpack.c.h.b16 %v6378
  %v6466 = vunpack.c.l.b16 %v6379
  %v6467 = vunpack.c.h.b16 %v6379
  %v6468 = vunpack.c.l.b16 %v6380
  %v6469 = vunpack.c.h.b16 %v6380
  %v6470 = vunpack.c.l.b16 %v6381
  %v6471 = vunpack.c.h.b16 %v6381
  %v6472 = vunpack.c.l.b16 %v6382
  %v6473 = vunpack.c.h.b16 %v6382
  %v6474 = vunpack.c.l.b16 %v6383
  %v6475 = vunpack.c.h.b16 %v6383
  %v6476 = vunpack.c.l.b16 %v6384
  %v6477 = vunpack.c.h.b16 %v6384
  %v6478 = vunpack.c.l.b16 %v6385
  %v6479 = vunpack.c.h.b16 %v6385
  %v6480 = vunpack.c.l.b16 %v6386
  %v6481 = vunpack.c.h.b16 %v6386
  %v6482 = vunpack.c.l.b16 %v6387
  %v6483 = vunpack.c.h.b16 %v6387
  %v6484 = vpack.c.b16 %v6422, %v6420
  %v6485 = vpack.c.b16 %v6423, %v6421
  %v6486 = vpack.c.b16 %v6426, %v6424
  %v6487 = vpack.c.b16 %v6427, %v6425
  %v6488 = vpack.c.b16 %v6430, %v6428
  %v6489 = vpack.c.b16 %v6431, %v6429
  %v6490 = vpack.c.b16 %v6434, %v6432
  %v6491 = vpack.c.b16 %v6435, %v6433
  %v6492 = vpack.c.b16 %v6438, %v6436
  %v6493 = vpack.c.b16 %v6439, %v6437
  %v6494 = vpack.c.b16 %v6442, %v6440
  %v6495 = vpack.c.b16 %v6443, %v6441
  %v6496 = vpack.c.b16 %v6446, %v6444
  %v6497 = vpack.c.b16 %v6447, %v6445
  %v6498 = vpack.c.b16 %v6450, %v6448
  %v6499 = vpack.c.b16 %v6451, %v6449
  %v6500 = vpack.c.b16 %v6454, %v6452
  %v6501 = vpack.c.b16 %v6455, %v6453
  %v6502 = vpack.c.b16 %v6458, %v6456
  %v6503 = vpack.c.b16 %v6459, %v6457
  %v6504 = vpack.c.b16 %v6462, %v6460
  %v6505 = vpack.c.b16 %v6463, %v6461
  %v6506 = vpack.c.b16 %v6466, %v6464
  %v6507 = vpack.c.b16 %v6467, %v6465
  %v6508 = vpack.c.b16 %v6470, %v6468
  %v6509 = vpack.c.b16 %v6471, %v6469
  %v6510 = vpack.c.b16 %v6474, %v6472
  %v6511 = vpack.c.b16 %v6475, %v6473
  %v6512 = vpack.c.b16 %v6478, %v6476
  %v6513 = vpack.c.b16 %v6479, %v6477
  %v6514 = vpack.c.b16 %v6482, %v6480
  %v6515 = vpack.c.b16 %v6483, %v6481
  %6548 = vmatprep.subr.bf16.mxu0 %v6499
  %6549 = vmatpush1.bf16.msra.mxu0 %v6498
  %6550 = vmatprep.subr.bf16.mxu0 %v6497
  %6551 = vmatpush1.bf16.msra.mxu0 %v6496
  %6552 = vmatprep.subr.bf16.mxu0 %v6495
  %6553 = vmatpush1.bf16.msra.mxu0 %v6494
  %6554 = vmatprep.subr.bf16.mxu0 %v6493
  %6555 = vmatpush1.bf16.msra.mxu0 %v6492
  %6556 = vmatprep.subr.bf16.mxu0 %v6491
  %6557 = vmatpush1.bf16.msra.mxu0 %v6490
  %6558 = vmatprep.subr.bf16.mxu0 %v6489
  %6559 = vmatpush1.bf16.msra.mxu0 %v6488
  %6560 = vmatprep.subr.bf16.mxu0 %v6487
  %6561 = vmatpush1.bf16.msra.mxu0 %v6486
  %6562 = vmatprep.subr.bf16.mxu0 %v6485
  %6563 = vmatpush1.bf16.msra.mxu0 %v6484
  %6564 = vmatprep.subr.bf16.mxu0 %v6515
  %6565 = vmatpush2.bf16.msra.mxu0 %v6514
  %6566 = vmatprep.subr.bf16.mxu0 %v6513
  %6567 = vmatpush2.bf16.msra.mxu0 %v6512
  %6568 = vmatprep.subr.bf16.mxu0 %v6511
  %6569 = vmatpush2.bf16.msra.mxu0 %v6510
  %6570 = vmatprep.subr.bf16.mxu0 %v6509
  %6571 = vmatpush2.bf16.msra.mxu0 %v6508
  %6572 = vmatprep.subr.bf16.mxu0 %v6507
  %6573 = vmatpush2.bf16.msra.mxu0 %v6506
  %6574 = vmatprep.subr.bf16.mxu0 %v6505
  %6575 = vmatpush2.bf16.msra.mxu0 %v6504
  %6576 = vmatprep.subr.bf16.mxu0 %v6503
  %6577 = vmatpush2.bf16.msra.mxu0 %v6502
  %6578 = vmatprep.subr.bf16.mxu0 %v6501
  %6579 = vmatpush2.bf16.msra.mxu0 %v6500
  %6580 = vmatprep.mubr.bf16.mxu0 %v4443
  %6581 = vmatmul.mubr.bf16.gmra.mxu0 %v4442
  %v6582 = vpop.f32.mrf.mxu0
  %v6583 = vadd.f32 0.0, %v6582
  %v6584 = vpop.f32.mrf.mxu0
  %v6585 = vadd.f32 0.0, %v6584
  %v6586 = vpop.f32.mrf.mxu0
  %v6587 = vadd.f32 0.0, %v6586
  %v6588 = vpop.f32.mrf.mxu0
  %v6589 = vadd.f32 0.0, %v6588
  %6590 = vdwg.mxu0
  %v6591 = vadd.f32 %v6351, %v6583
  %v6592 = vadd.f32 %v6352, %v6585
  %v6593 = vadd.f32 %v6353, %v6587
  %v6594 = vadd.f32 %v6354, %v6589
  %v6595 = vld [vmem:[%s8] sm:$0x3]
  %v6597 = vlaneseq
  %v6598 = vshrl.u32 %v6597, 7
  %v6599 = vsub.s32 0, %v6598
  %v6600 = vrot.slane %v6595, %v6599
  %v6601 = vlaneseq
  %v6602 = vshrl.u32 %v6601, 7
  %v6603 = vsub.s32 1, %v6602
  %v6604 = vrot.slane %v6595, %v6603
  %v6607 = vadd.f32 %v6591, %v6600
  %v6608 = vadd.f32 %v6592, %v6604
  %v6609 = vadd.f32 %v6593, %v6600
  %v6610 = vadd.f32 %v6594, %v6604
  %v6611 = vmul.f32 %v6607, 0.5
  %v6612 = vmul.f32 %v6608, 0.5
  %v6613 = vmul.f32 %v6609, 0.5
  %v6614 = vmul.f32 %v6610, 0.5
  %v6615 = vtanh.pop %v6611
  %v6616 = vtanh.pop %v6612
  %v6617 = vtanh.pop %v6613
  %v6618 = vtanh.pop %v6614
  %v6619 = vmul.f32 %v6615, 0.5
  %v6620 = vmul.f32 %v6616, 0.5
  %v6621 = vmul.f32 %v6617, 0.5
  %v6622 = vmul.f32 %v6618, 0.5
  %v6623 = vadd.f32 %v6619, 0.5
  %v6624 = vadd.f32 %v6620, 0.5
  %v6625 = vadd.f32 %v6621, 0.5
  %v6626 = vadd.f32 %v6622, 0.5
  %v6627 = vld [vmem:[%s9] sm:$0xf]
  %v6628 = vld [vmem:[%s9 + $0x4] sm:$0xf]
  %v6629 = vld [vmem:[%s9 + $0x8] sm:$0xf]
  %v6630 = vld [vmem:[%s9 + $0xc] sm:$0xf]
  %v6631 = vld [vmem:[%s9 + $0x10] sm:$0xf]
  %v6632 = vld [vmem:[%s9 + $0x14] sm:$0xf]
  %v6633 = vld [vmem:[%s9 + $0x18] sm:$0xf]
  %v6634 = vld [vmem:[%s9 + $0x1c] sm:$0xf]
  %v6635 = vld [vmem:[%s9 + $0x20] sm:$0xf]
  %v6636 = vld [vmem:[%s9 + $0x24] sm:$0xf]
  %v6637 = vld [vmem:[%s9 + $0x28] sm:$0xf]
  %v6638 = vld [vmem:[%s9 + $0x2c] sm:$0xf]
  %v6639 = vld [vmem:[%s9 + $0x30] sm:$0xf]
  %v6640 = vld [vmem:[%s9 + $0x34] sm:$0xf]
  %v6641 = vld [vmem:[%s9 + $0x38] sm:$0xf]
  %v6642 = vld [vmem:[%s9 + $0x3c] sm:$0xf]
  %v6643 = vld [vmem:[%s9 + $0x40] sm:$0xf]
  %v6644 = vld [vmem:[%s9 + $0x44] sm:$0xf]
  %v6645 = vpack.c.bf16 %v6625, %v6623
  %v6646 = vpack.c.bf16 %v6626, %v6624
  %v6665 = vunpack.c.l.b16 %v6627
  %v6666 = vunpack.c.l.b16 %v6628
  %v6667 = vunpack.c.l.b16 %v6629
  %v6668 = vunpack.c.l.b16 %v6630
  %v6669 = vunpack.c.l.b16 %v6631
  %v6670 = vunpack.c.l.b16 %v6632
  %v6671 = vunpack.c.l.b16 %v6633
  %v6672 = vunpack.c.l.b16 %v6634
  %v6673 = vunpack.c.l.b16 %v6635
  %v6674 = vunpack.c.l.b16 %v6636
  %v6675 = vunpack.c.l.b16 %v6637
  %v6676 = vunpack.c.l.b16 %v6638
  %v6677 = vunpack.c.l.b16 %v6639
  %v6678 = vunpack.c.l.b16 %v6640
  %v6679 = vunpack.c.l.b16 %v6641
  %v6680 = vunpack.c.l.b16 %v6642
  %v6681 = vunpack.c.l.b16 %v6643
  %v6682 = vunpack.c.l.b16 %v6644
  %v6683 = vpack.c.b16 %v6666, %v6665
  %v6684 = vpack.c.b16 %v6668, %v6667
  %v6685 = vpack.c.b16 %v6670, %v6669
  %v6686 = vpack.c.b16 %v6672, %v6671
  %v6687 = vpack.c.b16 %v6674, %v6673
  %v6688 = vpack.c.b16 %v6676, %v6675
  %v6689 = vpack.c.b16 %v6678, %v6677
  %v6690 = vpack.c.b16 %v6680, %v6679
  %v6691 = vpack.c.b16 %v6682, %v6681
  %vm6692 = vcmask 130048
  %v6694 = vsel %vm6692, %v6683, 0
  %v6697 = vsel %vm6692, %v6684, 0
  %v6700 = vsel %vm6692, %v6685, 0
  %v6703 = vsel %vm6692, %v6686, 0
  %v6706 = vsel %vm6692, %v6687, 0
  %v6709 = vsel %vm6692, %v6688, 0
  %v6712 = vsel %vm6692, %v6689, 0
  %v6715 = vsel %vm6692, %v6690, 0
  %v6718 = vsel %vm6692, %v6691, 0
  %6720 = vmatprep.subr.bf16.mxu0 0
  %6721 = vmatpush1.bf16.msra.mxu0 0
  %6722 = vmatprep.subr.bf16.mxu0 0
  %6723 = vmatpush1.bf16.msra.mxu0 0
  %6724 = vmatprep.subr.bf16.mxu0 0
  %6725 = vmatpush1.bf16.msra.mxu0 0
  %6726 = vmatprep.subr.bf16.mxu0 0
  %6727 = vmatpush1.bf16.msra.mxu0 0
  %6728 = vmatprep.subr.bf16.mxu0 0
  %6729 = vmatpush1.bf16.msra.mxu0 0
  %6730 = vmatprep.subr.bf16.mxu0 0
  %6731 = vmatpush1.bf16.msra.mxu0 0
  %6732 = vmatprep.subr.bf16.mxu0 0
  %6733 = vmatpush1.bf16.msra.mxu0 0
  %6734 = vmatprep.subr.bf16.mxu0 %v6646
  %6735 = vmatpush1.bf16.msra.mxu0 %v6645
  %6736 = vmatprep.subr.bf16.mxu0 0
  %6737 = vmatpush2.bf16.msra.mxu0 0
  %6738 = vmatprep.subr.bf16.mxu0 0
  %6739 = vmatpush2.bf16.msra.mxu0 0
  %6740 = vmatprep.subr.bf16.mxu0 0
  %6741 = vmatpush2.bf16.msra.mxu0 0
  %6742 = vmatprep.subr.bf16.mxu0 0
  %6743 = vmatpush2.bf16.msra.mxu0 0
  %6744 = vmatprep.subr.bf16.mxu0 0
  %6745 = vmatpush2.bf16.msra.mxu0 0
  %6746 = vmatprep.subr.bf16.mxu0 0
  %6747 = vmatpush2.bf16.msra.mxu0 0
  %6748 = vmatprep.subr.bf16.mxu0 0
  %6749 = vmatpush2.bf16.msra.mxu0 0
  %6750 = vmatprep.subr.bf16.mxu0 0
  %6751 = vmatpush2.bf16.msra.mxu0 0
  %6752 = vmatprep.mubr.bf16.mxu0 0
  %6753 = vmatmul.mubr.bf16.gmra.mxu0 %v6694
  %v6754 = vpop.f32.mrf.mxu0
  %v6755 = vadd.f32 0.0, %v6754
  %v6756 = vpop.f32.mrf.mxu0
  %v6757 = vadd.f32 0.0, %v6756
  %v6758 = vpop.f32.mrf.mxu0
  %v6759 = vadd.f32 0.0, %v6758
  %v6760 = vpop.f32.mrf.mxu0
  %v6761 = vadd.f32 0.0, %v6760
  %6762 = vmatprep.mubr.bf16.mxu0 0
  %6763 = vmatmul.mubr.bf16.gmra.mxu0 %v6697
  %v6764 = vpop.f32.mrf.mxu0
  %v6765 = vadd.f32 0.0, %v6764
  %v6766 = vpop.f32.mrf.mxu0
  %v6767 = vadd.f32 0.0, %v6766
  %v6768 = vpop.f32.mrf.mxu0
  %v6769 = vadd.f32 0.0, %v6768
  %v6770 = vpop.f32.mrf.mxu0
  %v6771 = vadd.f32 0.0, %v6770
  %6772 = vmatprep.mubr.bf16.mxu0 0
  %6773 = vmatmul.mubr.bf16.gmra.mxu0 %v6700
  %v6774 = vpop.f32.mrf.mxu0
  %v6775 = vadd.f32 0.0, %v6774
  %v6776 = vpop.f32.mrf.mxu0
  %v6777 = vadd.f32 0.0, %v6776
  %v6778 = vpop.f32.mrf.mxu0
  %v6779 = vadd.f32 0.0, %v6778
  %v6780 = vpop.f32.mrf.mxu0
  %v6781 = vadd.f32 0.0, %v6780
  %6782 = vmatprep.mubr.bf16.mxu0 0
  %6783 = vmatmul.mubr.bf16.gmra.mxu0 %v6703
  %v6784 = vpop.f32.mrf.mxu0
  %v6785 = vadd.f32 0.0, %v6784
  %v6786 = vpop.f32.mrf.mxu0
  %v6787 = vadd.f32 0.0, %v6786
  %v6788 = vpop.f32.mrf.mxu0
  %v6789 = vadd.f32 0.0, %v6788
  %v6790 = vpop.f32.mrf.mxu0
  %v6791 = vadd.f32 0.0, %v6790
  %6792 = vmatprep.mubr.bf16.mxu0 0
  %6793 = vmatmul.mubr.bf16.gmra.mxu0 %v6706
  %v6794 = vpop.f32.mrf.mxu0
  %v6795 = vadd.f32 0.0, %v6794
  %v6796 = vpop.f32.mrf.mxu0
  %v6797 = vadd.f32 0.0, %v6796
  %v6798 = vpop.f32.mrf.mxu0
  %v6799 = vadd.f32 0.0, %v6798
  %v6800 = vpop.f32.mrf.mxu0
  %v6801 = vadd.f32 0.0, %v6800
  %6802 = vmatprep.mubr.bf16.mxu0 0
  %6803 = vmatmul.mubr.bf16.gmra.mxu0 %v6709
  %v6804 = vpop.f32.mrf.mxu0
  %v6805 = vadd.f32 0.0, %v6804
  %v6806 = vpop.f32.mrf.mxu0
  %v6807 = vadd.f32 0.0, %v6806
  %v6808 = vpop.f32.mrf.mxu0
  %v6809 = vadd.f32 0.0, %v6808
  %v6810 = vpop.f32.mrf.mxu0
  %v6811 = vadd.f32 0.0, %v6810
  %6812 = vmatprep.mubr.bf16.mxu0 0
  %6813 = vmatmul.mubr.bf16.gmra.mxu0 %v6712
  %v6814 = vpop.f32.mrf.mxu0
  %v6815 = vadd.f32 0.0, %v6814
  %v6816 = vpop.f32.mrf.mxu0
  %v6817 = vadd.f32 0.0, %v6816
  %v6818 = vpop.f32.mrf.mxu0
  %v6819 = vadd.f32 0.0, %v6818
  %v6820 = vpop.f32.mrf.mxu0
  %v6821 = vadd.f32 0.0, %v6820
  %6822 = vmatprep.mubr.bf16.mxu0 0
  %6823 = vmatmul.mubr.bf16.gmra.mxu0 %v6715
  %v6824 = vpop.f32.mrf.mxu0
  %v6825 = vadd.f32 0.0, %v6824
  %v6826 = vpop.f32.mrf.mxu0
  %v6827 = vadd.f32 0.0, %v6826
  %v6828 = vpop.f32.mrf.mxu0
  %v6829 = vadd.f32 0.0, %v6828
  %v6830 = vpop.f32.mrf.mxu0
  %v6831 = vadd.f32 0.0, %v6830
  %6832 = vmatprep.mubr.bf16.mxu0 0
  %6833 = vmatmul.mubr.bf16.gmra.mxu0 %v6718
  %v6834 = vpop.f32.mrf.mxu0
  %v6835 = vadd.f32 0.0, %v6834
  %v6836 = vpop.f32.mrf.mxu0
  %v6837 = vadd.f32 0.0, %v6836
  %v6838 = vpop.f32.mrf.mxu0
  %v6839 = vadd.f32 0.0, %v6838
  %v6840 = vpop.f32.mrf.mxu0
  %v6841 = vadd.f32 0.0, %v6840
  %6842 = vdwg.mxu0
  %v6843 = vpack.c.bf16 %v6759, %v6755
  %v6844 = vpack.c.bf16 %v6761, %v6757
  %v6845 = vpack.c.bf16 %v6769, %v6765
  %v6846 = vpack.c.bf16 %v6771, %v6767
  %v6847 = vpack.c.bf16 %v6779, %v6775
  %v6848 = vpack.c.bf16 %v6781, %v6777
  %v6849 = vpack.c.bf16 %v6789, %v6785
  %v6850 = vpack.c.bf16 %v6791, %v6787
  %v6851 = vpack.c.bf16 %v6799, %v6795
  %v6852 = vpack.c.bf16 %v6801, %v6797
  %v6853 = vpack.c.bf16 %v6809, %v6805
  %v6854 = vpack.c.bf16 %v6811, %v6807
  %v6855 = vpack.c.bf16 %v6819, %v6815
  %v6856 = vpack.c.bf16 %v6821, %v6817
  %v6857 = vpack.c.bf16 %v6829, %v6825
  %v6858 = vpack.c.bf16 %v6831, %v6827
  %v6859 = vpack.c.bf16 %v6839, %v6835
  %v6860 = vpack.c.bf16 %v6841, %v6837
  %v6861 = vld [vmem:[%s10] sm:$0xf]
  %v6862 = vld [vmem:[%s10 + $0x4] sm:$0xf]
  %v6863 = vld [vmem:[%s10 + $0x8] sm:$0xf]
  %v6864 = vld [vmem:[%s10 + $0xc] sm:$0xf]
  %v6865 = vld [vmem:[%s10 + $0x10] sm:$0xf]
  %v6866 = vld [vmem:[%s10 + $0x14] sm:$0xf]
  %v6867 = vld [vmem:[%s10 + $0x18] sm:$0xf]
  %v6868 = vld [vmem:[%s10 + $0x1c] sm:$0xf]
  %v6869 = vld [vmem:[%s10 + $0x20] sm:$0xf]
  %v6870 = vld [vmem:[%s10 + $0x24] sm:$0xf]
  %v6871 = vld [vmem:[%s10 + $0x28] sm:$0xf]
  %v6872 = vld [vmem:[%s10 + $0x2c] sm:$0xf]
  %v6873 = vld [vmem:[%s10 + $0x30] sm:$0xf]
  %v6874 = vld [vmem:[%s10 + $0x34] sm:$0xf]
  %v6875 = vld [vmem:[%s10 + $0x38] sm:$0xf]
  %v6876 = vld [vmem:[%s10 + $0x3c] sm:$0xf]
  %v6877 = vld [vmem:[%s10 + $0x40] sm:$0xf]
  %v6878 = vld [vmem:[%s10 + $0x44] sm:$0xf]
  %v6879 = vld [vmem:[%s10 + $0x48] sm:$0xf]
  %v6880 = vld [vmem:[%s10 + $0x4c] sm:$0xf]
  %v6881 = vld [vmem:[%s10 + $0x50] sm:$0xf]
  %v6882 = vld [vmem:[%s10 + $0x54] sm:$0xf]
  %v6883 = vld [vmem:[%s10 + $0x58] sm:$0xf]
  %v6884 = vld [vmem:[%s10 + $0x5c] sm:$0xf]
  %v6885 = vld [vmem:[%s10 + $0x60] sm:$0xf]
  %v6886 = vld [vmem:[%s10 + $0x64] sm:$0xf]
  %v6887 = vld [vmem:[%s10 + $0x68] sm:$0xf]
  %v6888 = vld [vmem:[%s10 + $0x6c] sm:$0xf]
  %v6889 = vld [vmem:[%s10 + $0x70] sm:$0xf]
  %v6890 = vld [vmem:[%s10 + $0x74] sm:$0xf]
  %v6891 = vld [vmem:[%s10 + $0x78] sm:$0xf]
  %v6892 = vld [vmem:[%s10 + $0x7c] sm:$0xf]
  %s6893 = scalar_lea.vmem %s10, 128
  %v6894 = vld [vmem:[%s6893] sm:$0xf]
  %v6895 = vld [vmem:[%s6893 + $0x4] sm:$0xf]
  %v6896 = vld [vmem:[%s6893 + $0x8] sm:$0xf]
  %v6897 = vld [vmem:[%s6893 + $0xc] sm:$0xf]
  %v6898 = vld [vmem:[%s6893 + $0x10] sm:$0xf]
  %v6899 = vld [vmem:[%s6893 + $0x14] sm:$0xf]
  %v6900 = vld [vmem:[%s6893 + $0x18] sm:$0xf]
  %v6901 = vld [vmem:[%s6893 + $0x1c] sm:$0xf]
  %v6902 = vld [vmem:[%s6893 + $0x20] sm:$0xf]
  %v6903 = vld [vmem:[%s6893 + $0x24] sm:$0xf]
  %v6904 = vld [vmem:[%s6893 + $0x28] sm:$0xf]
  %v6905 = vld [vmem:[%s6893 + $0x2c] sm:$0xf]
  %v6906 = vld [vmem:[%s6893 + $0x30] sm:$0xf]
  %v6907 = vld [vmem:[%s6893 + $0x34] sm:$0xf]
  %v6908 = vld [vmem:[%s6893 + $0x38] sm:$0xf]
  %v6909 = vld [vmem:[%s6893 + $0x3c] sm:$0xf]
  %v6910 = vld [vmem:[%s6893 + $0x40] sm:$0xf]
  %v6911 = vld [vmem:[%s6893 + $0x44] sm:$0xf]
  %v6912 = vld [vmem:[%s6893 + $0x48] sm:$0xf]
  %v6913 = vld [vmem:[%s6893 + $0x4c] sm:$0xf]
  %v6914 = vld [vmem:[%s6893 + $0x50] sm:$0xf]
  %v6915 = vld [vmem:[%s6893 + $0x54] sm:$0xf]
  %v6916 = vld [vmem:[%s6893 + $0x58] sm:$0xf]
  %v6917 = vld [vmem:[%s6893 + $0x5c] sm:$0xf]
  %v6918 = vld [vmem:[%s6893 + $0x60] sm:$0xf]
  %v6919 = vld [vmem:[%s6893 + $0x64] sm:$0xf]
  %v6920 = vld [vmem:[%s6893 + $0x68] sm:$0xf]
  %v6921 = vld [vmem:[%s6893 + $0x6c] sm:$0xf]
  %v6922 = vld [vmem:[%s6893 + $0x70] sm:$0xf]
  %v6923 = vld [vmem:[%s6893 + $0x74] sm:$0xf]
  %v6924 = vld [vmem:[%s6893 + $0x78] sm:$0xf]
  %v6925 = vld [vmem:[%s6893 + $0x7c] sm:$0xf]
  %v6958 = vunpack.c.l.b16 %v6894
  %v6959 = vunpack.c.l.b16 %v6895
  %v6960 = vunpack.c.l.b16 %v6896
  %v6961 = vunpack.c.l.b16 %v6897
  %v6962 = vunpack.c.l.b16 %v6898
  %v6963 = vunpack.c.l.b16 %v6899
  %v6964 = vunpack.c.l.b16 %v6900
  %v6965 = vunpack.c.l.b16 %v6901
  %v6966 = vunpack.c.l.b16 %v6902
  %v6967 = vunpack.c.l.b16 %v6903
  %v6968 = vunpack.c.l.b16 %v6904
  %v6969 = vunpack.c.l.b16 %v6905
  %v6970 = vunpack.c.l.b16 %v6906
  %v6971 = vunpack.c.l.b16 %v6907
  %v6972 = vunpack.c.l.b16 %v6908
  %v6973 = vunpack.c.l.b16 %v6909
  %v6974 = vunpack.c.l.b16 %v6910
  %v6975 = vunpack.c.l.b16 %v6911
  %v6976 = vunpack.c.l.b16 %v6912
  %v6977 = vunpack.c.l.b16 %v6913
  %v6978 = vunpack.c.l.b16 %v6914
  %v6979 = vunpack.c.l.b16 %v6915
  %v6980 = vunpack.c.l.b16 %v6916
  %v6981 = vunpack.c.l.b16 %v6917
  %v6982 = vunpack.c.l.b16 %v6918
  %v6983 = vunpack.c.l.b16 %v6919
  %v6984 = vunpack.c.l.b16 %v6920
  %v6985 = vunpack.c.l.b16 %v6921
  %v6986 = vunpack.c.l.b16 %v6922
  %v6987 = vunpack.c.l.b16 %v6923
  %v6988 = vunpack.c.l.b16 %v6924
  %v6989 = vunpack.c.l.b16 %v6925
  %v6990 = vpack.c.b16 %v6959, %v6958
  %v6991 = vpack.c.b16 %v6961, %v6960
  %v6992 = vpack.c.b16 %v6963, %v6962
  %v6993 = vpack.c.b16 %v6965, %v6964
  %v6994 = vpack.c.b16 %v6967, %v6966
  %v6995 = vpack.c.b16 %v6969, %v6968
  %v6996 = vpack.c.b16 %v6971, %v6970
  %v6997 = vpack.c.b16 %v6973, %v6972
  %v6998 = vpack.c.b16 %v6975, %v6974
  %v6999 = vpack.c.b16 %v6977, %v6976
  %v7000 = vpack.c.b16 %v6979, %v6978
  %v7001 = vpack.c.b16 %v6981, %v6980
  %v7002 = vpack.c.b16 %v6983, %v6982
  %v7003 = vpack.c.b16 %v6985, %v6984
  %v7004 = vpack.c.b16 %v6987, %v6986
  %v7005 = vpack.c.b16 %v6989, %v6988
  %7022 = vmatprep.subr.bf16.mxu0 0
  %7023 = vmatpush1.bf16.msra.mxu0 %v6997
  %7024 = vmatprep.subr.bf16.mxu0 0
  %7025 = vmatpush1.bf16.msra.mxu0 %v6996
  %7026 = vmatprep.subr.bf16.mxu0 0
  %7027 = vmatpush1.bf16.msra.mxu0 %v6995
  %7028 = vmatprep.subr.bf16.mxu0 0
  %7029 = vmatpush1.bf16.msra.mxu0 %v6994
  %7030 = vmatprep.subr.bf16.mxu0 0
  %7031 = vmatpush1.bf16.msra.mxu0 %v6993
  %7032 = vmatprep.subr.bf16.mxu0 0
  %7033 = vmatpush1.bf16.msra.mxu0 %v6992
  %7034 = vmatprep.subr.bf16.mxu0 0
  %7035 = vmatpush1.bf16.msra.mxu0 %v6991
  %7036 = vmatprep.subr.bf16.mxu0 0
  %7037 = vmatpush1.bf16.msra.mxu0 %v6990
  %7038 = vmatprep.subr.bf16.mxu0 0
  %7039 = vmatpush2.bf16.msra.mxu0 %v7005
  %7040 = vmatprep.subr.bf16.mxu0 0
  %7041 = vmatpush2.bf16.msra.mxu0 %v7004
  %7042 = vmatprep.subr.bf16.mxu0 0
  %7043 = vmatpush2.bf16.msra.mxu0 %v7003
  %7044 = vmatprep.subr.bf16.mxu0 0
  %7045 = vmatpush2.bf16.msra.mxu0 %v7002
  %7046 = vmatprep.subr.bf16.mxu0 0
  %7047 = vmatpush2.bf16.msra.mxu0 %v7001
  %7048 = vmatprep.subr.bf16.mxu0 0
  %7049 = vmatpush2.bf16.msra.mxu0 %v7000
  %7050 = vmatprep.subr.bf16.mxu0 0
  %7051 = vmatpush2.bf16.msra.mxu0 %v6999
  %7052 = vmatprep.subr.bf16.mxu0 0
  %7053 = vmatpush2.bf16.msra.mxu0 %v6998
  %7054 = vmatprep.mubr.bf16.mxu0 %v6846
  %7055 = vmatmul.mubr.bf16.gmra.mxu0 %v6845
  %v7056 = vpop.f32.mrf.mxu0
  %v7057 = vadd.f32 0.0, %v7056
  %v7058 = vpop.f32.mrf.mxu0
  %v7059 = vpop.f32.mrf.mxu0
  %v7060 = vpop.f32.mrf.mxu0
  %7061 = vdwg.mxu0
  %v7094 = vunpack.c.l.b16 %v6861
  %v7095 = vunpack.c.l.b16 %v6862
  %v7096 = vunpack.c.l.b16 %v6863
  %v7097 = vunpack.c.l.b16 %v6864
  %v7098 = vunpack.c.l.b16 %v6865
  %v7099 = vunpack.c.l.b16 %v6866
  %v7100 = vunpack.c.l.b16 %v6867
  %v7101 = vunpack.c.l.b16 %v6868
  %v7102 = vunpack.c.l.b16 %v6869
  %v7103 = vunpack.c.l.b16 %v6870
  %v7104 = vunpack.c.l.b16 %v6871
  %v7105 = vunpack.c.l.b16 %v6872
  %v7106 = vunpack.c.l.b16 %v6873
  %v7107 = vunpack.c.l.b16 %v6874
  %v7108 = vunpack.c.l.b16 %v6875
  %v7109 = vunpack.c.l.b16 %v6876
  %v7110 = vunpack.c.l.b16 %v6877
  %v7111 = vunpack.c.l.b16 %v6878
  %v7112 = vunpack.c.l.b16 %v6879
  %v7113 = vunpack.c.l.b16 %v6880
  %v7114 = vunpack.c.l.b16 %v6881
  %v7115 = vunpack.c.l.b16 %v6882
  %v7116 = vunpack.c.l.b16 %v6883
  %v7117 = vunpack.c.l.b16 %v6884
  %v7118 = vunpack.c.l.b16 %v6885
  %v7119 = vunpack.c.l.b16 %v6886
  %v7120 = vunpack.c.l.b16 %v6887
  %v7121 = vunpack.c.l.b16 %v6888
  %v7122 = vunpack.c.l.b16 %v6889
  %v7123 = vunpack.c.l.b16 %v6890
  %v7124 = vunpack.c.l.b16 %v6891
  %v7125 = vunpack.c.l.b16 %v6892
  %v7126 = vpack.c.b16 %v7095, %v7094
  %v7127 = vpack.c.b16 %v7097, %v7096
  %v7128 = vpack.c.b16 %v7099, %v7098
  %v7129 = vpack.c.b16 %v7101, %v7100
  %v7130 = vpack.c.b16 %v7103, %v7102
  %v7131 = vpack.c.b16 %v7105, %v7104
  %v7132 = vpack.c.b16 %v7107, %v7106
  %v7133 = vpack.c.b16 %v7109, %v7108
  %v7134 = vpack.c.b16 %v7111, %v7110
  %v7135 = vpack.c.b16 %v7113, %v7112
  %v7136 = vpack.c.b16 %v7115, %v7114
  %v7137 = vpack.c.b16 %v7117, %v7116
  %v7138 = vpack.c.b16 %v7119, %v7118
  %v7139 = vpack.c.b16 %v7121, %v7120
  %v7140 = vpack.c.b16 %v7123, %v7122
  %v7141 = vpack.c.b16 %v7125, %v7124
  %7158 = vmatprep.subr.bf16.mxu0 0
  %7159 = vmatpush1.bf16.msra.mxu0 %v7133
  %7160 = vmatprep.subr.bf16.mxu0 0
  %7161 = vmatpush1.bf16.msra.mxu0 %v7132
  %7162 = vmatprep.subr.bf16.mxu0 0
  %7163 = vmatpush1.bf16.msra.mxu0 %v7131
  %7164 = vmatprep.subr.bf16.mxu0 0
  %7165 = vmatpush1.bf16.msra.mxu0 %v7130
  %7166 = vmatprep.subr.bf16.mxu0 0
  %7167 = vmatpush1.bf16.msra.mxu0 %v7129
  %7168 = vmatprep.subr.bf16.mxu0 0
  %7169 = vmatpush1.bf16.msra.mxu0 %v7128
  %7170 = vmatprep.subr.bf16.mxu0 0
  %7171 = vmatpush1.bf16.msra.mxu0 %v7127
  %7172 = vmatprep.subr.bf16.mxu0 0
  %7173 = vmatpush1.bf16.msra.mxu0 %v7126
  %7174 = vmatprep.subr.bf16.mxu0 0
  %7175 = vmatpush2.bf16.msra.mxu0 %v7141
  %7176 = vmatprep.subr.bf16.mxu0 0
  %7177 = vmatpush2.bf16.msra.mxu0 %v7140
  %7178 = vmatprep.subr.bf16.mxu0 0
  %7179 = vmatpush2.bf16.msra.mxu0 %v7139
  %7180 = vmatprep.subr.bf16.mxu0 0
  %7181 = vmatpush2.bf16.msra.mxu0 %v7138
  %7182 = vmatprep.subr.bf16.mxu0 0
  %7183 = vmatpush2.bf16.msra.mxu0 %v7137
  %7184 = vmatprep.subr.bf16.mxu0 0
  %7185 = vmatpush2.bf16.msra.mxu0 %v7136
  %7186 = vmatprep.subr.bf16.mxu0 0
  %7187 = vmatpush2.bf16.msra.mxu0 %v7135
  %7188 = vmatprep.subr.bf16.mxu0 0
  %7189 = vmatpush2.bf16.msra.mxu0 %v7134
  %7190 = vmatprep.mubr.bf16.mxu0 %v6844
  %7191 = vmatmul.mubr.bf16.gmra.mxu0 %v6843
  %v7192 = vpop.f32.mrf.mxu0
  %v7193 = vadd.f32 %v7057, %v7192
  %v7194 = vpop.f32.mrf.mxu0
  %v7195 = vpop.f32.mrf.mxu0
  %v7196 = vpop.f32.mrf.mxu0
  %7197 = vdwg.mxu0
  %s7198 = scalar_lea.vmem %s10, 256
  %v7199 = vld [vmem:[%s7198] sm:$0xf]
  %v7200 = vld [vmem:[%s7198 + $0x4] sm:$0xf]
  %v7201 = vld [vmem:[%s7198 + $0x8] sm:$0xf]
  %v7202 = vld [vmem:[%s7198 + $0xc] sm:$0xf]
  %v7203 = vld [vmem:[%s7198 + $0x10] sm:$0xf]
  %v7204 = vld [vmem:[%s7198 + $0x14] sm:$0xf]
  %v7205 = vld [vmem:[%s7198 + $0x18] sm:$0xf]
  %v7206 = vld [vmem:[%s7198 + $0x1c] sm:$0xf]
  %v7207 = vld [vmem:[%s7198 + $0x20] sm:$0xf]
  %v7208 = vld [vmem:[%s7198 + $0x24] sm:$0xf]
  %v7209 = vld [vmem:[%s7198 + $0x28] sm:$0xf]
  %v7210 = vld [vmem:[%s7198 + $0x2c] sm:$0xf]
  %v7211 = vld [vmem:[%s7198 + $0x30] sm:$0xf]
  %v7212 = vld [vmem:[%s7198 + $0x34] sm:$0xf]
  %v7213 = vld [vmem:[%s7198 + $0x38] sm:$0xf]
  %v7214 = vld [vmem:[%s7198 + $0x3c] sm:$0xf]
  %v7215 = vld [vmem:[%s7198 + $0x40] sm:$0xf]
  %v7216 = vld [vmem:[%s7198 + $0x44] sm:$0xf]
  %v7217 = vld [vmem:[%s7198 + $0x48] sm:$0xf]
  %v7218 = vld [vmem:[%s7198 + $0x4c] sm:$0xf]
  %v7219 = vld [vmem:[%s7198 + $0x50] sm:$0xf]
  %v7220 = vld [vmem:[%s7198 + $0x54] sm:$0xf]
  %v7221 = vld [vmem:[%s7198 + $0x58] sm:$0xf]
  %v7222 = vld [vmem:[%s7198 + $0x5c] sm:$0xf]
  %v7223 = vld [vmem:[%s7198 + $0x60] sm:$0xf]
  %v7224 = vld [vmem:[%s7198 + $0x64] sm:$0xf]
  %v7225 = vld [vmem:[%s7198 + $0x68] sm:$0xf]
  %v7226 = vld [vmem:[%s7198 + $0x6c] sm:$0xf]
  %v7227 = vld [vmem:[%s7198 + $0x70] sm:$0xf]
  %v7228 = vld [vmem:[%s7198 + $0x74] sm:$0xf]
  %v7229 = vld [vmem:[%s7198 + $0x78] sm:$0xf]
  %v7230 = vld [vmem:[%s7198 + $0x7c] sm:$0xf]
  %v7263 = vunpack.c.l.b16 %v7199
  %v7264 = vunpack.c.l.b16 %v7200
  %v7265 = vunpack.c.l.b16 %v7201
  %v7266 = vunpack.c.l.b16 %v7202
  %v7267 = vunpack.c.l.b16 %v7203
  %v7268 = vunpack.c.l.b16 %v7204
  %v7269 = vunpack.c.l.b16 %v7205
  %v7270 = vunpack.c.l.b16 %v7206
  %v7271 = vunpack.c.l.b16 %v7207
  %v7272 = vunpack.c.l.b16 %v7208
  %v7273 = vunpack.c.l.b16 %v7209
  %v7274 = vunpack.c.l.b16 %v7210
  %v7275 = vunpack.c.l.b16 %v7211
  %v7276 = vunpack.c.l.b16 %v7212
  %v7277 = vunpack.c.l.b16 %v7213
  %v7278 = vunpack.c.l.b16 %v7214
  %v7279 = vunpack.c.l.b16 %v7215
  %v7280 = vunpack.c.l.b16 %v7216
  %v7281 = vunpack.c.l.b16 %v7217
  %v7282 = vunpack.c.l.b16 %v7218
  %v7283 = vunpack.c.l.b16 %v7219
  %v7284 = vunpack.c.l.b16 %v7220
  %v7285 = vunpack.c.l.b16 %v7221
  %v7286 = vunpack.c.l.b16 %v7222
  %v7287 = vunpack.c.l.b16 %v7223
  %v7288 = vunpack.c.l.b16 %v7224
  %v7289 = vunpack.c.l.b16 %v7225
  %v7290 = vunpack.c.l.b16 %v7226
  %v7291 = vunpack.c.l.b16 %v7227
  %v7292 = vunpack.c.l.b16 %v7228
  %v7293 = vunpack.c.l.b16 %v7229
  %v7294 = vunpack.c.l.b16 %v7230
  %v7295 = vpack.c.b16 %v7264, %v7263
  %v7296 = vpack.c.b16 %v7266, %v7265
  %v7297 = vpack.c.b16 %v7268, %v7267
  %v7298 = vpack.c.b16 %v7270, %v7269
  %v7299 = vpack.c.b16 %v7272, %v7271
  %v7300 = vpack.c.b16 %v7274, %v7273
  %v7301 = vpack.c.b16 %v7276, %v7275
  %v7302 = vpack.c.b16 %v7278, %v7277
  %v7303 = vpack.c.b16 %v7280, %v7279
  %v7304 = vpack.c.b16 %v7282, %v7281
  %v7305 = vpack.c.b16 %v7284, %v7283
  %v7306 = vpack.c.b16 %v7286, %v7285
  %v7307 = vpack.c.b16 %v7288, %v7287
  %v7308 = vpack.c.b16 %v7290, %v7289
  %v7309 = vpack.c.b16 %v7292, %v7291
  %v7310 = vpack.c.b16 %v7294, %v7293
  %7327 = vmatprep.subr.bf16.mxu0 0
  %7328 = vmatpush1.bf16.msra.mxu0 %v7302
  %7329 = vmatprep.subr.bf16.mxu0 0
  %7330 = vmatpush1.bf16.msra.mxu0 %v7301
  %7331 = vmatprep.subr.bf16.mxu0 0
  %7332 = vmatpush1.bf16.msra.mxu0 %v7300
  %7333 = vmatprep.subr.bf16.mxu0 0
  %7334 = vmatpush1.bf16.msra.mxu0 %v7299
  %7335 = vmatprep.subr.bf16.mxu0 0
  %7336 = vmatpush1.bf16.msra.mxu0 %v7298
  %7337 = vmatprep.subr.bf16.mxu0 0
  %7338 = vmatpush1.bf16.msra.mxu0 %v7297
  %7339 = vmatprep.subr.bf16.mxu0 0
  %7340 = vmatpush1.bf16.msra.mxu0 %v7296
  %7341 = vmatprep.subr.bf16.mxu0 0
  %7342 = vmatpush1.bf16.msra.mxu0 %v7295
  %7343 = vmatprep.subr.bf16.mxu0 0
  %7344 = vmatpush2.bf16.msra.mxu0 %v7310
  %7345 = vmatprep.subr.bf16.mxu0 0
  %7346 = vmatpush2.bf16.msra.mxu0 %v7309
  %7347 = vmatprep.subr.bf16.mxu0 0
  %7348 = vmatpush2.bf16.msra.mxu0 %v7308
  %7349 = vmatprep.subr.bf16.mxu0 0
  %7350 = vmatpush2.bf16.msra.mxu0 %v7307
  %7351 = vmatprep.subr.bf16.mxu0 0
  %7352 = vmatpush2.bf16.msra.mxu0 %v7306
  %7353 = vmatprep.subr.bf16.mxu0 0
  %7354 = vmatpush2.bf16.msra.mxu0 %v7305
  %7355 = vmatprep.subr.bf16.mxu0 0
  %7356 = vmatpush2.bf16.msra.mxu0 %v7304
  %7357 = vmatprep.subr.bf16.mxu0 0
  %7358 = vmatpush2.bf16.msra.mxu0 %v7303
  %7359 = vmatprep.mubr.bf16.mxu0 %v6848
  %7360 = vmatmul.mubr.bf16.gmra.mxu0 %v6847
  %v7361 = vpop.f32.mrf.mxu0
  %v7362 = vadd.f32 0.0, %v7361
  %v7363 = vpop.f32.mrf.mxu0
  %v7364 = vpop.f32.mrf.mxu0
  %v7365 = vpop.f32.mrf.mxu0
  %7366 = vdwg.mxu0
  %v7367 = vadd.f32 %v7193, %v7362
  %s7368 = scalar_lea.vmem %s10, 384
  %v7369 = vld [vmem:[%s7368] sm:$0xf]
  %v7370 = vld [vmem:[%s7368 + $0x4] sm:$0xf]
  %v7371 = vld [vmem:[%s7368 + $0x8] sm:$0xf]
  %v7372 = vld [vmem:[%s7368 + $0xc] sm:$0xf]
  %v7373 = vld [vmem:[%s7368 + $0x10] sm:$0xf]
  %v7374 = vld [vmem:[%s7368 + $0x14] sm:$0xf]
  %v7375 = vld [vmem:[%s7368 + $0x18] sm:$0xf]
  %v7376 = vld [vmem:[%s7368 + $0x1c] sm:$0xf]
  %v7377 = vld [vmem:[%s7368 + $0x20] sm:$0xf]
  %v7378 = vld [vmem:[%s7368 + $0x24] sm:$0xf]
  %v7379 = vld [vmem:[%s7368 + $0x28] sm:$0xf]
  %v7380 = vld [vmem:[%s7368 + $0x2c] sm:$0xf]
  %v7381 = vld [vmem:[%s7368 + $0x30] sm:$0xf]
  %v7382 = vld [vmem:[%s7368 + $0x34] sm:$0xf]
  %v7383 = vld [vmem:[%s7368 + $0x38] sm:$0xf]
  %v7384 = vld [vmem:[%s7368 + $0x3c] sm:$0xf]
  %v7385 = vld [vmem:[%s7368 + $0x40] sm:$0xf]
  %v7386 = vld [vmem:[%s7368 + $0x44] sm:$0xf]
  %v7387 = vld [vmem:[%s7368 + $0x48] sm:$0xf]
  %v7388 = vld [vmem:[%s7368 + $0x4c] sm:$0xf]
  %v7389 = vld [vmem:[%s7368 + $0x50] sm:$0xf]
  %v7390 = vld [vmem:[%s7368 + $0x54] sm:$0xf]
  %v7391 = vld [vmem:[%s7368 + $0x58] sm:$0xf]
  %v7392 = vld [vmem:[%s7368 + $0x5c] sm:$0xf]
  %v7393 = vld [vmem:[%s7368 + $0x60] sm:$0xf]
  %v7394 = vld [vmem:[%s7368 + $0x64] sm:$0xf]
  %v7395 = vld [vmem:[%s7368 + $0x68] sm:$0xf]
  %v7396 = vld [vmem:[%s7368 + $0x6c] sm:$0xf]
  %v7397 = vld [vmem:[%s7368 + $0x70] sm:$0xf]
  %v7398 = vld [vmem:[%s7368 + $0x74] sm:$0xf]
  %v7399 = vld [vmem:[%s7368 + $0x78] sm:$0xf]
  %v7400 = vld [vmem:[%s7368 + $0x7c] sm:$0xf]
  %v7433 = vunpack.c.l.b16 %v7369
  %v7434 = vunpack.c.l.b16 %v7370
  %v7435 = vunpack.c.l.b16 %v7371
  %v7436 = vunpack.c.l.b16 %v7372
  %v7437 = vunpack.c.l.b16 %v7373
  %v7438 = vunpack.c.l.b16 %v7374
  %v7439 = vunpack.c.l.b16 %v7375
  %v7440 = vunpack.c.l.b16 %v7376
  %v7441 = vunpack.c.l.b16 %v7377
  %v7442 = vunpack.c.l.b16 %v7378
  %v7443 = vunpack.c.l.b16 %v7379
  %v7444 = vunpack.c.l.b16 %v7380
  %v7445 = vunpack.c.l.b16 %v7381
  %v7446 = vunpack.c.l.b16 %v7382
  %v7447 = vunpack.c.l.b16 %v7383
  %v7448 = vunpack.c.l.b16 %v7384
  %v7449 = vunpack.c.l.b16 %v7385
  %v7450 = vunpack.c.l.b16 %v7386
  %v7451 = vunpack.c.l.b16 %v7387
  %v7452 = vunpack.c.l.b16 %v7388
  %v7453 = vunpack.c.l.b16 %v7389
  %v7454 = vunpack.c.l.b16 %v7390
  %v7455 = vunpack.c.l.b16 %v7391
  %v7456 = vunpack.c.l.b16 %v7392
  %v7457 = vunpack.c.l.b16 %v7393
  %v7458 = vunpack.c.l.b16 %v7394
  %v7459 = vunpack.c.l.b16 %v7395
  %v7460 = vunpack.c.l.b16 %v7396
  %v7461 = vunpack.c.l.b16 %v7397
  %v7462 = vunpack.c.l.b16 %v7398
  %v7463 = vunpack.c.l.b16 %v7399
  %v7464 = vunpack.c.l.b16 %v7400
  %v7465 = vpack.c.b16 %v7434, %v7433
  %v7466 = vpack.c.b16 %v7436, %v7435
  %v7467 = vpack.c.b16 %v7438, %v7437
  %v7468 = vpack.c.b16 %v7440, %v7439
  %v7469 = vpack.c.b16 %v7442, %v7441
  %v7470 = vpack.c.b16 %v7444, %v7443
  %v7471 = vpack.c.b16 %v7446, %v7445
  %v7472 = vpack.c.b16 %v7448, %v7447
  %v7473 = vpack.c.b16 %v7450, %v7449
  %v7474 = vpack.c.b16 %v7452, %v7451
  %v7475 = vpack.c.b16 %v7454, %v7453
  %v7476 = vpack.c.b16 %v7456, %v7455
  %v7477 = vpack.c.b16 %v7458, %v7457
  %v7478 = vpack.c.b16 %v7460, %v7459
  %v7479 = vpack.c.b16 %v7462, %v7461
  %v7480 = vpack.c.b16 %v7464, %v7463
  %7497 = vmatprep.subr.bf16.mxu0 0
  %7498 = vmatpush1.bf16.msra.mxu0 %v7472
  %7499 = vmatprep.subr.bf16.mxu0 0
  %7500 = vmatpush1.bf16.msra.mxu0 %v7471
  %7501 = vmatprep.subr.bf16.mxu0 0
  %7502 = vmatpush1.bf16.msra.mxu0 %v7470
  %7503 = vmatprep.subr.bf16.mxu0 0
  %7504 = vmatpush1.bf16.msra.mxu0 %v7469
  %7505 = vmatprep.subr.bf16.mxu0 0
  %7506 = vmatpush1.bf16.msra.mxu0 %v7468
  %7507 = vmatprep.subr.bf16.mxu0 0
  %7508 = vmatpush1.bf16.msra.mxu0 %v7467
  %7509 = vmatprep.subr.bf16.mxu0 0
  %7510 = vmatpush1.bf16.msra.mxu0 %v7466
  %7511 = vmatprep.subr.bf16.mxu0 0
  %7512 = vmatpush1.bf16.msra.mxu0 %v7465
  %7513 = vmatprep.subr.bf16.mxu0 0
  %7514 = vmatpush2.bf16.msra.mxu0 %v7480
  %7515 = vmatprep.subr.bf16.mxu0 0
  %7516 = vmatpush2.bf16.msra.mxu0 %v7479
  %7517 = vmatprep.subr.bf16.mxu0 0
  %7518 = vmatpush2.bf16.msra.mxu0 %v7478
  %7519 = vmatprep.subr.bf16.mxu0 0
  %7520 = vmatpush2.bf16.msra.mxu0 %v7477
  %7521 = vmatprep.subr.bf16.mxu0 0
  %7522 = vmatpush2.bf16.msra.mxu0 %v7476
  %7523 = vmatprep.subr.bf16.mxu0 0
  %7524 = vmatpush2.bf16.msra.mxu0 %v7475
  %7525 = vmatprep.subr.bf16.mxu0 0
  %7526 = vmatpush2.bf16.msra.mxu0 %v7474
  %7527 = vmatprep.subr.bf16.mxu0 0
  %7528 = vmatpush2.bf16.msra.mxu0 %v7473
  %7529 = vmatprep.mubr.bf16.mxu0 %v6850
  %7530 = vmatmul.mubr.bf16.gmra.mxu0 %v6849
  %v7531 = vpop.f32.mrf.mxu0
  %v7532 = vadd.f32 0.0, %v7531
  %v7533 = vpop.f32.mrf.mxu0
  %v7534 = vpop.f32.mrf.mxu0
  %v7535 = vpop.f32.mrf.mxu0
  %7536 = vdwg.mxu0
  %v7537 = vadd.f32 %v7367, %v7532
  %s7538 = scalar_lea.vmem %s10, 512
  %v7539 = vld [vmem:[%s7538] sm:$0xf]
  %v7540 = vld [vmem:[%s7538 + $0x4] sm:$0xf]
  %v7541 = vld [vmem:[%s7538 + $0x8] sm:$0xf]
  %v7542 = vld [vmem:[%s7538 + $0xc] sm:$0xf]
  %v7543 = vld [vmem:[%s7538 + $0x10] sm:$0xf]
  %v7544 = vld [vmem:[%s7538 + $0x14] sm:$0xf]
  %v7545 = vld [vmem:[%s7538 + $0x18] sm:$0xf]
  %v7546 = vld [vmem:[%s7538 + $0x1c] sm:$0xf]
  %v7547 = vld [vmem:[%s7538 + $0x20] sm:$0xf]
  %v7548 = vld [vmem:[%s7538 + $0x24] sm:$0xf]
  %v7549 = vld [vmem:[%s7538 + $0x28] sm:$0xf]
  %v7550 = vld [vmem:[%s7538 + $0x2c] sm:$0xf]
  %v7551 = vld [vmem:[%s7538 + $0x30] sm:$0xf]
  %v7552 = vld [vmem:[%s7538 + $0x34] sm:$0xf]
  %v7553 = vld [vmem:[%s7538 + $0x38] sm:$0xf]
  %v7554 = vld [vmem:[%s7538 + $0x3c] sm:$0xf]
  %v7555 = vld [vmem:[%s7538 + $0x40] sm:$0xf]
  %v7556 = vld [vmem:[%s7538 + $0x44] sm:$0xf]
  %v7557 = vld [vmem:[%s7538 + $0x48] sm:$0xf]
  %v7558 = vld [vmem:[%s7538 + $0x4c] sm:$0xf]
  %v7559 = vld [vmem:[%s7538 + $0x50] sm:$0xf]
  %v7560 = vld [vmem:[%s7538 + $0x54] sm:$0xf]
  %v7561 = vld [vmem:[%s7538 + $0x58] sm:$0xf]
  %v7562 = vld [vmem:[%s7538 + $0x5c] sm:$0xf]
  %v7563 = vld [vmem:[%s7538 + $0x60] sm:$0xf]
  %v7564 = vld [vmem:[%s7538 + $0x64] sm:$0xf]
  %v7565 = vld [vmem:[%s7538 + $0x68] sm:$0xf]
  %v7566 = vld [vmem:[%s7538 + $0x6c] sm:$0xf]
  %v7567 = vld [vmem:[%s7538 + $0x70] sm:$0xf]
  %v7568 = vld [vmem:[%s7538 + $0x74] sm:$0xf]
  %v7569 = vld [vmem:[%s7538 + $0x78] sm:$0xf]
  %v7570 = vld [vmem:[%s7538 + $0x7c] sm:$0xf]
  %v7603 = vunpack.c.l.b16 %v7539
  %v7604 = vunpack.c.l.b16 %v7540
  %v7605 = vunpack.c.l.b16 %v7541
  %v7606 = vunpack.c.l.b16 %v7542
  %v7607 = vunpack.c.l.b16 %v7543
  %v7608 = vunpack.c.l.b16 %v7544
  %v7609 = vunpack.c.l.b16 %v7545
  %v7610 = vunpack.c.l.b16 %v7546
  %v7611 = vunpack.c.l.b16 %v7547
  %v7612 = vunpack.c.l.b16 %v7548
  %v7613 = vunpack.c.l.b16 %v7549
  %v7614 = vunpack.c.l.b16 %v7550
  %v7615 = vunpack.c.l.b16 %v7551
  %v7616 = vunpack.c.l.b16 %v7552
  %v7617 = vunpack.c.l.b16 %v7553
  %v7618 = vunpack.c.l.b16 %v7554
  %v7619 = vunpack.c.l.b16 %v7555
  %v7620 = vunpack.c.l.b16 %v7556
  %v7621 = vunpack.c.l.b16 %v7557
  %v7622 = vunpack.c.l.b16 %v7558
  %v7623 = vunpack.c.l.b16 %v7559
  %v7624 = vunpack.c.l.b16 %v7560
  %v7625 = vunpack.c.l.b16 %v7561
  %v7626 = vunpack.c.l.b16 %v7562
  %v7627 = vunpack.c.l.b16 %v7563
  %v7628 = vunpack.c.l.b16 %v7564
  %v7629 = vunpack.c.l.b16 %v7565
  %v7630 = vunpack.c.l.b16 %v7566
  %v7631 = vunpack.c.l.b16 %v7567
  %v7632 = vunpack.c.l.b16 %v7568
  %v7633 = vunpack.c.l.b16 %v7569
  %v7634 = vunpack.c.l.b16 %v7570
  %v7635 = vpack.c.b16 %v7604, %v7603
  %v7636 = vpack.c.b16 %v7606, %v7605
  %v7637 = vpack.c.b16 %v7608, %v7607
  %v7638 = vpack.c.b16 %v7610, %v7609
  %v7639 = vpack.c.b16 %v7612, %v7611
  %v7640 = vpack.c.b16 %v7614, %v7613
  %v7641 = vpack.c.b16 %v7616, %v7615
  %v7642 = vpack.c.b16 %v7618, %v7617
  %v7643 = vpack.c.b16 %v7620, %v7619
  %v7644 = vpack.c.b16 %v7622, %v7621
  %v7645 = vpack.c.b16 %v7624, %v7623
  %v7646 = vpack.c.b16 %v7626, %v7625
  %v7647 = vpack.c.b16 %v7628, %v7627
  %v7648 = vpack.c.b16 %v7630, %v7629
  %v7649 = vpack.c.b16 %v7632, %v7631
  %v7650 = vpack.c.b16 %v7634, %v7633
  %7667 = vmatprep.subr.bf16.mxu0 0
  %7668 = vmatpush1.bf16.msra.mxu0 %v7642
  %7669 = vmatprep.subr.bf16.mxu0 0
  %7670 = vmatpush1.bf16.msra.mxu0 %v7641
  %7671 = vmatprep.subr.bf16.mxu0 0
  %7672 = vmatpush1.bf16.msra.mxu0 %v7640
  %7673 = vmatprep.subr.bf16.mxu0 0
  %7674 = vmatpush1.bf16.msra.mxu0 %v7639
  %7675 = vmatprep.subr.bf16.mxu0 0
  %7676 = vmatpush1.bf16.msra.mxu0 %v7638
  %7677 = vmatprep.subr.bf16.mxu0 0
  %7678 = vmatpush1.bf16.msra.mxu0 %v7637
  %7679 = vmatprep.subr.bf16.mxu0 0
  %7680 = vmatpush1.bf16.msra.mxu0 %v7636
  %7681 = vmatprep.subr.bf16.mxu0 0
  %7682 = vmatpush1.bf16.msra.mxu0 %v7635
  %7683 = vmatprep.subr.bf16.mxu0 0
  %7684 = vmatpush2.bf16.msra.mxu0 %v7650
  %7685 = vmatprep.subr.bf16.mxu0 0
  %7686 = vmatpush2.bf16.msra.mxu0 %v7649
  %7687 = vmatprep.subr.bf16.mxu0 0
  %7688 = vmatpush2.bf16.msra.mxu0 %v7648
  %7689 = vmatprep.subr.bf16.mxu0 0
  %7690 = vmatpush2.bf16.msra.mxu0 %v7647
  %7691 = vmatprep.subr.bf16.mxu0 0
  %7692 = vmatpush2.bf16.msra.mxu0 %v7646
  %7693 = vmatprep.subr.bf16.mxu0 0
  %7694 = vmatpush2.bf16.msra.mxu0 %v7645
  %7695 = vmatprep.subr.bf16.mxu0 0
  %7696 = vmatpush2.bf16.msra.mxu0 %v7644
  %7697 = vmatprep.subr.bf16.mxu0 0
  %7698 = vmatpush2.bf16.msra.mxu0 %v7643
  %7699 = vmatprep.mubr.bf16.mxu0 %v6852
  %7700 = vmatmul.mubr.bf16.gmra.mxu0 %v6851
  %v7701 = vpop.f32.mrf.mxu0
  %v7702 = vadd.f32 0.0, %v7701
  %v7703 = vpop.f32.mrf.mxu0
  %v7704 = vpop.f32.mrf.mxu0
  %v7705 = vpop.f32.mrf.mxu0
  %7706 = vdwg.mxu0
  %v7707 = vadd.f32 %v7537, %v7702
  %s7708 = scalar_lea.vmem %s10, 640
  %v7709 = vld [vmem:[%s7708] sm:$0xf]
  %v7710 = vld [vmem:[%s7708 + $0x4] sm:$0xf]
  %v7711 = vld [vmem:[%s7708 + $0x8] sm:$0xf]
  %v7712 = vld [vmem:[%s7708 + $0xc] sm:$0xf]
  %v7713 = vld [vmem:[%s7708 + $0x10] sm:$0xf]
  %v7714 = vld [vmem:[%s7708 + $0x14] sm:$0xf]
  %v7715 = vld [vmem:[%s7708 + $0x18] sm:$0xf]
  %v7716 = vld [vmem:[%s7708 + $0x1c] sm:$0xf]
  %v7717 = vld [vmem:[%s7708 + $0x20] sm:$0xf]
  %v7718 = vld [vmem:[%s7708 + $0x24] sm:$0xf]
  %v7719 = vld [vmem:[%s7708 + $0x28] sm:$0xf]
  %v7720 = vld [vmem:[%s7708 + $0x2c] sm:$0xf]
  %v7721 = vld [vmem:[%s7708 + $0x30] sm:$0xf]
  %v7722 = vld [vmem:[%s7708 + $0x34] sm:$0xf]
  %v7723 = vld [vmem:[%s7708 + $0x38] sm:$0xf]
  %v7724 = vld [vmem:[%s7708 + $0x3c] sm:$0xf]
  %v7725 = vld [vmem:[%s7708 + $0x40] sm:$0xf]
  %v7726 = vld [vmem:[%s7708 + $0x44] sm:$0xf]
  %v7727 = vld [vmem:[%s7708 + $0x48] sm:$0xf]
  %v7728 = vld [vmem:[%s7708 + $0x4c] sm:$0xf]
  %v7729 = vld [vmem:[%s7708 + $0x50] sm:$0xf]
  %v7730 = vld [vmem:[%s7708 + $0x54] sm:$0xf]
  %v7731 = vld [vmem:[%s7708 + $0x58] sm:$0xf]
  %v7732 = vld [vmem:[%s7708 + $0x5c] sm:$0xf]
  %v7733 = vld [vmem:[%s7708 + $0x60] sm:$0xf]
  %v7734 = vld [vmem:[%s7708 + $0x64] sm:$0xf]
  %v7735 = vld [vmem:[%s7708 + $0x68] sm:$0xf]
  %v7736 = vld [vmem:[%s7708 + $0x6c] sm:$0xf]
  %v7737 = vld [vmem:[%s7708 + $0x70] sm:$0xf]
  %v7738 = vld [vmem:[%s7708 + $0x74] sm:$0xf]
  %v7739 = vld [vmem:[%s7708 + $0x78] sm:$0xf]
  %v7740 = vld [vmem:[%s7708 + $0x7c] sm:$0xf]
  %v7773 = vunpack.c.l.b16 %v7709
  %v7774 = vunpack.c.l.b16 %v7710
  %v7775 = vunpack.c.l.b16 %v7711
  %v7776 = vunpack.c.l.b16 %v7712
  %v7777 = vunpack.c.l.b16 %v7713
  %v7778 = vunpack.c.l.b16 %v7714
  %v7779 = vunpack.c.l.b16 %v7715
  %v7780 = vunpack.c.l.b16 %v7716
  %v7781 = vunpack.c.l.b16 %v7717
  %v7782 = vunpack.c.l.b16 %v7718
  %v7783 = vunpack.c.l.b16 %v7719
  %v7784 = vunpack.c.l.b16 %v7720
  %v7785 = vunpack.c.l.b16 %v7721
  %v7786 = vunpack.c.l.b16 %v7722
  %v7787 = vunpack.c.l.b16 %v7723
  %v7788 = vunpack.c.l.b16 %v7724
  %v7789 = vunpack.c.l.b16 %v7725
  %v7790 = vunpack.c.l.b16 %v7726
  %v7791 = vunpack.c.l.b16 %v7727
  %v7792 = vunpack.c.l.b16 %v7728
  %v7793 = vunpack.c.l.b16 %v7729
  %v7794 = vunpack.c.l.b16 %v7730
  %v7795 = vunpack.c.l.b16 %v7731
  %v7796 = vunpack.c.l.b16 %v7732
  %v7797 = vunpack.c.l.b16 %v7733
  %v7798 = vunpack.c.l.b16 %v7734
  %v7799 = vunpack.c.l.b16 %v7735
  %v7800 = vunpack.c.l.b16 %v7736
  %v7801 = vunpack.c.l.b16 %v7737
  %v7802 = vunpack.c.l.b16 %v7738
  %v7803 = vunpack.c.l.b16 %v7739
  %v7804 = vunpack.c.l.b16 %v7740
  %v7805 = vpack.c.b16 %v7774, %v7773
  %v7806 = vpack.c.b16 %v7776, %v7775
  %v7807 = vpack.c.b16 %v7778, %v7777
  %v7808 = vpack.c.b16 %v7780, %v7779
  %v7809 = vpack.c.b16 %v7782, %v7781
  %v7810 = vpack.c.b16 %v7784, %v7783
  %v7811 = vpack.c.b16 %v7786, %v7785
  %v7812 = vpack.c.b16 %v7788, %v7787
  %v7813 = vpack.c.b16 %v7790, %v7789
  %v7814 = vpack.c.b16 %v7792, %v7791
  %v7815 = vpack.c.b16 %v7794, %v7793
  %v7816 = vpack.c.b16 %v7796, %v7795
  %v7817 = vpack.c.b16 %v7798, %v7797
  %v7818 = vpack.c.b16 %v7800, %v7799
  %v7819 = vpack.c.b16 %v7802, %v7801
  %v7820 = vpack.c.b16 %v7804, %v7803
  %7837 = vmatprep.subr.bf16.mxu0 0
  %7838 = vmatpush1.bf16.msra.mxu0 %v7812
  %7839 = vmatprep.subr.bf16.mxu0 0
  %7840 = vmatpush1.bf16.msra.mxu0 %v7811
  %7841 = vmatprep.subr.bf16.mxu0 0
  %7842 = vmatpush1.bf16.msra.mxu0 %v7810
  %7843 = vmatprep.subr.bf16.mxu0 0
  %7844 = vmatpush1.bf16.msra.mxu0 %v7809
  %7845 = vmatprep.subr.bf16.mxu0 0
  %7846 = vmatpush1.bf16.msra.mxu0 %v7808
  %7847 = vmatprep.subr.bf16.mxu0 0
  %7848 = vmatpush1.bf16.msra.mxu0 %v7807
  %7849 = vmatprep.subr.bf16.mxu0 0
  %7850 = vmatpush1.bf16.msra.mxu0 %v7806
  %7851 = vmatprep.subr.bf16.mxu0 0
  %7852 = vmatpush1.bf16.msra.mxu0 %v7805
  %7853 = vmatprep.subr.bf16.mxu0 0
  %7854 = vmatpush2.bf16.msra.mxu0 %v7820
  %7855 = vmatprep.subr.bf16.mxu0 0
  %7856 = vmatpush2.bf16.msra.mxu0 %v7819
  %7857 = vmatprep.subr.bf16.mxu0 0
  %7858 = vmatpush2.bf16.msra.mxu0 %v7818
  %7859 = vmatprep.subr.bf16.mxu0 0
  %7860 = vmatpush2.bf16.msra.mxu0 %v7817
  %7861 = vmatprep.subr.bf16.mxu0 0
  %7862 = vmatpush2.bf16.msra.mxu0 %v7816
  %7863 = vmatprep.subr.bf16.mxu0 0
  %7864 = vmatpush2.bf16.msra.mxu0 %v7815
  %7865 = vmatprep.subr.bf16.mxu0 0
  %7866 = vmatpush2.bf16.msra.mxu0 %v7814
  %7867 = vmatprep.subr.bf16.mxu0 0
  %7868 = vmatpush2.bf16.msra.mxu0 %v7813
  %7869 = vmatprep.mubr.bf16.mxu0 %v6854
  %7870 = vmatmul.mubr.bf16.gmra.mxu0 %v6853
  %v7871 = vpop.f32.mrf.mxu0
  %v7872 = vadd.f32 0.0, %v7871
  %v7873 = vpop.f32.mrf.mxu0
  %v7874 = vpop.f32.mrf.mxu0
  %v7875 = vpop.f32.mrf.mxu0
  %7876 = vdwg.mxu0
  %v7877 = vadd.f32 %v7707, %v7872
  %s7878 = scalar_lea.vmem %s10, 768
  %v7879 = vld [vmem:[%s7878] sm:$0xf]
  %v7880 = vld [vmem:[%s7878 + $0x4] sm:$0xf]
  %v7881 = vld [vmem:[%s7878 + $0x8] sm:$0xf]
  %v7882 = vld [vmem:[%s7878 + $0xc] sm:$0xf]
  %v7883 = vld [vmem:[%s7878 + $0x10] sm:$0xf]
  %v7884 = vld [vmem:[%s7878 + $0x14] sm:$0xf]
  %v7885 = vld [vmem:[%s7878 + $0x18] sm:$0xf]
  %v7886 = vld [vmem:[%s7878 + $0x1c] sm:$0xf]
  %v7887 = vld [vmem:[%s7878 + $0x20] sm:$0xf]
  %v7888 = vld [vmem:[%s7878 + $0x24] sm:$0xf]
  %v7889 = vld [vmem:[%s7878 + $0x28] sm:$0xf]
  %v7890 = vld [vmem:[%s7878 + $0x2c] sm:$0xf]
  %v7891 = vld [vmem:[%s7878 + $0x30] sm:$0xf]
  %v7892 = vld [vmem:[%s7878 + $0x34] sm:$0xf]
  %v7893 = vld [vmem:[%s7878 + $0x38] sm:$0xf]
  %v7894 = vld [vmem:[%s7878 + $0x3c] sm:$0xf]
  %v7895 = vld [vmem:[%s7878 + $0x40] sm:$0xf]
  %v7896 = vld [vmem:[%s7878 + $0x44] sm:$0xf]
  %v7897 = vld [vmem:[%s7878 + $0x48] sm:$0xf]
  %v7898 = vld [vmem:[%s7878 + $0x4c] sm:$0xf]
  %v7899 = vld [vmem:[%s7878 + $0x50] sm:$0xf]
  %v7900 = vld [vmem:[%s7878 + $0x54] sm:$0xf]
  %v7901 = vld [vmem:[%s7878 + $0x58] sm:$0xf]
  %v7902 = vld [vmem:[%s7878 + $0x5c] sm:$0xf]
  %v7903 = vld [vmem:[%s7878 + $0x60] sm:$0xf]
  %v7904 = vld [vmem:[%s7878 + $0x64] sm:$0xf]
  %v7905 = vld [vmem:[%s7878 + $0x68] sm:$0xf]
  %v7906 = vld [vmem:[%s7878 + $0x6c] sm:$0xf]
  %v7907 = vld [vmem:[%s7878 + $0x70] sm:$0xf]
  %v7908 = vld [vmem:[%s7878 + $0x74] sm:$0xf]
  %v7909 = vld [vmem:[%s7878 + $0x78] sm:$0xf]
  %v7910 = vld [vmem:[%s7878 + $0x7c] sm:$0xf]
  %v7943 = vunpack.c.l.b16 %v7879
  %v7944 = vunpack.c.l.b16 %v7880
  %v7945 = vunpack.c.l.b16 %v7881
  %v7946 = vunpack.c.l.b16 %v7882
  %v7947 = vunpack.c.l.b16 %v7883
  %v7948 = vunpack.c.l.b16 %v7884
  %v7949 = vunpack.c.l.b16 %v7885
  %v7950 = vunpack.c.l.b16 %v7886
  %v7951 = vunpack.c.l.b16 %v7887
  %v7952 = vunpack.c.l.b16 %v7888
  %v7953 = vunpack.c.l.b16 %v7889
  %v7954 = vunpack.c.l.b16 %v7890
  %v7955 = vunpack.c.l.b16 %v7891
  %v7956 = vunpack.c.l.b16 %v7892
  %v7957 = vunpack.c.l.b16 %v7893
  %v7958 = vunpack.c.l.b16 %v7894
  %v7959 = vunpack.c.l.b16 %v7895
  %v7960 = vunpack.c.l.b16 %v7896
  %v7961 = vunpack.c.l.b16 %v7897
  %v7962 = vunpack.c.l.b16 %v7898
  %v7963 = vunpack.c.l.b16 %v7899
  %v7964 = vunpack.c.l.b16 %v7900
  %v7965 = vunpack.c.l.b16 %v7901
  %v7966 = vunpack.c.l.b16 %v7902
  %v7967 = vunpack.c.l.b16 %v7903
  %v7968 = vunpack.c.l.b16 %v7904
  %v7969 = vunpack.c.l.b16 %v7905
  %v7970 = vunpack.c.l.b16 %v7906
  %v7971 = vunpack.c.l.b16 %v7907
  %v7972 = vunpack.c.l.b16 %v7908
  %v7973 = vunpack.c.l.b16 %v7909
  %v7974 = vunpack.c.l.b16 %v7910
  %v7975 = vpack.c.b16 %v7944, %v7943
  %v7976 = vpack.c.b16 %v7946, %v7945
  %v7977 = vpack.c.b16 %v7948, %v7947
  %v7978 = vpack.c.b16 %v7950, %v7949
  %v7979 = vpack.c.b16 %v7952, %v7951
  %v7980 = vpack.c.b16 %v7954, %v7953
  %v7981 = vpack.c.b16 %v7956, %v7955
  %v7982 = vpack.c.b16 %v7958, %v7957
  %v7983 = vpack.c.b16 %v7960, %v7959
  %v7984 = vpack.c.b16 %v7962, %v7961
  %v7985 = vpack.c.b16 %v7964, %v7963
  %v7986 = vpack.c.b16 %v7966, %v7965
  %v7987 = vpack.c.b16 %v7968, %v7967
  %v7988 = vpack.c.b16 %v7970, %v7969
  %v7989 = vpack.c.b16 %v7972, %v7971
  %v7990 = vpack.c.b16 %v7974, %v7973
  %8007 = vmatprep.subr.bf16.mxu0 0
  %8008 = vmatpush1.bf16.msra.mxu0 %v7982
  %8009 = vmatprep.subr.bf16.mxu0 0
  %8010 = vmatpush1.bf16.msra.mxu0 %v7981
  %8011 = vmatprep.subr.bf16.mxu0 0
  %8012 = vmatpush1.bf16.msra.mxu0 %v7980
  %8013 = vmatprep.subr.bf16.mxu0 0
  %8014 = vmatpush1.bf16.msra.mxu0 %v7979
  %8015 = vmatprep.subr.bf16.mxu0 0
  %8016 = vmatpush1.bf16.msra.mxu0 %v7978
  %8017 = vmatprep.subr.bf16.mxu0 0
  %8018 = vmatpush1.bf16.msra.mxu0 %v7977
  %8019 = vmatprep.subr.bf16.mxu0 0
  %8020 = vmatpush1.bf16.msra.mxu0 %v7976
  %8021 = vmatprep.subr.bf16.mxu0 0
  %8022 = vmatpush1.bf16.msra.mxu0 %v7975
  %8023 = vmatprep.subr.bf16.mxu0 0
  %8024 = vmatpush2.bf16.msra.mxu0 %v7990
  %8025 = vmatprep.subr.bf16.mxu0 0
  %8026 = vmatpush2.bf16.msra.mxu0 %v7989
  %8027 = vmatprep.subr.bf16.mxu0 0
  %8028 = vmatpush2.bf16.msra.mxu0 %v7988
  %8029 = vmatprep.subr.bf16.mxu0 0
  %8030 = vmatpush2.bf16.msra.mxu0 %v7987
  %8031 = vmatprep.subr.bf16.mxu0 0
  %8032 = vmatpush2.bf16.msra.mxu0 %v7986
  %8033 = vmatprep.subr.bf16.mxu0 0
  %8034 = vmatpush2.bf16.msra.mxu0 %v7985
  %8035 = vmatprep.subr.bf16.mxu0 0
  %8036 = vmatpush2.bf16.msra.mxu0 %v7984
  %8037 = vmatprep.subr.bf16.mxu0 0
  %8038 = vmatpush2.bf16.msra.mxu0 %v7983
  %8039 = vmatprep.mubr.bf16.mxu0 %v6856
  %8040 = vmatmul.mubr.bf16.gmra.mxu0 %v6855
  %v8041 = vpop.f32.mrf.mxu0
  %v8042 = vadd.f32 0.0, %v8041
  %v8043 = vpop.f32.mrf.mxu0
  %v8044 = vpop.f32.mrf.mxu0
  %v8045 = vpop.f32.mrf.mxu0
  %8046 = vdwg.mxu0
  %v8047 = vadd.f32 %v7877, %v8042
  %s8048 = scalar_lea.vmem %s10, 896
  %v8049 = vld [vmem:[%s8048] sm:$0xf]
  %v8050 = vld [vmem:[%s8048 + $0x4] sm:$0xf]
  %v8051 = vld [vmem:[%s8048 + $0x8] sm:$0xf]
  %v8052 = vld [vmem:[%s8048 + $0xc] sm:$0xf]
  %v8053 = vld [vmem:[%s8048 + $0x10] sm:$0xf]
  %v8054 = vld [vmem:[%s8048 + $0x14] sm:$0xf]
  %v8055 = vld [vmem:[%s8048 + $0x18] sm:$0xf]
  %v8056 = vld [vmem:[%s8048 + $0x1c] sm:$0xf]
  %v8057 = vld [vmem:[%s8048 + $0x20] sm:$0xf]
  %v8058 = vld [vmem:[%s8048 + $0x24] sm:$0xf]
  %v8059 = vld [vmem:[%s8048 + $0x28] sm:$0xf]
  %v8060 = vld [vmem:[%s8048 + $0x2c] sm:$0xf]
  %v8061 = vld [vmem:[%s8048 + $0x30] sm:$0xf]
  %v8062 = vld [vmem:[%s8048 + $0x34] sm:$0xf]
  %v8063 = vld [vmem:[%s8048 + $0x38] sm:$0xf]
  %v8064 = vld [vmem:[%s8048 + $0x3c] sm:$0xf]
  %v8065 = vld [vmem:[%s8048 + $0x40] sm:$0xf]
  %v8066 = vld [vmem:[%s8048 + $0x44] sm:$0xf]
  %v8067 = vld [vmem:[%s8048 + $0x48] sm:$0xf]
  %v8068 = vld [vmem:[%s8048 + $0x4c] sm:$0xf]
  %v8069 = vld [vmem:[%s8048 + $0x50] sm:$0xf]
  %v8070 = vld [vmem:[%s8048 + $0x54] sm:$0xf]
  %v8071 = vld [vmem:[%s8048 + $0x58] sm:$0xf]
  %v8072 = vld [vmem:[%s8048 + $0x5c] sm:$0xf]
  %v8073 = vld [vmem:[%s8048 + $0x60] sm:$0xf]
  %v8074 = vld [vmem:[%s8048 + $0x64] sm:$0xf]
  %v8075 = vld [vmem:[%s8048 + $0x68] sm:$0xf]
  %v8076 = vld [vmem:[%s8048 + $0x6c] sm:$0xf]
  %v8077 = vld [vmem:[%s8048 + $0x70] sm:$0xf]
  %v8078 = vld [vmem:[%s8048 + $0x74] sm:$0xf]
  %v8079 = vld [vmem:[%s8048 + $0x78] sm:$0xf]
  %v8080 = vld [vmem:[%s8048 + $0x7c] sm:$0xf]
  %v8113 = vunpack.c.l.b16 %v8049
  %v8114 = vunpack.c.l.b16 %v8050
  %v8115 = vunpack.c.l.b16 %v8051
  %v8116 = vunpack.c.l.b16 %v8052
  %v8117 = vunpack.c.l.b16 %v8053
  %v8118 = vunpack.c.l.b16 %v8054
  %v8119 = vunpack.c.l.b16 %v8055
  %v8120 = vunpack.c.l.b16 %v8056
  %v8121 = vunpack.c.l.b16 %v8057
  %v8122 = vunpack.c.l.b16 %v8058
  %v8123 = vunpack.c.l.b16 %v8059
  %v8124 = vunpack.c.l.b16 %v8060
  %v8125 = vunpack.c.l.b16 %v8061
  %v8126 = vunpack.c.l.b16 %v8062
  %v8127 = vunpack.c.l.b16 %v8063
  %v8128 = vunpack.c.l.b16 %v8064
  %v8129 = vunpack.c.l.b16 %v8065
  %v8130 = vunpack.c.l.b16 %v8066
  %v8131 = vunpack.c.l.b16 %v8067
  %v8132 = vunpack.c.l.b16 %v8068
  %v8133 = vunpack.c.l.b16 %v8069
  %v8134 = vunpack.c.l.b16 %v8070
  %v8135 = vunpack.c.l.b16 %v8071
  %v8136 = vunpack.c.l.b16 %v8072
  %v8137 = vunpack.c.l.b16 %v8073
  %v8138 = vunpack.c.l.b16 %v8074
  %v8139 = vunpack.c.l.b16 %v8075
  %v8140 = vunpack.c.l.b16 %v8076
  %v8141 = vunpack.c.l.b16 %v8077
  %v8142 = vunpack.c.l.b16 %v8078
  %v8143 = vunpack.c.l.b16 %v8079
  %v8144 = vunpack.c.l.b16 %v8080
  %v8145 = vpack.c.b16 %v8114, %v8113
  %v8146 = vpack.c.b16 %v8116, %v8115
  %v8147 = vpack.c.b16 %v8118, %v8117
  %v8148 = vpack.c.b16 %v8120, %v8119
  %v8149 = vpack.c.b16 %v8122, %v8121
  %v8150 = vpack.c.b16 %v8124, %v8123
  %v8151 = vpack.c.b16 %v8126, %v8125
  %v8152 = vpack.c.b16 %v8128, %v8127
  %v8153 = vpack.c.b16 %v8130, %v8129
  %v8154 = vpack.c.b16 %v8132, %v8131
  %v8155 = vpack.c.b16 %v8134, %v8133
  %v8156 = vpack.c.b16 %v8136, %v8135
  %v8157 = vpack.c.b16 %v8138, %v8137
  %v8158 = vpack.c.b16 %v8140, %v8139
  %v8159 = vpack.c.b16 %v8142, %v8141
  %v8160 = vpack.c.b16 %v8144, %v8143
  %8177 = vmatprep.subr.bf16.mxu0 0
  %8178 = vmatpush1.bf16.msra.mxu0 %v8152
  %8179 = vmatprep.subr.bf16.mxu0 0
  %8180 = vmatpush1.bf16.msra.mxu0 %v8151
  %8181 = vmatprep.subr.bf16.mxu0 0
  %8182 = vmatpush1.bf16.msra.mxu0 %v8150
  %8183 = vmatprep.subr.bf16.mxu0 0
  %8184 = vmatpush1.bf16.msra.mxu0 %v8149
  %8185 = vmatprep.subr.bf16.mxu0 0
  %8186 = vmatpush1.bf16.msra.mxu0 %v8148
  %8187 = vmatprep.subr.bf16.mxu0 0
  %8188 = vmatpush1.bf16.msra.mxu0 %v8147
  %8189 = vmatprep.subr.bf16.mxu0 0
  %8190 = vmatpush1.bf16.msra.mxu0 %v8146
  %8191 = vmatprep.subr.bf16.mxu0 0
  %8192 = vmatpush1.bf16.msra.mxu0 %v8145
  %8193 = vmatprep.subr.bf16.mxu0 0
  %8194 = vmatpush2.bf16.msra.mxu0 %v8160
  %8195 = vmatprep.subr.bf16.mxu0 0
  %8196 = vmatpush2.bf16.msra.mxu0 %v8159
  %8197 = vmatprep.subr.bf16.mxu0 0
  %8198 = vmatpush2.bf16.msra.mxu0 %v8158
  %8199 = vmatprep.subr.bf16.mxu0 0
  %8200 = vmatpush2.bf16.msra.mxu0 %v8157
  %8201 = vmatprep.subr.bf16.mxu0 0
  %8202 = vmatpush2.bf16.msra.mxu0 %v8156
  %8203 = vmatprep.subr.bf16.mxu0 0
  %8204 = vmatpush2.bf16.msra.mxu0 %v8155
  %8205 = vmatprep.subr.bf16.mxu0 0
  %8206 = vmatpush2.bf16.msra.mxu0 %v8154
  %8207 = vmatprep.subr.bf16.mxu0 0
  %8208 = vmatpush2.bf16.msra.mxu0 %v8153
  %8209 = vmatprep.mubr.bf16.mxu0 %v6858
  %8210 = vmatmul.mubr.bf16.gmra.mxu0 %v6857
  %v8211 = vpop.f32.mrf.mxu0
  %v8212 = vadd.f32 0.0, %v8211
  %v8213 = vpop.f32.mrf.mxu0
  %v8214 = vpop.f32.mrf.mxu0
  %v8215 = vpop.f32.mrf.mxu0
  %8216 = vdwg.mxu0
  %v8217 = vadd.f32 %v8047, %v8212
  %s8218 = scalar_lea.vmem %s10, 1024
  %v8219 = vld [vmem:[%s8218] sm:$0xf]
  %v8220 = vld [vmem:[%s8218 + $0x4] sm:$0xf]
  %v8221 = vld [vmem:[%s8218 + $0x8] sm:$0xf]
  %v8222 = vld [vmem:[%s8218 + $0xc] sm:$0xf]
  %v8223 = vld [vmem:[%s8218 + $0x10] sm:$0xf]
  %v8224 = vld [vmem:[%s8218 + $0x14] sm:$0xf]
  %v8225 = vld [vmem:[%s8218 + $0x18] sm:$0xf]
  %v8226 = vld [vmem:[%s8218 + $0x1c] sm:$0xf]
  %v8227 = vld [vmem:[%s8218 + $0x20] sm:$0xf]
  %v8228 = vld [vmem:[%s8218 + $0x24] sm:$0xf]
  %v8229 = vld [vmem:[%s8218 + $0x28] sm:$0xf]
  %v8230 = vld [vmem:[%s8218 + $0x2c] sm:$0xf]
  %v8231 = vld [vmem:[%s8218 + $0x30] sm:$0xf]
  %v8232 = vld [vmem:[%s8218 + $0x34] sm:$0xf]
  %v8233 = vld [vmem:[%s8218 + $0x38] sm:$0xf]
  %v8234 = vld [vmem:[%s8218 + $0x3c] sm:$0xf]
  %v8235 = vld [vmem:[%s8218 + $0x40] sm:$0xf]
  %v8236 = vld [vmem:[%s8218 + $0x44] sm:$0xf]
  %v8237 = vld [vmem:[%s8218 + $0x48] sm:$0xf]
  %v8238 = vld [vmem:[%s8218 + $0x4c] sm:$0xf]
  %v8239 = vld [vmem:[%s8218 + $0x50] sm:$0xf]
  %v8240 = vld [vmem:[%s8218 + $0x54] sm:$0xf]
  %v8241 = vld [vmem:[%s8218 + $0x58] sm:$0xf]
  %v8242 = vld [vmem:[%s8218 + $0x5c] sm:$0xf]
  %v8243 = vld [vmem:[%s8218 + $0x60] sm:$0xf]
  %v8244 = vld [vmem:[%s8218 + $0x64] sm:$0xf]
  %v8245 = vld [vmem:[%s8218 + $0x68] sm:$0xf]
  %v8246 = vld [vmem:[%s8218 + $0x6c] sm:$0xf]
  %v8247 = vld [vmem:[%s8218 + $0x70] sm:$0xf]
  %v8248 = vld [vmem:[%s8218 + $0x74] sm:$0xf]
  %v8249 = vld [vmem:[%s8218 + $0x78] sm:$0xf]
  %v8250 = vld [vmem:[%s8218 + $0x7c] sm:$0xf]
  %v8283 = vunpack.c.l.b16 %v8219
  %v8284 = vunpack.c.l.b16 %v8220
  %v8285 = vunpack.c.l.b16 %v8221
  %v8286 = vunpack.c.l.b16 %v8222
  %v8287 = vunpack.c.l.b16 %v8223
  %v8288 = vunpack.c.l.b16 %v8224
  %v8289 = vunpack.c.l.b16 %v8225
  %v8290 = vunpack.c.l.b16 %v8226
  %v8291 = vunpack.c.l.b16 %v8227
  %v8292 = vunpack.c.l.b16 %v8228
  %v8293 = vunpack.c.l.b16 %v8229
  %v8294 = vunpack.c.l.b16 %v8230
  %v8295 = vunpack.c.l.b16 %v8231
  %v8296 = vunpack.c.l.b16 %v8232
  %v8297 = vunpack.c.l.b16 %v8233
  %v8298 = vunpack.c.l.b16 %v8234
  %v8299 = vunpack.c.l.b16 %v8235
  %v8300 = vunpack.c.l.b16 %v8236
  %v8301 = vunpack.c.l.b16 %v8237
  %v8302 = vunpack.c.l.b16 %v8238
  %v8303 = vunpack.c.l.b16 %v8239
  %v8304 = vunpack.c.l.b16 %v8240
  %v8305 = vunpack.c.l.b16 %v8241
  %v8306 = vunpack.c.l.b16 %v8242
  %v8307 = vunpack.c.l.b16 %v8243
  %v8308 = vunpack.c.l.b16 %v8244
  %v8309 = vunpack.c.l.b16 %v8245
  %v8310 = vunpack.c.l.b16 %v8246
  %v8311 = vunpack.c.l.b16 %v8247
  %v8312 = vunpack.c.l.b16 %v8248
  %v8313 = vunpack.c.l.b16 %v8249
  %v8314 = vunpack.c.l.b16 %v8250
  %v8315 = vpack.c.b16 %v8284, %v8283
  %v8316 = vpack.c.b16 %v8286, %v8285
  %v8317 = vpack.c.b16 %v8288, %v8287
  %v8318 = vpack.c.b16 %v8290, %v8289
  %v8319 = vpack.c.b16 %v8292, %v8291
  %v8320 = vpack.c.b16 %v8294, %v8293
  %v8321 = vpack.c.b16 %v8296, %v8295
  %v8322 = vpack.c.b16 %v8298, %v8297
  %v8323 = vpack.c.b16 %v8300, %v8299
  %v8324 = vpack.c.b16 %v8302, %v8301
  %v8325 = vpack.c.b16 %v8304, %v8303
  %v8326 = vpack.c.b16 %v8306, %v8305
  %v8327 = vpack.c.b16 %v8308, %v8307
  %v8328 = vpack.c.b16 %v8310, %v8309
  %v8329 = vpack.c.b16 %v8312, %v8311
  %v8330 = vpack.c.b16 %v8314, %v8313
  %8347 = vmatprep.subr.bf16.mxu0 0
  %8348 = vmatpush1.bf16.msra.mxu0 %v8322
  %8349 = vmatprep.subr.bf16.mxu0 0
  %8350 = vmatpush1.bf16.msra.mxu0 %v8321
  %8351 = vmatprep.subr.bf16.mxu0 0
  %8352 = vmatpush1.bf16.msra.mxu0 %v8320
  %8353 = vmatprep.subr.bf16.mxu0 0
  %8354 = vmatpush1.bf16.msra.mxu0 %v8319
  %8355 = vmatprep.subr.bf16.mxu0 0
  %8356 = vmatpush1.bf16.msra.mxu0 %v8318
  %8357 = vmatprep.subr.bf16.mxu0 0
  %8358 = vmatpush1.bf16.msra.mxu0 %v8317
  %8359 = vmatprep.subr.bf16.mxu0 0
  %8360 = vmatpush1.bf16.msra.mxu0 %v8316
  %8361 = vmatprep.subr.bf16.mxu0 0
  %8362 = vmatpush1.bf16.msra.mxu0 %v8315
  %8363 = vmatprep.subr.bf16.mxu0 0
  %8364 = vmatpush2.bf16.msra.mxu0 %v8330
  %8365 = vmatprep.subr.bf16.mxu0 0
  %8366 = vmatpush2.bf16.msra.mxu0 %v8329
  %8367 = vmatprep.subr.bf16.mxu0 0
  %8368 = vmatpush2.bf16.msra.mxu0 %v8328
  %8369 = vmatprep.subr.bf16.mxu0 0
  %8370 = vmatpush2.bf16.msra.mxu0 %v8327
  %8371 = vmatprep.subr.bf16.mxu0 0
  %8372 = vmatpush2.bf16.msra.mxu0 %v8326
  %8373 = vmatprep.subr.bf16.mxu0 0
  %8374 = vmatpush2.bf16.msra.mxu0 %v8325
  %8375 = vmatprep.subr.bf16.mxu0 0
  %8376 = vmatpush2.bf16.msra.mxu0 %v8324
  %8377 = vmatprep.subr.bf16.mxu0 0
  %8378 = vmatpush2.bf16.msra.mxu0 %v8323
  %8379 = vmatprep.mubr.bf16.mxu0 %v6860
  %8380 = vmatmul.mubr.bf16.gmra.mxu0 %v6859
  %v8381 = vpop.f32.mrf.mxu0
  %v8382 = vadd.f32 0.0, %v8381
  %v8383 = vpop.f32.mrf.mxu0
  %v8384 = vpop.f32.mrf.mxu0
  %v8385 = vpop.f32.mrf.mxu0
  %8386 = vdwg.mxu0
  %v8387 = vadd.f32 %v8217, %v8382
  %v8388 = vld [vmem:[%s11] sm:$0x1]
  %v8390 = vlaneseq
  %v8391 = vshrl.u32 %v8390, 7
  %v8392 = vsub.s32 0, %v8391
  %v8393 = vrot.slane %v8388, %v8392
  %v8395 = vadd.f32 %v8387, %v8393
  %v8396 = vmul.f32 %v8395, 0.5
  %v8397 = vtanh.pop %v8396
  %v8398 = vmul.f32 %v8397, 0.5
  %v8399 = vadd.f32 %v8398, 0.5
  %vm8400 = vcmask 654336
  %8401 = vst.msk [vmem:[%s12] sm:$0xff] %vm8400, %v8399
  // Predicated region
  $region50: #{conv_encoder_forward.1} parent=0 // pred_check
    _
  $region51: #{conv_encoder_forward.1} parent=0 // pred_check_branch
    %8403 = sbr.rel (0) target = $region53
  $region52: #{conv_encoder_forward.1} parent=0 // pred_region
    _
  $region53: #{conv_encoder_forward.1} parent=0 // pred_fallthru
    _
  // Predicated region
  $region54: #{conv_encoder_forward.1} parent=0 // pred_check
    _
  $region55: #{conv_encoder_forward.1} parent=0 // pred_check_branch
    %8405 = sbr.rel (0) target = $region57
  $region56: #{conv_encoder_forward.1} parent=0 // pred_region
    _
  $region57: #{conv_encoder_forward.1} parent=0 // pred_fallthru
    _

</llo_original>
